<compile_context>
chip_gen: v7x
topology: tpu7x:2x2x1
jax: 0.10.0
libtpu: 0.0.40
codegen_flags: <defaults>
</compile_context>

<pallas_src>
import functools
import math

import jax
import jax.numpy as jnp
import numpy as np
from jax.experimental import pallas as pl
from jax.experimental.pallas import tpu as pltpu

_BN_EPS = 1e-5


def _round_up(x, m):
    return (x + m - 1) // m * m


# ---------------------------------------------------------------------------
# Pallas kernel: NB batch images per grid step, everything resident in VMEM.
# ---------------------------------------------------------------------------
def _basic_block_kernel(x_ref, w1a_ref, w1b_ref, w2_ref, eca_ref, bn_ref,
                        out_ref, pad_x, pad_mid, *, has_shortcut):
    f32 = jnp.float32
    bf16 = jnp.bfloat16
    NB, H, W, Cinp = x_ref.shape
    Wp = pad_x.shape[2]
    Cpp = pad_mid.shape[3]
    HW = H * W
    M = NB * HW

    def stage_padded(buf, interior, c):
        # Zero-haloed staging for a 3x3 / pad-1 conv.  Only the halo ring is
        # rewritten; the interior is fully overwritten each step.
        # TODO(synk): hoist halo zeroing behind a per-core "first step" guard
        # (kept per-step for megacore correctness; it is 4 narrow stores).
        buf[:, 0:1, :, :] = jnp.zeros((NB, 1, Wp, c), bf16)
        buf[:, H + 1:H + 2, :, :] = jnp.zeros((NB, 1, Wp, c), bf16)
        buf[:, 1:H + 1, 0:1, :] = jnp.zeros((NB, H, 1, c), bf16)
        buf[:, 1:H + 1, W + 1:W + 2, :] = jnp.zeros((NB, H, 1, c), bf16)
        buf[:, 1:H + 1, 1:W + 1, :] = interior

    def row_cols(buf, dy, c):
        # im2col for one kernel row (3 horizontal taps): (M, 3*c),
        # K ordered (dx, channel) — matches the weight packing below.
        return jnp.concatenate(
            [buf[:, dy:dy + H, dx:dx + W, :] for dx in range(3)],
            axis=-1).reshape(M, 3 * c)

    # ---- stage raw x; conv1 im2col is built in-kernel ----------------------
    stage_padded(pad_x, x_ref[...], Cinp)

    # ---- conv1 as 3 row-group GEMMs (f32 acc).  The centre row carries the
    #      fused 1x1-shortcut weights in its upper output columns, filling the
    #      256-wide MXU on v6e/v7x when Cpp == 128. --------------------------
    mid = jnp.dot(row_cols(pad_x, 1, Cinp), w1b_ref[...],
                  preferred_element_type=f32)                # (M, Cpp or 2*Cpp)
    acc1 = mid[:, :Cpp]
    acc1 = acc1 + jnp.dot(row_cols(pad_x, 0, Cinp), w1a_ref[0],
                          preferred_element_type=f32)
    acc1 = acc1 + jnp.dot(row_cols(pad_x, 2, Cinp), w1a_ref[1],
                          preferred_element_type=f32)
    out1 = jnp.maximum(acc1 * bn_ref[0:1, :] + bn_ref[1:2, :], 0.0)   # BN1+ReLU

    # ---- conv2: same 3-row-group scheme (no (M, 9*Cpp) materialization) ----
    stage_padded(pad_mid, out1.astype(bf16).reshape(NB, H, W, Cpp), Cpp)
    acc2 = jnp.dot(row_cols(pad_mid, 0, Cpp), w2_ref[0],
                   preferred_element_type=f32)
    acc2 = acc2 + jnp.dot(row_cols(pad_mid, 1, Cpp), w2_ref[1],
                          preferred_element_type=f32)
    acc2 = acc2 + jnp.dot(row_cols(pad_mid, 2, Cpp), w2_ref[2],
                          preferred_element_type=f32)
    out2 = acc2 * bn_ref[2:3, :] + bn_ref[3:4, :]                     # BN2

    # ---- Efficient Channel Attention: global avg pool + banded 1-D conv ----
    avg = jnp.mean(out2.reshape(NB, HW, Cpp), axis=1)                 # (NB, Cpp)
    attn = jax.nn.sigmoid(jnp.dot(avg, eca_ref[...],
                                  preferred_element_type=f32))        # (NB, Cpp)
    scaled = out2.reshape(NB, HW, Cpp) * attn[:, None, :]

    # ---- shortcut + final ReLU ---------------------------------------------
    if has_shortcut:
        sc = mid[:, Cpp:] * bn_ref[4:5, :] + bn_ref[5:6, :]           # 1x1 + BN
    else:
        # identity: reuse the already-DMA'd x block (Cinp == Cpp here).
        sc = x_ref[...].reshape(M, Cpp).astype(f32)
    out_ref[...] = jnp.maximum(scaled + sc.reshape(NB, HW, Cpp),
                               0.0).astype(out_ref.dtype)


# ---------------------------------------------------------------------------
# Parameter setup / folding helpers (plain JAX)
# ---------------------------------------------------------------------------
def _fold_bn(gamma, beta, mean, var):
    scale = gamma / jnp.sqrt(var + _BN_EPS)
    bias = beta - mean * scale
    return scale.astype(jnp.float32), bias.astype(jnp.float32)


def _eca_kernel_size(c, b=1, gamma=2):
    t = int(abs((math.log(c, 2) + b) / gamma))
    return t if t % 2 else t + 1


def _eca_band_matrix(w, c):
    # attn[o] = sum_j w[j] * avg[o - pad + j]  ==  avg @ M,  M[i, o] = w[i-o+pad]
    k = w.shape[0]
    pad = k // 2
    i = jnp.arange(c)[:, None]
    o = jnp.arange(c)[None, :]
    j = i - o + pad
    valid = (j >= 0) & (j < k)
    return jnp.where(valid, w[jnp.clip(j, 0, k - 1)], 0.0).astype(jnp.float32)


def init_params(key, in_planes, planes):
    ks = jax.random.split(key, 16)
    r = lambda k, s, sc=0.2: (jax.random.normal(k, s, jnp.float32) * sc)
    p = {}
    p["conv1_w"] = r(ks[0], (planes, in_planes, 3, 3))          # OIHW
    p["conv2_w"] = r(ks[1], (planes, planes, 3, 3))
    p["bn1"] = (1.0 + r(ks[2], (planes,), 0.1), r(ks[3], (planes,), 0.1),
                r(ks[4], (planes,), 0.1), 1.0 + jnp.abs(r(ks[5], (planes,), 0.1)))
    p["bn2"] = (1.0 + r(ks[6], (planes,), 0.1), r(ks[7], (planes,), 0.1),
                r(ks[8], (planes,), 0.1), 1.0 + jnp.abs(r(ks[9], (planes,), 0.1)))
    k_eca = _eca_kernel_size(planes)
    p["eca_w"] = r(ks[10], (k_eca,), 0.5)
    p["has_shortcut"] = in_planes != planes                     # stride fixed at 1
    if p["has_shortcut"]:
        p["sc_w"] = r(ks[11], (planes, in_planes, 1, 1))
        p["bn_sc"] = (1.0 + r(ks[12], (planes,), 0.1), r(ks[13], (planes,), 0.1),
                      r(ks[14], (planes,), 0.1), 1.0 + jnp.abs(r(ks[15], (planes,), 0.1)))
    return p


# ---------------------------------------------------------------------------
# VMEM sizing helpers + batch-block selection
# ---------------------------------------------------------------------------
def _per_image_vmem_bytes(H, W, Wp, Cinp, Cpp, n_out_cols):
    HW = H * W
    bf, f4 = 2, 4
    return (2 * HW * Cinp * bf                    # double-buffered x block
            + 2 * HW * Cpp * bf                   # double-buffered output block
            + (H + 2) * Wp * (Cinp + Cpp) * bf    # halo scratches
            + HW * (n_out_cols + 3 * Cpp) * f4    # f32 acc / out2 / scaled
            + HW * 3 * max(Cinp, Cpp) * bf)       # one row-group of im2col cols


def _weights_vmem_bytes(Cinp, Cpp, n_out_cols):
    bf, f4 = 2, 4
    return 2 * ((2 * 3 * Cinp * Cpp + 3 * Cinp * n_out_cols
                 + 9 * Cpp * Cpp) * bf
                + (Cpp * Cpp + 8 * Cpp) * f4)


def _pick_batch_block(n, per_image_bytes, max_nb=8, budget_bytes=24 * 2**20):
    # Largest divisor of n that (a) leaves >= 2 grid steps (v7x dual-TC) and
    # (b) keeps the per-step working set within the VMEM budget.
    cap = min(max_nb, max(1, budget_bytes // max(per_image_bytes, 1)))
    nb = 1
    for d in range(1, n + 1):
        if n % d == 0 and d <= cap and (n // d >= 2 or n < 2):
            nb = d
    return nb


# ---------------------------------------------------------------------------
# Wrapper: layout transforms + pallas_call
# ---------------------------------------------------------------------------
def basic_block_pallas(x_nchw, params, *, batch_block=None):
    N, Cin, H, W = x_nchw.shape
    Cp = params["conv1_w"].shape[0]
    Cpp = _round_up(Cp, 128)            # lane-dense output channels
    Cinp = _round_up(Cin, 128)          # lane-dense input channels
    HW = H * W
    Wp = _round_up(W + 2, 8)            # sublane-aligned haloed width
    has_shortcut = bool(params["has_shortcut"])
    n_out_cols = 2 * Cpp if has_shortcut else Cpp

    per_img = _per_image_vmem_bytes(H, W, Wp, Cinp, Cpp, n_out_cols)
    nb = (_pick_batch_block(N, per_img) if batch_block is None else batch_block)
    assert N % nb == 0

    # Raw x in NHWC, channel-padded to a lane multiple, bf16.  The conv1
    # im2col and the spatial halo are built in-kernel (no 9x wrapper DMA).
    x_nhwc = jnp.transpose(x_nchw, (0, 2, 3, 1))
    x_in = jnp.pad(x_nhwc, ((0, 0), (0, 0), (0, 0),
                            (0, Cinp - Cin))).astype(jnp.bfloat16)

    # conv1 weight -> per-row im2col groups (ky, kx*cin, cout).
    w1 = jnp.transpose(params["conv1_w"], (2, 3, 1, 0))         # (ky,kx,Cin,Cp)
    w1 = jnp.pad(w1, ((0, 0), (0, 0), (0, Cinp - Cin), (0, Cpp - Cp)))
    w1 = w1.reshape(3, 3 * Cinp, Cpp)
    w1a = jnp.stack([w1[0], w1[2]])                              # dy = 0, 2
    w1b = w1[1]                                                  # dy = 1
    if has_shortcut:
        wsc = jnp.transpose(params["sc_w"][:, :, 0, 0], (1, 0))  # (Cin, Cp)
        wsc_blk = jnp.zeros((3 * Cinp, Cpp), jnp.float32)
        wsc_blk = wsc_blk.at[Cinp:Cinp + Cin, :Cp].set(wsc)      # centre tap (dx=1)
        w1b = jnp.concatenate([w1b, wsc_blk], axis=-1)           # (3*Cinp, 2*Cpp)
    w1a = w1a.astype(jnp.bfloat16)
    w1b = w1b.astype(jnp.bfloat16)

    # conv2 weight -> per-row im2col groups.
    w2 = jnp.transpose(params["conv2_w"], (2, 3, 1, 0))
    w2 = jnp.pad(w2, ((0, 0), (0, 0), (0, Cpp - Cp), (0, Cpp - Cp)))
    w2 = w2.reshape(3, 3 * Cpp, Cpp).astype(jnp.bfloat16)

    bn1s, bn1b = _fold_bn(*params["bn1"])
    bn2s, bn2b = _fold_bn(*params["bn2"])
    if has_shortcut:
        scs, scb = _fold_bn(*params["bn_sc"])
    else:
        scs = jnp.zeros((Cp,), jnp.float32)
        scb = jnp.zeros((Cp,), jnp.float32)
    pad_c = lambda v: jnp.pad(v.astype(jnp.float32), (0, Cpp - v.shape[0]))
    bn_pack = jnp.stack([pad_c(bn1s), pad_c(bn1b), pad_c(bn2s), pad_c(bn2b),
                         pad_c(scs), pad_c(scb),
                         jnp.zeros((Cpp,), jnp.float32),
                         jnp.zeros((Cpp,), jnp.float32)])        # (8, Cpp)

    eca_m = jnp.pad(_eca_band_matrix(params["eca_w"], Cp),
                    ((0, Cpp - Cp), (0, Cpp - Cp)))              # (Cpp, Cpp)

    # Scoped VMEM sized to the real working set (+headroom), clamped so it
    # stays sane across v5e / v6e / v7x.
    est = nb * per_img + _weights_vmem_bytes(Cinp, Cpp, n_out_cols)
    vmem_limit = int(min(96 * 2**20, max(32 * 2**20, 4 * est)))

    kernel = functools.partial(_basic_block_kernel, has_shortcut=has_shortcut)

    out = pl.pallas_call(
        kernel,
        out_shape=jax.ShapeDtypeStruct((N, HW, Cpp), jnp.bfloat16),
        grid=(N // nb,),
        in_specs=[
            pl.BlockSpec((nb, H, W, Cinp), lambda b: (b, 0, 0, 0)),    # raw x
            pl.BlockSpec((2, 3 * Cinp, Cpp), lambda b: (0, 0, 0)),     # w1 rows 0,2
            pl.BlockSpec((3 * Cinp, n_out_cols), lambda b: (0, 0)),    # w1 row 1 (+sc)
            pl.BlockSpec((3, 3 * Cpp, Cpp), lambda b: (0, 0, 0)),      # w2 rows
            pl.BlockSpec((Cpp, Cpp), lambda b: (0, 0)),                # ECA band
            pl.BlockSpec((8, Cpp), lambda b: (0, 0)),                  # folded BN
        ],
        out_specs=pl.BlockSpec((nb, HW, Cpp), lambda b: (b, 0, 0)),
        scratch_shapes=[pltpu.VMEM((nb, H + 2, Wp, Cinp), jnp.bfloat16),
                        pltpu.VMEM((nb, H + 2, Wp, Cpp), jnp.bfloat16)],
        compiler_params=pltpu.CompilerParams(
            dimension_semantics=("parallel",),
            vmem_limit_bytes=vmem_limit),
    )(x_in, w1a, w1b, w2, eca_m, bn_pack)

    # Lane-dense padded NHWC slab (N, H*W, Cpp) bf16; channels [Cp:] are zero.
    return out


def slab_to_nchw(out_slab, H, W, c):
    # Test-harness conversion only (the fused consumer should keep the slab).
    n = out_slab.shape[0]
    o = out_slab[:, :, :c].astype(jnp.float32).reshape(n, H, W, c)
    return jnp.transpose(o, (0, 3, 1, 2))


# ---------------------------------------------------------------------------
# Pure-JAX reference (NCHW, matches the PyTorch forward) for verification
# ---------------------------------------------------------------------------
def basic_block_reference(x, p):
    def conv2d(x, w, pad):
        return jax.lax.conv_general_dilated(
            x, w, (1, 1), [(pad, pad), (pad, pad)],
            dimension_numbers=("NCHW", "OIHW", "NCHW"), precision="highest")

    def bn(x, stats):
        g, b, m, v = stats
        inv = g / jnp.sqrt(v + _BN_EPS)
        return x * inv[None, :, None, None] + (b - m * inv)[None, :, None, None]

    out = jax.nn.relu(bn(conv2d(x, p["conv1_w"], 1), p["bn1"]))
    out = bn(conv2d(out, p["conv2_w"], 1), p["bn2"])
    # ECA
    avg = out.mean(axis=(2, 3))                                    # (N, C)
    w = p["eca_w"]
    k = w.shape[0]
    pad = k // 2
    padded = jnp.pad(avg, ((0, 0), (pad, pad)))
    attn = sum(w[j] * padded[:, j:j + avg.shape[1]] for j in range(k))
    attn = jax.nn.sigmoid(attn)
    out = out * attn[:, :, None, None]
    sc = bn(conv2d(x, p["sc_w"], 0), p["bn_sc"]) if p["has_shortcut"] else x
    return jax.nn.relu(out + sc)


# ---------------------------------------------------------------------------
if __name__ == "__main__":
    N, Cin, Cp, H, W = 2, 4, 8, 16, 16

    key = jax.random.PRNGKey(0)
    kx, kp = jax.random.split(key)
    x = jax.random.normal(kx, (N, Cin, H, W), jnp.float32)
    params = init_params(kp, Cin, Cp)

    # Round matmul operands to bf16-representable values so the f32 reference
    # and the bf16-MXU kernel agree tightly (kernel accumulates in f32).
    as_bf16 = lambda a: a.astype(jnp.bfloat16).astype(jnp.float32)
    x = as_bf16(x)
    params["conv1_w"] = as_bf16(params["conv1_w"])
    params["conv2_w"] = as_bf16(params["conv2_w"])
    if params["has_shortcut"]:
        params["sc_w"] = as_bf16(params["sc_w"])

    out_slab = jax.block_until_ready(basic_block_pallas(x, params))
    out = jax.block_until_ready(slab_to_nchw(out_slab, H, W, Cp))
    ref = jax.block_until_ready(basic_block_reference(x, params))

    np.testing.assert_allclose(np.asarray(out), np.asarray(ref),
                               rtol=2e-2, atol=5e-2)
    print("KERNEL_OK")
</pallas_src>

<mosaic_0001>
module attributes {stable_mosaic.version = 11 : i64} {
  func.func @_basic_block_kernel(%arg0: i32, %arg1: memref<1x16x16x128xbf16, #tpu.memory_space<vmem>>, %arg2: memref<2x384x128xbf16, #tpu.memory_space<vmem>>, %arg3: memref<384x256xbf16, #tpu.memory_space<vmem>>, %arg4: memref<3x384x128xbf16, #tpu.memory_space<vmem>>, %arg5: memref<128x128xf32, #tpu.memory_space<vmem>>, %arg6: memref<8x128xf32, #tpu.memory_space<vmem>>, %arg7: memref<1x256x128xbf16, #tpu.memory_space<vmem>>, %arg8: memref<1x18x24x128xbf16, #tpu.memory_space<vmem>>, %arg9: memref<1x18x24x128xbf16, #tpu.memory_space<vmem>>) attributes {dimension_semantics = [#tpu.dimension_semantics<parallel>], iteration_bounds = array<i64: 2>, scalar_prefetch = 0 : i64, scratch_operands = 2 : i64, tpu.core_type = #tpu.core_type<tc>, window_params = [{transform_indices = @transform_0, window_bounds = array<i64: 1, 16, 16, 128>}, {pipeline_mode = #tpu.pipeline_mode<synchronous>, transform_indices = @transform_1, window_bounds = array<i64: 2, 384, 128>}, {pipeline_mode = #tpu.pipeline_mode<synchronous>, transform_indices = @transform_2, window_bounds = array<i64: 384, 256>}, {pipeline_mode = #tpu.pipeline_mode<synchronous>, transform_indices = @transform_3, window_bounds = array<i64: 3, 384, 128>}, {pipeline_mode = #tpu.pipeline_mode<synchronous>, transform_indices = @transform_4, window_bounds = array<i64: 128, 128>}, {pipeline_mode = #tpu.pipeline_mode<synchronous>, transform_indices = @transform_5, window_bounds = array<i64: 8, 128>}, {transform_indices = @transform_6, window_bounds = array<i64: 1, 256, 128>}]} {
    %c0 = arith.constant 0 : index
    %c0_0 = arith.constant 0 : index
    %c0_1 = arith.constant 0 : index
    %c0_2 = arith.constant 0 : index
    %0 = vector.load %arg1[%c0, %c0_0, %c0_1, %c0_2] : memref<1x16x16x128xbf16, #tpu.memory_space<vmem>>, vector<1x16x16x128xbf16>
    %cst = arith.constant 0.000000e+00 : bf16
    %1 = vector.broadcast %cst : bf16 to vector<1x1x24x128xbf16>
    %c0_3 = arith.constant 0 : index
    %c0_4 = arith.constant 0 : index
    %c0_5 = arith.constant 0 : index
    %c0_6 = arith.constant 0 : index
    %2 = vector.load %arg8[%c0_3, %c0_4, %c0_5, %c0_6] : memref<1x18x24x128xbf16, #tpu.memory_space<vmem>>, vector<1x1x24x128xbf16>
    tpu.vector_store %arg8[%c0_3, %c0_4, %c0_5, %c0_6], %1 {strides = array<i32>} : memref<1x18x24x128xbf16, #tpu.memory_space<vmem>>, vector<1x1x24x128xbf16>,
    %cst_7 = arith.constant 0.000000e+00 : bf16
    %3 = vector.broadcast %cst_7 : bf16 to vector<1x1x24x128xbf16>
    %c0_8 = arith.constant 0 : index
    %c17 = arith.constant 17 : index
    %c0_9 = arith.constant 0 : index
    %c0_10 = arith.constant 0 : index
    %4 = vector.load %arg8[%c0_8, %c17, %c0_9, %c0_10] : memref<1x18x24x128xbf16, #tpu.memory_space<vmem>>, vector<1x1x24x128xbf16>
    tpu.vector_store %arg8[%c0_8, %c17, %c0_9, %c0_10], %3 {strides = array<i32>} : memref<1x18x24x128xbf16, #tpu.memory_space<vmem>>, vector<1x1x24x128xbf16>,
    %cst_11 = arith.constant 0.000000e+00 : bf16
    %5 = vector.broadcast %cst_11 : bf16 to vector<1x16x1x128xbf16>
    %c0_12 = arith.constant 0 : index
    %c1 = arith.constant 1 : index
    %c0_13 = arith.constant 0 : index
    %c0_14 = arith.constant 0 : index
    %6 = vector.load %arg8[%c0_12, %c1, %c0_13, %c0_14] : memref<1x18x24x128xbf16, #tpu.memory_space<vmem>>, vector<1x16x1x128xbf16>
    tpu.vector_store %arg8[%c0_12, %c1, %c0_13, %c0_14], %5 {strides = array<i32>} : memref<1x18x24x128xbf16, #tpu.memory_space<vmem>>, vector<1x16x1x128xbf16>,
    %cst_15 = arith.constant 0.000000e+00 : bf16
    %7 = vector.broadcast %cst_15 : bf16 to vector<1x16x1x128xbf16>
    %c0_16 = arith.constant 0 : index
    %c1_17 = arith.constant 1 : index
    %c17_18 = arith.constant 17 : index
    %c0_19 = arith.constant 0 : index
    %8 = vector.load %arg8[%c0_16, %c1_17, %c17_18, %c0_19] : memref<1x18x24x128xbf16, #tpu.memory_space<vmem>>, vector<1x16x1x128xbf16>
    tpu.vector_store %arg8[%c0_16, %c1_17, %c17_18, %c0_19], %7 {strides = array<i32>} : memref<1x18x24x128xbf16, #tpu.memory_space<vmem>>, vector<1x16x1x128xbf16>,
    %c0_20 = arith.constant 0 : index
    %c1_21 = arith.constant 1 : index
    %c1_22 = arith.constant 1 : index
    %c0_23 = arith.constant 0 : index
    %9 = vector.load %arg8[%c0_20, %c1_21, %c1_22, %c0_23] : memref<1x18x24x128xbf16, #tpu.memory_space<vmem>>, vector<1x16x16x128xbf16>
    tpu.vector_store %arg8[%c0_20, %c1_21, %c1_22, %c0_23], %0 {strides = array<i32>} : memref<1x18x24x128xbf16, #tpu.memory_space<vmem>>, vector<1x16x16x128xbf16>,
    %c0_24 = arith.constant 0 : index
    %c1_25 = arith.constant 1 : index
    %c0_26 = arith.constant 0 : index
    %c0_27 = arith.constant 0 : index
    %10 = vector.load %arg8[%c0_24, %c1_25, %c0_26, %c0_27] : memref<1x18x24x128xbf16, #tpu.memory_space<vmem>>, vector<1x16x16x128xbf16>
    %c0_28 = arith.constant 0 : index
    %c1_29 = arith.constant 1 : index
    %c1_30 = arith.constant 1 : index
    %c0_31 = arith.constant 0 : index
    %11 = vector.load %arg8[%c0_28, %c1_29, %c1_30, %c0_31] : memref<1x18x24x128xbf16, #tpu.memory_space<vmem>>, vector<1x16x16x128xbf16>
    %c0_32 = arith.constant 0 : index
    %c1_33 = arith.constant 1 : index
    %c2 = arith.constant 2 : index
    %c0_34 = arith.constant 0 : index
    %12 = vector.load %arg8[%c0_32, %c1_33, %c2, %c0_34] : memref<1x18x24x128xbf16, #tpu.memory_space<vmem>>, vector<1x16x16x128xbf16>
    %13 = tpu.concatenate %10, %11, %12 in 3 : vector<1x16x16x128xbf16>, vector<1x16x16x128xbf16>, vector<1x16x16x128xbf16> -> vector<1x16x16x384xbf16>
    %14 = vector.shape_cast %13 : vector<1x16x16x384xbf16> to vector<256x384xbf16>
    %c0_35 = arith.constant 0 : index
    %c0_36 = arith.constant 0 : index
    %15 = vector.load %arg3[%c0_35, %c0_36] : memref<384x256xbf16, #tpu.memory_space<vmem>>, vector<384x256xbf16>
    %cst_37 = arith.constant dense<0.000000e+00> : vector<256x256xf32>
    %16 = tpu.matmul %14, %15, %cst_37 {dimension_numbers = #tpu.dot_dimension_numbers<[1], [0], [0], [1], [0, 0, 1, 1], [], []>} : vector<256x384xbf16>, vector<384x256xbf16>, vector<256x256xf32> -> vector<256x256xf32>
    %17 = vector.extract_strided_slice %16 {offsets = [0, 0], sizes = [256, 128], strides = [1, 1]} : vector<256x256xf32> to vector<256x128xf32>
    %c0_38 = arith.constant 0 : index
    %c0_39 = arith.constant 0 : index
    %c0_40 = arith.constant 0 : index
    %c0_41 = arith.constant 0 : index
    %18 = vector.load %arg8[%c0_38, %c0_39, %c0_40, %c0_41] : memref<1x18x24x128xbf16, #tpu.memory_space<vmem>>, vector<1x16x16x128xbf16>
    %c0_42 = arith.constant 0 : index
    %c0_43 = arith.constant 0 : index
    %c1_44 = arith.constant 1 : index
    %c0_45 = arith.constant 0 : index
    %19 = vector.load %arg8[%c0_42, %c0_43, %c1_44, %c0_45] : memref<1x18x24x128xbf16, #tpu.memory_space<vmem>>, vector<1x16x16x128xbf16>
    %c0_46 = arith.constant 0 : index
    %c0_47 = arith.constant 0 : index
    %c2_48 = arith.constant 2 : index
    %c0_49 = arith.constant 0 : index
    %20 = vector.load %arg8[%c0_46, %c0_47, %c2_48, %c0_49] : memref<1x18x24x128xbf16, #tpu.memory_space<vmem>>, vector<1x16x16x128xbf16>
    %21 = tpu.concatenate %18, %19, %20 in 3 : vector<1x16x16x128xbf16>, vector<1x16x16x128xbf16>, vector<1x16x16x128xbf16> -> vector<1x16x16x384xbf16>
    %22 = vector.shape_cast %21 : vector<1x16x16x384xbf16> to vector<256x384xbf16>
    %c0_50 = arith.constant 0 : index
    %c0_51 = arith.constant 0 : index
    %c0_52 = arith.constant 0 : index
    %23 = vector.load %arg2[%c0_50, %c0_51, %c0_52] : memref<2x384x128xbf16, #tpu.memory_space<vmem>>, vector<1x384x128xbf16>
    %24 = vector.shape_cast %23 : vector<1x384x128xbf16> to vector<384x128xbf16>
    %cst_53 = arith.constant dense<0.000000e+00> : vector<256x128xf32>
    %25 = tpu.matmul %22, %24, %cst_53 {dimension_numbers = #tpu.dot_dimension_numbers<[1], [0], [0], [1], [0, 0, 1, 1], [], []>} : vector<256x384xbf16>, vector<384x128xbf16>, vector<256x128xf32> -> vector<256x128xf32>
    %26 = arith.addf %17, %25 : vector<256x128xf32>
    %c0_54 = arith.constant 0 : index
    %c2_55 = arith.constant 2 : index
    %c0_56 = arith.constant 0 : index
    %c0_57 = arith.constant 0 : index
    %27 = vector.load %arg8[%c0_54, %c2_55, %c0_56, %c0_57] : memref<1x18x24x128xbf16, #tpu.memory_space<vmem>>, vector<1x16x16x128xbf16>
    %c0_58 = arith.constant 0 : index
    %c2_59 = arith.constant 2 : index
    %c1_60 = arith.constant 1 : index
    %c0_61 = arith.constant 0 : index
    %28 = vector.load %arg8[%c0_58, %c2_59, %c1_60, %c0_61] : memref<1x18x24x128xbf16, #tpu.memory_space<vmem>>, vector<1x16x16x128xbf16>
    %c0_62 = arith.constant 0 : index
    %c2_63 = arith.constant 2 : index
    %c2_64 = arith.constant 2 : index
    %c0_65 = arith.constant 0 : index
    %29 = vector.load %arg8[%c0_62, %c2_63, %c2_64, %c0_65] : memref<1x18x24x128xbf16, #tpu.memory_space<vmem>>, vector<1x16x16x128xbf16>
    %30 = tpu.concatenate %27, %28, %29 in 3 : vector<1x16x16x128xbf16>, vector<1x16x16x128xbf16>, vector<1x16x16x128xbf16> -> vector<1x16x16x384xbf16>
    %31 = vector.shape_cast %30 : vector<1x16x16x384xbf16> to vector<256x384xbf16>
    %c1_66 = arith.constant 1 : index
    %c0_67 = arith.constant 0 : index
    %c0_68 = arith.constant 0 : index
    %32 = vector.load %arg2[%c1_66, %c0_67, %c0_68] : memref<2x384x128xbf16, #tpu.memory_space<vmem>>, vector<1x384x128xbf16>
    %33 = vector.shape_cast %32 : vector<1x384x128xbf16> to vector<384x128xbf16>
    %cst_69 = arith.constant dense<0.000000e+00> : vector<256x128xf32>
    %34 = tpu.matmul %31, %33, %cst_69 {dimension_numbers = #tpu.dot_dimension_numbers<[1], [0], [0], [1], [0, 0, 1, 1], [], []>} : vector<256x384xbf16>, vector<384x128xbf16>, vector<256x128xf32> -> vector<256x128xf32>
    %35 = arith.addf %26, %34 : vector<256x128xf32>
    %c0_70 = arith.constant 0 : index
    %c0_71 = arith.constant 0 : index
    %36 = vector.load %arg6[%c0_70, %c0_71] : memref<8x128xf32, #tpu.memory_space<vmem>>, vector<1x128xf32>
    %37 = vector.broadcast %36 : vector<1x128xf32> to vector<256x128xf32>
    %38 = arith.mulf %35, %37 : vector<256x128xf32>
    %c1_72 = arith.constant 1 : index
    %c0_73 = arith.constant 0 : index
    %39 = vector.load %arg6[%c1_72, %c0_73] : memref<8x128xf32, #tpu.memory_space<vmem>>, vector<1x128xf32>
    %40 = vector.broadcast %39 : vector<1x128xf32> to vector<256x128xf32>
    %41 = arith.addf %38, %40 : vector<256x128xf32>
    %cst_74 = arith.constant 0.000000e+00 : f32
    %42 = vector.broadcast %cst_74 : f32 to vector<256x128xf32>
    %43 = arith.maximumf %41, %42 : vector<256x128xf32>
    %44 = arith.truncf %43 : vector<256x128xf32> to vector<256x128xbf16>
    %45 = vector.shape_cast %44 : vector<256x128xbf16> to vector<1x16x16x128xbf16>
    %cst_75 = arith.constant 0.000000e+00 : bf16
    %46 = vector.broadcast %cst_75 : bf16 to vector<1x1x24x128xbf16>
    %c0_76 = arith.constant 0 : index
    %c0_77 = arith.constant 0 : index
    %c0_78 = arith.constant 0 : index
    %c0_79 = arith.constant 0 : index
    %47 = vector.load %arg9[%c0_76, %c0_77, %c0_78, %c0_79] : memref<1x18x24x128xbf16, #tpu.memory_space<vmem>>, vector<1x1x24x128xbf16>
    tpu.vector_store %arg9[%c0_76, %c0_77, %c0_78, %c0_79], %46 {strides = array<i32>} : memref<1x18x24x128xbf16, #tpu.memory_space<vmem>>, vector<1x1x24x128xbf16>,
    %cst_80 = arith.constant 0.000000e+00 : bf16
    %48 = vector.broadcast %cst_80 : bf16 to vector<1x1x24x128xbf16>
    %c0_81 = arith.constant 0 : index
    %c17_82 = arith.constant 17 : index
    %c0_83 = arith.constant 0 : index
    %c0_84 = arith.constant 0 : index
    %49 = vector.load %arg9[%c0_81, %c17_82, %c0_83, %c0_84] : memref<1x18x24x128xbf16, #tpu.memory_space<vmem>>, vector<1x1x24x128xbf16>
    tpu.vector_store %arg9[%c0_81, %c17_82, %c0_83, %c0_84], %48 {strides = array<i32>} : memref<1x18x24x128xbf16, #tpu.memory_space<vmem>>, vector<1x1x24x128xbf16>,
    %cst_85 = arith.constant 0.000000e+00 : bf16
    %50 = vector.broadcast %cst_85 : bf16 to vector<1x16x1x128xbf16>
    %c0_86 = arith.constant 0 : index
    %c1_87 = arith.constant 1 : index
    %c0_88 = arith.constant 0 : index
    %c0_89 = arith.constant 0 : index
    %51 = vector.load %arg9[%c0_86, %c1_87, %c0_88, %c0_89] : memref<1x18x24x128xbf16, #tpu.memory_space<vmem>>, vector<1x16x1x128xbf16>
    tpu.vector_store %arg9[%c0_86, %c1_87, %c0_88, %c0_89], %50 {strides = array<i32>} : memref<1x18x24x128xbf16, #tpu.memory_space<vmem>>, vector<1x16x1x128xbf16>,
    %cst_90 = arith.constant 0.000000e+00 : bf16
    %52 = vector.broadcast %cst_90 : bf16 to vector<1x16x1x128xbf16>
    %c0_91 = arith.constant 0 : index
    %c1_92 = arith.constant 1 : index
    %c17_93 = arith.constant 17 : index
    %c0_94 = arith.constant 0 : index
    %53 = vector.load %arg9[%c0_91, %c1_92, %c17_93, %c0_94] : memref<1x18x24x128xbf16, #tpu.memory_space<vmem>>, vector<1x16x1x128xbf16>
    tpu.vector_store %arg9[%c0_91, %c1_92, %c17_93, %c0_94], %52 {strides = array<i32>} : memref<1x18x24x128xbf16, #tpu.memory_space<vmem>>, vector<1x16x1x128xbf16>,
    %c0_95 = arith.constant 0 : index
    %c1_96 = arith.constant 1 : index
    %c1_97 = arith.constant 1 : index
    %c0_98 = arith.constant 0 : index
    %54 = vector.load %arg9[%c0_95, %c1_96, %c1_97, %c0_98] : memref<1x18x24x128xbf16, #tpu.memory_space<vmem>>, vector<1x16x16x128xbf16>
    tpu.vector_store %arg9[%c0_95, %c1_96, %c1_97, %c0_98], %45 {strides = array<i32>} : memref<1x18x24x128xbf16, #tpu.memory_space<vmem>>, vector<1x16x16x128xbf16>,
    %c0_99 = arith.constant 0 : index
    %c0_100 = arith.constant 0 : index
    %c0_101 = arith.constant 0 : index
    %c0_102 = arith.constant 0 : index
    %55 = vector.load %arg9[%c0_99, %c0_100, %c0_101, %c0_102] : memref<1x18x24x128xbf16, #tpu.memory_space<vmem>>, vector<1x16x16x128xbf16>
    %c0_103 = arith.constant 0 : index
    %c0_104 = arith.constant 0 : index
    %c1_105 = arith.constant 1 : index
    %c0_106 = arith.constant 0 : index
    %56 = vector.load %arg9[%c0_103, %c0_104, %c1_105, %c0_106] : memref<1x18x24x128xbf16, #tpu.memory_space<vmem>>, vector<1x16x16x128xbf16>
    %c0_107 = arith.constant 0 : index
    %c0_108 = arith.constant 0 : index
    %c2_109 = arith.constant 2 : index
    %c0_110 = arith.constant 0 : index
    %57 = vector.load %arg9[%c0_107, %c0_108, %c2_109, %c0_110] : memref<1x18x24x128xbf16, #tpu.memory_space<vmem>>, vector<1x16x16x128xbf16>
    %58 = tpu.concatenate %55, %56, %57 in 3 : vector<1x16x16x128xbf16>, vector<1x16x16x128xbf16>, vector<1x16x16x128xbf16> -> vector<1x16x16x384xbf16>
    %59 = vector.shape_cast %58 : vector<1x16x16x384xbf16> to vector<256x384xbf16>
    %c0_111 = arith.constant 0 : index
    %c0_112 = arith.constant 0 : index
    %c0_113 = arith.constant 0 : index
    %60 = vector.load %arg4[%c0_111, %c0_112, %c0_113] : memref<3x384x128xbf16, #tpu.memory_space<vmem>>, vector<1x384x128xbf16>
    %61 = vector.shape_cast %60 : vector<1x384x128xbf16> to vector<384x128xbf16>
    %cst_114 = arith.constant dense<0.000000e+00> : vector<256x128xf32>
    %62 = tpu.matmul %59, %61, %cst_114 {dimension_numbers = #tpu.dot_dimension_numbers<[1], [0], [0], [1], [0, 0, 1, 1], [], []>} : vector<256x384xbf16>, vector<384x128xbf16>, vector<256x128xf32> -> vector<256x128xf32>
    %c0_115 = arith.constant 0 : index
    %c1_116 = arith.constant 1 : index
    %c0_117 = arith.constant 0 : index
    %c0_118 = arith.constant 0 : index
    %63 = vector.load %arg9[%c0_115, %c1_116, %c0_117, %c0_118] : memref<1x18x24x128xbf16, #tpu.memory_space<vmem>>, vector<1x16x16x128xbf16>
    %c0_119 = arith.constant 0 : index
    %c1_120 = arith.constant 1 : index
    %c1_121 = arith.constant 1 : index
    %c0_122 = arith.constant 0 : index
    %64 = vector.load %arg9[%c0_119, %c1_120, %c1_121, %c0_122] : memref<1x18x24x128xbf16, #tpu.memory_space<vmem>>, vector<1x16x16x128xbf16>
    %c0_123 = arith.constant 0 : index
    %c1_124 = arith.constant 1 : index
    %c2_125 = arith.constant 2 : index
    %c0_126 = arith.constant 0 : index
    %65 = vector.load %arg9[%c0_123, %c1_124, %c2_125, %c0_126] : memref<1x18x24x128xbf16, #tpu.memory_space<vmem>>, vector<1x16x16x128xbf16>
    %66 = tpu.concatenate %63, %64, %65 in 3 : vector<1x16x16x128xbf16>, vector<1x16x16x128xbf16>, vector<1x16x16x128xbf16> -> vector<1x16x16x384xbf16>
    %67 = vector.shape_cast %66 : vector<1x16x16x384xbf16> to vector<256x384xbf16>
    %c1_127 = arith.constant 1 : index
    %c0_128 = arith.constant 0 : index
    %c0_129 = arith.constant 0 : index
    %68 = vector.load %arg4[%c1_127, %c0_128, %c0_129] : memref<3x384x128xbf16, #tpu.memory_space<vmem>>, vector<1x384x128xbf16>
    %69 = vector.shape_cast %68 : vector<1x384x128xbf16> to vector<384x128xbf16>
    %cst_130 = arith.constant dense<0.000000e+00> : vector<256x128xf32>
    %70 = tpu.matmul %67, %69, %cst_130 {dimension_numbers = #tpu.dot_dimension_numbers<[1], [0], [0], [1], [0, 0, 1, 1], [], []>} : vector<256x384xbf16>, vector<384x128xbf16>, vector<256x128xf32> -> vector<256x128xf32>
    %71 = arith.addf %62, %70 : vector<256x128xf32>
    %c0_131 = arith.constant 0 : index
    %c2_132 = arith.constant 2 : index
    %c0_133 = arith.constant 0 : index
    %c0_134 = arith.constant 0 : index
    %72 = vector.load %arg9[%c0_131, %c2_132, %c0_133, %c0_134] : memref<1x18x24x128xbf16, #tpu.memory_space<vmem>>, vector<1x16x16x128xbf16>
    %c0_135 = arith.constant 0 : index
    %c2_136 = arith.constant 2 : index
    %c1_137 = arith.constant 1 : index
    %c0_138 = arith.constant 0 : index
    %73 = vector.load %arg9[%c0_135, %c2_136, %c1_137, %c0_138] : memref<1x18x24x128xbf16, #tpu.memory_space<vmem>>, vector<1x16x16x128xbf16>
    %c0_139 = arith.constant 0 : index
    %c2_140 = arith.constant 2 : index
    %c2_141 = arith.constant 2 : index
    %c0_142 = arith.constant 0 : index
    %74 = vector.load %arg9[%c0_139, %c2_140, %c2_141, %c0_142] : memref<1x18x24x128xbf16, #tpu.memory_space<vmem>>, vector<1x16x16x128xbf16>
    %75 = tpu.concatenate %72, %73, %74 in 3 : vector<1x16x16x128xbf16>, vector<1x16x16x128xbf16>, vector<1x16x16x128xbf16> -> vector<1x16x16x384xbf16>
    %76 = vector.shape_cast %75 : vector<1x16x16x384xbf16> to vector<256x384xbf16>
    %c2_143 = arith.constant 2 : index
    %c0_144 = arith.constant 0 : index
    %c0_145 = arith.constant 0 : index
    %77 = vector.load %arg4[%c2_143, %c0_144, %c0_145] : memref<3x384x128xbf16, #tpu.memory_space<vmem>>, vector<1x384x128xbf16>
    %78 = vector.shape_cast %77 : vector<1x384x128xbf16> to vector<384x128xbf16>
    %cst_146 = arith.constant dense<0.000000e+00> : vector<256x128xf32>
    %79 = tpu.matmul %76, %78, %cst_146 {dimension_numbers = #tpu.dot_dimension_numbers<[1], [0], [0], [1], [0, 0, 1, 1], [], []>} : vector<256x384xbf16>, vector<384x128xbf16>, vector<256x128xf32> -> vector<256x128xf32>
    %80 = arith.addf %71, %79 : vector<256x128xf32>
    %c2_147 = arith.constant 2 : index
    %c0_148 = arith.constant 0 : index
    %81 = vector.load %arg6[%c2_147, %c0_148] : memref<8x128xf32, #tpu.memory_space<vmem>>, vector<1x128xf32>
    %82 = vector.broadcast %81 : vector<1x128xf32> to vector<256x128xf32>
    %83 = arith.mulf %80, %82 : vector<256x128xf32>
    %c3 = arith.constant 3 : index
    %c0_149 = arith.constant 0 : index
    %84 = vector.load %arg6[%c3, %c0_149] : memref<8x128xf32, #tpu.memory_space<vmem>>, vector<1x128xf32>
    %85 = vector.broadcast %84 : vector<1x128xf32> to vector<256x128xf32>
    %86 = arith.addf %83, %85 : vector<256x128xf32>
    %87 = vector.shape_cast %86 : vector<256x128xf32> to vector<1x256x128xf32>
    %cst_150 = arith.constant dense<0.000000e+00> : vector<1x128xf32>
    %88 = vector.multi_reduction <add>, %87, %cst_150 [1] : vector<1x256x128xf32> to vector<1x128xf32>
    %cst_151 = arith.constant 2.560000e+02 : f32
    %89 = vector.broadcast %cst_151 : f32 to vector<1x128xf32>
    %90 = arith.divf %88, %89 : vector<1x128xf32>
    %c0_152 = arith.constant 0 : index
    %c0_153 = arith.constant 0 : index
    %91 = vector.load %arg5[%c0_152, %c0_153] : memref<128x128xf32, #tpu.memory_space<vmem>>, vector<128x128xf32>
    %cst_154 = arith.constant dense<0.000000e+00> : vector<1x128xf32>
    %92 = tpu.matmul %90, %91, %cst_154 {dimension_numbers = #tpu.dot_dimension_numbers<[1], [0], [0], [1], [0, 0, 1, 1], [], []>} : vector<1x128xf32>, vector<128x128xf32>, vector<1x128xf32> -> vector<1x128xf32>
    %93 = arith.negf %92 : vector<1x128xf32>
    %94 = math.exp %93 : vector<1x128xf32>
    %cst_155 = arith.constant 1.000000e+00 : f32
    %95 = vector.broadcast %cst_155 : f32 to vector<1x128xf32>
    %96 = arith.addf %95, %94 : vector<1x128xf32>
    %97 = arith.divf %95, %96 : vector<1x128xf32>
    %98 = vector.shape_cast %86 : vector<256x128xf32> to vector<1x256x128xf32>
    %99 = vector.shape_cast %97 : vector<1x128xf32> to vector<1x1x128xf32>
    %100 = vector.broadcast %99 : vector<1x1x128xf32> to vector<1x256x128xf32>
    %101 = arith.mulf %98, %100 : vector<1x256x128xf32>
    %102 = vector.extract_strided_slice %16 {offsets = [0, 128], sizes = [256, 128], strides = [1, 1]} : vector<256x256xf32> to vector<256x128xf32>
    %c4 = arith.constant 4 : index
    %c0_156 = arith.constant 0 : index
    %103 = vector.load %arg6[%c4, %c0_156] : memref<8x128xf32, #tpu.memory_space<vmem>>, vector<1x128xf32>
    %104 = vector.broadcast %103 : vector<1x128xf32> to vector<256x128xf32>
    %105 = arith.mulf %102, %104 : vector<256x128xf32>
    %c5 = arith.constant 5 : index
    %c0_157 = arith.constant 0 : index
    %106 = vector.load %arg6[%c5, %c0_157] : memref<8x128xf32, #tpu.memory_space<vmem>>, vector<1x128xf32>
    %107 = vector.broadcast %106 : vector<1x128xf32> to vector<256x128xf32>
    %108 = arith.addf %105, %107 : vector<256x128xf32>
    %109 = vector.shape_cast %108 : vector<256x128xf32> to vector<1x256x128xf32>
    %110 = arith.addf %101, %109 : vector<1x256x128xf32>
    %cst_158 = arith.constant 0.000000e+00 : f32
    %111 = vector.broadcast %cst_158 : f32 to vector<1x256x128xf32>
    %112 = arith.maximumf %110, %111 : vector<1x256x128xf32>
    %113 = arith.truncf %112 : vector<1x256x128xf32> to vector<1x256x128xbf16>
    %c0_159 = arith.constant 0 : index
    %c0_160 = arith.constant 0 : index
    %c0_161 = arith.constant 0 : index
    %114 = vector.load %arg7[%c0_159, %c0_160, %c0_161] : memref<1x256x128xbf16, #tpu.memory_space<vmem>>, vector<1x256x128xbf16>
    tpu.vector_store %arg7[%c0_159, %c0_160, %c0_161], %113 {strides = array<i32>} : memref<1x256x128xbf16, #tpu.memory_space<vmem>>, vector<1x256x128xbf16>,
    return
  }
  func.func @transform_0(%arg0: i32) -> (i32, i32, i32, i32) {
    %c0_i32 = arith.constant 0 : i32
    %c0_i32_0 = arith.constant 0 : i32
    %c0_i32_1 = arith.constant 0 : i32
    %c0_i32_2 = arith.constant 0 : i32
    return %arg0, %c0_i32, %c0_i32_0, %c0_i32_1 : i32, i32, i32, i32
  }
  func.func @transform_1(%arg0: i32) -> (i32, i32, i32) {
    %c0_i32 = arith.constant 0 : i32
    %c0_i32_0 = arith.constant 0 : i32
    %c0_i32_1 = arith.constant 0 : i32
    %c0_i32_2 = arith.constant 0 : i32
    return %c0_i32, %c0_i32_0, %c0_i32_1 : i32, i32, i32
  }
  func.func @transform_2(%arg0: i32) -> (i32, i32) {
    %c0_i32 = arith.constant 0 : i32
    %c0_i32_0 = arith.constant 0 : i32
    %c0_i32_1 = arith.constant 0 : i32
    return %c0_i32, %c0_i32_0 : i32, i32
  }
  func.func @transform_3(%arg0: i32) -> (i32, i32, i32) {
    %c0_i32 = arith.constant 0 : i32
    %c0_i32_0 = arith.constant 0 : i32
    %c0_i32_1 = arith.constant 0 : i32
    %c0_i32_2 = arith.constant 0 : i32
    return %c0_i32, %c0_i32_0, %c0_i32_1 : i32, i32, i32
  }
  func.func @transform_4(%arg0: i32) -> (i32, i32) {
    %c0_i32 = arith.constant 0 : i32
    %c0_i32_0 = arith.constant 0 : i32
    %c0_i32_1 = arith.constant 0 : i32
    return %c0_i32, %c0_i32_0 : i32, i32
  }
  func.func @transform_5(%arg0: i32) -> (i32, i32) {
    %c0_i32 = arith.constant 0 : i32
    %c0_i32_0 = arith.constant 0 : i32
    %c0_i32_1 = arith.constant 0 : i32
    return %c0_i32, %c0_i32_0 : i32, i32
  }
  func.func @transform_6(%arg0: i32) -> (i32, i32, i32) {
    %c0_i32 = arith.constant 0 : i32
    %c0_i32_0 = arith.constant 0 : i32
    %c0_i32_1 = arith.constant 0 : i32
    return %arg0, %c0_i32, %c0_i32_0 : i32, i32, i32
  }
}

</mosaic_0001>

<llo_original>
// kernel: tpu_custom_call.1
$region0: #{tpu_custom_call.1}
  #allocation0 [shape = 'u32[]', space=smem, size = 0x4, offset = 0x4, fixed_abs, tag = 'smem constant byte address 0x4 - core index']
  #allocation1 [shape = 'u32[144,128]{1,0:T(1,128)}', space=vmem, size = 0x12000, scoped, tag = 'internal scratch']
  #allocation2 [shape = 'bf16[1,18,24,128]{3,2,1,0:T(8,128)(2,1)}', space=vmem, size = 0x1b000, scoped, tag = 'scratch operand']
  #allocation3 [shape = 'bf16[1,18,24,128]{3,2,1,0:T(8,128)(2,1)}', space=vmem, size = 0x1b000, scoped, tag = 'scratch operand']
  %s0 = inlined_call_operand.hbm [shape: bf16[2,16,16,128], index: 0, kind: input, shape index: {}]
  %s1 = inlined_call_operand.hbm [shape: bf16[2,384,128], index: 1, kind: input, shape index: {}]
  %s2 = inlined_call_operand.hbm [shape: bf16[384,256], index: 2, kind: input, shape index: {}]
  %s3 = inlined_call_operand.hbm [shape: bf16[3,384,128], index: 3, kind: input, shape index: {}]
  %s4 = inlined_call_operand.hbm [shape: f32[128,128], index: 4, kind: input, shape index: {}]
  %s5 = inlined_call_operand.vmem [shape: f32[8,128], index: 5, kind: input, shape index: {}]
  %s6 = inlined_call_operand.hbm [shape: bf16[2,256,128], index: 6, kind: output, shape index: {}]
  %s7 = sld [smem:[#allocation0]]
  $region77: #{tpu_custom_call.1} parent=0
    _
  %s9 = ssub.s32 1, %s7
  %s10 = scalar_select 0, %s9, %s7
  $region1: #{tpu_custom_call.1} parent=0
    #allocation4 [shape = 'u8[131072]{0}', space=vmem, size = 0x20000, scoped, tag = 'input window, operand 0']
    #allocation5 [shape = 's32[2]{0}', space=sflag, size = 0x8, scoped, tag = 'scoped memory for tpu_custom_call.1']
    #allocation6 [shape = 's32[2]{0}', space=sflag, size = 0x8, scoped, tag = 'scoped memory for tpu_custom_call.1']
    #allocation7 [shape = 'u8[196608]{0}', space=vmem, size = 0x30000, scoped, tag = 'input window, operand 1, single buffered']
    #allocation8 [shape = 's32[1]{0}', space=sflag, size = 0x4, scoped, tag = 'scoped memory for tpu_custom_call.1']
    #allocation9 [shape = 'u8[196608]{0}', space=vmem, size = 0x30000, scoped, tag = 'input window, operand 2, single buffered']
    #allocation10 [shape = 'u8[294912]{0}', space=vmem, size = 0x48000, scoped, tag = 'input window, operand 3, single buffered']
    #allocation11 [shape = 's32[1]{0}', space=sflag, size = 0x4, scoped, tag = 'scoped memory for tpu_custom_call.1']
    #allocation12 [shape = 'u8[65536]{0}', space=vmem, size = 0x10000, scoped, tag = 'input window, operand 4, single buffered']
    #allocation13 [shape = 'u8[131072]{0}', space=vmem, size = 0x20000, scoped, tag = 'output window, operand 0']
    %11 = vsyncpa [#allocation5], 0
    %s12 = scalar_lea.sflag [#allocation5], 1
    %13 = vsyncpa %s12, 0
    %14 = vsyncpa [#allocation8], 0
    %15 = vsyncpa [#allocation11], 0
    %16 = vsyncpa [#allocation6], 0
    %s17 = scalar_lea.sflag [#allocation6], 1
    %18 = vsyncpa %s17, 0
    loop: start=0, step=1, limit=4
    $region2: #{tpu_custom_call.1} parent=1 // loop_pre_header
      _
    $region3: #{tpu_custom_call.1} parent=1 // loop_header
      %s20 = sphi 0, %s24
      %p21 = scmp.ge.s32.totalorder %s20, 4
      %s30 = sphi 0, %s32
      %s33 = sphi 0, %s30
      %s34 = sphi 0, %s33
      %s50 = sphi 0, %s34
      %s54 = sphi 0, %s54
      %s56 = sphi 0, %s54
      %s57 = sphi 0, %s56
      %s71 = sphi 0, %s57
      %s75 = sphi 0, %s75
      %s77 = sphi 0, %s75
      %s78 = sphi 0, %s77
      %s92 = sphi 0, %s78
      %s96 = sphi 0, %s96
      %s98 = sphi 0, %s96
      %s99 = sphi 0, %s98
      %s113 = sphi 0, %s99
      %s117 = sphi 0, %s117
      %s119 = sphi 0, %s117
      %s120 = sphi 0, %s119
      %s134 = sphi 0, %s120
      %s138 = sphi 0, %s138
      %s140 = sphi 0, %s138
      %s141 = sphi 0, %s140
      %s155 = sphi 0, %s141
      %s161 = sphi 0, %s163
      %s164 = sphi 0, %s161
      %s165 = sphi 0, %s164
      %s181 = sphi 0, %s165
    $region4: #{tpu_custom_call.1} parent=1 // loop_header_branch
      %23 = sbr.rel (%p21) target = $region8
    $region5: #{tpu_custom_call.1} parent=1 // loop_body
      %s25 = ssub.s32 %s20, 1
      %s26 = ssub.s32 %s20, 2
      %s27 = sadd.s32 %s20, 1
      %s28 = ssub.s32 %s20, %s27
      %p29 = scmp.eq.s32.totalorder %s28, 0
      %s31 = sadd.s32 %s30, 1
      %s32 = scalar_select %p29, %s30, %s31
      %p35 = pneg %p29
      %p36 = scmp.eq.s32.totalorder %s20, 1
      %p37 = por %p35, %p36
      %p38 = scmp.ne.s32.totalorder %s30, %s33
      %p39 = scmp.eq.s32.totalorder %s20, 0
      %p40 = por %p38, %p39
      %p41 = scmp.ne.s32.totalorder %s30, %s33
      %p42 = scmp.eq.s32.totalorder %s25, 1
      %p43 = por %p41, %p42
      %p44 = scmp.ne.s32.totalorder %s33, %s34
      %p45 = scmp.eq.s32.totalorder %s25, 0
      %p46 = por %p44, %p45
      %p47 = scmp.ne.s32.totalorder %s33, %s34
      %p48 = scmp.eq.s32.totalorder %s26, 1
      %p49 = por %p47, %p48
      %p51 = scmp.ne.s32.totalorder %s34, %s50
      %p52 = scmp.eq.s32.totalorder %s26, 0
      %p53 = por %p51, %p52
      %s55 = sadd.s32 %s54, 1
      %p58 = scmp.eq.s32.totalorder %s20, 1
      %p59 = scmp.ne.s32.totalorder %s54, %s56
      %p60 = scmp.eq.s32.totalorder %s20, 0
      %p61 = por %p59, %p60
      %p62 = scmp.ne.s32.totalorder %s54, %s56
      %p63 = scmp.eq.s32.totalorder %s25, 1
      %p64 = por %p62, %p63
      %p65 = scmp.ne.s32.totalorder %s56, %s57
      %p66 = scmp.eq.s32.totalorder %s25, 0
      %p67 = por %p65, %p66
      %p68 = scmp.ne.s32.totalorder %s56, %s57
      %p69 = scmp.eq.s32.totalorder %s26, 1
      %p70 = por %p68, %p69
      %p72 = scmp.ne.s32.totalorder %s57, %s71
      %p73 = scmp.eq.s32.totalorder %s26, 0
      %p74 = por %p72, %p73
      %s76 = sadd.s32 %s75, 1
      %p79 = scmp.eq.s32.totalorder %s20, 1
      %p80 = scmp.ne.s32.totalorder %s75, %s77
      %p81 = scmp.eq.s32.totalorder %s20, 0
      %p82 = por %p80, %p81
      %p83 = scmp.ne.s32.totalorder %s75, %s77
      %p84 = scmp.eq.s32.totalorder %s25, 1
      %p85 = por %p83, %p84
      %p86 = scmp.ne.s32.totalorder %s77, %s78
      %p87 = scmp.eq.s32.totalorder %s25, 0
      %p88 = por %p86, %p87
      %p89 = scmp.ne.s32.totalorder %s77, %s78
      %p90 = scmp.eq.s32.totalorder %s26, 1
      %p91 = por %p89, %p90
      %p93 = scmp.ne.s32.totalorder %s78, %s92
      %p94 = scmp.eq.s32.totalorder %s26, 0
      %p95 = por %p93, %p94
      %s97 = sadd.s32 %s96, 1
      %p100 = scmp.eq.s32.totalorder %s20, 1
      %p101 = scmp.ne.s32.totalorder %s96, %s98
      %p102 = scmp.eq.s32.totalorder %s20, 0
      %p103 = por %p101, %p102
      %p104 = scmp.ne.s32.totalorder %s96, %s98
      %p105 = scmp.eq.s32.totalorder %s25, 1
      %p106 = por %p104, %p105
      %p107 = scmp.ne.s32.totalorder %s98, %s99
      %p108 = scmp.eq.s32.totalorder %s25, 0
      %p109 = por %p107, %p108
      %p110 = scmp.ne.s32.totalorder %s98, %s99
      %p111 = scmp.eq.s32.totalorder %s26, 1
      %p112 = por %p110, %p111
      %p114 = scmp.ne.s32.totalorder %s99, %s113
      %p115 = scmp.eq.s32.totalorder %s26, 0
      %p116 = por %p114, %p115
      %s118 = sadd.s32 %s117, 1
      %p121 = scmp.eq.s32.totalorder %s20, 1
      %p122 = scmp.ne.s32.totalorder %s117, %s119
      %p123 = scmp.eq.s32.totalorder %s20, 0
      %p124 = por %p122, %p123
      %p125 = scmp.ne.s32.totalorder %s117, %s119
      %p126 = scmp.eq.s32.totalorder %s25, 1
      %p127 = por %p125, %p126
      %p128 = scmp.ne.s32.totalorder %s119, %s120
      %p129 = scmp.eq.s32.totalorder %s25, 0
      %p130 = por %p128, %p129
      %p131 = scmp.ne.s32.totalorder %s119, %s120
      %p132 = scmp.eq.s32.totalorder %s26, 1
      %p133 = por %p131, %p132
      %p135 = scmp.ne.s32.totalorder %s120, %s134
      %p136 = scmp.eq.s32.totalorder %s26, 0
      %p137 = por %p135, %p136
      %s139 = sadd.s32 %s138, 1
      %p142 = scmp.eq.s32.totalorder %s20, 1
      %p143 = scmp.ne.s32.totalorder %s138, %s140
      %p144 = scmp.eq.s32.totalorder %s20, 0
      %p145 = por %p143, %p144
      %p146 = scmp.ne.s32.totalorder %s138, %s140
      %p147 = scmp.eq.s32.totalorder %s25, 1
      %p148 = por %p146, %p147
      %p149 = scmp.ne.s32.totalorder %s140, %s141
      %p150 = scmp.eq.s32.totalorder %s25, 0
      %p151 = por %p149, %p150
      %p152 = scmp.ne.s32.totalorder %s140, %s141
      %p153 = scmp.eq.s32.totalorder %s26, 1
      %p154 = por %p152, %p153
      %p156 = scmp.ne.s32.totalorder %s141, %s155
      %p157 = scmp.eq.s32.totalorder %s26, 0
      %p158 = por %p156, %p157
      %s159 = ssub.s32 %s20, %s27
      %p160 = scmp.eq.s32.totalorder %s159, 0
      %s162 = sadd.s32 %s161, 1
      %s163 = scalar_select %p160, %s161, %s162
      %p166 = pneg %p160
      %p167 = scmp.eq.s32.totalorder %s20, 1
      %p168 = por %p166, %p167
      %p169 = scmp.ne.s32.totalorder %s161, %s164
      %p170 = scmp.eq.s32.totalorder %s20, 0
      %p171 = por %p169, %p170
      %p172 = scmp.ne.s32.totalorder %s161, %s164
      %p173 = scmp.eq.s32.totalorder %s25, 1
      %p174 = por %p172, %p173
      %p175 = scmp.ne.s32.totalorder %s164, %s165
      %p176 = scmp.eq.s32.totalorder %s25, 0
      %p177 = por %p175, %p176
      %p178 = scmp.ne.s32.totalorder %s164, %s165
      %p179 = scmp.eq.s32.totalorder %s26, 1
      %p180 = por %p178, %p179
      %p182 = scmp.ne.s32.totalorder %s165, %s181
      %p183 = scmp.eq.s32.totalorder %s26, 0
      %p184 = por %p182, %p183
      %p185 = scmp.le.s32.totalorder 1, %s20
      %p186 = scmp.lt.s32.totalorder %s20, 3
      %p187 = pnand %p185, %p186
      %p188 = pneg %p187
      // Predicated region
      $region9: #{tpu_custom_call.1} parent=5 // pred_check
        _
      $region10: #{tpu_custom_call.1} parent=5 // pred_check_branch
        %190 = sbr.rel (%p187) target = $region12
      $region11: #{tpu_custom_call.1} parent=5 // pred_region
        %s191 = ssub.s32 %s20, 1
        // Predicated region
        $region13: #{tpu_custom_call.1} parent=11 // pred_check
          %p192 = pneg %p67
        $region14: #{tpu_custom_call.1} parent=11 // pred_check_branch
          %194 = sbr.rel (%p192) target = $region16
        $region15: #{tpu_custom_call.1} parent=11 // pred_region
          %s196 = ssub.s32 6144, 6144
          %197 = vsyncadd [#allocation8], %s196
          %s198 = sshll.u32 [#allocation7], 4
          %s199 = int_to_ptr.vmem [resolvable:$true] %s198
          %204 = dma.hbm_to_vmem [thread:$0]  %s1, 6144, %s199, [#allocation8], 64, 64, 4
        $region16: #{tpu_custom_call.1} parent=11 // pred_fallthru
          _
        // Predicated region
        $region17: #{tpu_custom_call.1} parent=11 // pred_check
          %p205 = pneg %p88
        $region18: #{tpu_custom_call.1} parent=11 // pred_check_branch
          %207 = sbr.rel (%p205) target = $region20
        $region19: #{tpu_custom_call.1} parent=11 // pred_region
          %s209 = ssub.s32 6144, 6144
          %210 = vsyncadd [#allocation8], %s209
          %s211 = sshll.u32 [#allocation9], 4
          %s212 = int_to_ptr.vmem [resolvable:$true] %s211
          %217 = dma.hbm_to_vmem [thread:$0]  %s2, 6144, %s212, [#allocation8], 128, 128, 8
        $region20: #{tpu_custom_call.1} parent=11 // pred_fallthru
          _
        // Predicated region
        $region21: #{tpu_custom_call.1} parent=11 // pred_check
          %p218 = pneg %p109
        $region22: #{tpu_custom_call.1} parent=11 // pred_check_branch
          %220 = sbr.rel (%p218) target = $region24
        $region23: #{tpu_custom_call.1} parent=11 // pred_region
          %s222 = ssub.s32 9216, 9216
          %223 = vsyncadd [#allocation11], %s222
          %s224 = sshll.u32 [#allocation10], 4
          %s225 = int_to_ptr.vmem [resolvable:$true] %s224
          %230 = dma.hbm_to_vmem [thread:$0]  %s3, 9216, %s225, [#allocation11], 64, 64, 4
        $region24: #{tpu_custom_call.1} parent=11 // pred_fallthru
          _
        // Predicated region
        $region25: #{tpu_custom_call.1} parent=11 // pred_check
          %p231 = pneg %p130
        $region26: #{tpu_custom_call.1} parent=11 // pred_check_branch
          %233 = sbr.rel (%p231) target = $region28
        $region27: #{tpu_custom_call.1} parent=11 // pred_region
          %s235 = ssub.s32 2048, 2048
          %236 = vsyncadd [#allocation11], %s235
          %s237 = sshll.u32 [#allocation12], 4
          %s238 = int_to_ptr.vmem [resolvable:$true] %s237
          %243 = dma.hbm_to_vmem [thread:$0]  %s4, 2048, %s238, [#allocation11], 128, 128, 8
        $region28: #{tpu_custom_call.1} parent=11 // pred_fallthru
          _
        // Predicated region
        $region29: #{tpu_custom_call.1} parent=11 // pred_check
          %p244 = pneg %p151
        $region30: #{tpu_custom_call.1} parent=11 // pred_check_branch
          %246 = sbr.rel (%p244) target = $region32
        $region31: #{tpu_custom_call.1} parent=11 // pred_region
          _
        $region32: #{tpu_custom_call.1} parent=11 // pred_fallthru
          _
      $region12: #{tpu_custom_call.1} parent=5 // pred_fallthru
        _
      %p247 = scmp.lt.s32.totalorder %s20, 2
      // Predicated region
      $region33: #{tpu_custom_call.1} parent=5 // pred_check
        %p248 = pneg %p247
      $region34: #{tpu_custom_call.1} parent=5 // pred_check_branch
        %250 = sbr.rel (%p248) target = $region36
      $region35: #{tpu_custom_call.1} parent=5 // pred_region
        // Predicated region
        $region37: #{tpu_custom_call.1} parent=35 // pred_check
          %p251 = pneg %p40
        $region38: #{tpu_custom_call.1} parent=35 // pred_check_branch
          %253 = sbr.rel (%p251) target = $region40
        $region39: #{tpu_custom_call.1} parent=35 // pred_region
          %s254 = sand.u32 %s30, 1
          %s255 = scalar_lea.sflag [#allocation5], %s254
          %s256 = sand.u32 %s30, 1
          %s257 = smul.addr %s256, 128
          %s258 = scalar_lea.vmem [#allocation4], %s257
          %s260 = ssub.s32 2048, 2048
          %261 = vsyncadd %s255, %s260
          %s262 = smul.addr %s20, 32
          %s263 = smul.addr %s262, 64
          %s264 = scalar_lea.hbm %s0, %s263
          %s265 = sshll.u32 %s258, 4
          %s266 = int_to_ptr.vmem [resolvable:$true] %s265
          %271 = dma.hbm_to_vmem [thread:$0]  %s264, 2048, %s266, %s255, 64, 64, 4
        $region40: #{tpu_custom_call.1} parent=35 // pred_fallthru
          _
      $region36: #{tpu_custom_call.1} parent=5 // pred_fallthru
        _
      %p272 = scmp.le.s32.totalorder 1, %s20
      %p273 = scmp.lt.s32.totalorder %s20, 3
      %p274 = pnand %p272, %p273
      %p275 = pneg %p274
      // Predicated region
      $region41: #{tpu_custom_call.1} parent=5 // pred_check
        _
      $region42: #{tpu_custom_call.1} parent=5 // pred_check_branch
        %277 = sbr.rel (%p274) target = $region44
      $region43: #{tpu_custom_call.1} parent=5 // pred_region
        %s278 = ssub.s32 %s20, 1
        %s279 = sand.u32 %s33, 1
        %s280 = scalar_lea.sflag [#allocation5], %s279
        %s281 = sand.u32 %s33, 1
        %s282 = smul.addr %s281, 128
        %s283 = scalar_lea.vmem [#allocation4], %s282
        // Predicated region
        $region45: #{tpu_custom_call.1} parent=43 // pred_check
          %p284 = pneg %p46
        $region46: #{tpu_custom_call.1} parent=43 // pred_check_branch
          %286 = sbr.rel (%p284) target = $region48
        $region47: #{tpu_custom_call.1} parent=43 // pred_region
          %287 = dma.done %s280, 2048
        $region48: #{tpu_custom_call.1} parent=43 // pred_fallthru
          _
        // Predicated region
        $region49: #{tpu_custom_call.1} parent=43 // pred_check
          %p288 = pneg %p67
        $region50: #{tpu_custom_call.1} parent=43 // pred_check_branch
          %290 = sbr.rel (%p288) target = $region52
        $region51: #{tpu_custom_call.1} parent=43 // pred_region
          %291 = dma.done [#allocation8], 6144
        $region52: #{tpu_custom_call.1} parent=43 // pred_fallthru
          _
        // Predicated region
        $region53: #{tpu_custom_call.1} parent=43 // pred_check
          %p292 = pneg %p88
        $region54: #{tpu_custom_call.1} parent=43 // pred_check_branch
          %294 = sbr.rel (%p292) target = $region56
        $region55: #{tpu_custom_call.1} parent=43 // pred_region
          %295 = dma.done [#allocation8], 6144
        $region56: #{tpu_custom_call.1} parent=43 // pred_fallthru
          _
        // Predicated region
        $region57: #{tpu_custom_call.1} parent=43 // pred_check
          %p296 = pneg %p109
        $region58: #{tpu_custom_call.1} parent=43 // pred_check_branch
          %298 = sbr.rel (%p296) target = $region60
        $region59: #{tpu_custom_call.1} parent=43 // pred_region
          %299 = dma.done [#allocation11], 9216
        $region60: #{tpu_custom_call.1} parent=43 // pred_fallthru
          _
        // Predicated region
        $region61: #{tpu_custom_call.1} parent=43 // pred_check
          %p300 = pneg %p130
        $region62: #{tpu_custom_call.1} parent=43 // pred_check_branch
          %302 = sbr.rel (%p300) target = $region64
        $region63: #{tpu_custom_call.1} parent=43 // pred_region
          %303 = dma.done [#allocation11], 2048
        $region64: #{tpu_custom_call.1} parent=43 // pred_fallthru
          _
        %s304 = sand.u32 %s33, 1
        %s305 = scalar_lea.sflag [#allocation5], %s304
        %s306 = sand.u32 %s33, 1
        %s307 = smul.addr %s306, 128
        %s308 = scalar_lea.vmem [#allocation4], %s307
        %p309 = pneg %p46
        %p310 = pneg %p43
        %p311 = pneg %p67
        %p312 = pneg %p64
        %p313 = pneg %p88
        %p314 = pneg %p85
        %p315 = pneg %p109
        %p316 = pneg %p106
        %p317 = pneg %p130
        %p318 = pneg %p127
        %p319 = pneg %p151
        %p320 = pneg %p148
        %p321 = pneg %p177
        %p322 = pneg %p174
        %s323 = sand.u32 %s164, 1
        %s324 = scalar_lea.sflag [#allocation6], %s323
        %s325 = sand.u32 %s164, 1
        %s326 = smul.addr %s325, 128
        %s327 = scalar_lea.vmem [#allocation13], %s326
        %v329 = vld [vmem:[%s283] sm:$0xf]
        %v330 = vld [vmem:[%s283 + $0x4] sm:$0xf]
        %v331 = vld [vmem:[%s283 + $0x8] sm:$0xf]
        %v332 = vld [vmem:[%s283 + $0xc] sm:$0xf]
        %v333 = vld [vmem:[%s283 + $0x10] sm:$0xf]
        %v334 = vld [vmem:[%s283 + $0x14] sm:$0xf]
        %v335 = vld [vmem:[%s283 + $0x18] sm:$0xf]
        %v336 = vld [vmem:[%s283 + $0x1c] sm:$0xf]
        %v337 = vld [vmem:[%s283 + $0x20] sm:$0xf]
        %v338 = vld [vmem:[%s283 + $0x24] sm:$0xf]
        %v339 = vld [vmem:[%s283 + $0x28] sm:$0xf]
        %v340 = vld [vmem:[%s283 + $0x2c] sm:$0xf]
        %v341 = vld [vmem:[%s283 + $0x30] sm:$0xf]
        %v342 = vld [vmem:[%s283 + $0x34] sm:$0xf]
        %v343 = vld [vmem:[%s283 + $0x38] sm:$0xf]
        %v344 = vld [vmem:[%s283 + $0x3c] sm:$0xf]
        %v345 = vld [vmem:[%s283 + $0x40] sm:$0xf]
        %v346 = vld [vmem:[%s283 + $0x44] sm:$0xf]
        %v347 = vld [vmem:[%s283 + $0x48] sm:$0xf]
        %v348 = vld [vmem:[%s283 + $0x4c] sm:$0xf]
        %v349 = vld [vmem:[%s283 + $0x50] sm:$0xf]
        %v350 = vld [vmem:[%s283 + $0x54] sm:$0xf]
        %v351 = vld [vmem:[%s283 + $0x58] sm:$0xf]
        %v352 = vld [vmem:[%s283 + $0x5c] sm:$0xf]
        %v353 = vld [vmem:[%s283 + $0x60] sm:$0xf]
        %v354 = vld [vmem:[%s283 + $0x64] sm:$0xf]
        %v355 = vld [vmem:[%s283 + $0x68] sm:$0xf]
        %v356 = vld [vmem:[%s283 + $0x6c] sm:$0xf]
        %v357 = vld [vmem:[%s283 + $0x70] sm:$0xf]
        %v358 = vld [vmem:[%s283 + $0x74] sm:$0xf]
        %v359 = vld [vmem:[%s283 + $0x78] sm:$0xf]
        %v360 = vld [vmem:[%s283 + $0x7c] sm:$0xf]
        %361 = vst [vmem:[#allocation2] sm:$0xf] 0
        %362 = vst [vmem:[#allocation2 + $0x4] sm:$0xf] 0
        %363 = vst [vmem:[#allocation2 + $0x8] sm:$0xf] 0
        %s364 = scalar_lea.vmem [#allocation2], 204
        %365 = vst [vmem:[%s364] sm:$0xf] 0
        %366 = vst [vmem:[%s364 + $0x4] sm:$0xf] 0
        %367 = vst [vmem:[%s364 + $0x8] sm:$0xf] 0
        %s368 = scalar_lea.vmem [#allocation2], 12
        %vm369 = vcmask 1040384
        %vm370 = vsmask.f32 256
        %vm371 = vmand %vm369, %vm370
        %v372 = vld [vmem:[%s368] sm:$0x1]
        %v373 = vsel %vm371, 0, %v372
        %374 = vst [vmem:[%s368] sm:$0x1] %v373
        %v375 = vld [vmem:[%s368 + $0xc] sm:$0x1]
        %v376 = vsel %vm371, 0, %v375
        %377 = vst [vmem:[%s368 + $0xc] sm:$0x1] %v376
        %v378 = vld [vmem:[%s368 + $0x18] sm:$0x1]
        %v379 = vsel %vm371, 0, %v378
        %380 = vst [vmem:[%s368 + $0x18] sm:$0x1] %v379
        %v381 = vld [vmem:[%s368 + $0x24] sm:$0x1]
        %v382 = vsel %vm371, 0, %v381
        %383 = vst [vmem:[%s368 + $0x24] sm:$0x1] %v382
        %v384 = vld [vmem:[%s368 + $0x30] sm:$0x1]
        %v385 = vsel %vm371, 0, %v384
        %386 = vst [vmem:[%s368 + $0x30] sm:$0x1] %v385
        %v387 = vld [vmem:[%s368 + $0x3c] sm:$0x1]
        %v388 = vsel %vm371, 0, %v387
        %389 = vst [vmem:[%s368 + $0x3c] sm:$0x1] %v388
        %v390 = vld [vmem:[%s368 + $0x48] sm:$0x1]
        %v391 = vsel %vm371, 0, %v390
        %392 = vst [vmem:[%s368 + $0x48] sm:$0x1] %v391
        %v393 = vld [vmem:[%s368 + $0x54] sm:$0x1]
        %v394 = vsel %vm371, 0, %v393
        %395 = vst [vmem:[%s368 + $0x54] sm:$0x1] %v394
        %v396 = vld [vmem:[%s368 + $0x60] sm:$0x1]
        %v397 = vsel %vm371, 0, %v396
        %398 = vst [vmem:[%s368 + $0x60] sm:$0x1] %v397
        %v399 = vld [vmem:[%s368 + $0x6c] sm:$0x1]
        %v400 = vsel %vm371, 0, %v399
        %401 = vst [vmem:[%s368 + $0x6c] sm:$0x1] %v400
        %v402 = vld [vmem:[%s368 + $0x78] sm:$0x1]
        %v403 = vsel %vm371, 0, %v402
        %404 = vst [vmem:[%s368 + $0x78] sm:$0x1] %v403
        %v405 = vld [vmem:[%s368 + $0x84] sm:$0x1]
        %v406 = vsel %vm371, 0, %v405
        %407 = vst [vmem:[%s368 + $0x84] sm:$0x1] %v406
        %v408 = vld [vmem:[%s368 + $0x90] sm:$0x1]
        %v409 = vsel %vm371, 0, %v408
        %410 = vst [vmem:[%s368 + $0x90] sm:$0x1] %v409
        %v411 = vld [vmem:[%s368 + $0x9c] sm:$0x1]
        %v412 = vsel %vm371, 0, %v411
        %413 = vst [vmem:[%s368 + $0x9c] sm:$0x1] %v412
        %v414 = vld [vmem:[%s368 + $0xa8] sm:$0x1]
        %v415 = vsel %vm371, 0, %v414
        %416 = vst [vmem:[%s368 + $0xa8] sm:$0x1] %v415
        %v417 = vld [vmem:[%s368 + $0xb4] sm:$0x1]
        %v418 = vsel %vm371, 0, %v417
        %419 = vst [vmem:[%s368 + $0xb4] sm:$0x1] %v418
        %vm420 = vsmask.f32 7938
        %vm421 = vmand %vm369, %vm420
        %v422 = vld [vmem:[%s368 + $0x8] sm:$0x1]
        %v423 = vsel %vm421, 0, %v422
        %424 = vst [vmem:[%s368 + $0x8] sm:$0x1] %v423
        %v425 = vld [vmem:[%s368 + $0x14] sm:$0x1]
        %v426 = vsel %vm421, 0, %v425
        %427 = vst [vmem:[%s368 + $0x14] sm:$0x1] %v426
        %v428 = vld [vmem:[%s368 + $0x20] sm:$0x1]
        %v429 = vsel %vm421, 0, %v428
        %430 = vst [vmem:[%s368 + $0x20] sm:$0x1] %v429
        %v431 = vld [vmem:[%s368 + $0x2c] sm:$0x1]
        %v432 = vsel %vm421, 0, %v431
        %433 = vst [vmem:[%s368 + $0x2c] sm:$0x1] %v432
        %v434 = vld [vmem:[%s368 + $0x38] sm:$0x1]
        %v435 = vsel %vm421, 0, %v434
        %436 = vst [vmem:[%s368 + $0x38] sm:$0x1] %v435
        %v437 = vld [vmem:[%s368 + $0x44] sm:$0x1]
        %v438 = vsel %vm421, 0, %v437
        %439 = vst [vmem:[%s368 + $0x44] sm:$0x1] %v438
        %v440 = vld [vmem:[%s368 + $0x50] sm:$0x1]
        %v441 = vsel %vm421, 0, %v440
        %442 = vst [vmem:[%s368 + $0x50] sm:$0x1] %v441
        %v443 = vld [vmem:[%s368 + $0x5c] sm:$0x1]
        %v444 = vsel %vm421, 0, %v443
        %445 = vst [vmem:[%s368 + $0x5c] sm:$0x1] %v444
        %v446 = vld [vmem:[%s368 + $0x68] sm:$0x1]
        %v447 = vsel %vm421, 0, %v446
        %448 = vst [vmem:[%s368 + $0x68] sm:$0x1] %v447
        %v449 = vld [vmem:[%s368 + $0x74] sm:$0x1]
        %v450 = vsel %vm421, 0, %v449
        %451 = vst [vmem:[%s368 + $0x74] sm:$0x1] %v450
        %v452 = vld [vmem:[%s368 + $0x80] sm:$0x1]
        %v453 = vsel %vm421, 0, %v452
        %454 = vst [vmem:[%s368 + $0x80] sm:$0x1] %v453
        %v455 = vld [vmem:[%s368 + $0x8c] sm:$0x1]
        %v456 = vsel %vm421, 0, %v455
        %457 = vst [vmem:[%s368 + $0x8c] sm:$0x1] %v456
        %v458 = vld [vmem:[%s368 + $0x98] sm:$0x1]
        %v459 = vsel %vm421, 0, %v458
        %460 = vst [vmem:[%s368 + $0x98] sm:$0x1] %v459
        %v461 = vld [vmem:[%s368 + $0xa4] sm:$0x1]
        %v462 = vsel %vm421, 0, %v461
        %463 = vst [vmem:[%s368 + $0xa4] sm:$0x1] %v462
        %v464 = vld [vmem:[%s368 + $0xb0] sm:$0x1]
        %v465 = vsel %vm421, 0, %v464
        %466 = vst [vmem:[%s368 + $0xb0] sm:$0x1] %v465
        %v467 = vld [vmem:[%s368 + $0xbc] sm:$0x1]
        %v468 = vsel %vm421, 0, %v467
        %469 = vst [vmem:[%s368 + $0xbc] sm:$0x1] %v468
        %vm470 = vsmask.f32 4368
        %vm471 = vmor %vm370, %vm470
        %v473 = vshrl.u32 %v329, 16
        %v475 = vrot.slane %v473, 7
        %v476 = vshll.u32 %v329, 16
        %v478 = vor.u32 %v475, %v476
        %v479 = vrot.slane %v475, 4
        %v481 = vshrl.u32 %v330, 16
        %v483 = vrot.slane %v481, 7
        %v484 = vshll.u32 %v330, 16
        %v486 = vor.u32 %v483, %v484
        %v487 = vsel %vm471, %v479, %v486
        %v488 = vrot.slane %v483, 4
        %v490 = vshrl.u32 %v331, 16
        %v492 = vrot.slane %v490, 7
        %v493 = vshll.u32 %v331, 16
        %v495 = vor.u32 %v492, %v493
        %v496 = vrot.slane %v492, 4
        %v498 = vshrl.u32 %v332, 16
        %v500 = vrot.slane %v498, 7
        %v501 = vshll.u32 %v332, 16
        %v503 = vor.u32 %v500, %v501
        %v504 = vsel %vm471, %v496, %v503
        %v505 = vrot.slane %v500, 4
        %v507 = vshrl.u32 %v333, 16
        %v509 = vrot.slane %v507, 7
        %v510 = vshll.u32 %v333, 16
        %v512 = vor.u32 %v509, %v510
        %v513 = vrot.slane %v509, 4
        %v515 = vshrl.u32 %v334, 16
        %v517 = vrot.slane %v515, 7
        %v518 = vshll.u32 %v334, 16
        %v520 = vor.u32 %v517, %v518
        %v521 = vsel %vm471, %v513, %v520
        %v522 = vrot.slane %v517, 4
        %v524 = vshrl.u32 %v335, 16
        %v526 = vrot.slane %v524, 7
        %v527 = vshll.u32 %v335, 16
        %v529 = vor.u32 %v526, %v527
        %v530 = vrot.slane %v526, 4
        %v532 = vshrl.u32 %v336, 16
        %v534 = vrot.slane %v532, 7
        %v535 = vshll.u32 %v336, 16
        %v537 = vor.u32 %v534, %v535
        %v538 = vsel %vm471, %v530, %v537
        %v539 = vrot.slane %v534, 4
        %v541 = vshrl.u32 %v337, 16
        %v543 = vrot.slane %v541, 7
        %v544 = vshll.u32 %v337, 16
        %v546 = vor.u32 %v543, %v544
        %v547 = vrot.slane %v543, 4
        %v549 = vshrl.u32 %v338, 16
        %v551 = vrot.slane %v549, 7
        %v552 = vshll.u32 %v338, 16
        %v554 = vor.u32 %v551, %v552
        %v555 = vsel %vm471, %v547, %v554
        %v556 = vrot.slane %v551, 4
        %v558 = vshrl.u32 %v339, 16
        %v560 = vrot.slane %v558, 7
        %v561 = vshll.u32 %v339, 16
        %v563 = vor.u32 %v560, %v561
        %v564 = vrot.slane %v560, 4
        %v566 = vshrl.u32 %v340, 16
        %v568 = vrot.slane %v566, 7
        %v569 = vshll.u32 %v340, 16
        %v571 = vor.u32 %v568, %v569
        %v572 = vsel %vm471, %v564, %v571
        %v573 = vrot.slane %v568, 4
        %v575 = vshrl.u32 %v341, 16
        %v577 = vrot.slane %v575, 7
        %v578 = vshll.u32 %v341, 16
        %v580 = vor.u32 %v577, %v578
        %v581 = vrot.slane %v577, 4
        %v583 = vshrl.u32 %v342, 16
        %v585 = vrot.slane %v583, 7
        %v586 = vshll.u32 %v342, 16
        %v588 = vor.u32 %v585, %v586
        %v589 = vsel %vm471, %v581, %v588
        %v590 = vrot.slane %v585, 4
        %v592 = vshrl.u32 %v343, 16
        %v594 = vrot.slane %v592, 7
        %v595 = vshll.u32 %v343, 16
        %v597 = vor.u32 %v594, %v595
        %v598 = vrot.slane %v594, 4
        %v600 = vshrl.u32 %v344, 16
        %v602 = vrot.slane %v600, 7
        %v603 = vshll.u32 %v344, 16
        %v605 = vor.u32 %v602, %v603
        %v606 = vsel %vm471, %v598, %v605
        %v607 = vrot.slane %v602, 4
        %v609 = vshrl.u32 %v345, 16
        %v611 = vrot.slane %v609, 7
        %v612 = vshll.u32 %v345, 16
        %v614 = vor.u32 %v611, %v612
        %v615 = vrot.slane %v611, 4
        %v617 = vshrl.u32 %v346, 16
        %v619 = vrot.slane %v617, 7
        %v620 = vshll.u32 %v346, 16
        %v622 = vor.u32 %v619, %v620
        %v623 = vsel %vm471, %v615, %v622
        %v624 = vrot.slane %v619, 4
        %v626 = vshrl.u32 %v347, 16
        %v628 = vrot.slane %v626, 7
        %v629 = vshll.u32 %v347, 16
        %v631 = vor.u32 %v628, %v629
        %v632 = vrot.slane %v628, 4
        %v634 = vshrl.u32 %v348, 16
        %v636 = vrot.slane %v634, 7
        %v637 = vshll.u32 %v348, 16
        %v639 = vor.u32 %v636, %v637
        %v640 = vsel %vm471, %v632, %v639
        %v641 = vrot.slane %v636, 4
        %v643 = vshrl.u32 %v349, 16
        %v645 = vrot.slane %v643, 7
        %v646 = vshll.u32 %v349, 16
        %v648 = vor.u32 %v645, %v646
        %v649 = vrot.slane %v645, 4
        %v651 = vshrl.u32 %v350, 16
        %v653 = vrot.slane %v651, 7
        %v654 = vshll.u32 %v350, 16
        %v656 = vor.u32 %v653, %v654
        %v657 = vsel %vm471, %v649, %v656
        %v658 = vrot.slane %v653, 4
        %v660 = vshrl.u32 %v351, 16
        %v662 = vrot.slane %v660, 7
        %v663 = vshll.u32 %v351, 16
        %v665 = vor.u32 %v662, %v663
        %v666 = vrot.slane %v662, 4
        %v668 = vshrl.u32 %v352, 16
        %v670 = vrot.slane %v668, 7
        %v671 = vshll.u32 %v352, 16
        %v673 = vor.u32 %v670, %v671
        %v674 = vsel %vm471, %v666, %v673
        %v675 = vrot.slane %v670, 4
        %v677 = vshrl.u32 %v353, 16
        %v679 = vrot.slane %v677, 7
        %v680 = vshll.u32 %v353, 16
        %v682 = vor.u32 %v679, %v680
        %v683 = vrot.slane %v679, 4
        %v685 = vshrl.u32 %v354, 16
        %v687 = vrot.slane %v685, 7
        %v688 = vshll.u32 %v354, 16
        %v690 = vor.u32 %v687, %v688
        %v691 = vsel %vm471, %v683, %v690
        %v692 = vrot.slane %v687, 4
        %v694 = vshrl.u32 %v355, 16
        %v696 = vrot.slane %v694, 7
        %v697 = vshll.u32 %v355, 16
        %v699 = vor.u32 %v696, %v697
        %v700 = vrot.slane %v696, 4
        %v702 = vshrl.u32 %v356, 16
        %v704 = vrot.slane %v702, 7
        %v705 = vshll.u32 %v356, 16
        %v707 = vor.u32 %v704, %v705
        %v708 = vsel %vm471, %v700, %v707
        %v709 = vrot.slane %v704, 4
        %v711 = vshrl.u32 %v357, 16
        %v713 = vrot.slane %v711, 7
        %v714 = vshll.u32 %v357, 16
        %v716 = vor.u32 %v713, %v714
        %v717 = vrot.slane %v713, 4
        %v719 = vshrl.u32 %v358, 16
        %v721 = vrot.slane %v719, 7
        %v722 = vshll.u32 %v358, 16
        %v724 = vor.u32 %v721, %v722
        %v725 = vsel %vm471, %v717, %v724
        %v726 = vrot.slane %v721, 4
        %v728 = vshrl.u32 %v359, 16
        %v730 = vrot.slane %v728, 7
        %v731 = vshll.u32 %v359, 16
        %v733 = vor.u32 %v730, %v731
        %v734 = vrot.slane %v730, 4
        %v736 = vshrl.u32 %v360, 16
        %v738 = vrot.slane %v736, 7
        %v739 = vshll.u32 %v360, 16
        %v741 = vor.u32 %v738, %v739
        %v742 = vsel %vm471, %v734, %v741
        %v743 = vrot.slane %v738, 4
        %vm792 = vcmask 1043456
        %vm793 = vmand %vm792, %vm420
        %v794 = vld [vmem:[%s368] sm:$0xf]
        %v795 = vsel %vm793, %v478, %v794
        %796 = vst [vmem:[%s368] sm:$0xf] %v795
        %797 = vst [vmem:[%s368 + $0x4] sm:$0xf] %v487
        %v798 = vld [vmem:[%s368 + $0x8] sm:$0x1]
        %v799 = vsel %vm371, %v488, %v798
        %800 = vst [vmem:[%s368 + $0x8] sm:$0x1] %v799
        %v801 = vld [vmem:[%s368 + $0xc] sm:$0xf]
        %v802 = vsel %vm793, %v495, %v801
        %803 = vst [vmem:[%s368 + $0xc] sm:$0xf] %v802
        %804 = vst [vmem:[%s368 + $0x10] sm:$0xf] %v504
        %v805 = vld [vmem:[%s368 + $0x14] sm:$0x1]
        %v806 = vsel %vm371, %v505, %v805
        %807 = vst [vmem:[%s368 + $0x14] sm:$0x1] %v806
        %v808 = vld [vmem:[%s368 + $0x18] sm:$0xf]
        %v809 = vsel %vm793, %v512, %v808
        %810 = vst [vmem:[%s368 + $0x18] sm:$0xf] %v809
        %811 = vst [vmem:[%s368 + $0x1c] sm:$0xf] %v521
        %v812 = vld [vmem:[%s368 + $0x20] sm:$0x1]
        %v813 = vsel %vm371, %v522, %v812
        %814 = vst [vmem:[%s368 + $0x20] sm:$0x1] %v813
        %v815 = vld [vmem:[%s368 + $0x24] sm:$0xf]
        %v816 = vsel %vm793, %v529, %v815
        %817 = vst [vmem:[%s368 + $0x24] sm:$0xf] %v816
        %818 = vst [vmem:[%s368 + $0x28] sm:$0xf] %v538
        %v819 = vld [vmem:[%s368 + $0x2c] sm:$0x1]
        %v820 = vsel %vm371, %v539, %v819
        %821 = vst [vmem:[%s368 + $0x2c] sm:$0x1] %v820
        %v822 = vld [vmem:[%s368 + $0x30] sm:$0xf]
        %v823 = vsel %vm793, %v546, %v822
        %824 = vst [vmem:[%s368 + $0x30] sm:$0xf] %v823
        %825 = vst [vmem:[%s368 + $0x34] sm:$0xf] %v555
        %v826 = vld [vmem:[%s368 + $0x38] sm:$0x1]
        %v827 = vsel %vm371, %v556, %v826
        %828 = vst [vmem:[%s368 + $0x38] sm:$0x1] %v827
        %v829 = vld [vmem:[%s368 + $0x3c] sm:$0xf]
        %v830 = vsel %vm793, %v563, %v829
        %831 = vst [vmem:[%s368 + $0x3c] sm:$0xf] %v830
        %832 = vst [vmem:[%s368 + $0x40] sm:$0xf] %v572
        %v833 = vld [vmem:[%s368 + $0x44] sm:$0x1]
        %v834 = vsel %vm371, %v573, %v833
        %835 = vst [vmem:[%s368 + $0x44] sm:$0x1] %v834
        %v836 = vld [vmem:[%s368 + $0x48] sm:$0xf]
        %v837 = vsel %vm793, %v580, %v836
        %838 = vst [vmem:[%s368 + $0x48] sm:$0xf] %v837
        %839 = vst [vmem:[%s368 + $0x4c] sm:$0xf] %v589
        %v840 = vld [vmem:[%s368 + $0x50] sm:$0x1]
        %v841 = vsel %vm371, %v590, %v840
        %842 = vst [vmem:[%s368 + $0x50] sm:$0x1] %v841
        %v843 = vld [vmem:[%s368 + $0x54] sm:$0xf]
        %v844 = vsel %vm793, %v597, %v843
        %845 = vst [vmem:[%s368 + $0x54] sm:$0xf] %v844
        %846 = vst [vmem:[%s368 + $0x58] sm:$0xf] %v606
        %v847 = vld [vmem:[%s368 + $0x5c] sm:$0x1]
        %v848 = vsel %vm371, %v607, %v847
        %849 = vst [vmem:[%s368 + $0x5c] sm:$0x1] %v848
        %v850 = vld [vmem:[%s368 + $0x60] sm:$0xf]
        %v851 = vsel %vm793, %v614, %v850
        %852 = vst [vmem:[%s368 + $0x60] sm:$0xf] %v851
        %853 = vst [vmem:[%s368 + $0x64] sm:$0xf] %v623
        %v854 = vld [vmem:[%s368 + $0x68] sm:$0x1]
        %v855 = vsel %vm371, %v624, %v854
        %856 = vst [vmem:[%s368 + $0x68] sm:$0x1] %v855
        %v857 = vld [vmem:[%s368 + $0x6c] sm:$0xf]
        %v858 = vsel %vm793, %v631, %v857
        %859 = vst [vmem:[%s368 + $0x6c] sm:$0xf] %v858
        %860 = vst [vmem:[%s368 + $0x70] sm:$0xf] %v640
        %v861 = vld [vmem:[%s368 + $0x74] sm:$0x1]
        %v862 = vsel %vm371, %v641, %v861
        %863 = vst [vmem:[%s368 + $0x74] sm:$0x1] %v862
        %v864 = vld [vmem:[%s368 + $0x78] sm:$0xf]
        %v865 = vsel %vm793, %v648, %v864
        %866 = vst [vmem:[%s368 + $0x78] sm:$0xf] %v865
        %867 = vst [vmem:[%s368 + $0x7c] sm:$0xf] %v657
        %v868 = vld [vmem:[%s368 + $0x80] sm:$0x1]
        %v869 = vsel %vm371, %v658, %v868
        %870 = vst [vmem:[%s368 + $0x80] sm:$0x1] %v869
        %v871 = vld [vmem:[%s368 + $0x84] sm:$0xf]
        %v872 = vsel %vm793, %v665, %v871
        %873 = vst [vmem:[%s368 + $0x84] sm:$0xf] %v872
        %874 = vst [vmem:[%s368 + $0x88] sm:$0xf] %v674
        %v875 = vld [vmem:[%s368 + $0x8c] sm:$0x1]
        %v876 = vsel %vm371, %v675, %v875
        %877 = vst [vmem:[%s368 + $0x8c] sm:$0x1] %v876
        %v878 = vld [vmem:[%s368 + $0x90] sm:$0xf]
        %v879 = vsel %vm793, %v682, %v878
        %880 = vst [vmem:[%s368 + $0x90] sm:$0xf] %v879
        %881 = vst [vmem:[%s368 + $0x94] sm:$0xf] %v691
        %v882 = vld [vmem:[%s368 + $0x98] sm:$0x1]
        %v883 = vsel %vm371, %v692, %v882
        %884 = vst [vmem:[%s368 + $0x98] sm:$0x1] %v883
        %v885 = vld [vmem:[%s368 + $0x9c] sm:$0xf]
        %v886 = vsel %vm793, %v699, %v885
        %887 = vst [vmem:[%s368 + $0x9c] sm:$0xf] %v886
        %888 = vst [vmem:[%s368 + $0xa0] sm:$0xf] %v708
        %v889 = vld [vmem:[%s368 + $0xa4] sm:$0x1]
        %v890 = vsel %vm371, %v709, %v889
        %891 = vst [vmem:[%s368 + $0xa4] sm:$0x1] %v890
        %v892 = vld [vmem:[%s368 + $0xa8] sm:$0xf]
        %v893 = vsel %vm793, %v716, %v892
        %894 = vst [vmem:[%s368 + $0xa8] sm:$0xf] %v893
        %895 = vst [vmem:[%s368 + $0xac] sm:$0xf] %v725
        %v896 = vld [vmem:[%s368 + $0xb0] sm:$0x1]
        %v897 = vsel %vm371, %v726, %v896
        %898 = vst [vmem:[%s368 + $0xb0] sm:$0x1] %v897
        %v899 = vld [vmem:[%s368 + $0xb4] sm:$0xf]
        %v900 = vsel %vm793, %v733, %v899
        %901 = vst [vmem:[%s368 + $0xb4] sm:$0xf] %v900
        %902 = vst [vmem:[%s368 + $0xb8] sm:$0xf] %v742
        %v903 = vld [vmem:[%s368 + $0xbc] sm:$0x1]
        %v904 = vsel %vm371, %v743, %v903
        %905 = vst [vmem:[%s368 + $0xbc] sm:$0x1] %v904
        %v906 = vld [vmem:[%s368] sm:$0xf]
        %v907 = vld [vmem:[%s368 + $0x4] sm:$0xf]
        %v908 = vld [vmem:[%s368 + $0xc] sm:$0xf]
        %v909 = vld [vmem:[%s368 + $0x10] sm:$0xf]
        %v910 = vld [vmem:[%s368 + $0x18] sm:$0xf]
        %v911 = vld [vmem:[%s368 + $0x1c] sm:$0xf]
        %v912 = vld [vmem:[%s368 + $0x24] sm:$0xf]
        %v913 = vld [vmem:[%s368 + $0x28] sm:$0xf]
        %v914 = vld [vmem:[%s368 + $0x30] sm:$0xf]
        %v915 = vld [vmem:[%s368 + $0x34] sm:$0xf]
        %v916 = vld [vmem:[%s368 + $0x3c] sm:$0xf]
        %v917 = vld [vmem:[%s368 + $0x40] sm:$0xf]
        %v918 = vld [vmem:[%s368 + $0x48] sm:$0xf]
        %v919 = vld [vmem:[%s368 + $0x4c] sm:$0xf]
        %v920 = vld [vmem:[%s368 + $0x54] sm:$0xf]
        %v921 = vld [vmem:[%s368 + $0x58] sm:$0xf]
        %v922 = vld [vmem:[%s368 + $0x60] sm:$0xf]
        %v923 = vld [vmem:[%s368 + $0x64] sm:$0xf]
        %v924 = vld [vmem:[%s368 + $0x6c] sm:$0xf]
        %v925 = vld [vmem:[%s368 + $0x70] sm:$0xf]
        %v926 = vld [vmem:[%s368 + $0x78] sm:$0xf]
        %v927 = vld [vmem:[%s368 + $0x7c] sm:$0xf]
        %v928 = vld [vmem:[%s368 + $0x84] sm:$0xf]
        %v929 = vld [vmem:[%s368 + $0x88] sm:$0xf]
        %v930 = vld [vmem:[%s368 + $0x90] sm:$0xf]
        %v931 = vld [vmem:[%s368 + $0x94] sm:$0xf]
        %v932 = vld [vmem:[%s368 + $0x9c] sm:$0xf]
        %v933 = vld [vmem:[%s368 + $0xa0] sm:$0xf]
        %v934 = vld [vmem:[%s368 + $0xa8] sm:$0xf]
        %v935 = vld [vmem:[%s368 + $0xac] sm:$0xf]
        %v936 = vld [vmem:[%s368 + $0xb4] sm:$0xf]
        %v937 = vld [vmem:[%s368 + $0xb8] sm:$0xf]
        %v938 = vld [vmem:[%s368 + $0x8] sm:$0x1]
        %v939 = vld [vmem:[%s368 + $0x14] sm:$0x1]
        %v940 = vld [vmem:[%s368 + $0x20] sm:$0x1]
        %v941 = vld [vmem:[%s368 + $0x2c] sm:$0x1]
        %v942 = vld [vmem:[%s368 + $0x38] sm:$0x1]
        %v943 = vld [vmem:[%s368 + $0x44] sm:$0x1]
        %v944 = vld [vmem:[%s368 + $0x50] sm:$0x1]
        %v945 = vld [vmem:[%s368 + $0x5c] sm:$0x1]
        %v946 = vld [vmem:[%s368 + $0x68] sm:$0x1]
        %v947 = vld [vmem:[%s368 + $0x74] sm:$0x1]
        %v948 = vld [vmem:[%s368 + $0x80] sm:$0x1]
        %v949 = vld [vmem:[%s368 + $0x8c] sm:$0x1]
        %v950 = vld [vmem:[%s368 + $0x98] sm:$0x1]
        %v951 = vld [vmem:[%s368 + $0xa4] sm:$0x1]
        %v952 = vld [vmem:[%s368 + $0xb0] sm:$0x1]
        %v953 = vld [vmem:[%s368 + $0xbc] sm:$0x1]
        %v954 = vld [vmem:[%s368] sm:$0xe]
        %v955 = vld [vmem:[%s368 + $0xc] sm:$0xe]
        %v956 = vld [vmem:[%s368 + $0x18] sm:$0xe]
        %v957 = vld [vmem:[%s368 + $0x24] sm:$0xe]
        %v958 = vld [vmem:[%s368 + $0x30] sm:$0xe]
        %v959 = vld [vmem:[%s368 + $0x3c] sm:$0xe]
        %v960 = vld [vmem:[%s368 + $0x48] sm:$0xe]
        %v961 = vld [vmem:[%s368 + $0x54] sm:$0xe]
        %v962 = vld [vmem:[%s368 + $0x60] sm:$0xe]
        %v963 = vld [vmem:[%s368 + $0x6c] sm:$0xe]
        %v964 = vld [vmem:[%s368 + $0x78] sm:$0xe]
        %v965 = vld [vmem:[%s368 + $0x84] sm:$0xe]
        %v966 = vld [vmem:[%s368 + $0x90] sm:$0xe]
        %v967 = vld [vmem:[%s368 + $0x9c] sm:$0xe]
        %v968 = vld [vmem:[%s368 + $0xa8] sm:$0xe]
        %v969 = vld [vmem:[%s368 + $0xb4] sm:$0xe]
        %v1002 = vunpack.c.l.b16 %v906
        %v1003 = vunpack.c.l.b16 %v907
        %v1004 = vunpack.c.l.b16 %v908
        %v1005 = vunpack.c.l.b16 %v909
        %v1006 = vunpack.c.l.b16 %v910
        %v1007 = vunpack.c.l.b16 %v911
        %v1008 = vunpack.c.l.b16 %v912
        %v1009 = vunpack.c.l.b16 %v913
        %v1010 = vunpack.c.l.b16 %v914
        %v1011 = vunpack.c.l.b16 %v915
        %v1012 = vunpack.c.l.b16 %v916
        %v1013 = vunpack.c.l.b16 %v917
        %v1014 = vunpack.c.l.b16 %v918
        %v1015 = vunpack.c.l.b16 %v919
        %v1016 = vunpack.c.l.b16 %v920
        %v1017 = vunpack.c.l.b16 %v921
        %v1018 = vunpack.c.l.b16 %v922
        %v1019 = vunpack.c.l.b16 %v923
        %v1020 = vunpack.c.l.b16 %v924
        %v1021 = vunpack.c.l.b16 %v925
        %v1022 = vunpack.c.l.b16 %v926
        %v1023 = vunpack.c.l.b16 %v927
        %v1024 = vunpack.c.l.b16 %v928
        %v1025 = vunpack.c.l.b16 %v929
        %v1026 = vunpack.c.l.b16 %v930
        %v1027 = vunpack.c.l.b16 %v931
        %v1028 = vunpack.c.l.b16 %v932
        %v1029 = vunpack.c.l.b16 %v933
        %v1030 = vunpack.c.l.b16 %v934
        %v1031 = vunpack.c.l.b16 %v935
        %v1032 = vunpack.c.l.b16 %v936
        %v1033 = vunpack.c.l.b16 %v937
        %v1034 = vpack.c.b16 %v1003, %v1002
        %v1035 = vpack.c.b16 %v1005, %v1004
        %v1036 = vpack.c.b16 %v1007, %v1006
        %v1037 = vpack.c.b16 %v1009, %v1008
        %v1038 = vpack.c.b16 %v1011, %v1010
        %v1039 = vpack.c.b16 %v1013, %v1012
        %v1040 = vpack.c.b16 %v1015, %v1014
        %v1041 = vpack.c.b16 %v1017, %v1016
        %v1042 = vpack.c.b16 %v1019, %v1018
        %v1043 = vpack.c.b16 %v1021, %v1020
        %v1044 = vpack.c.b16 %v1023, %v1022
        %v1045 = vpack.c.b16 %v1025, %v1024
        %v1046 = vpack.c.b16 %v1027, %v1026
        %v1047 = vpack.c.b16 %v1029, %v1028
        %v1048 = vpack.c.b16 %v1031, %v1030
        %v1049 = vpack.c.b16 %v1033, %v1032
        %v1082 = vunpack.c.l.b16 %v938
        %v1083 = vunpack.c.l.b16 %v939
        %v1084 = vunpack.c.l.b16 %v940
        %v1085 = vunpack.c.l.b16 %v941
        %v1086 = vunpack.c.l.b16 %v942
        %v1087 = vunpack.c.l.b16 %v943
        %v1088 = vunpack.c.l.b16 %v944
        %v1089 = vunpack.c.l.b16 %v945
        %v1090 = vunpack.c.l.b16 %v946
        %v1091 = vunpack.c.l.b16 %v947
        %v1092 = vunpack.c.l.b16 %v948
        %v1093 = vunpack.c.l.b16 %v949
        %v1094 = vunpack.c.l.b16 %v950
        %v1095 = vunpack.c.l.b16 %v951
        %v1096 = vunpack.c.l.b16 %v952
        %v1097 = vunpack.c.l.b16 %v953
        %v1098 = vpack.c.b16 %v1082, %v1082
        %v1099 = vpack.c.b16 %v1083, %v1083
        %v1100 = vpack.c.b16 %v1084, %v1084
        %v1101 = vpack.c.b16 %v1085, %v1085
        %v1102 = vpack.c.b16 %v1086, %v1086
        %v1103 = vpack.c.b16 %v1087, %v1087
        %v1104 = vpack.c.b16 %v1088, %v1088
        %v1105 = vpack.c.b16 %v1089, %v1089
        %v1106 = vpack.c.b16 %v1090, %v1090
        %v1107 = vpack.c.b16 %v1091, %v1091
        %v1108 = vpack.c.b16 %v1092, %v1092
        %v1109 = vpack.c.b16 %v1093, %v1093
        %v1110 = vpack.c.b16 %v1094, %v1094
        %v1111 = vpack.c.b16 %v1095, %v1095
        %v1112 = vpack.c.b16 %v1096, %v1096
        %v1113 = vpack.c.b16 %v1097, %v1097
        %vm1114 = vsmask.f32 7424
        %v1116 = vshrl.u32 %v1034, 16
        %v1118 = vshll.u32 %v1034, 16
        %v1120 = vrot.slane %v1118, 1
        %v1121 = vor.u32 %v1116, %v1120
        %v1123 = vshll.u32 %v1098, 16
        %v1125 = vrot.slane %v1123, 1
        %v1126 = vsel %vm1114, %v1121, %v1125
        %v1128 = vshrl.u32 %v1035, 16
        %v1130 = vshll.u32 %v1035, 16
        %v1132 = vrot.slane %v1130, 1
        %v1133 = vor.u32 %v1128, %v1132
        %v1135 = vshll.u32 %v1099, 16
        %v1137 = vrot.slane %v1135, 1
        %v1138 = vsel %vm1114, %v1133, %v1137
        %v1140 = vshrl.u32 %v1036, 16
        %v1142 = vshll.u32 %v1036, 16
        %v1144 = vrot.slane %v1142, 1
        %v1145 = vor.u32 %v1140, %v1144
        %v1147 = vshll.u32 %v1100, 16
        %v1149 = vrot.slane %v1147, 1
        %v1150 = vsel %vm1114, %v1145, %v1149
        %v1152 = vshrl.u32 %v1037, 16
        %v1154 = vshll.u32 %v1037, 16
        %v1156 = vrot.slane %v1154, 1
        %v1157 = vor.u32 %v1152, %v1156
        %v1159 = vshll.u32 %v1101, 16
        %v1161 = vrot.slane %v1159, 1
        %v1162 = vsel %vm1114, %v1157, %v1161
        %v1164 = vshrl.u32 %v1038, 16
        %v1166 = vshll.u32 %v1038, 16
        %v1168 = vrot.slane %v1166, 1
        %v1169 = vor.u32 %v1164, %v1168
        %v1171 = vshll.u32 %v1102, 16
        %v1173 = vrot.slane %v1171, 1
        %v1174 = vsel %vm1114, %v1169, %v1173
        %v1176 = vshrl.u32 %v1039, 16
        %v1178 = vshll.u32 %v1039, 16
        %v1180 = vrot.slane %v1178, 1
        %v1181 = vor.u32 %v1176, %v1180
        %v1183 = vshll.u32 %v1103, 16
        %v1185 = vrot.slane %v1183, 1
        %v1186 = vsel %vm1114, %v1181, %v1185
        %v1188 = vshrl.u32 %v1040, 16
        %v1190 = vshll.u32 %v1040, 16
        %v1192 = vrot.slane %v1190, 1
        %v1193 = vor.u32 %v1188, %v1192
        %v1195 = vshll.u32 %v1104, 16
        %v1197 = vrot.slane %v1195, 1
        %v1198 = vsel %vm1114, %v1193, %v1197
        %v1200 = vshrl.u32 %v1041, 16
        %v1202 = vshll.u32 %v1041, 16
        %v1204 = vrot.slane %v1202, 1
        %v1205 = vor.u32 %v1200, %v1204
        %v1207 = vshll.u32 %v1105, 16
        %v1209 = vrot.slane %v1207, 1
        %v1210 = vsel %vm1114, %v1205, %v1209
        %v1212 = vshrl.u32 %v1042, 16
        %v1214 = vshll.u32 %v1042, 16
        %v1216 = vrot.slane %v1214, 1
        %v1217 = vor.u32 %v1212, %v1216
        %v1219 = vshll.u32 %v1106, 16
        %v1221 = vrot.slane %v1219, 1
        %v1222 = vsel %vm1114, %v1217, %v1221
        %v1224 = vshrl.u32 %v1043, 16
        %v1226 = vshll.u32 %v1043, 16
        %v1228 = vrot.slane %v1226, 1
        %v1229 = vor.u32 %v1224, %v1228
        %v1231 = vshll.u32 %v1107, 16
        %v1233 = vrot.slane %v1231, 1
        %v1234 = vsel %vm1114, %v1229, %v1233
        %v1236 = vshrl.u32 %v1044, 16
        %v1238 = vshll.u32 %v1044, 16
        %v1240 = vrot.slane %v1238, 1
        %v1241 = vor.u32 %v1236, %v1240
        %v1243 = vshll.u32 %v1108, 16
        %v1245 = vrot.slane %v1243, 1
        %v1246 = vsel %vm1114, %v1241, %v1245
        %v1248 = vshrl.u32 %v1045, 16
        %v1250 = vshll.u32 %v1045, 16
        %v1252 = vrot.slane %v1250, 1
        %v1253 = vor.u32 %v1248, %v1252
        %v1255 = vshll.u32 %v1109, 16
        %v1257 = vrot.slane %v1255, 1
        %v1258 = vsel %vm1114, %v1253, %v1257
        %v1260 = vshrl.u32 %v1046, 16
        %v1262 = vshll.u32 %v1046, 16
        %v1264 = vrot.slane %v1262, 1
        %v1265 = vor.u32 %v1260, %v1264
        %v1267 = vshll.u32 %v1110, 16
        %v1269 = vrot.slane %v1267, 1
        %v1270 = vsel %vm1114, %v1265, %v1269
        %v1272 = vshrl.u32 %v1047, 16
        %v1274 = vshll.u32 %v1047, 16
        %v1276 = vrot.slane %v1274, 1
        %v1277 = vor.u32 %v1272, %v1276
        %v1279 = vshll.u32 %v1111, 16
        %v1281 = vrot.slane %v1279, 1
        %v1282 = vsel %vm1114, %v1277, %v1281
        %v1284 = vshrl.u32 %v1048, 16
        %v1286 = vshll.u32 %v1048, 16
        %v1288 = vrot.slane %v1286, 1
        %v1289 = vor.u32 %v1284, %v1288
        %v1291 = vshll.u32 %v1112, 16
        %v1293 = vrot.slane %v1291, 1
        %v1294 = vsel %vm1114, %v1289, %v1293
        %v1296 = vshrl.u32 %v1049, 16
        %v1298 = vshll.u32 %v1049, 16
        %v1300 = vrot.slane %v1298, 1
        %v1301 = vor.u32 %v1296, %v1300
        %v1303 = vshll.u32 %v1113, 16
        %v1305 = vrot.slane %v1303, 1
        %v1306 = vsel %vm1114, %v1301, %v1305
        %v1339 = vunpack.c.l.b16 %v954
        %v1340 = vunpack.c.l.b16 %v955
        %v1341 = vunpack.c.l.b16 %v956
        %v1342 = vunpack.c.l.b16 %v957
        %v1343 = vunpack.c.l.b16 %v958
        %v1344 = vunpack.c.l.b16 %v959
        %v1345 = vunpack.c.l.b16 %v960
        %v1346 = vunpack.c.l.b16 %v961
        %v1347 = vunpack.c.l.b16 %v962
        %v1348 = vunpack.c.l.b16 %v963
        %v1349 = vunpack.c.l.b16 %v964
        %v1350 = vunpack.c.l.b16 %v965
        %v1351 = vunpack.c.l.b16 %v966
        %v1352 = vunpack.c.l.b16 %v967
        %v1353 = vunpack.c.l.b16 %v968
        %v1354 = vunpack.c.l.b16 %v969
        %v1355 = vpack.c.b16 %v1003, %v1339
        %v1356 = vpack.c.b16 %v1005, %v1340
        %v1357 = vpack.c.b16 %v1007, %v1341
        %v1358 = vpack.c.b16 %v1009, %v1342
        %v1359 = vpack.c.b16 %v1011, %v1343
        %v1360 = vpack.c.b16 %v1013, %v1344
        %v1361 = vpack.c.b16 %v1015, %v1345
        %v1362 = vpack.c.b16 %v1017, %v1346
        %v1363 = vpack.c.b16 %v1019, %v1347
        %v1364 = vpack.c.b16 %v1021, %v1348
        %v1365 = vpack.c.b16 %v1023, %v1349
        %v1366 = vpack.c.b16 %v1025, %v1350
        %v1367 = vpack.c.b16 %v1027, %v1351
        %v1368 = vpack.c.b16 %v1029, %v1352
        %v1369 = vpack.c.b16 %v1031, %v1353
        %v1370 = vpack.c.b16 %v1033, %v1354
        %vm1371 = vcmask 1046528
        %v1372 = vrot.slane %v1355, 1
        %v1373 = vrot.slane %v1098, 1
        %v1374 = vsel %vm1371, %v1372, %v1373
        %v1375 = vrot.slane %v1356, 1
        %v1376 = vrot.slane %v1099, 1
        %v1377 = vsel %vm1371, %v1375, %v1376
        %v1378 = vrot.slane %v1357, 1
        %v1379 = vrot.slane %v1100, 1
        %v1380 = vsel %vm1371, %v1378, %v1379
        %v1381 = vrot.slane %v1358, 1
        %v1382 = vrot.slane %v1101, 1
        %v1383 = vsel %vm1371, %v1381, %v1382
        %v1384 = vrot.slane %v1359, 1
        %v1385 = vrot.slane %v1102, 1
        %v1386 = vsel %vm1371, %v1384, %v1385
        %v1387 = vrot.slane %v1360, 1
        %v1388 = vrot.slane %v1103, 1
        %v1389 = vsel %vm1371, %v1387, %v1388
        %v1390 = vrot.slane %v1361, 1
        %v1391 = vrot.slane %v1104, 1
        %v1392 = vsel %vm1371, %v1390, %v1391
        %v1393 = vrot.slane %v1362, 1
        %v1394 = vrot.slane %v1105, 1
        %v1395 = vsel %vm1371, %v1393, %v1394
        %v1396 = vrot.slane %v1363, 1
        %v1397 = vrot.slane %v1106, 1
        %v1398 = vsel %vm1371, %v1396, %v1397
        %v1399 = vrot.slane %v1364, 1
        %v1400 = vrot.slane %v1107, 1
        %v1401 = vsel %vm1371, %v1399, %v1400
        %v1402 = vrot.slane %v1365, 1
        %v1403 = vrot.slane %v1108, 1
        %v1404 = vsel %vm1371, %v1402, %v1403
        %v1405 = vrot.slane %v1366, 1
        %v1406 = vrot.slane %v1109, 1
        %v1407 = vsel %vm1371, %v1405, %v1406
        %v1408 = vrot.slane %v1367, 1
        %v1409 = vrot.slane %v1110, 1
        %v1410 = vsel %vm1371, %v1408, %v1409
        %v1411 = vrot.slane %v1368, 1
        %v1412 = vrot.slane %v1111, 1
        %v1413 = vsel %vm1371, %v1411, %v1412
        %v1414 = vrot.slane %v1369, 1
        %v1415 = vrot.slane %v1112, 1
        %v1416 = vsel %vm1371, %v1414, %v1415
        %v1417 = vrot.slane %v1370, 1
        %v1418 = vrot.slane %v1113, 1
        %v1419 = vsel %vm1371, %v1417, %v1418
        %v1436 = vld [vmem:[#allocation9] sm:$0xff]
        %v1437 = vld [vmem:[#allocation9 + $0x8] sm:$0xff]
        %v1438 = vld [vmem:[#allocation9 + $0x10] sm:$0xff]
        %v1439 = vld [vmem:[#allocation9 + $0x18] sm:$0xff]
        %v1440 = vld [vmem:[#allocation9 + $0x20] sm:$0xff]
        %v1441 = vld [vmem:[#allocation9 + $0x28] sm:$0xff]
        %v1442 = vld [vmem:[#allocation9 + $0x30] sm:$0xff]
        %v1443 = vld [vmem:[#allocation9 + $0x38] sm:$0xff]
        %v1444 = vld [vmem:[#allocation9 + $0x40] sm:$0xff]
        %v1445 = vld [vmem:[#allocation9 + $0x48] sm:$0xff]
        %v1446 = vld [vmem:[#allocation9 + $0x50] sm:$0xff]
        %v1447 = vld [vmem:[#allocation9 + $0x58] sm:$0xff]
        %v1448 = vld [vmem:[#allocation9 + $0x60] sm:$0xff]
        %v1449 = vld [vmem:[#allocation9 + $0x68] sm:$0xff]
        %v1450 = vld [vmem:[#allocation9 + $0x70] sm:$0xff]
        %v1451 = vld [vmem:[#allocation9 + $0x78] sm:$0xff]
        %v1452 = vld [vmem:[#allocation9 + $0x80] sm:$0xff]
        %v1453 = vld [vmem:[#allocation9 + $0x88] sm:$0xff]
        %v1454 = vld [vmem:[#allocation9 + $0x90] sm:$0xff]
        %v1455 = vld [vmem:[#allocation9 + $0x98] sm:$0xff]
        %v1456 = vld [vmem:[#allocation9 + $0xa0] sm:$0xff]
        %v1457 = vld [vmem:[#allocation9 + $0xa8] sm:$0xff]
        %v1458 = vld [vmem:[#allocation9 + $0xb0] sm:$0xff]
        %v1459 = vld [vmem:[#allocation9 + $0xb8] sm:$0xff]
        %v1460 = vld [vmem:[#allocation9 + $0xc0] sm:$0xff]
        %v1461 = vld [vmem:[#allocation9 + $0xc8] sm:$0xff]
        %v1462 = vld [vmem:[#allocation9 + $0xd0] sm:$0xff]
        %v1463 = vld [vmem:[#allocation9 + $0xd8] sm:$0xff]
        %v1464 = vld [vmem:[#allocation9 + $0xe0] sm:$0xff]
        %v1465 = vld [vmem:[#allocation9 + $0xe8] sm:$0xff]
        %v1466 = vld [vmem:[#allocation9 + $0xf0] sm:$0xff]
        %v1467 = vld [vmem:[#allocation9 + $0xf8] sm:$0xff]
        %v1468 = vld [vmem:[#allocation9 + $0x100] sm:$0xff]
        %v1469 = vld [vmem:[#allocation9 + $0x108] sm:$0xff]
        %v1470 = vld [vmem:[#allocation9 + $0x110] sm:$0xff]
        %v1471 = vld [vmem:[#allocation9 + $0x118] sm:$0xff]
        %v1472 = vld [vmem:[#allocation9 + $0x120] sm:$0xff]
        %v1473 = vld [vmem:[#allocation9 + $0x128] sm:$0xff]
        %v1474 = vld [vmem:[#allocation9 + $0x130] sm:$0xff]
        %v1475 = vld [vmem:[#allocation9 + $0x138] sm:$0xff]
        %v1476 = vld [vmem:[#allocation9 + $0x140] sm:$0xff]
        %v1477 = vld [vmem:[#allocation9 + $0x148] sm:$0xff]
        %v1478 = vld [vmem:[#allocation9 + $0x150] sm:$0xff]
        %v1479 = vld [vmem:[#allocation9 + $0x158] sm:$0xff]
        %v1480 = vld [vmem:[#allocation9 + $0x160] sm:$0xff]
        %v1481 = vld [vmem:[#allocation9 + $0x168] sm:$0xff]
        %v1482 = vld [vmem:[#allocation9 + $0x170] sm:$0xff]
        %v1483 = vld [vmem:[#allocation9 + $0x178] sm:$0xff]
        %v1532 = vunpack.c.l.b16 %v1436
        %v1533 = vunpack.c.h.b16 %v1436
        %v1534 = vunpack.c.l.b16 %v1437
        %v1535 = vunpack.c.h.b16 %v1437
        %v1536 = vunpack.c.l.b16 %v1438
        %v1537 = vunpack.c.h.b16 %v1438
        %v1538 = vunpack.c.l.b16 %v1439
        %v1539 = vunpack.c.h.b16 %v1439
        %v1540 = vunpack.c.l.b16 %v1440
        %v1541 = vunpack.c.h.b16 %v1440
        %v1542 = vunpack.c.l.b16 %v1441
        %v1543 = vunpack.c.h.b16 %v1441
        %v1544 = vunpack.c.l.b16 %v1442
        %v1545 = vunpack.c.h.b16 %v1442
        %v1546 = vunpack.c.l.b16 %v1443
        %v1547 = vunpack.c.h.b16 %v1443
        %v1548 = vunpack.c.l.b16 %v1444
        %v1549 = vunpack.c.h.b16 %v1444
        %v1550 = vunpack.c.l.b16 %v1445
        %v1551 = vunpack.c.h.b16 %v1445
        %v1552 = vunpack.c.l.b16 %v1446
        %v1553 = vunpack.c.h.b16 %v1446
        %v1554 = vunpack.c.l.b16 %v1447
        %v1555 = vunpack.c.h.b16 %v1447
        %v1556 = vunpack.c.l.b16 %v1448
        %v1557 = vunpack.c.h.b16 %v1448
        %v1558 = vunpack.c.l.b16 %v1449
        %v1559 = vunpack.c.h.b16 %v1449
        %v1560 = vunpack.c.l.b16 %v1450
        %v1561 = vunpack.c.h.b16 %v1450
        %v1562 = vunpack.c.l.b16 %v1451
        %v1563 = vunpack.c.h.b16 %v1451
        %v1564 = vunpack.c.l.b16 %v1452
        %v1565 = vunpack.c.h.b16 %v1452
        %v1566 = vunpack.c.l.b16 %v1453
        %v1567 = vunpack.c.h.b16 %v1453
        %v1568 = vunpack.c.l.b16 %v1454
        %v1569 = vunpack.c.h.b16 %v1454
        %v1570 = vunpack.c.l.b16 %v1455
        %v1571 = vunpack.c.h.b16 %v1455
        %v1572 = vunpack.c.l.b16 %v1456
        %v1573 = vunpack.c.h.b16 %v1456
        %v1574 = vunpack.c.l.b16 %v1457
        %v1575 = vunpack.c.h.b16 %v1457
        %v1576 = vunpack.c.l.b16 %v1458
        %v1577 = vunpack.c.h.b16 %v1458
        %v1578 = vunpack.c.l.b16 %v1459
        %v1579 = vunpack.c.h.b16 %v1459
        %v1580 = vunpack.c.l.b16 %v1460
        %v1581 = vunpack.c.h.b16 %v1460
        %v1582 = vunpack.c.l.b16 %v1461
        %v1583 = vunpack.c.h.b16 %v1461
        %v1584 = vunpack.c.l.b16 %v1462
        %v1585 = vunpack.c.h.b16 %v1462
        %v1586 = vunpack.c.l.b16 %v1463
        %v1587 = vunpack.c.h.b16 %v1463
        %v1588 = vunpack.c.l.b16 %v1464
        %v1589 = vunpack.c.h.b16 %v1464
        %v1590 = vunpack.c.l.b16 %v1465
        %v1591 = vunpack.c.h.b16 %v1465
        %v1592 = vunpack.c.l.b16 %v1466
        %v1593 = vunpack.c.h.b16 %v1466
        %v1594 = vunpack.c.l.b16 %v1467
        %v1595 = vunpack.c.h.b16 %v1467
        %v1596 = vunpack.c.l.b16 %v1468
        %v1597 = vunpack.c.h.b16 %v1468
        %v1598 = vunpack.c.l.b16 %v1469
        %v1599 = vunpack.c.h.b16 %v1469
        %v1600 = vunpack.c.l.b16 %v1470
        %v1601 = vunpack.c.h.b16 %v1470
        %v1602 = vunpack.c.l.b16 %v1471
        %v1603 = vunpack.c.h.b16 %v1471
        %v1604 = vunpack.c.l.b16 %v1472
        %v1605 = vunpack.c.h.b16 %v1472
        %v1606 = vunpack.c.l.b16 %v1473
        %v1607 = vunpack.c.h.b16 %v1473
        %v1608 = vunpack.c.l.b16 %v1474
        %v1609 = vunpack.c.h.b16 %v1474
        %v1610 = vunpack.c.l.b16 %v1475
        %v1611 = vunpack.c.h.b16 %v1475
        %v1612 = vunpack.c.l.b16 %v1476
        %v1613 = vunpack.c.h.b16 %v1476
        %v1614 = vunpack.c.l.b16 %v1477
        %v1615 = vunpack.c.h.b16 %v1477
        %v1616 = vunpack.c.l.b16 %v1478
        %v1617 = vunpack.c.h.b16 %v1478
        %v1618 = vunpack.c.l.b16 %v1479
        %v1619 = vunpack.c.h.b16 %v1479
        %v1620 = vunpack.c.l.b16 %v1480
        %v1621 = vunpack.c.h.b16 %v1480
        %v1622 = vunpack.c.l.b16 %v1481
        %v1623 = vunpack.c.h.b16 %v1481
        %v1624 = vunpack.c.l.b16 %v1482
        %v1625 = vunpack.c.h.b16 %v1482
        %v1626 = vunpack.c.l.b16 %v1483
        %v1627 = vunpack.c.h.b16 %v1483
        %v1628 = vpack.c.b16 %v1534, %v1532
        %v1629 = vpack.c.b16 %v1535, %v1533
        %v1630 = vpack.c.b16 %v1538, %v1536
        %v1631 = vpack.c.b16 %v1539, %v1537
        %v1632 = vpack.c.b16 %v1542, %v1540
        %v1633 = vpack.c.b16 %v1543, %v1541
        %v1634 = vpack.c.b16 %v1546, %v1544
        %v1635 = vpack.c.b16 %v1547, %v1545
        %v1636 = vpack.c.b16 %v1550, %v1548
        %v1637 = vpack.c.b16 %v1551, %v1549
        %v1638 = vpack.c.b16 %v1554, %v1552
        %v1639 = vpack.c.b16 %v1555, %v1553
        %v1640 = vpack.c.b16 %v1558, %v1556
        %v1641 = vpack.c.b16 %v1559, %v1557
        %v1642 = vpack.c.b16 %v1562, %v1560
        %v1643 = vpack.c.b16 %v1563, %v1561
        %v1644 = vpack.c.b16 %v1566, %v1564
        %v1645 = vpack.c.b16 %v1567, %v1565
        %v1646 = vpack.c.b16 %v1570, %v1568
        %v1647 = vpack.c.b16 %v1571, %v1569
        %v1648 = vpack.c.b16 %v1574, %v1572
        %v1649 = vpack.c.b16 %v1575, %v1573
        %v1650 = vpack.c.b16 %v1578, %v1576
        %v1651 = vpack.c.b16 %v1579, %v1577
        %v1652 = vpack.c.b16 %v1582, %v1580
        %v1653 = vpack.c.b16 %v1583, %v1581
        %v1654 = vpack.c.b16 %v1586, %v1584
        %v1655 = vpack.c.b16 %v1587, %v1585
        %v1656 = vpack.c.b16 %v1590, %v1588
        %v1657 = vpack.c.b16 %v1591, %v1589
        %v1658 = vpack.c.b16 %v1594, %v1592
        %v1659 = vpack.c.b16 %v1595, %v1593
        %v1660 = vpack.c.b16 %v1598, %v1596
        %v1661 = vpack.c.b16 %v1599, %v1597
        %v1662 = vpack.c.b16 %v1602, %v1600
        %v1663 = vpack.c.b16 %v1603, %v1601
        %v1664 = vpack.c.b16 %v1606, %v1604
        %v1665 = vpack.c.b16 %v1607, %v1605
        %v1666 = vpack.c.b16 %v1610, %v1608
        %v1667 = vpack.c.b16 %v1611, %v1609
        %v1668 = vpack.c.b16 %v1614, %v1612
        %v1669 = vpack.c.b16 %v1615, %v1613
        %v1670 = vpack.c.b16 %v1618, %v1616
        %v1671 = vpack.c.b16 %v1619, %v1617
        %v1672 = vpack.c.b16 %v1622, %v1620
        %v1673 = vpack.c.b16 %v1623, %v1621
        %v1674 = vpack.c.b16 %v1626, %v1624
        %v1675 = vpack.c.b16 %v1627, %v1625
        %1724 = vmatprep.subr.bf16.mxu0 %v1629
        %1725 = vmatpush1.bf16.msra.mxu0 %v1628
        %1726 = vmatprep.subr.bf16.mxu0 %v1631
        %1727 = vmatpush1.bf16.msra.mxu0 %v1630
        %1728 = vmatprep.subr.bf16.mxu0 %v1633
        %1729 = vmatpush1.bf16.msra.mxu0 %v1632
        %1730 = vmatprep.subr.bf16.mxu0 %v1635
        %1731 = vmatpush1.bf16.msra.mxu0 %v1634
        %1732 = vmatprep.subr.bf16.mxu0 %v1637
        %1733 = vmatpush1.bf16.msra.mxu0 %v1636
        %1734 = vmatprep.subr.bf16.mxu0 %v1639
        %1735 = vmatpush1.bf16.msra.mxu0 %v1638
        %1736 = vmatprep.subr.bf16.mxu0 %v1641
        %1737 = vmatpush1.bf16.msra.mxu0 %v1640
        %1738 = vmatprep.subr.bf16.mxu0 %v1643
        %1739 = vmatpush1.bf16.msra.mxu0 %v1642
        %1740 = vmatprep.subr.bf16.mxu0 %v1645
        %1741 = vmatpush1.bf16.msra.mxu0 %v1644
        %1742 = vmatprep.subr.bf16.mxu0 %v1647
        %1743 = vmatpush1.bf16.msra.mxu0 %v1646
        %1744 = vmatprep.subr.bf16.mxu0 %v1649
        %1745 = vmatpush1.bf16.msra.mxu0 %v1648
        %1746 = vmatprep.subr.bf16.mxu0 %v1651
        %1747 = vmatpush1.bf16.msra.mxu0 %v1650
        %1748 = vmatprep.subr.bf16.mxu0 %v1653
        %1749 = vmatpush1.bf16.msra.mxu0 %v1652
        %1750 = vmatprep.subr.bf16.mxu0 %v1655
        %1751 = vmatpush1.bf16.msra.mxu0 %v1654
        %1752 = vmatprep.subr.bf16.mxu0 %v1657
        %1753 = vmatpush1.bf16.msra.mxu0 %v1656
        %1754 = vmatprep.subr.bf16.mxu0 %v1659
        %1755 = vmatpush1.bf16.msra.mxu0 %v1658
        %1756 = vmatprep.mubr.bf16.mxu0 %v1126
        %1757 = vmatmul.mubr.bf16.gmra.mrb[0].mxu0 %v1034
        %v1758 = vpop.f32.mrb[0].mxu0
        %v1759 = vadd.f32 0.0, %v1758
        %v1760 = vpop.f32.mrb[0].mxu0
        %v1761 = vadd.f32 0.0, %v1760
        %v1762 = vpop.f32.mrb[0].mxu0
        %v1763 = vadd.f32 0.0, %v1762
        %v1764 = vpop.f32.mrb[0].mxu0
        %v1765 = vadd.f32 0.0, %v1764
        %1766 = vmatprep.mubr.bf16.mxu0 %v1138
        %1767 = vmatmul.mubr.bf16.gmra.mrb[0].mxu0 %v1035
        %v1768 = vpop.f32.mrb[0].mxu0
        %v1769 = vadd.f32 0.0, %v1768
        %v1770 = vpop.f32.mrb[0].mxu0
        %v1771 = vadd.f32 0.0, %v1770
        %v1772 = vpop.f32.mrb[0].mxu0
        %v1773 = vadd.f32 0.0, %v1772
        %v1774 = vpop.f32.mrb[0].mxu0
        %v1775 = vadd.f32 0.0, %v1774
        %1776 = vmatprep.mubr.bf16.mxu0 %v1150
        %1777 = vmatmul.mubr.bf16.gmra.mrb[0].mxu0 %v1036
        %v1778 = vpop.f32.mrb[0].mxu0
        %v1779 = vadd.f32 0.0, %v1778
        %v1780 = vpop.f32.mrb[0].mxu0
        %v1781 = vadd.f32 0.0, %v1780
        %v1782 = vpop.f32.mrb[0].mxu0
        %v1783 = vadd.f32 0.0, %v1782
        %v1784 = vpop.f32.mrb[0].mxu0
        %v1785 = vadd.f32 0.0, %v1784
        %1786 = vmatprep.mubr.bf16.mxu0 %v1162
        %1787 = vmatmul.mubr.bf16.gmra.mrb[0].mxu0 %v1037
        %v1788 = vpop.f32.mrb[0].mxu0
        %v1789 = vadd.f32 0.0, %v1788
        %v1790 = vpop.f32.mrb[0].mxu0
        %v1791 = vadd.f32 0.0, %v1790
        %v1792 = vpop.f32.mrb[0].mxu0
        %v1793 = vadd.f32 0.0, %v1792
        %v1794 = vpop.f32.mrb[0].mxu0
        %v1795 = vadd.f32 0.0, %v1794
        %1796 = vmatprep.mubr.bf16.mxu0 %v1174
        %1797 = vmatmul.mubr.bf16.gmra.mrb[0].mxu0 %v1038
        %v1798 = vpop.f32.mrb[0].mxu0
        %v1799 = vadd.f32 0.0, %v1798
        %v1800 = vpop.f32.mrb[0].mxu0
        %v1801 = vadd.f32 0.0, %v1800
        %v1802 = vpop.f32.mrb[0].mxu0
        %v1803 = vadd.f32 0.0, %v1802
        %v1804 = vpop.f32.mrb[0].mxu0
        %v1805 = vadd.f32 0.0, %v1804
        %1806 = vmatprep.mubr.bf16.mxu0 %v1186
        %1807 = vmatmul.mubr.bf16.gmra.mrb[0].mxu0 %v1039
        %v1808 = vpop.f32.mrb[0].mxu0
        %v1809 = vadd.f32 0.0, %v1808
        %v1810 = vpop.f32.mrb[0].mxu0
        %v1811 = vadd.f32 0.0, %v1810
        %v1812 = vpop.f32.mrb[0].mxu0
        %v1813 = vadd.f32 0.0, %v1812
        %v1814 = vpop.f32.mrb[0].mxu0
        %v1815 = vadd.f32 0.0, %v1814
        %1816 = vmatprep.mubr.bf16.mxu0 %v1198
        %1817 = vmatmul.mubr.bf16.gmra.mrb[0].mxu0 %v1040
        %v1818 = vpop.f32.mrb[0].mxu0
        %v1819 = vadd.f32 0.0, %v1818
        %v1820 = vpop.f32.mrb[0].mxu0
        %v1821 = vadd.f32 0.0, %v1820
        %v1822 = vpop.f32.mrb[0].mxu0
        %v1823 = vadd.f32 0.0, %v1822
        %v1824 = vpop.f32.mrb[0].mxu0
        %v1825 = vadd.f32 0.0, %v1824
        %1826 = vmatprep.mubr.bf16.mxu0 %v1210
        %1827 = vmatmul.mubr.bf16.gmra.mrb[0].mxu0 %v1041
        %v1828 = vpop.f32.mrb[0].mxu0
        %v1829 = vadd.f32 0.0, %v1828
        %v1830 = vpop.f32.mrb[0].mxu0
        %v1831 = vadd.f32 0.0, %v1830
        %v1832 = vpop.f32.mrb[0].mxu0
        %v1833 = vadd.f32 0.0, %v1832
        %v1834 = vpop.f32.mrb[0].mxu0
        %v1835 = vadd.f32 0.0, %v1834
        %1836 = vmatprep.mubr.bf16.mxu0 %v1222
        %1837 = vmatmul.mubr.bf16.gmra.mrb[0].mxu0 %v1042
        %v1838 = vpop.f32.mrb[0].mxu0
        %v1839 = vadd.f32 0.0, %v1838
        %v1840 = vpop.f32.mrb[0].mxu0
        %v1841 = vadd.f32 0.0, %v1840
        %v1842 = vpop.f32.mrb[0].mxu0
        %v1843 = vadd.f32 0.0, %v1842
        %v1844 = vpop.f32.mrb[0].mxu0
        %v1845 = vadd.f32 0.0, %v1844
        %1846 = vmatprep.mubr.bf16.mxu0 %v1234
        %1847 = vmatmul.mubr.bf16.gmra.mrb[0].mxu0 %v1043
        %v1848 = vpop.f32.mrb[0].mxu0
        %v1849 = vadd.f32 0.0, %v1848
        %v1850 = vpop.f32.mrb[0].mxu0
        %v1851 = vadd.f32 0.0, %v1850
        %v1852 = vpop.f32.mrb[0].mxu0
        %v1853 = vadd.f32 0.0, %v1852
        %v1854 = vpop.f32.mrb[0].mxu0
        %v1855 = vadd.f32 0.0, %v1854
        %1856 = vmatprep.mubr.bf16.mxu0 %v1246
        %1857 = vmatmul.mubr.bf16.gmra.mrb[0].mxu0 %v1044
        %v1858 = vpop.f32.mrb[0].mxu0
        %v1859 = vadd.f32 0.0, %v1858
        %v1860 = vpop.f32.mrb[0].mxu0
        %v1861 = vadd.f32 0.0, %v1860
        %v1862 = vpop.f32.mrb[0].mxu0
        %v1863 = vadd.f32 0.0, %v1862
        %v1864 = vpop.f32.mrb[0].mxu0
        %v1865 = vadd.f32 0.0, %v1864
        %1866 = vmatprep.mubr.bf16.mxu0 %v1258
        %1867 = vmatmul.mubr.bf16.gmra.mrb[0].mxu0 %v1045
        %v1868 = vpop.f32.mrb[0].mxu0
        %v1869 = vadd.f32 0.0, %v1868
        %v1870 = vpop.f32.mrb[0].mxu0
        %v1871 = vadd.f32 0.0, %v1870
        %v1872 = vpop.f32.mrb[0].mxu0
        %v1873 = vadd.f32 0.0, %v1872
        %v1874 = vpop.f32.mrb[0].mxu0
        %v1875 = vadd.f32 0.0, %v1874
        %1876 = vmatprep.mubr.bf16.mxu0 %v1270
        %1877 = vmatmul.mubr.bf16.gmra.mrb[0].mxu0 %v1046
        %v1878 = vpop.f32.mrb[0].mxu0
        %v1879 = vadd.f32 0.0, %v1878
        %v1880 = vpop.f32.mrb[0].mxu0
        %v1881 = vadd.f32 0.0, %v1880
        %v1882 = vpop.f32.mrb[0].mxu0
        %v1883 = vadd.f32 0.0, %v1882
        %v1884 = vpop.f32.mrb[0].mxu0
        %v1885 = vadd.f32 0.0, %v1884
        %1886 = vmatprep.mubr.bf16.mxu0 %v1282
        %1887 = vmatmul.mubr.bf16.gmra.mrb[0].mxu0 %v1047
        %v1888 = vpop.f32.mrb[0].mxu0
        %v1889 = vadd.f32 0.0, %v1888
        %v1890 = vpop.f32.mrb[0].mxu0
        %v1891 = vadd.f32 0.0, %v1890
        %v1892 = vpop.f32.mrb[0].mxu0
        %v1893 = vadd.f32 0.0, %v1892
        %v1894 = vpop.f32.mrb[0].mxu0
        %v1895 = vadd.f32 0.0, %v1894
        %1896 = vmatprep.mubr.bf16.mxu0 %v1294
        %1897 = vmatmul.mubr.bf16.gmra.mrb[0].mxu0 %v1048
        %v1898 = vpop.f32.mrb[0].mxu0
        %v1899 = vadd.f32 0.0, %v1898
        %v1900 = vpop.f32.mrb[0].mxu0
        %v1901 = vadd.f32 0.0, %v1900
        %v1902 = vpop.f32.mrb[0].mxu0
        %v1903 = vadd.f32 0.0, %v1902
        %v1904 = vpop.f32.mrb[0].mxu0
        %v1905 = vadd.f32 0.0, %v1904
        %1906 = vmatprep.mubr.bf16.mxu0 %v1306
        %1907 = vmatmul.mubr.bf16.gmra.mrb[0].mxu0 %v1049
        %v1908 = vpop.f32.mrb[0].mxu0
        %v1909 = vadd.f32 0.0, %v1908
        %v1910 = vpop.f32.mrb[0].mxu0
        %v1911 = vadd.f32 0.0, %v1910
        %v1912 = vpop.f32.mrb[0].mxu0
        %v1913 = vadd.f32 0.0, %v1912
        %v1914 = vpop.f32.mrb[0].mxu0
        %v1915 = vadd.f32 0.0, %v1914
        %1916 = vdwg.mxu0
        %1917 = vmatprep.subr.bf16.mxu0 %v1661
        %1918 = vmatpush1.bf16.msra.mxu0 %v1660
        %1919 = vmatprep.subr.bf16.mxu0 %v1663
        %1920 = vmatpush1.bf16.msra.mxu0 %v1662
        %1921 = vmatprep.subr.bf16.mxu0 %v1665
        %1922 = vmatpush1.bf16.msra.mxu0 %v1664
        %1923 = vmatprep.subr.bf16.mxu0 %v1667
        %1924 = vmatpush1.bf16.msra.mxu0 %v1666
        %1925 = vmatprep.subr.bf16.mxu0 %v1669
        %1926 = vmatpush1.bf16.msra.mxu0 %v1668
        %1927 = vmatprep.subr.bf16.mxu0 %v1671
        %1928 = vmatpush1.bf16.msra.mxu0 %v1670
        %1929 = vmatprep.subr.bf16.mxu0 %v1673
        %1930 = vmatpush1.bf16.msra.mxu0 %v1672
        %1931 = vmatprep.subr.bf16.mxu0 %v1675
        %1932 = vmatpush1.bf16.msra.mxu0 %v1674
        %1933 = vmatprep.subr.bf16.mxu0 0
        %1934 = vmatpush1.bf16.msra.mxu0 0
        %1935 = vmatprep.subr.bf16.mxu0 0
        %1936 = vmatpush1.bf16.msra.mxu0 0
        %1937 = vmatprep.subr.bf16.mxu0 0
        %1938 = vmatpush1.bf16.msra.mxu0 0
        %1939 = vmatprep.subr.bf16.mxu0 0
        %1940 = vmatpush1.bf16.msra.mxu0 0
        %1941 = vmatprep.subr.bf16.mxu0 0
        %1942 = vmatpush1.bf16.msra.mxu0 0
        %1943 = vmatprep.subr.bf16.mxu0 0
        %1944 = vmatpush1.bf16.msra.mxu0 0
        %1945 = vmatprep.subr.bf16.mxu0 0
        %1946 = vmatpush1.bf16.msra.mxu0 0
        %1947 = vmatprep.subr.bf16.mxu0 0
        %1948 = vmatpush1.bf16.msra.mxu0 0
        %1949 = vmatprep.mubr.bf16.mxu0 0
        %1950 = vmatmul.mubr.bf16.gmra.mrb[0].mxu0 %v1374
        %v1951 = vpop.f32.mrb[0].mxu0
        %v1952 = vadd.f32 %v1759, %v1951
        %v1953 = vpop.f32.mrb[0].mxu0
        %v1954 = vadd.f32 %v1761, %v1953
        %v1955 = vpop.f32.mrb[0].mxu0
        %v1956 = vadd.f32 %v1763, %v1955
        %v1957 = vpop.f32.mrb[0].mxu0
        %v1958 = vadd.f32 %v1765, %v1957
        %1959 = vmatprep.mubr.bf16.mxu0 0
        %1960 = vmatmul.mubr.bf16.gmra.mrb[0].mxu0 %v1377
        %v1961 = vpop.f32.mrb[0].mxu0
        %v1962 = vadd.f32 %v1769, %v1961
        %v1963 = vpop.f32.mrb[0].mxu0
        %v1964 = vadd.f32 %v1771, %v1963
        %v1965 = vpop.f32.mrb[0].mxu0
        %v1966 = vadd.f32 %v1773, %v1965
        %v1967 = vpop.f32.mrb[0].mxu0
        %v1968 = vadd.f32 %v1775, %v1967
        %1969 = vmatprep.mubr.bf16.mxu0 0
        %1970 = vmatmul.mubr.bf16.gmra.mrb[0].mxu0 %v1380
        %v1971 = vpop.f32.mrb[0].mxu0
        %v1972 = vadd.f32 %v1779, %v1971
        %v1973 = vpop.f32.mrb[0].mxu0
        %v1974 = vadd.f32 %v1781, %v1973
        %v1975 = vpop.f32.mrb[0].mxu0
        %v1976 = vadd.f32 %v1783, %v1975
        %v1977 = vpop.f32.mrb[0].mxu0
        %v1978 = vadd.f32 %v1785, %v1977
        %1979 = vmatprep.mubr.bf16.mxu0 0
        %1980 = vmatmul.mubr.bf16.gmra.mrb[0].mxu0 %v1383
        %v1981 = vpop.f32.mrb[0].mxu0
        %v1982 = vadd.f32 %v1789, %v1981
        %v1983 = vpop.f32.mrb[0].mxu0
        %v1984 = vadd.f32 %v1791, %v1983
        %v1985 = vpop.f32.mrb[0].mxu0
        %v1986 = vadd.f32 %v1793, %v1985
        %v1987 = vpop.f32.mrb[0].mxu0
        %v1988 = vadd.f32 %v1795, %v1987
        %1989 = vmatprep.mubr.bf16.mxu0 0
        %1990 = vmatmul.mubr.bf16.gmra.mrb[0].mxu0 %v1386
        %v1991 = vpop.f32.mrb[0].mxu0
        %v1992 = vadd.f32 %v1799, %v1991
        %v1993 = vpop.f32.mrb[0].mxu0
        %v1994 = vadd.f32 %v1801, %v1993
        %v1995 = vpop.f32.mrb[0].mxu0
        %v1996 = vadd.f32 %v1803, %v1995
        %v1997 = vpop.f32.mrb[0].mxu0
        %v1998 = vadd.f32 %v1805, %v1997
        %1999 = vmatprep.mubr.bf16.mxu0 0
        %2000 = vmatmul.mubr.bf16.gmra.mrb[0].mxu0 %v1389
        %v2001 = vpop.f32.mrb[0].mxu0
        %v2002 = vadd.f32 %v1809, %v2001
        %v2003 = vpop.f32.mrb[0].mxu0
        %v2004 = vadd.f32 %v1811, %v2003
        %v2005 = vpop.f32.mrb[0].mxu0
        %v2006 = vadd.f32 %v1813, %v2005
        %v2007 = vpop.f32.mrb[0].mxu0
        %v2008 = vadd.f32 %v1815, %v2007
        %2009 = vmatprep.mubr.bf16.mxu0 0
        %2010 = vmatmul.mubr.bf16.gmra.mrb[0].mxu0 %v1392
        %v2011 = vpop.f32.mrb[0].mxu0
        %v2012 = vadd.f32 %v1819, %v2011
        %v2013 = vpop.f32.mrb[0].mxu0
        %v2014 = vadd.f32 %v1821, %v2013
        %v2015 = vpop.f32.mrb[0].mxu0
        %v2016 = vadd.f32 %v1823, %v2015
        %v2017 = vpop.f32.mrb[0].mxu0
        %v2018 = vadd.f32 %v1825, %v2017
        %2019 = vmatprep.mubr.bf16.mxu0 0
        %2020 = vmatmul.mubr.bf16.gmra.mrb[0].mxu0 %v1395
        %v2021 = vpop.f32.mrb[0].mxu0
        %v2022 = vadd.f32 %v1829, %v2021
        %v2023 = vpop.f32.mrb[0].mxu0
        %v2024 = vadd.f32 %v1831, %v2023
        %v2025 = vpop.f32.mrb[0].mxu0
        %v2026 = vadd.f32 %v1833, %v2025
        %v2027 = vpop.f32.mrb[0].mxu0
        %v2028 = vadd.f32 %v1835, %v2027
        %2029 = vmatprep.mubr.bf16.mxu0 0
        %2030 = vmatmul.mubr.bf16.gmra.mrb[0].mxu0 %v1398
        %v2031 = vpop.f32.mrb[0].mxu0
        %v2032 = vadd.f32 %v1839, %v2031
        %v2033 = vpop.f32.mrb[0].mxu0
        %v2034 = vadd.f32 %v1841, %v2033
        %v2035 = vpop.f32.mrb[0].mxu0
        %v2036 = vadd.f32 %v1843, %v2035
        %v2037 = vpop.f32.mrb[0].mxu0
        %v2038 = vadd.f32 %v1845, %v2037
        %2039 = vmatprep.mubr.bf16.mxu0 0
        %2040 = vmatmul.mubr.bf16.gmra.mrb[0].mxu0 %v1401
        %v2041 = vpop.f32.mrb[0].mxu0
        %v2042 = vadd.f32 %v1849, %v2041
        %v2043 = vpop.f32.mrb[0].mxu0
        %v2044 = vadd.f32 %v1851, %v2043
        %v2045 = vpop.f32.mrb[0].mxu0
        %v2046 = vadd.f32 %v1853, %v2045
        %v2047 = vpop.f32.mrb[0].mxu0
        %v2048 = vadd.f32 %v1855, %v2047
        %2049 = vmatprep.mubr.bf16.mxu0 0
        %2050 = vmatmul.mubr.bf16.gmra.mrb[0].mxu0 %v1404
        %v2051 = vpop.f32.mrb[0].mxu0
        %v2052 = vadd.f32 %v1859, %v2051
        %v2053 = vpop.f32.mrb[0].mxu0
        %v2054 = vadd.f32 %v1861, %v2053
        %v2055 = vpop.f32.mrb[0].mxu0
        %v2056 = vadd.f32 %v1863, %v2055
        %v2057 = vpop.f32.mrb[0].mxu0
        %v2058 = vadd.f32 %v1865, %v2057
        %2059 = vmatprep.mubr.bf16.mxu0 0
        %2060 = vmatmul.mubr.bf16.gmra.mrb[0].mxu0 %v1407
        %v2061 = vpop.f32.mrb[0].mxu0
        %v2062 = vadd.f32 %v1869, %v2061
        %v2063 = vpop.f32.mrb[0].mxu0
        %v2064 = vadd.f32 %v1871, %v2063
        %v2065 = vpop.f32.mrb[0].mxu0
        %v2066 = vadd.f32 %v1873, %v2065
        %v2067 = vpop.f32.mrb[0].mxu0
        %v2068 = vadd.f32 %v1875, %v2067
        %2069 = vmatprep.mubr.bf16.mxu0 0
        %2070 = vmatmul.mubr.bf16.gmra.mrb[0].mxu0 %v1410
        %v2071 = vpop.f32.mrb[0].mxu0
        %v2072 = vadd.f32 %v1879, %v2071
        %v2073 = vpop.f32.mrb[0].mxu0
        %v2074 = vadd.f32 %v1881, %v2073
        %v2075 = vpop.f32.mrb[0].mxu0
        %v2076 = vadd.f32 %v1883, %v2075
        %v2077 = vpop.f32.mrb[0].mxu0
        %v2078 = vadd.f32 %v1885, %v2077
        %2079 = vmatprep.mubr.bf16.mxu0 0
        %2080 = vmatmul.mubr.bf16.gmra.mrb[0].mxu0 %v1413
        %v2081 = vpop.f32.mrb[0].mxu0
        %v2082 = vadd.f32 %v1889, %v2081
        %v2083 = vpop.f32.mrb[0].mxu0
        %v2084 = vadd.f32 %v1891, %v2083
        %v2085 = vpop.f32.mrb[0].mxu0
        %v2086 = vadd.f32 %v1893, %v2085
        %v2087 = vpop.f32.mrb[0].mxu0
        %v2088 = vadd.f32 %v1895, %v2087
        %2089 = vmatprep.mubr.bf16.mxu0 0
        %2090 = vmatmul.mubr.bf16.gmra.mrb[0].mxu0 %v1416
        %v2091 = vpop.f32.mrb[0].mxu0
        %v2092 = vadd.f32 %v1899, %v2091
        %v2093 = vpop.f32.mrb[0].mxu0
        %v2094 = vadd.f32 %v1901, %v2093
        %v2095 = vpop.f32.mrb[0].mxu0
        %v2096 = vadd.f32 %v1903, %v2095
        %v2097 = vpop.f32.mrb[0].mxu0
        %v2098 = vadd.f32 %v1905, %v2097
        %2099 = vmatprep.mubr.bf16.mxu0 0
        %2100 = vmatmul.mubr.bf16.gmra.mrb[0].mxu0 %v1419
        %v2101 = vpop.f32.mrb[0].mxu0
        %v2102 = vadd.f32 %v1909, %v2101
        %v2103 = vpop.f32.mrb[0].mxu0
        %v2104 = vadd.f32 %v1911, %v2103
        %v2105 = vpop.f32.mrb[0].mxu0
        %v2106 = vadd.f32 %v1913, %v2105
        %v2107 = vpop.f32.mrb[0].mxu0
        %v2108 = vadd.f32 %v1915, %v2107
        %2109 = vdwg.mxu0
        %v2110 = vld [vmem:[#allocation2] sm:$0xf]
        %v2111 = vld [vmem:[#allocation2 + $0x4] sm:$0xf]
        %v2112 = vld [vmem:[#allocation2 + $0xc] sm:$0xf]
        %v2113 = vld [vmem:[#allocation2 + $0x10] sm:$0xf]
        %v2114 = vld [vmem:[#allocation2 + $0x18] sm:$0xf]
        %v2115 = vld [vmem:[#allocation2 + $0x1c] sm:$0xf]
        %v2116 = vld [vmem:[#allocation2 + $0x24] sm:$0xf]
        %v2117 = vld [vmem:[#allocation2 + $0x28] sm:$0xf]
        %v2118 = vld [vmem:[#allocation2 + $0x30] sm:$0xf]
        %v2119 = vld [vmem:[#allocation2 + $0x34] sm:$0xf]
        %v2120 = vld [vmem:[#allocation2 + $0x3c] sm:$0xf]
        %v2121 = vld [vmem:[#allocation2 + $0x40] sm:$0xf]
        %v2122 = vld [vmem:[#allocation2 + $0x48] sm:$0xf]
        %v2123 = vld [vmem:[#allocation2 + $0x4c] sm:$0xf]
        %v2124 = vld [vmem:[#allocation2 + $0x54] sm:$0xf]
        %v2125 = vld [vmem:[#allocation2 + $0x58] sm:$0xf]
        %v2126 = vld [vmem:[#allocation2 + $0x60] sm:$0xf]
        %v2127 = vld [vmem:[#allocation2 + $0x64] sm:$0xf]
        %v2128 = vld [vmem:[#allocation2 + $0x6c] sm:$0xf]
        %v2129 = vld [vmem:[#allocation2 + $0x70] sm:$0xf]
        %v2130 = vld [vmem:[#allocation2 + $0x78] sm:$0xf]
        %v2131 = vld [vmem:[#allocation2 + $0x7c] sm:$0xf]
        %v2132 = vld [vmem:[#allocation2 + $0x84] sm:$0xf]
        %v2133 = vld [vmem:[#allocation2 + $0x88] sm:$0xf]
        %v2134 = vld [vmem:[#allocation2 + $0x90] sm:$0xf]
        %v2135 = vld [vmem:[#allocation2 + $0x94] sm:$0xf]
        %v2136 = vld [vmem:[#allocation2 + $0x9c] sm:$0xf]
        %v2137 = vld [vmem:[#allocation2 + $0xa0] sm:$0xf]
        %v2138 = vld [vmem:[#allocation2 + $0xa8] sm:$0xf]
        %v2139 = vld [vmem:[#allocation2 + $0xac] sm:$0xf]
        %v2140 = vld [vmem:[#allocation2 + $0xb4] sm:$0xf]
        %v2141 = vld [vmem:[#allocation2 + $0xb8] sm:$0xf]
        %v2142 = vld [vmem:[#allocation2 + $0x8] sm:$0x1]
        %v2143 = vld [vmem:[#allocation2 + $0x14] sm:$0x1]
        %v2144 = vld [vmem:[#allocation2 + $0x20] sm:$0x1]
        %v2145 = vld [vmem:[#allocation2 + $0x2c] sm:$0x1]
        %v2146 = vld [vmem:[#allocation2 + $0x38] sm:$0x1]
        %v2147 = vld [vmem:[#allocation2 + $0x44] sm:$0x1]
        %v2148 = vld [vmem:[#allocation2 + $0x50] sm:$0x1]
        %v2149 = vld [vmem:[#allocation2 + $0x5c] sm:$0x1]
        %v2150 = vld [vmem:[#allocation2 + $0x68] sm:$0x1]
        %v2151 = vld [vmem:[#allocation2 + $0x74] sm:$0x1]
        %v2152 = vld [vmem:[#allocation2 + $0x80] sm:$0x1]
        %v2153 = vld [vmem:[#allocation2 + $0x8c] sm:$0x1]
        %v2154 = vld [vmem:[#allocation2 + $0x98] sm:$0x1]
        %v2155 = vld [vmem:[#allocation2 + $0xa4] sm:$0x1]
        %v2156 = vld [vmem:[#allocation2 + $0xb0] sm:$0x1]
        %v2157 = vld [vmem:[#allocation2 + $0xbc] sm:$0x1]
        %v2158 = vld [vmem:[#allocation2] sm:$0xe]
        %v2159 = vld [vmem:[#allocation2 + $0xc] sm:$0xe]
        %v2160 = vld [vmem:[#allocation2 + $0x18] sm:$0xe]
        %v2161 = vld [vmem:[#allocation2 + $0x24] sm:$0xe]
        %v2162 = vld [vmem:[#allocation2 + $0x30] sm:$0xe]
        %v2163 = vld [vmem:[#allocation2 + $0x3c] sm:$0xe]
        %v2164 = vld [vmem:[#allocation2 + $0x48] sm:$0xe]
        %v2165 = vld [vmem:[#allocation2 + $0x54] sm:$0xe]
        %v2166 = vld [vmem:[#allocation2 + $0x60] sm:$0xe]
        %v2167 = vld [vmem:[#allocation2 + $0x6c] sm:$0xe]
        %v2168 = vld [vmem:[#allocation2 + $0x78] sm:$0xe]
        %v2169 = vld [vmem:[#allocation2 + $0x84] sm:$0xe]
        %v2170 = vld [vmem:[#allocation2 + $0x90] sm:$0xe]
        %v2171 = vld [vmem:[#allocation2 + $0x9c] sm:$0xe]
        %v2172 = vld [vmem:[#allocation2 + $0xa8] sm:$0xe]
        %v2173 = vld [vmem:[#allocation2 + $0xb4] sm:$0xe]
        %v2206 = vunpack.c.l.b16 %v2110
        %v2207 = vunpack.c.l.b16 %v2111
        %v2208 = vunpack.c.l.b16 %v2112
        %v2209 = vunpack.c.l.b16 %v2113
        %v2210 = vunpack.c.l.b16 %v2114
        %v2211 = vunpack.c.l.b16 %v2115
        %v2212 = vunpack.c.l.b16 %v2116
        %v2213 = vunpack.c.l.b16 %v2117
        %v2214 = vunpack.c.l.b16 %v2118
        %v2215 = vunpack.c.l.b16 %v2119
        %v2216 = vunpack.c.l.b16 %v2120
        %v2217 = vunpack.c.l.b16 %v2121
        %v2218 = vunpack.c.l.b16 %v2122
        %v2219 = vunpack.c.l.b16 %v2123
        %v2220 = vunpack.c.l.b16 %v2124
        %v2221 = vunpack.c.l.b16 %v2125
        %v2222 = vunpack.c.l.b16 %v2126
        %v2223 = vunpack.c.l.b16 %v2127
        %v2224 = vunpack.c.l.b16 %v2128
        %v2225 = vunpack.c.l.b16 %v2129
        %v2226 = vunpack.c.l.b16 %v2130
        %v2227 = vunpack.c.l.b16 %v2131
        %v2228 = vunpack.c.l.b16 %v2132
        %v2229 = vunpack.c.l.b16 %v2133
        %v2230 = vunpack.c.l.b16 %v2134
        %v2231 = vunpack.c.l.b16 %v2135
        %v2232 = vunpack.c.l.b16 %v2136
        %v2233 = vunpack.c.l.b16 %v2137
        %v2234 = vunpack.c.l.b16 %v2138
        %v2235 = vunpack.c.l.b16 %v2139
        %v2236 = vunpack.c.l.b16 %v2140
        %v2237 = vunpack.c.l.b16 %v2141
        %v2238 = vpack.c.b16 %v2207, %v2206
        %v2239 = vpack.c.b16 %v2209, %v2208
        %v2240 = vpack.c.b16 %v2211, %v2210
        %v2241 = vpack.c.b16 %v2213, %v2212
        %v2242 = vpack.c.b16 %v2215, %v2214
        %v2243 = vpack.c.b16 %v2217, %v2216
        %v2244 = vpack.c.b16 %v2219, %v2218
        %v2245 = vpack.c.b16 %v2221, %v2220
        %v2246 = vpack.c.b16 %v2223, %v2222
        %v2247 = vpack.c.b16 %v2225, %v2224
        %v2248 = vpack.c.b16 %v2227, %v2226
        %v2249 = vpack.c.b16 %v2229, %v2228
        %v2250 = vpack.c.b16 %v2231, %v2230
        %v2251 = vpack.c.b16 %v2233, %v2232
        %v2252 = vpack.c.b16 %v2235, %v2234
        %v2253 = vpack.c.b16 %v2237, %v2236
        %v2286 = vunpack.c.l.b16 %v2142
        %v2287 = vunpack.c.l.b16 %v2143
        %v2288 = vunpack.c.l.b16 %v2144
        %v2289 = vunpack.c.l.b16 %v2145
        %v2290 = vunpack.c.l.b16 %v2146
        %v2291 = vunpack.c.l.b16 %v2147
        %v2292 = vunpack.c.l.b16 %v2148
        %v2293 = vunpack.c.l.b16 %v2149
        %v2294 = vunpack.c.l.b16 %v2150
        %v2295 = vunpack.c.l.b16 %v2151
        %v2296 = vunpack.c.l.b16 %v2152
        %v2297 = vunpack.c.l.b16 %v2153
        %v2298 = vunpack.c.l.b16 %v2154
        %v2299 = vunpack.c.l.b16 %v2155
        %v2300 = vunpack.c.l.b16 %v2156
        %v2301 = vunpack.c.l.b16 %v2157
        %v2302 = vpack.c.b16 %v2286, %v2286
        %v2303 = vpack.c.b16 %v2287, %v2287
        %v2304 = vpack.c.b16 %v2288, %v2288
        %v2305 = vpack.c.b16 %v2289, %v2289
        %v2306 = vpack.c.b16 %v2290, %v2290
        %v2307 = vpack.c.b16 %v2291, %v2291
        %v2308 = vpack.c.b16 %v2292, %v2292
        %v2309 = vpack.c.b16 %v2293, %v2293
        %v2310 = vpack.c.b16 %v2294, %v2294
        %v2311 = vpack.c.b16 %v2295, %v2295
        %v2312 = vpack.c.b16 %v2296, %v2296
        %v2313 = vpack.c.b16 %v2297, %v2297
        %v2314 = vpack.c.b16 %v2298, %v2298
        %v2315 = vpack.c.b16 %v2299, %v2299
        %v2316 = vpack.c.b16 %v2300, %v2300
        %v2317 = vpack.c.b16 %v2301, %v2301
        %v2319 = vshrl.u32 %v2238, 16
        %v2321 = vshll.u32 %v2238, 16
        %v2323 = vrot.slane %v2321, 1
        %v2324 = vor.u32 %v2319, %v2323
        %v2326 = vshll.u32 %v2302, 16
        %v2328 = vrot.slane %v2326, 1
        %v2329 = vsel %vm1114, %v2324, %v2328
        %v2331 = vshrl.u32 %v2239, 16
        %v2333 = vshll.u32 %v2239, 16
        %v2335 = vrot.slane %v2333, 1
        %v2336 = vor.u32 %v2331, %v2335
        %v2338 = vshll.u32 %v2303, 16
        %v2340 = vrot.slane %v2338, 1
        %v2341 = vsel %vm1114, %v2336, %v2340
        %v2343 = vshrl.u32 %v2240, 16
        %v2345 = vshll.u32 %v2240, 16
        %v2347 = vrot.slane %v2345, 1
        %v2348 = vor.u32 %v2343, %v2347
        %v2350 = vshll.u32 %v2304, 16
        %v2352 = vrot.slane %v2350, 1
        %v2353 = vsel %vm1114, %v2348, %v2352
        %v2355 = vshrl.u32 %v2241, 16
        %v2357 = vshll.u32 %v2241, 16
        %v2359 = vrot.slane %v2357, 1
        %v2360 = vor.u32 %v2355, %v2359
        %v2362 = vshll.u32 %v2305, 16
        %v2364 = vrot.slane %v2362, 1
        %v2365 = vsel %vm1114, %v2360, %v2364
        %v2367 = vshrl.u32 %v2242, 16
        %v2369 = vshll.u32 %v2242, 16
        %v2371 = vrot.slane %v2369, 1
        %v2372 = vor.u32 %v2367, %v2371
        %v2374 = vshll.u32 %v2306, 16
        %v2376 = vrot.slane %v2374, 1
        %v2377 = vsel %vm1114, %v2372, %v2376
        %v2379 = vshrl.u32 %v2243, 16
        %v2381 = vshll.u32 %v2243, 16
        %v2383 = vrot.slane %v2381, 1
        %v2384 = vor.u32 %v2379, %v2383
        %v2386 = vshll.u32 %v2307, 16
        %v2388 = vrot.slane %v2386, 1
        %v2389 = vsel %vm1114, %v2384, %v2388
        %v2391 = vshrl.u32 %v2244, 16
        %v2393 = vshll.u32 %v2244, 16
        %v2395 = vrot.slane %v2393, 1
        %v2396 = vor.u32 %v2391, %v2395
        %v2398 = vshll.u32 %v2308, 16
        %v2400 = vrot.slane %v2398, 1
        %v2401 = vsel %vm1114, %v2396, %v2400
        %v2403 = vshrl.u32 %v2245, 16
        %v2405 = vshll.u32 %v2245, 16
        %v2407 = vrot.slane %v2405, 1
        %v2408 = vor.u32 %v2403, %v2407
        %v2410 = vshll.u32 %v2309, 16
        %v2412 = vrot.slane %v2410, 1
        %v2413 = vsel %vm1114, %v2408, %v2412
        %v2415 = vshrl.u32 %v2246, 16
        %v2417 = vshll.u32 %v2246, 16
        %v2419 = vrot.slane %v2417, 1
        %v2420 = vor.u32 %v2415, %v2419
        %v2422 = vshll.u32 %v2310, 16
        %v2424 = vrot.slane %v2422, 1
        %v2425 = vsel %vm1114, %v2420, %v2424
        %v2427 = vshrl.u32 %v2247, 16
        %v2429 = vshll.u32 %v2247, 16
        %v2431 = vrot.slane %v2429, 1
        %v2432 = vor.u32 %v2427, %v2431
        %v2434 = vshll.u32 %v2311, 16
        %v2436 = vrot.slane %v2434, 1
        %v2437 = vsel %vm1114, %v2432, %v2436
        %v2439 = vshrl.u32 %v2248, 16
        %v2441 = vshll.u32 %v2248, 16
        %v2443 = vrot.slane %v2441, 1
        %v2444 = vor.u32 %v2439, %v2443
        %v2446 = vshll.u32 %v2312, 16
        %v2448 = vrot.slane %v2446, 1
        %v2449 = vsel %vm1114, %v2444, %v2448
        %v2451 = vshrl.u32 %v2249, 16
        %v2453 = vshll.u32 %v2249, 16
        %v2455 = vrot.slane %v2453, 1
        %v2456 = vor.u32 %v2451, %v2455
        %v2458 = vshll.u32 %v2313, 16
        %v2460 = vrot.slane %v2458, 1
        %v2461 = vsel %vm1114, %v2456, %v2460
        %v2463 = vshrl.u32 %v2250, 16
        %v2465 = vshll.u32 %v2250, 16
        %v2467 = vrot.slane %v2465, 1
        %v2468 = vor.u32 %v2463, %v2467
        %v2470 = vshll.u32 %v2314, 16
        %v2472 = vrot.slane %v2470, 1
        %v2473 = vsel %vm1114, %v2468, %v2472
        %v2475 = vshrl.u32 %v2251, 16
        %v2477 = vshll.u32 %v2251, 16
        %v2479 = vrot.slane %v2477, 1
        %v2480 = vor.u32 %v2475, %v2479
        %v2482 = vshll.u32 %v2315, 16
        %v2484 = vrot.slane %v2482, 1
        %v2485 = vsel %vm1114, %v2480, %v2484
        %v2487 = vshrl.u32 %v2252, 16
        %v2489 = vshll.u32 %v2252, 16
        %v2491 = vrot.slane %v2489, 1
        %v2492 = vor.u32 %v2487, %v2491
        %v2494 = vshll.u32 %v2316, 16
        %v2496 = vrot.slane %v2494, 1
        %v2497 = vsel %vm1114, %v2492, %v2496
        %v2499 = vshrl.u32 %v2253, 16
        %v2501 = vshll.u32 %v2253, 16
        %v2503 = vrot.slane %v2501, 1
        %v2504 = vor.u32 %v2499, %v2503
        %v2506 = vshll.u32 %v2317, 16
        %v2508 = vrot.slane %v2506, 1
        %v2509 = vsel %vm1114, %v2504, %v2508
        %v2542 = vunpack.c.l.b16 %v2158
        %v2543 = vunpack.c.l.b16 %v2159
        %v2544 = vunpack.c.l.b16 %v2160
        %v2545 = vunpack.c.l.b16 %v2161
        %v2546 = vunpack.c.l.b16 %v2162
        %v2547 = vunpack.c.l.b16 %v2163
        %v2548 = vunpack.c.l.b16 %v2164
        %v2549 = vunpack.c.l.b16 %v2165
        %v2550 = vunpack.c.l.b16 %v2166
        %v2551 = vunpack.c.l.b16 %v2167
        %v2552 = vunpack.c.l.b16 %v2168
        %v2553 = vunpack.c.l.b16 %v2169
        %v2554 = vunpack.c.l.b16 %v2170
        %v2555 = vunpack.c.l.b16 %v2171
        %v2556 = vunpack.c.l.b16 %v2172
        %v2557 = vunpack.c.l.b16 %v2173
        %v2558 = vpack.c.b16 %v2207, %v2542
        %v2559 = vpack.c.b16 %v2209, %v2543
        %v2560 = vpack.c.b16 %v2211, %v2544
        %v2561 = vpack.c.b16 %v2213, %v2545
        %v2562 = vpack.c.b16 %v2215, %v2546
        %v2563 = vpack.c.b16 %v2217, %v2547
        %v2564 = vpack.c.b16 %v2219, %v2548
        %v2565 = vpack.c.b16 %v2221, %v2549
        %v2566 = vpack.c.b16 %v2223, %v2550
        %v2567 = vpack.c.b16 %v2225, %v2551
        %v2568 = vpack.c.b16 %v2227, %v2552
        %v2569 = vpack.c.b16 %v2229, %v2553
        %v2570 = vpack.c.b16 %v2231, %v2554
        %v2571 = vpack.c.b16 %v2233, %v2555
        %v2572 = vpack.c.b16 %v2235, %v2556
        %v2573 = vpack.c.b16 %v2237, %v2557
        %v2574 = vrot.slane %v2558, 1
        %v2575 = vrot.slane %v2302, 1
        %v2576 = vsel %vm1371, %v2574, %v2575
        %v2577 = vrot.slane %v2559, 1
        %v2578 = vrot.slane %v2303, 1
        %v2579 = vsel %vm1371, %v2577, %v2578
        %v2580 = vrot.slane %v2560, 1
        %v2581 = vrot.slane %v2304, 1
        %v2582 = vsel %vm1371, %v2580, %v2581
        %v2583 = vrot.slane %v2561, 1
        %v2584 = vrot.slane %v2305, 1
        %v2585 = vsel %vm1371, %v2583, %v2584
        %v2586 = vrot.slane %v2562, 1
        %v2587 = vrot.slane %v2306, 1
        %v2588 = vsel %vm1371, %v2586, %v2587
        %v2589 = vrot.slane %v2563, 1
        %v2590 = vrot.slane %v2307, 1
        %v2591 = vsel %vm1371, %v2589, %v2590
        %v2592 = vrot.slane %v2564, 1
        %v2593 = vrot.slane %v2308, 1
        %v2594 = vsel %vm1371, %v2592, %v2593
        %v2595 = vrot.slane %v2565, 1
        %v2596 = vrot.slane %v2309, 1
        %v2597 = vsel %vm1371, %v2595, %v2596
        %v2598 = vrot.slane %v2566, 1
        %v2599 = vrot.slane %v2310, 1
        %v2600 = vsel %vm1371, %v2598, %v2599
        %v2601 = vrot.slane %v2567, 1
        %v2602 = vrot.slane %v2311, 1
        %v2603 = vsel %vm1371, %v2601, %v2602
        %v2604 = vrot.slane %v2568, 1
        %v2605 = vrot.slane %v2312, 1
        %v2606 = vsel %vm1371, %v2604, %v2605
        %v2607 = vrot.slane %v2569, 1
        %v2608 = vrot.slane %v2313, 1
        %v2609 = vsel %vm1371, %v2607, %v2608
        %v2610 = vrot.slane %v2570, 1
        %v2611 = vrot.slane %v2314, 1
        %v2612 = vsel %vm1371, %v2610, %v2611
        %v2613 = vrot.slane %v2571, 1
        %v2614 = vrot.slane %v2315, 1
        %v2615 = vsel %vm1371, %v2613, %v2614
        %v2616 = vrot.slane %v2572, 1
        %v2617 = vrot.slane %v2316, 1
        %v2618 = vsel %vm1371, %v2616, %v2617
        %v2619 = vrot.slane %v2573, 1
        %v2620 = vrot.slane %v2317, 1
        %v2621 = vsel %vm1371, %v2619, %v2620
        %v2638 = vld [vmem:[#allocation7] sm:$0xf]
        %v2639 = vld [vmem:[#allocation7 + $0x4] sm:$0xf]
        %v2640 = vld [vmem:[#allocation7 + $0x8] sm:$0xf]
        %v2641 = vld [vmem:[#allocation7 + $0xc] sm:$0xf]
        %v2642 = vld [vmem:[#allocation7 + $0x10] sm:$0xf]
        %v2643 = vld [vmem:[#allocation7 + $0x14] sm:$0xf]
        %v2644 = vld [vmem:[#allocation7 + $0x18] sm:$0xf]
        %v2645 = vld [vmem:[#allocation7 + $0x1c] sm:$0xf]
        %v2646 = vld [vmem:[#allocation7 + $0x20] sm:$0xf]
        %v2647 = vld [vmem:[#allocation7 + $0x24] sm:$0xf]
        %v2648 = vld [vmem:[#allocation7 + $0x28] sm:$0xf]
        %v2649 = vld [vmem:[#allocation7 + $0x2c] sm:$0xf]
        %v2650 = vld [vmem:[#allocation7 + $0x30] sm:$0xf]
        %v2651 = vld [vmem:[#allocation7 + $0x34] sm:$0xf]
        %v2652 = vld [vmem:[#allocation7 + $0x38] sm:$0xf]
        %v2653 = vld [vmem:[#allocation7 + $0x3c] sm:$0xf]
        %v2654 = vld [vmem:[#allocation7 + $0x40] sm:$0xf]
        %v2655 = vld [vmem:[#allocation7 + $0x44] sm:$0xf]
        %v2656 = vld [vmem:[#allocation7 + $0x48] sm:$0xf]
        %v2657 = vld [vmem:[#allocation7 + $0x4c] sm:$0xf]
        %v2658 = vld [vmem:[#allocation7 + $0x50] sm:$0xf]
        %v2659 = vld [vmem:[#allocation7 + $0x54] sm:$0xf]
        %v2660 = vld [vmem:[#allocation7 + $0x58] sm:$0xf]
        %v2661 = vld [vmem:[#allocation7 + $0x5c] sm:$0xf]
        %v2662 = vld [vmem:[#allocation7 + $0x60] sm:$0xf]
        %v2663 = vld [vmem:[#allocation7 + $0x64] sm:$0xf]
        %v2664 = vld [vmem:[#allocation7 + $0x68] sm:$0xf]
        %v2665 = vld [vmem:[#allocation7 + $0x6c] sm:$0xf]
        %v2666 = vld [vmem:[#allocation7 + $0x70] sm:$0xf]
        %v2667 = vld [vmem:[#allocation7 + $0x74] sm:$0xf]
        %v2668 = vld [vmem:[#allocation7 + $0x78] sm:$0xf]
        %v2669 = vld [vmem:[#allocation7 + $0x7c] sm:$0xf]
        %v2670 = vld [vmem:[#allocation7 + $0x80] sm:$0xf]
        %v2671 = vld [vmem:[#allocation7 + $0x84] sm:$0xf]
        %v2672 = vld [vmem:[#allocation7 + $0x88] sm:$0xf]
        %v2673 = vld [vmem:[#allocation7 + $0x8c] sm:$0xf]
        %v2674 = vld [vmem:[#allocation7 + $0x90] sm:$0xf]
        %v2675 = vld [vmem:[#allocation7 + $0x94] sm:$0xf]
        %v2676 = vld [vmem:[#allocation7 + $0x98] sm:$0xf]
        %v2677 = vld [vmem:[#allocation7 + $0x9c] sm:$0xf]
        %v2678 = vld [vmem:[#allocation7 + $0xa0] sm:$0xf]
        %v2679 = vld [vmem:[#allocation7 + $0xa4] sm:$0xf]
        %v2680 = vld [vmem:[#allocation7 + $0xa8] sm:$0xf]
        %v2681 = vld [vmem:[#allocation7 + $0xac] sm:$0xf]
        %v2682 = vld [vmem:[#allocation7 + $0xb0] sm:$0xf]
        %v2683 = vld [vmem:[#allocation7 + $0xb4] sm:$0xf]
        %v2684 = vld [vmem:[#allocation7 + $0xb8] sm:$0xf]
        %v2685 = vld [vmem:[#allocation7 + $0xbc] sm:$0xf]
        %v2734 = vunpack.c.l.b16 %v2638
        %v2735 = vunpack.c.l.b16 %v2639
        %v2736 = vunpack.c.l.b16 %v2640
        %v2737 = vunpack.c.l.b16 %v2641
        %v2738 = vunpack.c.l.b16 %v2642
        %v2739 = vunpack.c.l.b16 %v2643
        %v2740 = vunpack.c.l.b16 %v2644
        %v2741 = vunpack.c.l.b16 %v2645
        %v2742 = vunpack.c.l.b16 %v2646
        %v2743 = vunpack.c.l.b16 %v2647
        %v2744 = vunpack.c.l.b16 %v2648
        %v2745 = vunpack.c.l.b16 %v2649
        %v2746 = vunpack.c.l.b16 %v2650
        %v2747 = vunpack.c.l.b16 %v2651
        %v2748 = vunpack.c.l.b16 %v2652
        %v2749 = vunpack.c.l.b16 %v2653
        %v2750 = vunpack.c.l.b16 %v2654
        %v2751 = vunpack.c.l.b16 %v2655
        %v2752 = vunpack.c.l.b16 %v2656
        %v2753 = vunpack.c.l.b16 %v2657
        %v2754 = vunpack.c.l.b16 %v2658
        %v2755 = vunpack.c.l.b16 %v2659
        %v2756 = vunpack.c.l.b16 %v2660
        %v2757 = vunpack.c.l.b16 %v2661
        %v2758 = vunpack.c.l.b16 %v2662
        %v2759 = vunpack.c.l.b16 %v2663
        %v2760 = vunpack.c.l.b16 %v2664
        %v2761 = vunpack.c.l.b16 %v2665
        %v2762 = vunpack.c.l.b16 %v2666
        %v2763 = vunpack.c.l.b16 %v2667
        %v2764 = vunpack.c.l.b16 %v2668
        %v2765 = vunpack.c.l.b16 %v2669
        %v2766 = vunpack.c.l.b16 %v2670
        %v2767 = vunpack.c.l.b16 %v2671
        %v2768 = vunpack.c.l.b16 %v2672
        %v2769 = vunpack.c.l.b16 %v2673
        %v2770 = vunpack.c.l.b16 %v2674
        %v2771 = vunpack.c.l.b16 %v2675
        %v2772 = vunpack.c.l.b16 %v2676
        %v2773 = vunpack.c.l.b16 %v2677
        %v2774 = vunpack.c.l.b16 %v2678
        %v2775 = vunpack.c.l.b16 %v2679
        %v2776 = vunpack.c.l.b16 %v2680
        %v2777 = vunpack.c.l.b16 %v2681
        %v2778 = vunpack.c.l.b16 %v2682
        %v2779 = vunpack.c.l.b16 %v2683
        %v2780 = vunpack.c.l.b16 %v2684
        %v2781 = vunpack.c.l.b16 %v2685
        %v2782 = vpack.c.b16 %v2735, %v2734
        %v2783 = vpack.c.b16 %v2737, %v2736
        %v2784 = vpack.c.b16 %v2739, %v2738
        %v2785 = vpack.c.b16 %v2741, %v2740
        %v2786 = vpack.c.b16 %v2743, %v2742
        %v2787 = vpack.c.b16 %v2745, %v2744
        %v2788 = vpack.c.b16 %v2747, %v2746
        %v2789 = vpack.c.b16 %v2749, %v2748
        %v2790 = vpack.c.b16 %v2751, %v2750
        %v2791 = vpack.c.b16 %v2753, %v2752
        %v2792 = vpack.c.b16 %v2755, %v2754
        %v2793 = vpack.c.b16 %v2757, %v2756
        %v2794 = vpack.c.b16 %v2759, %v2758
        %v2795 = vpack.c.b16 %v2761, %v2760
        %v2796 = vpack.c.b16 %v2763, %v2762
        %v2797 = vpack.c.b16 %v2765, %v2764
        %v2798 = vpack.c.b16 %v2767, %v2766
        %v2799 = vpack.c.b16 %v2769, %v2768
        %v2800 = vpack.c.b16 %v2771, %v2770
        %v2801 = vpack.c.b16 %v2773, %v2772
        %v2802 = vpack.c.b16 %v2775, %v2774
        %v2803 = vpack.c.b16 %v2777, %v2776
        %v2804 = vpack.c.b16 %v2779, %v2778
        %v2805 = vpack.c.b16 %v2781, %v2780
        %2830 = vmatprep.subr.bf16.mxu0 0
        %2831 = vmatpush1.bf16.msra.mxu0 %v2782
        %2832 = vmatprep.subr.bf16.mxu0 0
        %2833 = vmatpush1.bf16.msra.mxu0 %v2783
        %2834 = vmatprep.subr.bf16.mxu0 0
        %2835 = vmatpush1.bf16.msra.mxu0 %v2784
        %2836 = vmatprep.subr.bf16.mxu0 0
        %2837 = vmatpush1.bf16.msra.mxu0 %v2785
        %2838 = vmatprep.subr.bf16.mxu0 0
        %2839 = vmatpush1.bf16.msra.mxu0 %v2786
        %2840 = vmatprep.subr.bf16.mxu0 0
        %2841 = vmatpush1.bf16.msra.mxu0 %v2787
        %2842 = vmatprep.subr.bf16.mxu0 0
        %2843 = vmatpush1.bf16.msra.mxu0 %v2788
        %2844 = vmatprep.subr.bf16.mxu0 0
        %2845 = vmatpush1.bf16.msra.mxu0 %v2789
        %2846 = vmatprep.subr.bf16.mxu0 0
        %2847 = vmatpush1.bf16.msra.mxu0 %v2790
        %2848 = vmatprep.subr.bf16.mxu0 0
        %2849 = vmatpush1.bf16.msra.mxu0 %v2791
        %2850 = vmatprep.subr.bf16.mxu0 0
        %2851 = vmatpush1.bf16.msra.mxu0 %v2792
        %2852 = vmatprep.subr.bf16.mxu0 0
        %2853 = vmatpush1.bf16.msra.mxu0 %v2793
        %2854 = vmatprep.subr.bf16.mxu0 0
        %2855 = vmatpush1.bf16.msra.mxu0 %v2794
        %2856 = vmatprep.subr.bf16.mxu0 0
        %2857 = vmatpush1.bf16.msra.mxu0 %v2795
        %2858 = vmatprep.subr.bf16.mxu0 0
        %2859 = vmatpush1.bf16.msra.mxu0 %v2796
        %2860 = vmatprep.subr.bf16.mxu0 0
        %2861 = vmatpush1.bf16.msra.mxu0 %v2797
        %2862 = vmatprep.mubr.bf16.mxu0 %v2329
        %2863 = vmatmul.mubr.bf16.gmra.mrb[0].mxu0 %v2238
        %v2864 = vpop.f32.mrb[0].mxu0
        %v2865 = vadd.f32 0.0, %v2864
        %v2866 = vpop.f32.mrb[0].mxu0
        %v2867 = vpop.f32.mrb[0].mxu0
        %v2868 = vadd.f32 0.0, %v2867
        %v2869 = vpop.f32.mrb[0].mxu0
        %2870 = vmatprep.mubr.bf16.mxu0 %v2341
        %2871 = vmatmul.mubr.bf16.gmra.mrb[0].mxu0 %v2239
        %v2872 = vpop.f32.mrb[0].mxu0
        %v2873 = vadd.f32 0.0, %v2872
        %v2874 = vpop.f32.mrb[0].mxu0
        %v2875 = vpop.f32.mrb[0].mxu0
        %v2876 = vadd.f32 0.0, %v2875
        %v2877 = vpop.f32.mrb[0].mxu0
        %2878 = vmatprep.mubr.bf16.mxu0 %v2353
        %2879 = vmatmul.mubr.bf16.gmra.mrb[0].mxu0 %v2240
        %v2880 = vpop.f32.mrb[0].mxu0
        %v2881 = vadd.f32 0.0, %v2880
        %v2882 = vpop.f32.mrb[0].mxu0
        %v2883 = vpop.f32.mrb[0].mxu0
        %v2884 = vadd.f32 0.0, %v2883
        %v2885 = vpop.f32.mrb[0].mxu0
        %2886 = vmatprep.mubr.bf16.mxu0 %v2365
        %2887 = vmatmul.mubr.bf16.gmra.mrb[0].mxu0 %v2241
        %v2888 = vpop.f32.mrb[0].mxu0
        %v2889 = vadd.f32 0.0, %v2888
        %v2890 = vpop.f32.mrb[0].mxu0
        %v2891 = vpop.f32.mrb[0].mxu0
        %v2892 = vadd.f32 0.0, %v2891
        %v2893 = vpop.f32.mrb[0].mxu0
        %2894 = vmatprep.mubr.bf16.mxu0 %v2377
        %2895 = vmatmul.mubr.bf16.gmra.mrb[0].mxu0 %v2242
        %v2896 = vpop.f32.mrb[0].mxu0
        %v2897 = vadd.f32 0.0, %v2896
        %v2898 = vpop.f32.mrb[0].mxu0
        %v2899 = vpop.f32.mrb[0].mxu0
        %v2900 = vadd.f32 0.0, %v2899
        %v2901 = vpop.f32.mrb[0].mxu0
        %2902 = vmatprep.mubr.bf16.mxu0 %v2389
        %2903 = vmatmul.mubr.bf16.gmra.mrb[0].mxu0 %v2243
        %v2904 = vpop.f32.mrb[0].mxu0
        %v2905 = vadd.f32 0.0, %v2904
        %v2906 = vpop.f32.mrb[0].mxu0
        %v2907 = vpop.f32.mrb[0].mxu0
        %v2908 = vadd.f32 0.0, %v2907
        %v2909 = vpop.f32.mrb[0].mxu0
        %2910 = vmatprep.mubr.bf16.mxu0 %v2401
        %2911 = vmatmul.mubr.bf16.gmra.mrb[0].mxu0 %v2244
        %v2912 = vpop.f32.mrb[0].mxu0
        %v2913 = vadd.f32 0.0, %v2912
        %v2914 = vpop.f32.mrb[0].mxu0
        %v2915 = vpop.f32.mrb[0].mxu0
        %v2916 = vadd.f32 0.0, %v2915
        %v2917 = vpop.f32.mrb[0].mxu0
        %2918 = vmatprep.mubr.bf16.mxu0 %v2413
        %2919 = vmatmul.mubr.bf16.gmra.mrb[0].mxu0 %v2245
        %v2920 = vpop.f32.mrb[0].mxu0
        %v2921 = vadd.f32 0.0, %v2920
        %v2922 = vpop.f32.mrb[0].mxu0
        %v2923 = vpop.f32.mrb[0].mxu0
        %v2924 = vadd.f32 0.0, %v2923
        %v2925 = vpop.f32.mrb[0].mxu0
        %2926 = vmatprep.mubr.bf16.mxu0 %v2425
        %2927 = vmatmul.mubr.bf16.gmra.mrb[0].mxu0 %v2246
        %v2928 = vpop.f32.mrb[0].mxu0
        %v2929 = vadd.f32 0.0, %v2928
        %v2930 = vpop.f32.mrb[0].mxu0
        %v2931 = vpop.f32.mrb[0].mxu0
        %v2932 = vadd.f32 0.0, %v2931
        %v2933 = vpop.f32.mrb[0].mxu0
        %2934 = vmatprep.mubr.bf16.mxu0 %v2437
        %2935 = vmatmul.mubr.bf16.gmra.mrb[0].mxu0 %v2247
        %v2936 = vpop.f32.mrb[0].mxu0
        %v2937 = vadd.f32 0.0, %v2936
        %v2938 = vpop.f32.mrb[0].mxu0
        %v2939 = vpop.f32.mrb[0].mxu0
        %v2940 = vadd.f32 0.0, %v2939
        %v2941 = vpop.f32.mrb[0].mxu0
        %2942 = vmatprep.mubr.bf16.mxu0 %v2449
        %2943 = vmatmul.mubr.bf16.gmra.mrb[0].mxu0 %v2248
        %v2944 = vpop.f32.mrb[0].mxu0
        %v2945 = vadd.f32 0.0, %v2944
        %v2946 = vpop.f32.mrb[0].mxu0
        %v2947 = vpop.f32.mrb[0].mxu0
        %v2948 = vadd.f32 0.0, %v2947
        %v2949 = vpop.f32.mrb[0].mxu0
        %2950 = vmatprep.mubr.bf16.mxu0 %v2461
        %2951 = vmatmul.mubr.bf16.gmra.mrb[0].mxu0 %v2249
        %v2952 = vpop.f32.mrb[0].mxu0
        %v2953 = vadd.f32 0.0, %v2952
        %v2954 = vpop.f32.mrb[0].mxu0
        %v2955 = vpop.f32.mrb[0].mxu0
        %v2956 = vadd.f32 0.0, %v2955
        %v2957 = vpop.f32.mrb[0].mxu0
        %2958 = vmatprep.mubr.bf16.mxu0 %v2473
        %2959 = vmatmul.mubr.bf16.gmra.mrb[0].mxu0 %v2250
        %v2960 = vpop.f32.mrb[0].mxu0
        %v2961 = vadd.f32 0.0, %v2960
        %v2962 = vpop.f32.mrb[0].mxu0
        %v2963 = vpop.f32.mrb[0].mxu0
        %v2964 = vadd.f32 0.0, %v2963
        %v2965 = vpop.f32.mrb[0].mxu0
        %2966 = vmatprep.mubr.bf16.mxu0 %v2485
        %2967 = vmatmul.mubr.bf16.gmra.mrb[0].mxu0 %v2251
        %v2968 = vpop.f32.mrb[0].mxu0
        %v2969 = vadd.f32 0.0, %v2968
        %v2970 = vpop.f32.mrb[0].mxu0
        %v2971 = vpop.f32.mrb[0].mxu0
        %v2972 = vadd.f32 0.0, %v2971
        %v2973 = vpop.f32.mrb[0].mxu0
        %2974 = vmatprep.mubr.bf16.mxu0 %v2497
        %2975 = vmatmul.mubr.bf16.gmra.mrb[0].mxu0 %v2252
        %v2976 = vpop.f32.mrb[0].mxu0
        %v2977 = vadd.f32 0.0, %v2976
        %v2978 = vpop.f32.mrb[0].mxu0
        %v2979 = vpop.f32.mrb[0].mxu0
        %v2980 = vadd.f32 0.0, %v2979
        %v2981 = vpop.f32.mrb[0].mxu0
        %2982 = vmatprep.mubr.bf16.mxu0 %v2509
        %2983 = vmatmul.mubr.bf16.gmra.mrb[0].mxu0 %v2253
        %v2984 = vpop.f32.mrb[0].mxu0
        %v2985 = vadd.f32 0.0, %v2984
        %v2986 = vpop.f32.mrb[0].mxu0
        %v2987 = vpop.f32.mrb[0].mxu0
        %v2988 = vadd.f32 0.0, %v2987
        %v2989 = vpop.f32.mrb[0].mxu0
        %2990 = vdwg.mxu0
        %2991 = vmatprep.subr.bf16.mxu0 0
        %2992 = vmatpush1.bf16.msra.mxu0 %v2798
        %2993 = vmatprep.subr.bf16.mxu0 0
        %2994 = vmatpush1.bf16.msra.mxu0 %v2799
        %2995 = vmatprep.subr.bf16.mxu0 0
        %2996 = vmatpush1.bf16.msra.mxu0 %v2800
        %2997 = vmatprep.subr.bf16.mxu0 0
        %2998 = vmatpush1.bf16.msra.mxu0 %v2801
        %2999 = vmatprep.subr.bf16.mxu0 0
        %3000 = vmatpush1.bf16.msra.mxu0 %v2802
        %3001 = vmatprep.subr.bf16.mxu0 0
        %3002 = vmatpush1.bf16.msra.mxu0 %v2803
        %3003 = vmatprep.subr.bf16.mxu0 0
        %3004 = vmatpush1.bf16.msra.mxu0 %v2804
        %3005 = vmatprep.subr.bf16.mxu0 0
        %3006 = vmatpush1.bf16.msra.mxu0 %v2805
        %3007 = vmatprep.subr.bf16.mxu0 0
        %3008 = vmatpush1.bf16.msra.mxu0 0
        %3009 = vmatprep.subr.bf16.mxu0 0
        %3010 = vmatpush1.bf16.msra.mxu0 0
        %3011 = vmatprep.subr.bf16.mxu0 0
        %3012 = vmatpush1.bf16.msra.mxu0 0
        %3013 = vmatprep.subr.bf16.mxu0 0
        %3014 = vmatpush1.bf16.msra.mxu0 0
        %3015 = vmatprep.subr.bf16.mxu0 0
        %3016 = vmatpush1.bf16.msra.mxu0 0
        %3017 = vmatprep.subr.bf16.mxu0 0
        %3018 = vmatpush1.bf16.msra.mxu0 0
        %3019 = vmatprep.subr.bf16.mxu0 0
        %3020 = vmatpush1.bf16.msra.mxu0 0
        %3021 = vmatprep.subr.bf16.mxu0 0
        %3022 = vmatpush1.bf16.msra.mxu0 0
        %3023 = vmatprep.mubr.bf16.mxu0 0
        %3024 = vmatmul.mubr.bf16.gmra.mrb[0].mxu0 %v2576
        %v3025 = vpop.f32.mrb[0].mxu0
        %v3026 = vadd.f32 %v2865, %v3025
        %v3027 = vpop.f32.mrb[0].mxu0
        %v3028 = vpop.f32.mrb[0].mxu0
        %v3029 = vadd.f32 %v2868, %v3028
        %v3030 = vpop.f32.mrb[0].mxu0
        %3031 = vmatprep.mubr.bf16.mxu0 0
        %3032 = vmatmul.mubr.bf16.gmra.mrb[0].mxu0 %v2579
        %v3033 = vpop.f32.mrb[0].mxu0
        %v3034 = vadd.f32 %v2873, %v3033
        %v3035 = vpop.f32.mrb[0].mxu0
        %v3036 = vpop.f32.mrb[0].mxu0
        %v3037 = vadd.f32 %v2876, %v3036
        %v3038 = vpop.f32.mrb[0].mxu0
        %3039 = vmatprep.mubr.bf16.mxu0 0
        %3040 = vmatmul.mubr.bf16.gmra.mrb[0].mxu0 %v2582
        %v3041 = vpop.f32.mrb[0].mxu0
        %v3042 = vadd.f32 %v2881, %v3041
        %v3043 = vpop.f32.mrb[0].mxu0
        %v3044 = vpop.f32.mrb[0].mxu0
        %v3045 = vadd.f32 %v2884, %v3044
        %v3046 = vpop.f32.mrb[0].mxu0
        %3047 = vmatprep.mubr.bf16.mxu0 0
        %3048 = vmatmul.mubr.bf16.gmra.mrb[0].mxu0 %v2585
        %v3049 = vpop.f32.mrb[0].mxu0
        %v3050 = vadd.f32 %v2889, %v3049
        %v3051 = vpop.f32.mrb[0].mxu0
        %v3052 = vpop.f32.mrb[0].mxu0
        %v3053 = vadd.f32 %v2892, %v3052
        %v3054 = vpop.f32.mrb[0].mxu0
        %3055 = vmatprep.mubr.bf16.mxu0 0
        %3056 = vmatmul.mubr.bf16.gmra.mrb[0].mxu0 %v2588
        %v3057 = vpop.f32.mrb[0].mxu0
        %v3058 = vadd.f32 %v2897, %v3057
        %v3059 = vpop.f32.mrb[0].mxu0
        %v3060 = vpop.f32.mrb[0].mxu0
        %v3061 = vadd.f32 %v2900, %v3060
        %v3062 = vpop.f32.mrb[0].mxu0
        %3063 = vmatprep.mubr.bf16.mxu0 0
        %3064 = vmatmul.mubr.bf16.gmra.mrb[0].mxu0 %v2591
        %v3065 = vpop.f32.mrb[0].mxu0
        %v3066 = vadd.f32 %v2905, %v3065
        %v3067 = vpop.f32.mrb[0].mxu0
        %v3068 = vpop.f32.mrb[0].mxu0
        %v3069 = vadd.f32 %v2908, %v3068
        %v3070 = vpop.f32.mrb[0].mxu0
        %3071 = vmatprep.mubr.bf16.mxu0 0
        %3072 = vmatmul.mubr.bf16.gmra.mrb[0].mxu0 %v2594
        %v3073 = vpop.f32.mrb[0].mxu0
        %v3074 = vadd.f32 %v2913, %v3073
        %v3075 = vpop.f32.mrb[0].mxu0
        %v3076 = vpop.f32.mrb[0].mxu0
        %v3077 = vadd.f32 %v2916, %v3076
        %v3078 = vpop.f32.mrb[0].mxu0
        %3079 = vmatprep.mubr.bf16.mxu0 0
        %3080 = vmatmul.mubr.bf16.gmra.mrb[0].mxu0 %v2597
        %v3081 = vpop.f32.mrb[0].mxu0
        %v3082 = vadd.f32 %v2921, %v3081
        %v3083 = vpop.f32.mrb[0].mxu0
        %v3084 = vpop.f32.mrb[0].mxu0
        %v3085 = vadd.f32 %v2924, %v3084
        %v3086 = vpop.f32.mrb[0].mxu0
        %3087 = vmatprep.mubr.bf16.mxu0 0
        %3088 = vmatmul.mubr.bf16.gmra.mrb[0].mxu0 %v2600
        %v3089 = vpop.f32.mrb[0].mxu0
        %v3090 = vadd.f32 %v2929, %v3089
        %v3091 = vpop.f32.mrb[0].mxu0
        %v3092 = vpop.f32.mrb[0].mxu0
        %v3093 = vadd.f32 %v2932, %v3092
        %v3094 = vpop.f32.mrb[0].mxu0
        %3095 = vmatprep.mubr.bf16.mxu0 0
        %3096 = vmatmul.mubr.bf16.gmra.mrb[0].mxu0 %v2603
        %v3097 = vpop.f32.mrb[0].mxu0
        %v3098 = vadd.f32 %v2937, %v3097
        %v3099 = vpop.f32.mrb[0].mxu0
        %v3100 = vpop.f32.mrb[0].mxu0
        %v3101 = vadd.f32 %v2940, %v3100
        %v3102 = vpop.f32.mrb[0].mxu0
        %3103 = vmatprep.mubr.bf16.mxu0 0
        %3104 = vmatmul.mubr.bf16.gmra.mrb[0].mxu0 %v2606
        %v3105 = vpop.f32.mrb[0].mxu0
        %v3106 = vadd.f32 %v2945, %v3105
        %v3107 = vpop.f32.mrb[0].mxu0
        %v3108 = vpop.f32.mrb[0].mxu0
        %v3109 = vadd.f32 %v2948, %v3108
        %v3110 = vpop.f32.mrb[0].mxu0
        %3111 = vmatprep.mubr.bf16.mxu0 0
        %3112 = vmatmul.mubr.bf16.gmra.mrb[0].mxu0 %v2609
        %v3113 = vpop.f32.mrb[0].mxu0
        %v3114 = vadd.f32 %v2953, %v3113
        %v3115 = vpop.f32.mrb[0].mxu0
        %v3116 = vpop.f32.mrb[0].mxu0
        %v3117 = vadd.f32 %v2956, %v3116
        %v3118 = vpop.f32.mrb[0].mxu0
        %3119 = vmatprep.mubr.bf16.mxu0 0
        %3120 = vmatmul.mubr.bf16.gmra.mrb[0].mxu0 %v2612
        %v3121 = vpop.f32.mrb[0].mxu0
        %v3122 = vadd.f32 %v2961, %v3121
        %v3123 = vpop.f32.mrb[0].mxu0
        %v3124 = vpop.f32.mrb[0].mxu0
        %v3125 = vadd.f32 %v2964, %v3124
        %v3126 = vpop.f32.mrb[0].mxu0
        %3127 = vmatprep.mubr.bf16.mxu0 0
        %3128 = vmatmul.mubr.bf16.gmra.mrb[0].mxu0 %v2615
        %v3129 = vpop.f32.mrb[0].mxu0
        %v3130 = vadd.f32 %v2969, %v3129
        %v3131 = vpop.f32.mrb[0].mxu0
        %v3132 = vpop.f32.mrb[0].mxu0
        %v3133 = vadd.f32 %v2972, %v3132
        %v3134 = vpop.f32.mrb[0].mxu0
        %3135 = vmatprep.mubr.bf16.mxu0 0
        %3136 = vmatmul.mubr.bf16.gmra.mrb[0].mxu0 %v2618
        %v3137 = vpop.f32.mrb[0].mxu0
        %v3138 = vadd.f32 %v2977, %v3137
        %v3139 = vpop.f32.mrb[0].mxu0
        %v3140 = vpop.f32.mrb[0].mxu0
        %v3141 = vadd.f32 %v2980, %v3140
        %v3142 = vpop.f32.mrb[0].mxu0
        %3143 = vmatprep.mubr.bf16.mxu0 0
        %3144 = vmatmul.mubr.bf16.gmra.mrb[0].mxu0 %v2621
        %v3145 = vpop.f32.mrb[0].mxu0
        %v3146 = vadd.f32 %v2985, %v3145
        %v3147 = vpop.f32.mrb[0].mxu0
        %v3148 = vpop.f32.mrb[0].mxu0
        %v3149 = vadd.f32 %v2988, %v3148
        %v3150 = vpop.f32.mrb[0].mxu0
        %3151 = vdwg.mxu0
        %v3152 = vadd.f32 %v1952, %v3026
        %v3153 = vadd.f32 %v1956, %v3029
        %v3154 = vadd.f32 %v1962, %v3034
        %v3155 = vadd.f32 %v1966, %v3037
        %v3156 = vadd.f32 %v1972, %v3042
        %v3157 = vadd.f32 %v1976, %v3045
        %v3158 = vadd.f32 %v1982, %v3050
        %v3159 = vadd.f32 %v1986, %v3053
        %v3160 = vadd.f32 %v1992, %v3058
        %v3161 = vadd.f32 %v1996, %v3061
        %v3162 = vadd.f32 %v2002, %v3066
        %v3163 = vadd.f32 %v2006, %v3069
        %v3164 = vadd.f32 %v2012, %v3074
        %v3165 = vadd.f32 %v2016, %v3077
        %v3166 = vadd.f32 %v2022, %v3082
        %v3167 = vadd.f32 %v2026, %v3085
        %v3168 = vadd.f32 %v2032, %v3090
        %v3169 = vadd.f32 %v2036, %v3093
        %v3170 = vadd.f32 %v2042, %v3098
        %v3171 = vadd.f32 %v2046, %v3101
        %v3172 = vadd.f32 %v2052, %v3106
        %v3173 = vadd.f32 %v2056, %v3109
        %v3174 = vadd.f32 %v2062, %v3114
        %v3175 = vadd.f32 %v2066, %v3117
        %v3176 = vadd.f32 %v2072, %v3122
        %v3177 = vadd.f32 %v2076, %v3125
        %v3178 = vadd.f32 %v2082, %v3130
        %v3179 = vadd.f32 %v2086, %v3133
        %v3180 = vadd.f32 %v2092, %v3138
        %v3181 = vadd.f32 %v2096, %v3141
        %v3182 = vadd.f32 %v2102, %v3146
        %v3183 = vadd.f32 %v2106, %v3149
        %s3184 = scalar_lea.vmem [#allocation2], 24
        %v3185 = vld [vmem:[%s3184] sm:$0xf]
        %v3186 = vld [vmem:[%s3184 + $0x4] sm:$0xf]
        %v3187 = vld [vmem:[%s3184 + $0xc] sm:$0xf]
        %v3188 = vld [vmem:[%s3184 + $0x10] sm:$0xf]
        %v3189 = vld [vmem:[%s3184 + $0x18] sm:$0xf]
        %v3190 = vld [vmem:[%s3184 + $0x1c] sm:$0xf]
        %v3191 = vld [vmem:[%s3184 + $0x24] sm:$0xf]
        %v3192 = vld [vmem:[%s3184 + $0x28] sm:$0xf]
        %v3193 = vld [vmem:[%s3184 + $0x30] sm:$0xf]
        %v3194 = vld [vmem:[%s3184 + $0x34] sm:$0xf]
        %v3195 = vld [vmem:[%s3184 + $0x3c] sm:$0xf]
        %v3196 = vld [vmem:[%s3184 + $0x40] sm:$0xf]
        %v3197 = vld [vmem:[%s3184 + $0x48] sm:$0xf]
        %v3198 = vld [vmem:[%s3184 + $0x4c] sm:$0xf]
        %v3199 = vld [vmem:[%s3184 + $0x54] sm:$0xf]
        %v3200 = vld [vmem:[%s3184 + $0x58] sm:$0xf]
        %v3201 = vld [vmem:[%s3184 + $0x60] sm:$0xf]
        %v3202 = vld [vmem:[%s3184 + $0x64] sm:$0xf]
        %v3203 = vld [vmem:[%s3184 + $0x6c] sm:$0xf]
        %v3204 = vld [vmem:[%s3184 + $0x70] sm:$0xf]
        %v3205 = vld [vmem:[%s3184 + $0x78] sm:$0xf]
        %v3206 = vld [vmem:[%s3184 + $0x7c] sm:$0xf]
        %v3207 = vld [vmem:[%s3184 + $0x84] sm:$0xf]
        %v3208 = vld [vmem:[%s3184 + $0x88] sm:$0xf]
        %v3209 = vld [vmem:[%s3184 + $0x90] sm:$0xf]
        %v3210 = vld [vmem:[%s3184 + $0x94] sm:$0xf]
        %v3211 = vld [vmem:[%s3184 + $0x9c] sm:$0xf]
        %v3212 = vld [vmem:[%s3184 + $0xa0] sm:$0xf]
        %v3213 = vld [vmem:[%s3184 + $0xa8] sm:$0xf]
        %v3214 = vld [vmem:[%s3184 + $0xac] sm:$0xf]
        %v3215 = vld [vmem:[%s3184 + $0xb4] sm:$0xf]
        %v3216 = vld [vmem:[%s3184 + $0xb8] sm:$0xf]
        %v3217 = vld [vmem:[%s3184 + $0x8] sm:$0x1]
        %v3218 = vld [vmem:[%s3184 + $0x14] sm:$0x1]
        %v3219 = vld [vmem:[%s3184 + $0x20] sm:$0x1]
        %v3220 = vld [vmem:[%s3184 + $0x2c] sm:$0x1]
        %v3221 = vld [vmem:[%s3184 + $0x38] sm:$0x1]
        %v3222 = vld [vmem:[%s3184 + $0x44] sm:$0x1]
        %v3223 = vld [vmem:[%s3184 + $0x50] sm:$0x1]
        %v3224 = vld [vmem:[%s3184 + $0x5c] sm:$0x1]
        %v3225 = vld [vmem:[%s3184 + $0x68] sm:$0x1]
        %v3226 = vld [vmem:[%s3184 + $0x74] sm:$0x1]
        %v3227 = vld [vmem:[%s3184 + $0x80] sm:$0x1]
        %v3228 = vld [vmem:[%s3184 + $0x8c] sm:$0x1]
        %v3229 = vld [vmem:[%s3184 + $0x98] sm:$0x1]
        %v3230 = vld [vmem:[%s3184 + $0xa4] sm:$0x1]
        %v3231 = vld [vmem:[%s3184 + $0xb0] sm:$0x1]
        %v3232 = vld [vmem:[%s3184 + $0xbc] sm:$0x1]
        %v3233 = vld [vmem:[%s3184] sm:$0xe]
        %v3234 = vld [vmem:[%s3184 + $0xc] sm:$0xe]
        %v3235 = vld [vmem:[%s3184 + $0x18] sm:$0xe]
        %v3236 = vld [vmem:[%s3184 + $0x24] sm:$0xe]
        %v3237 = vld [vmem:[%s3184 + $0x30] sm:$0xe]
        %v3238 = vld [vmem:[%s3184 + $0x3c] sm:$0xe]
        %v3239 = vld [vmem:[%s3184 + $0x48] sm:$0xe]
        %v3240 = vld [vmem:[%s3184 + $0x54] sm:$0xe]
        %v3241 = vld [vmem:[%s3184 + $0x60] sm:$0xe]
        %v3242 = vld [vmem:[%s3184 + $0x6c] sm:$0xe]
        %v3243 = vld [vmem:[%s3184 + $0x78] sm:$0xe]
        %v3244 = vld [vmem:[%s3184 + $0x84] sm:$0xe]
        %v3245 = vld [vmem:[%s3184 + $0x90] sm:$0xe]
        %v3246 = vld [vmem:[%s3184 + $0x9c] sm:$0xe]
        %v3247 = vld [vmem:[%s3184 + $0xa8] sm:$0xe]
        %v3248 = vld [vmem:[%s3184 + $0xb4] sm:$0xe]
        %v3281 = vunpack.c.l.b16 %v3185
        %v3282 = vunpack.c.l.b16 %v3186
        %v3283 = vunpack.c.l.b16 %v3187
        %v3284 = vunpack.c.l.b16 %v3188
        %v3285 = vunpack.c.l.b16 %v3189
        %v3286 = vunpack.c.l.b16 %v3190
        %v3287 = vunpack.c.l.b16 %v3191
        %v3288 = vunpack.c.l.b16 %v3192
        %v3289 = vunpack.c.l.b16 %v3193
        %v3290 = vunpack.c.l.b16 %v3194
        %v3291 = vunpack.c.l.b16 %v3195
        %v3292 = vunpack.c.l.b16 %v3196
        %v3293 = vunpack.c.l.b16 %v3197
        %v3294 = vunpack.c.l.b16 %v3198
        %v3295 = vunpack.c.l.b16 %v3199
        %v3296 = vunpack.c.l.b16 %v3200
        %v3297 = vunpack.c.l.b16 %v3201
        %v3298 = vunpack.c.l.b16 %v3202
        %v3299 = vunpack.c.l.b16 %v3203
        %v3300 = vunpack.c.l.b16 %v3204
        %v3301 = vunpack.c.l.b16 %v3205
        %v3302 = vunpack.c.l.b16 %v3206
        %v3303 = vunpack.c.l.b16 %v3207
        %v3304 = vunpack.c.l.b16 %v3208
        %v3305 = vunpack.c.l.b16 %v3209
        %v3306 = vunpack.c.l.b16 %v3210
        %v3307 = vunpack.c.l.b16 %v3211
        %v3308 = vunpack.c.l.b16 %v3212
        %v3309 = vunpack.c.l.b16 %v3213
        %v3310 = vunpack.c.l.b16 %v3214
        %v3311 = vunpack.c.l.b16 %v3215
        %v3312 = vunpack.c.l.b16 %v3216
        %v3313 = vpack.c.b16 %v3282, %v3281
        %v3314 = vpack.c.b16 %v3284, %v3283
        %v3315 = vpack.c.b16 %v3286, %v3285
        %v3316 = vpack.c.b16 %v3288, %v3287
        %v3317 = vpack.c.b16 %v3290, %v3289
        %v3318 = vpack.c.b16 %v3292, %v3291
        %v3319 = vpack.c.b16 %v3294, %v3293
        %v3320 = vpack.c.b16 %v3296, %v3295
        %v3321 = vpack.c.b16 %v3298, %v3297
        %v3322 = vpack.c.b16 %v3300, %v3299
        %v3323 = vpack.c.b16 %v3302, %v3301
        %v3324 = vpack.c.b16 %v3304, %v3303
        %v3325 = vpack.c.b16 %v3306, %v3305
        %v3326 = vpack.c.b16 %v3308, %v3307
        %v3327 = vpack.c.b16 %v3310, %v3309
        %v3328 = vpack.c.b16 %v3312, %v3311
        %v3361 = vunpack.c.l.b16 %v3217
        %v3362 = vunpack.c.l.b16 %v3218
        %v3363 = vunpack.c.l.b16 %v3219
        %v3364 = vunpack.c.l.b16 %v3220
        %v3365 = vunpack.c.l.b16 %v3221
        %v3366 = vunpack.c.l.b16 %v3222
        %v3367 = vunpack.c.l.b16 %v3223
        %v3368 = vunpack.c.l.b16 %v3224
        %v3369 = vunpack.c.l.b16 %v3225
        %v3370 = vunpack.c.l.b16 %v3226
        %v3371 = vunpack.c.l.b16 %v3227
        %v3372 = vunpack.c.l.b16 %v3228
        %v3373 = vunpack.c.l.b16 %v3229
        %v3374 = vunpack.c.l.b16 %v3230
        %v3375 = vunpack.c.l.b16 %v3231
        %v3376 = vunpack.c.l.b16 %v3232
        %v3377 = vpack.c.b16 %v3361, %v3361
        %v3378 = vpack.c.b16 %v3362, %v3362
        %v3379 = vpack.c.b16 %v3363, %v3363
        %v3380 = vpack.c.b16 %v3364, %v3364
        %v3381 = vpack.c.b16 %v3365, %v3365
        %v3382 = vpack.c.b16 %v3366, %v3366
        %v3383 = vpack.c.b16 %v3367, %v3367
        %v3384 = vpack.c.b16 %v3368, %v3368
        %v3385 = vpack.c.b16 %v3369, %v3369
        %v3386 = vpack.c.b16 %v3370, %v3370
        %v3387 = vpack.c.b16 %v3371, %v3371
        %v3388 = vpack.c.b16 %v3372, %v3372
        %v3389 = vpack.c.b16 %v3373, %v3373
        %v3390 = vpack.c.b16 %v3374, %v3374
        %v3391 = vpack.c.b16 %v3375, %v3375
        %v3392 = vpack.c.b16 %v3376, %v3376
        %v3394 = vshrl.u32 %v3313, 16
        %v3396 = vshll.u32 %v3313, 16
        %v3398 = vrot.slane %v3396, 1
        %v3399 = vor.u32 %v3394, %v3398
        %v3401 = vshll.u32 %v3377, 16
        %v3403 = vrot.slane %v3401, 1
        %v3404 = vsel %vm1114, %v3399, %v3403
        %v3406 = vshrl.u32 %v3314, 16
        %v3408 = vshll.u32 %v3314, 16
        %v3410 = vrot.slane %v3408, 1
        %v3411 = vor.u32 %v3406, %v3410
        %v3413 = vshll.u32 %v3378, 16
        %v3415 = vrot.slane %v3413, 1
        %v3416 = vsel %vm1114, %v3411, %v3415
        %v3418 = vshrl.u32 %v3315, 16
        %v3420 = vshll.u32 %v3315, 16
        %v3422 = vrot.slane %v3420, 1
        %v3423 = vor.u32 %v3418, %v3422
        %v3425 = vshll.u32 %v3379, 16
        %v3427 = vrot.slane %v3425, 1
        %v3428 = vsel %vm1114, %v3423, %v3427
        %v3430 = vshrl.u32 %v3316, 16
        %v3432 = vshll.u32 %v3316, 16
        %v3434 = vrot.slane %v3432, 1
        %v3435 = vor.u32 %v3430, %v3434
        %v3437 = vshll.u32 %v3380, 16
        %v3439 = vrot.slane %v3437, 1
        %v3440 = vsel %vm1114, %v3435, %v3439
        %v3442 = vshrl.u32 %v3317, 16
        %v3444 = vshll.u32 %v3317, 16
        %v3446 = vrot.slane %v3444, 1
        %v3447 = vor.u32 %v3442, %v3446
        %v3449 = vshll.u32 %v3381, 16
        %v3451 = vrot.slane %v3449, 1
        %v3452 = vsel %vm1114, %v3447, %v3451
        %v3454 = vshrl.u32 %v3318, 16
        %v3456 = vshll.u32 %v3318, 16
        %v3458 = vrot.slane %v3456, 1
        %v3459 = vor.u32 %v3454, %v3458
        %v3461 = vshll.u32 %v3382, 16
        %v3463 = vrot.slane %v3461, 1
        %v3464 = vsel %vm1114, %v3459, %v3463
        %v3466 = vshrl.u32 %v3319, 16
        %v3468 = vshll.u32 %v3319, 16
        %v3470 = vrot.slane %v3468, 1
        %v3471 = vor.u32 %v3466, %v3470
        %v3473 = vshll.u32 %v3383, 16
        %v3475 = vrot.slane %v3473, 1
        %v3476 = vsel %vm1114, %v3471, %v3475
        %v3478 = vshrl.u32 %v3320, 16
        %v3480 = vshll.u32 %v3320, 16
        %v3482 = vrot.slane %v3480, 1
        %v3483 = vor.u32 %v3478, %v3482
        %v3485 = vshll.u32 %v3384, 16
        %v3487 = vrot.slane %v3485, 1
        %v3488 = vsel %vm1114, %v3483, %v3487
        %v3490 = vshrl.u32 %v3321, 16
        %v3492 = vshll.u32 %v3321, 16
        %v3494 = vrot.slane %v3492, 1
        %v3495 = vor.u32 %v3490, %v3494
        %v3497 = vshll.u32 %v3385, 16
        %v3499 = vrot.slane %v3497, 1
        %v3500 = vsel %vm1114, %v3495, %v3499
        %v3502 = vshrl.u32 %v3322, 16
        %v3504 = vshll.u32 %v3322, 16
        %v3506 = vrot.slane %v3504, 1
        %v3507 = vor.u32 %v3502, %v3506
        %v3509 = vshll.u32 %v3386, 16
        %v3511 = vrot.slane %v3509, 1
        %v3512 = vsel %vm1114, %v3507, %v3511
        %v3514 = vshrl.u32 %v3323, 16
        %v3516 = vshll.u32 %v3323, 16
        %v3518 = vrot.slane %v3516, 1
        %v3519 = vor.u32 %v3514, %v3518
        %v3521 = vshll.u32 %v3387, 16
        %v3523 = vrot.slane %v3521, 1
        %v3524 = vsel %vm1114, %v3519, %v3523
        %v3526 = vshrl.u32 %v3324, 16
        %v3528 = vshll.u32 %v3324, 16
        %v3530 = vrot.slane %v3528, 1
        %v3531 = vor.u32 %v3526, %v3530
        %v3533 = vshll.u32 %v3388, 16
        %v3535 = vrot.slane %v3533, 1
        %v3536 = vsel %vm1114, %v3531, %v3535
        %v3538 = vshrl.u32 %v3325, 16
        %v3540 = vshll.u32 %v3325, 16
        %v3542 = vrot.slane %v3540, 1
        %v3543 = vor.u32 %v3538, %v3542
        %v3545 = vshll.u32 %v3389, 16
        %v3547 = vrot.slane %v3545, 1
        %v3548 = vsel %vm1114, %v3543, %v3547
        %v3550 = vshrl.u32 %v3326, 16
        %v3552 = vshll.u32 %v3326, 16
        %v3554 = vrot.slane %v3552, 1
        %v3555 = vor.u32 %v3550, %v3554
        %v3557 = vshll.u32 %v3390, 16
        %v3559 = vrot.slane %v3557, 1
        %v3560 = vsel %vm1114, %v3555, %v3559
        %v3562 = vshrl.u32 %v3327, 16
        %v3564 = vshll.u32 %v3327, 16
        %v3566 = vrot.slane %v3564, 1
        %v3567 = vor.u32 %v3562, %v3566
        %v3569 = vshll.u32 %v3391, 16
        %v3571 = vrot.slane %v3569, 1
        %v3572 = vsel %vm1114, %v3567, %v3571
        %v3574 = vshrl.u32 %v3328, 16
        %v3576 = vshll.u32 %v3328, 16
        %v3578 = vrot.slane %v3576, 1
        %v3579 = vor.u32 %v3574, %v3578
        %v3581 = vshll.u32 %v3392, 16
        %v3583 = vrot.slane %v3581, 1
        %v3584 = vsel %vm1114, %v3579, %v3583
        %v3617 = vunpack.c.l.b16 %v3233
        %v3618 = vunpack.c.l.b16 %v3234
        %v3619 = vunpack.c.l.b16 %v3235
        %v3620 = vunpack.c.l.b16 %v3236
        %v3621 = vunpack.c.l.b16 %v3237
        %v3622 = vunpack.c.l.b16 %v3238
        %v3623 = vunpack.c.l.b16 %v3239
        %v3624 = vunpack.c.l.b16 %v3240
        %v3625 = vunpack.c.l.b16 %v3241
        %v3626 = vunpack.c.l.b16 %v3242
        %v3627 = vunpack.c.l.b16 %v3243
        %v3628 = vunpack.c.l.b16 %v3244
        %v3629 = vunpack.c.l.b16 %v3245
        %v3630 = vunpack.c.l.b16 %v3246
        %v3631 = vunpack.c.l.b16 %v3247
        %v3632 = vunpack.c.l.b16 %v3248
        %v3633 = vpack.c.b16 %v3282, %v3617
        %v3634 = vpack.c.b16 %v3284, %v3618
        %v3635 = vpack.c.b16 %v3286, %v3619
        %v3636 = vpack.c.b16 %v3288, %v3620
        %v3637 = vpack.c.b16 %v3290, %v3621
        %v3638 = vpack.c.b16 %v3292, %v3622
        %v3639 = vpack.c.b16 %v3294, %v3623
        %v3640 = vpack.c.b16 %v3296, %v3624
        %v3641 = vpack.c.b16 %v3298, %v3625
        %v3642 = vpack.c.b16 %v3300, %v3626
        %v3643 = vpack.c.b16 %v3302, %v3627
        %v3644 = vpack.c.b16 %v3304, %v3628
        %v3645 = vpack.c.b16 %v3306, %v3629
        %v3646 = vpack.c.b16 %v3308, %v3630
        %v3647 = vpack.c.b16 %v3310, %v3631
        %v3648 = vpack.c.b16 %v3312, %v3632
        %v3649 = vrot.slane %v3633, 1
        %v3650 = vrot.slane %v3377, 1
        %v3651 = vsel %vm1371, %v3649, %v3650
        %v3652 = vrot.slane %v3634, 1
        %v3653 = vrot.slane %v3378, 1
        %v3654 = vsel %vm1371, %v3652, %v3653
        %v3655 = vrot.slane %v3635, 1
        %v3656 = vrot.slane %v3379, 1
        %v3657 = vsel %vm1371, %v3655, %v3656
        %v3658 = vrot.slane %v3636, 1
        %v3659 = vrot.slane %v3380, 1
        %v3660 = vsel %vm1371, %v3658, %v3659
        %v3661 = vrot.slane %v3637, 1
        %v3662 = vrot.slane %v3381, 1
        %v3663 = vsel %vm1371, %v3661, %v3662
        %v3664 = vrot.slane %v3638, 1
        %v3665 = vrot.slane %v3382, 1
        %v3666 = vsel %vm1371, %v3664, %v3665
        %v3667 = vrot.slane %v3639, 1
        %v3668 = vrot.slane %v3383, 1
        %v3669 = vsel %vm1371, %v3667, %v3668
        %v3670 = vrot.slane %v3640, 1
        %v3671 = vrot.slane %v3384, 1
        %v3672 = vsel %vm1371, %v3670, %v3671
        %v3673 = vrot.slane %v3641, 1
        %v3674 = vrot.slane %v3385, 1
        %v3675 = vsel %vm1371, %v3673, %v3674
        %v3676 = vrot.slane %v3642, 1
        %v3677 = vrot.slane %v3386, 1
        %v3678 = vsel %vm1371, %v3676, %v3677
        %v3679 = vrot.slane %v3643, 1
        %v3680 = vrot.slane %v3387, 1
        %v3681 = vsel %vm1371, %v3679, %v3680
        %v3682 = vrot.slane %v3644, 1
        %v3683 = vrot.slane %v3388, 1
        %v3684 = vsel %vm1371, %v3682, %v3683
        %v3685 = vrot.slane %v3645, 1
        %v3686 = vrot.slane %v3389, 1
        %v3687 = vsel %vm1371, %v3685, %v3686
        %v3688 = vrot.slane %v3646, 1
        %v3689 = vrot.slane %v3390, 1
        %v3690 = vsel %vm1371, %v3688, %v3689
        %v3691 = vrot.slane %v3647, 1
        %v3692 = vrot.slane %v3391, 1
        %v3693 = vsel %vm1371, %v3691, %v3692
        %v3694 = vrot.slane %v3648, 1
        %v3695 = vrot.slane %v3392, 1
        %v3696 = vsel %vm1371, %v3694, %v3695
        %s3713 = scalar_lea.vmem [#allocation7], 192
        %v3714 = vld [vmem:[%s3713] sm:$0xf]
        %v3715 = vld [vmem:[%s3713 + $0x4] sm:$0xf]
        %v3716 = vld [vmem:[%s3713 + $0x8] sm:$0xf]
        %v3717 = vld [vmem:[%s3713 + $0xc] sm:$0xf]
        %v3718 = vld [vmem:[%s3713 + $0x10] sm:$0xf]
        %v3719 = vld [vmem:[%s3713 + $0x14] sm:$0xf]
        %v3720 = vld [vmem:[%s3713 + $0x18] sm:$0xf]
        %v3721 = vld [vmem:[%s3713 + $0x1c] sm:$0xf]
        %v3722 = vld [vmem:[%s3713 + $0x20] sm:$0xf]
        %v3723 = vld [vmem:[%s3713 + $0x24] sm:$0xf]
        %v3724 = vld [vmem:[%s3713 + $0x28] sm:$0xf]
        %v3725 = vld [vmem:[%s3713 + $0x2c] sm:$0xf]
        %v3726 = vld [vmem:[%s3713 + $0x30] sm:$0xf]
        %v3727 = vld [vmem:[%s3713 + $0x34] sm:$0xf]
        %v3728 = vld [vmem:[%s3713 + $0x38] sm:$0xf]
        %v3729 = vld [vmem:[%s3713 + $0x3c] sm:$0xf]
        %v3730 = vld [vmem:[%s3713 + $0x40] sm:$0xf]
        %v3731 = vld [vmem:[%s3713 + $0x44] sm:$0xf]
        %v3732 = vld [vmem:[%s3713 + $0x48] sm:$0xf]
        %v3733 = vld [vmem:[%s3713 + $0x4c] sm:$0xf]
        %v3734 = vld [vmem:[%s3713 + $0x50] sm:$0xf]
        %v3735 = vld [vmem:[%s3713 + $0x54] sm:$0xf]
        %v3736 = vld [vmem:[%s3713 + $0x58] sm:$0xf]
        %v3737 = vld [vmem:[%s3713 + $0x5c] sm:$0xf]
        %v3738 = vld [vmem:[%s3713 + $0x60] sm:$0xf]
        %v3739 = vld [vmem:[%s3713 + $0x64] sm:$0xf]
        %v3740 = vld [vmem:[%s3713 + $0x68] sm:$0xf]
        %v3741 = vld [vmem:[%s3713 + $0x6c] sm:$0xf]
        %v3742 = vld [vmem:[%s3713 + $0x70] sm:$0xf]
        %v3743 = vld [vmem:[%s3713 + $0x74] sm:$0xf]
        %v3744 = vld [vmem:[%s3713 + $0x78] sm:$0xf]
        %v3745 = vld [vmem:[%s3713 + $0x7c] sm:$0xf]
        %v3746 = vld [vmem:[%s3713 + $0x80] sm:$0xf]
        %v3747 = vld [vmem:[%s3713 + $0x84] sm:$0xf]
        %v3748 = vld [vmem:[%s3713 + $0x88] sm:$0xf]
        %v3749 = vld [vmem:[%s3713 + $0x8c] sm:$0xf]
        %v3750 = vld [vmem:[%s3713 + $0x90] sm:$0xf]
        %v3751 = vld [vmem:[%s3713 + $0x94] sm:$0xf]
        %v3752 = vld [vmem:[%s3713 + $0x98] sm:$0xf]
        %v3753 = vld [vmem:[%s3713 + $0x9c] sm:$0xf]
        %v3754 = vld [vmem:[%s3713 + $0xa0] sm:$0xf]
        %v3755 = vld [vmem:[%s3713 + $0xa4] sm:$0xf]
        %v3756 = vld [vmem:[%s3713 + $0xa8] sm:$0xf]
        %v3757 = vld [vmem:[%s3713 + $0xac] sm:$0xf]
        %v3758 = vld [vmem:[%s3713 + $0xb0] sm:$0xf]
        %v3759 = vld [vmem:[%s3713 + $0xb4] sm:$0xf]
        %v3760 = vld [vmem:[%s3713 + $0xb8] sm:$0xf]
        %v3761 = vld [vmem:[%s3713 + $0xbc] sm:$0xf]
        %v3810 = vunpack.c.l.b16 %v3714
        %v3811 = vunpack.c.l.b16 %v3715
        %v3812 = vunpack.c.l.b16 %v3716
        %v3813 = vunpack.c.l.b16 %v3717
        %v3814 = vunpack.c.l.b16 %v3718
        %v3815 = vunpack.c.l.b16 %v3719
        %v3816 = vunpack.c.l.b16 %v3720
        %v3817 = vunpack.c.l.b16 %v3721
        %v3818 = vunpack.c.l.b16 %v3722
        %v3819 = vunpack.c.l.b16 %v3723
        %v3820 = vunpack.c.l.b16 %v3724
        %v3821 = vunpack.c.l.b16 %v3725
        %v3822 = vunpack.c.l.b16 %v3726
        %v3823 = vunpack.c.l.b16 %v3727
        %v3824 = vunpack.c.l.b16 %v3728
        %v3825 = vunpack.c.l.b16 %v3729
        %v3826 = vunpack.c.l.b16 %v3730
        %v3827 = vunpack.c.l.b16 %v3731
        %v3828 = vunpack.c.l.b16 %v3732
        %v3829 = vunpack.c.l.b16 %v3733
        %v3830 = vunpack.c.l.b16 %v3734
        %v3831 = vunpack.c.l.b16 %v3735
        %v3832 = vunpack.c.l.b16 %v3736
        %v3833 = vunpack.c.l.b16 %v3737
        %v3834 = vunpack.c.l.b16 %v3738
        %v3835 = vunpack.c.l.b16 %v3739
        %v3836 = vunpack.c.l.b16 %v3740
        %v3837 = vunpack.c.l.b16 %v3741
        %v3838 = vunpack.c.l.b16 %v3742
        %v3839 = vunpack.c.l.b16 %v3743
        %v3840 = vunpack.c.l.b16 %v3744
        %v3841 = vunpack.c.l.b16 %v3745
        %v3842 = vunpack.c.l.b16 %v3746
        %v3843 = vunpack.c.l.b16 %v3747
        %v3844 = vunpack.c.l.b16 %v3748
        %v3845 = vunpack.c.l.b16 %v3749
        %v3846 = vunpack.c.l.b16 %v3750
        %v3847 = vunpack.c.l.b16 %v3751
        %v3848 = vunpack.c.l.b16 %v3752
        %v3849 = vunpack.c.l.b16 %v3753
        %v3850 = vunpack.c.l.b16 %v3754
        %v3851 = vunpack.c.l.b16 %v3755
        %v3852 = vunpack.c.l.b16 %v3756
        %v3853 = vunpack.c.l.b16 %v3757
        %v3854 = vunpack.c.l.b16 %v3758
        %v3855 = vunpack.c.l.b16 %v3759
        %v3856 = vunpack.c.l.b16 %v3760
        %v3857 = vunpack.c.l.b16 %v3761
        %v3858 = vpack.c.b16 %v3811, %v3810
        %v3859 = vpack.c.b16 %v3813, %v3812
        %v3860 = vpack.c.b16 %v3815, %v3814
        %v3861 = vpack.c.b16 %v3817, %v3816
        %v3862 = vpack.c.b16 %v3819, %v3818
        %v3863 = vpack.c.b16 %v3821, %v3820
        %v3864 = vpack.c.b16 %v3823, %v3822
        %v3865 = vpack.c.b16 %v3825, %v3824
        %v3866 = vpack.c.b16 %v3827, %v3826
        %v3867 = vpack.c.b16 %v3829, %v3828
        %v3868 = vpack.c.b16 %v3831, %v3830
        %v3869 = vpack.c.b16 %v3833, %v3832
        %v3870 = vpack.c.b16 %v3835, %v3834
        %v3871 = vpack.c.b16 %v3837, %v3836
        %v3872 = vpack.c.b16 %v3839, %v3838
        %v3873 = vpack.c.b16 %v3841, %v3840
        %v3874 = vpack.c.b16 %v3843, %v3842
        %v3875 = vpack.c.b16 %v3845, %v3844
        %v3876 = vpack.c.b16 %v3847, %v3846
        %v3877 = vpack.c.b16 %v3849, %v3848
        %v3878 = vpack.c.b16 %v3851, %v3850
        %v3879 = vpack.c.b16 %v3853, %v3852
        %v3880 = vpack.c.b16 %v3855, %v3854
        %v3881 = vpack.c.b16 %v3857, %v3856
        %3906 = vmatprep.subr.bf16.mxu0 0
        %3907 = vmatpush1.bf16.msra.mxu0 %v3858
        %3908 = vmatprep.subr.bf16.mxu0 0
        %3909 = vmatpush1.bf16.msra.mxu0 %v3859
        %3910 = vmatprep.subr.bf16.mxu0 0
        %3911 = vmatpush1.bf16.msra.mxu0 %v3860
        %3912 = vmatprep.subr.bf16.mxu0 0
        %3913 = vmatpush1.bf16.msra.mxu0 %v3861
        %3914 = vmatprep.subr.bf16.mxu0 0
        %3915 = vmatpush1.bf16.msra.mxu0 %v3862
        %3916 = vmatprep.subr.bf16.mxu0 0
        %3917 = vmatpush1.bf16.msra.mxu0 %v3863
        %3918 = vmatprep.subr.bf16.mxu0 0
        %3919 = vmatpush1.bf16.msra.mxu0 %v3864
        %3920 = vmatprep.subr.bf16.mxu0 0
        %3921 = vmatpush1.bf16.msra.mxu0 %v3865
        %3922 = vmatprep.subr.bf16.mxu0 0
        %3923 = vmatpush1.bf16.msra.mxu0 %v3866
        %3924 = vmatprep.subr.bf16.mxu0 0
        %3925 = vmatpush1.bf16.msra.mxu0 %v3867
        %3926 = vmatprep.subr.bf16.mxu0 0
        %3927 = vmatpush1.bf16.msra.mxu0 %v3868
        %3928 = vmatprep.subr.bf16.mxu0 0
        %3929 = vmatpush1.bf16.msra.mxu0 %v3869
        %3930 = vmatprep.subr.bf16.mxu0 0
        %3931 = vmatpush1.bf16.msra.mxu0 %v3870
        %3932 = vmatprep.subr.bf16.mxu0 0
        %3933 = vmatpush1.bf16.msra.mxu0 %v3871
        %3934 = vmatprep.subr.bf16.mxu0 0
        %3935 = vmatpush1.bf16.msra.mxu0 %v3872
        %3936 = vmatprep.subr.bf16.mxu0 0
        %3937 = vmatpush1.bf16.msra.mxu0 %v3873
        %3938 = vmatprep.mubr.bf16.mxu0 %v3404
        %3939 = vmatmul.mubr.bf16.gmra.mrb[0].mxu0 %v3313
        %v3940 = vpop.f32.mrb[0].mxu0
        %v3941 = vadd.f32 0.0, %v3940
        %v3942 = vpop.f32.mrb[0].mxu0
        %v3943 = vpop.f32.mrb[0].mxu0
        %v3944 = vadd.f32 0.0, %v3943
        %v3945 = vpop.f32.mrb[0].mxu0
        %3946 = vmatprep.mubr.bf16.mxu0 %v3416
        %3947 = vmatmul.mubr.bf16.gmra.mrb[0].mxu0 %v3314
        %v3948 = vpop.f32.mrb[0].mxu0
        %v3949 = vadd.f32 0.0, %v3948
        %v3950 = vpop.f32.mrb[0].mxu0
        %v3951 = vpop.f32.mrb[0].mxu0
        %v3952 = vadd.f32 0.0, %v3951
        %v3953 = vpop.f32.mrb[0].mxu0
        %3954 = vmatprep.mubr.bf16.mxu0 %v3428
        %3955 = vmatmul.mubr.bf16.gmra.mrb[0].mxu0 %v3315
        %v3956 = vpop.f32.mrb[0].mxu0
        %v3957 = vadd.f32 0.0, %v3956
        %v3958 = vpop.f32.mrb[0].mxu0
        %v3959 = vpop.f32.mrb[0].mxu0
        %v3960 = vadd.f32 0.0, %v3959
        %v3961 = vpop.f32.mrb[0].mxu0
        %3962 = vmatprep.mubr.bf16.mxu0 %v3440
        %3963 = vmatmul.mubr.bf16.gmra.mrb[0].mxu0 %v3316
        %v3964 = vpop.f32.mrb[0].mxu0
        %v3965 = vadd.f32 0.0, %v3964
        %v3966 = vpop.f32.mrb[0].mxu0
        %v3967 = vpop.f32.mrb[0].mxu0
        %v3968 = vadd.f32 0.0, %v3967
        %v3969 = vpop.f32.mrb[0].mxu0
        %3970 = vmatprep.mubr.bf16.mxu0 %v3452
        %3971 = vmatmul.mubr.bf16.gmra.mrb[0].mxu0 %v3317
        %v3972 = vpop.f32.mrb[0].mxu0
        %v3973 = vadd.f32 0.0, %v3972
        %v3974 = vpop.f32.mrb[0].mxu0
        %v3975 = vpop.f32.mrb[0].mxu0
        %v3976 = vadd.f32 0.0, %v3975
        %v3977 = vpop.f32.mrb[0].mxu0
        %3978 = vmatprep.mubr.bf16.mxu0 %v3464
        %3979 = vmatmul.mubr.bf16.gmra.mrb[0].mxu0 %v3318
        %v3980 = vpop.f32.mrb[0].mxu0
        %v3981 = vadd.f32 0.0, %v3980
        %v3982 = vpop.f32.mrb[0].mxu0
        %v3983 = vpop.f32.mrb[0].mxu0
        %v3984 = vadd.f32 0.0, %v3983
        %v3985 = vpop.f32.mrb[0].mxu0
        %3986 = vmatprep.mubr.bf16.mxu0 %v3476
        %3987 = vmatmul.mubr.bf16.gmra.mrb[0].mxu0 %v3319
        %v3988 = vpop.f32.mrb[0].mxu0
        %v3989 = vadd.f32 0.0, %v3988
        %v3990 = vpop.f32.mrb[0].mxu0
        %v3991 = vpop.f32.mrb[0].mxu0
        %v3992 = vadd.f32 0.0, %v3991
        %v3993 = vpop.f32.mrb[0].mxu0
        %3994 = vmatprep.mubr.bf16.mxu0 %v3488
        %3995 = vmatmul.mubr.bf16.gmra.mrb[0].mxu0 %v3320
        %v3996 = vpop.f32.mrb[0].mxu0
        %v3997 = vadd.f32 0.0, %v3996
        %v3998 = vpop.f32.mrb[0].mxu0
        %v3999 = vpop.f32.mrb[0].mxu0
        %v4000 = vadd.f32 0.0, %v3999
        %v4001 = vpop.f32.mrb[0].mxu0
        %4002 = vmatprep.mubr.bf16.mxu0 %v3500
        %4003 = vmatmul.mubr.bf16.gmra.mrb[0].mxu0 %v3321
        %v4004 = vpop.f32.mrb[0].mxu0
        %v4005 = vadd.f32 0.0, %v4004
        %v4006 = vpop.f32.mrb[0].mxu0
        %v4007 = vpop.f32.mrb[0].mxu0
        %v4008 = vadd.f32 0.0, %v4007
        %v4009 = vpop.f32.mrb[0].mxu0
        %4010 = vmatprep.mubr.bf16.mxu0 %v3512
        %4011 = vmatmul.mubr.bf16.gmra.mrb[0].mxu0 %v3322
        %v4012 = vpop.f32.mrb[0].mxu0
        %v4013 = vadd.f32 0.0, %v4012
        %v4014 = vpop.f32.mrb[0].mxu0
        %v4015 = vpop.f32.mrb[0].mxu0
        %v4016 = vadd.f32 0.0, %v4015
        %v4017 = vpop.f32.mrb[0].mxu0
        %4018 = vmatprep.mubr.bf16.mxu0 %v3524
        %4019 = vmatmul.mubr.bf16.gmra.mrb[0].mxu0 %v3323
        %v4020 = vpop.f32.mrb[0].mxu0
        %v4021 = vadd.f32 0.0, %v4020
        %v4022 = vpop.f32.mrb[0].mxu0
        %v4023 = vpop.f32.mrb[0].mxu0
        %v4024 = vadd.f32 0.0, %v4023
        %v4025 = vpop.f32.mrb[0].mxu0
        %4026 = vmatprep.mubr.bf16.mxu0 %v3536
        %4027 = vmatmul.mubr.bf16.gmra.mrb[0].mxu0 %v3324
        %v4028 = vpop.f32.mrb[0].mxu0
        %v4029 = vadd.f32 0.0, %v4028
        %v4030 = vpop.f32.mrb[0].mxu0
        %v4031 = vpop.f32.mrb[0].mxu0
        %v4032 = vadd.f32 0.0, %v4031
        %v4033 = vpop.f32.mrb[0].mxu0
        %4034 = vmatprep.mubr.bf16.mxu0 %v3548
        %4035 = vmatmul.mubr.bf16.gmra.mrb[0].mxu0 %v3325
        %v4036 = vpop.f32.mrb[0].mxu0
        %v4037 = vadd.f32 0.0, %v4036
        %v4038 = vpop.f32.mrb[0].mxu0
        %v4039 = vpop.f32.mrb[0].mxu0
        %v4040 = vadd.f32 0.0, %v4039
        %v4041 = vpop.f32.mrb[0].mxu0
        %4042 = vmatprep.mubr.bf16.mxu0 %v3560
        %4043 = vmatmul.mubr.bf16.gmra.mrb[0].mxu0 %v3326
        %v4044 = vpop.f32.mrb[0].mxu0
        %v4045 = vadd.f32 0.0, %v4044
        %v4046 = vpop.f32.mrb[0].mxu0
        %v4047 = vpop.f32.mrb[0].mxu0
        %v4048 = vadd.f32 0.0, %v4047
        %v4049 = vpop.f32.mrb[0].mxu0
        %4050 = vmatprep.mubr.bf16.mxu0 %v3572
        %4051 = vmatmul.mubr.bf16.gmra.mrb[0].mxu0 %v3327
        %v4052 = vpop.f32.mrb[0].mxu0
        %v4053 = vadd.f32 0.0, %v4052
        %v4054 = vpop.f32.mrb[0].mxu0
        %v4055 = vpop.f32.mrb[0].mxu0
        %v4056 = vadd.f32 0.0, %v4055
        %v4057 = vpop.f32.mrb[0].mxu0
        %4058 = vmatprep.mubr.bf16.mxu0 %v3584
        %4059 = vmatmul.mubr.bf16.gmra.mrb[0].mxu0 %v3328
        %v4060 = vpop.f32.mrb[0].mxu0
        %v4061 = vadd.f32 0.0, %v4060
        %v4062 = vpop.f32.mrb[0].mxu0
        %v4063 = vpop.f32.mrb[0].mxu0
        %v4064 = vadd.f32 0.0, %v4063
        %v4065 = vpop.f32.mrb[0].mxu0
        %4066 = vdwg.mxu0
        %4067 = vmatprep.subr.bf16.mxu0 0
        %4068 = vmatpush1.bf16.msra.mxu0 %v3874
        %4069 = vmatprep.subr.bf16.mxu0 0
        %4070 = vmatpush1.bf16.msra.mxu0 %v3875
        %4071 = vmatprep.subr.bf16.mxu0 0
        %4072 = vmatpush1.bf16.msra.mxu0 %v3876
        %4073 = vmatprep.subr.bf16.mxu0 0
        %4074 = vmatpush1.bf16.msra.mxu0 %v3877
        %4075 = vmatprep.subr.bf16.mxu0 0
        %4076 = vmatpush1.bf16.msra.mxu0 %v3878
        %4077 = vmatprep.subr.bf16.mxu0 0
        %4078 = vmatpush1.bf16.msra.mxu0 %v3879
        %4079 = vmatprep.subr.bf16.mxu0 0
        %4080 = vmatpush1.bf16.msra.mxu0 %v3880
        %4081 = vmatprep.subr.bf16.mxu0 0
        %4082 = vmatpush1.bf16.msra.mxu0 %v3881
        %4083 = vmatprep.subr.bf16.mxu0 0
        %4084 = vmatpush1.bf16.msra.mxu0 0
        %4085 = vmatprep.subr.bf16.mxu0 0
        %4086 = vmatpush1.bf16.msra.mxu0 0
        %4087 = vmatprep.subr.bf16.mxu0 0
        %4088 = vmatpush1.bf16.msra.mxu0 0
        %4089 = vmatprep.subr.bf16.mxu0 0
        %4090 = vmatpush1.bf16.msra.mxu0 0
        %4091 = vmatprep.subr.bf16.mxu0 0
        %4092 = vmatpush1.bf16.msra.mxu0 0
        %4093 = vmatprep.subr.bf16.mxu0 0
        %4094 = vmatpush1.bf16.msra.mxu0 0
        %4095 = vmatprep.subr.bf16.mxu0 0
        %4096 = vmatpush1.bf16.msra.mxu0 0
        %4097 = vmatprep.subr.bf16.mxu0 0
        %4098 = vmatpush1.bf16.msra.mxu0 0
        %4099 = vmatprep.mubr.bf16.mxu0 0
        %4100 = vmatmul.mubr.bf16.gmra.mrb[0].mxu0 %v3651
        %v4101 = vpop.f32.mrb[0].mxu0
        %v4102 = vadd.f32 %v3941, %v4101
        %v4103 = vpop.f32.mrb[0].mxu0
        %v4104 = vpop.f32.mrb[0].mxu0
        %v4105 = vadd.f32 %v3944, %v4104
        %v4106 = vpop.f32.mrb[0].mxu0
        %4107 = vmatprep.mubr.bf16.mxu0 0
        %4108 = vmatmul.mubr.bf16.gmra.mrb[0].mxu0 %v3654
        %v4109 = vpop.f32.mrb[0].mxu0
        %v4110 = vadd.f32 %v3949, %v4109
        %v4111 = vpop.f32.mrb[0].mxu0
        %v4112 = vpop.f32.mrb[0].mxu0
        %v4113 = vadd.f32 %v3952, %v4112
        %v4114 = vpop.f32.mrb[0].mxu0
        %4115 = vmatprep.mubr.bf16.mxu0 0
        %4116 = vmatmul.mubr.bf16.gmra.mrb[0].mxu0 %v3657
        %v4117 = vpop.f32.mrb[0].mxu0
        %v4118 = vadd.f32 %v3957, %v4117
        %v4119 = vpop.f32.mrb[0].mxu0
        %v4120 = vpop.f32.mrb[0].mxu0
        %v4121 = vadd.f32 %v3960, %v4120
        %v4122 = vpop.f32.mrb[0].mxu0
        %4123 = vmatprep.mubr.bf16.mxu0 0
        %4124 = vmatmul.mubr.bf16.gmra.mrb[0].mxu0 %v3660
        %v4125 = vpop.f32.mrb[0].mxu0
        %v4126 = vadd.f32 %v3965, %v4125
        %v4127 = vpop.f32.mrb[0].mxu0
        %v4128 = vpop.f32.mrb[0].mxu0
        %v4129 = vadd.f32 %v3968, %v4128
        %v4130 = vpop.f32.mrb[0].mxu0
        %4131 = vmatprep.mubr.bf16.mxu0 0
        %4132 = vmatmul.mubr.bf16.gmra.mrb[0].mxu0 %v3663
        %v4133 = vpop.f32.mrb[0].mxu0
        %v4134 = vadd.f32 %v3973, %v4133
        %v4135 = vpop.f32.mrb[0].mxu0
        %v4136 = vpop.f32.mrb[0].mxu0
        %v4137 = vadd.f32 %v3976, %v4136
        %v4138 = vpop.f32.mrb[0].mxu0
        %4139 = vmatprep.mubr.bf16.mxu0 0
        %4140 = vmatmul.mubr.bf16.gmra.mrb[0].mxu0 %v3666
        %v4141 = vpop.f32.mrb[0].mxu0
        %v4142 = vadd.f32 %v3981, %v4141
        %v4143 = vpop.f32.mrb[0].mxu0
        %v4144 = vpop.f32.mrb[0].mxu0
        %v4145 = vadd.f32 %v3984, %v4144
        %v4146 = vpop.f32.mrb[0].mxu0
        %4147 = vmatprep.mubr.bf16.mxu0 0
        %4148 = vmatmul.mubr.bf16.gmra.mrb[0].mxu0 %v3669
        %v4149 = vpop.f32.mrb[0].mxu0
        %v4150 = vadd.f32 %v3989, %v4149
        %v4151 = vpop.f32.mrb[0].mxu0
        %v4152 = vpop.f32.mrb[0].mxu0
        %v4153 = vadd.f32 %v3992, %v4152
        %v4154 = vpop.f32.mrb[0].mxu0
        %4155 = vmatprep.mubr.bf16.mxu0 0
        %4156 = vmatmul.mubr.bf16.gmra.mrb[0].mxu0 %v3672
        %v4157 = vpop.f32.mrb[0].mxu0
        %v4158 = vadd.f32 %v3997, %v4157
        %v4159 = vpop.f32.mrb[0].mxu0
        %v4160 = vpop.f32.mrb[0].mxu0
        %v4161 = vadd.f32 %v4000, %v4160
        %v4162 = vpop.f32.mrb[0].mxu0
        %4163 = vmatprep.mubr.bf16.mxu0 0
        %4164 = vmatmul.mubr.bf16.gmra.mrb[0].mxu0 %v3675
        %v4165 = vpop.f32.mrb[0].mxu0
        %v4166 = vadd.f32 %v4005, %v4165
        %v4167 = vpop.f32.mrb[0].mxu0
        %v4168 = vpop.f32.mrb[0].mxu0
        %v4169 = vadd.f32 %v4008, %v4168
        %v4170 = vpop.f32.mrb[0].mxu0
        %4171 = vmatprep.mubr.bf16.mxu0 0
        %4172 = vmatmul.mubr.bf16.gmra.mrb[0].mxu0 %v3678
        %v4173 = vpop.f32.mrb[0].mxu0
        %v4174 = vadd.f32 %v4013, %v4173
        %v4175 = vpop.f32.mrb[0].mxu0
        %v4176 = vpop.f32.mrb[0].mxu0
        %v4177 = vadd.f32 %v4016, %v4176
        %v4178 = vpop.f32.mrb[0].mxu0
        %4179 = vmatprep.mubr.bf16.mxu0 0
        %4180 = vmatmul.mubr.bf16.gmra.mrb[0].mxu0 %v3681
        %v4181 = vpop.f32.mrb[0].mxu0
        %v4182 = vadd.f32 %v4021, %v4181
        %v4183 = vpop.f32.mrb[0].mxu0
        %v4184 = vpop.f32.mrb[0].mxu0
        %v4185 = vadd.f32 %v4024, %v4184
        %v4186 = vpop.f32.mrb[0].mxu0
        %4187 = vmatprep.mubr.bf16.mxu0 0
        %4188 = vmatmul.mubr.bf16.gmra.mrb[0].mxu0 %v3684
        %v4189 = vpop.f32.mrb[0].mxu0
        %v4190 = vadd.f32 %v4029, %v4189
        %v4191 = vpop.f32.mrb[0].mxu0
        %v4192 = vpop.f32.mrb[0].mxu0
        %v4193 = vadd.f32 %v4032, %v4192
        %v4194 = vpop.f32.mrb[0].mxu0
        %4195 = vmatprep.mubr.bf16.mxu0 0
        %4196 = vmatmul.mubr.bf16.gmra.mrb[0].mxu0 %v3687
        %v4197 = vpop.f32.mrb[0].mxu0
        %v4198 = vadd.f32 %v4037, %v4197
        %v4199 = vpop.f32.mrb[0].mxu0
        %v4200 = vpop.f32.mrb[0].mxu0
        %v4201 = vadd.f32 %v4040, %v4200
        %v4202 = vpop.f32.mrb[0].mxu0
        %4203 = vmatprep.mubr.bf16.mxu0 0
        %4204 = vmatmul.mubr.bf16.gmra.mrb[0].mxu0 %v3690
        %v4205 = vpop.f32.mrb[0].mxu0
        %v4206 = vadd.f32 %v4045, %v4205
        %v4207 = vpop.f32.mrb[0].mxu0
        %v4208 = vpop.f32.mrb[0].mxu0
        %v4209 = vadd.f32 %v4048, %v4208
        %v4210 = vpop.f32.mrb[0].mxu0
        %4211 = vmatprep.mubr.bf16.mxu0 0
        %4212 = vmatmul.mubr.bf16.gmra.mrb[0].mxu0 %v3693
        %v4213 = vpop.f32.mrb[0].mxu0
        %v4214 = vadd.f32 %v4053, %v4213
        %v4215 = vpop.f32.mrb[0].mxu0
        %v4216 = vpop.f32.mrb[0].mxu0
        %v4217 = vadd.f32 %v4056, %v4216
        %v4218 = vpop.f32.mrb[0].mxu0
        %4219 = vmatprep.mubr.bf16.mxu0 0
        %4220 = vmatmul.mubr.bf16.gmra.mrb[0].mxu0 %v3696
        %v4221 = vpop.f32.mrb[0].mxu0
        %v4222 = vadd.f32 %v4061, %v4221
        %v4223 = vpop.f32.mrb[0].mxu0
        %v4224 = vpop.f32.mrb[0].mxu0
        %v4225 = vadd.f32 %v4064, %v4224
        %v4226 = vpop.f32.mrb[0].mxu0
        %4227 = vdwg.mxu0
        %v4228 = vadd.f32 %v3152, %v4102
        %v4229 = vadd.f32 %v3153, %v4105
        %v4230 = vadd.f32 %v3154, %v4110
        %v4231 = vadd.f32 %v3155, %v4113
        %v4232 = vadd.f32 %v3156, %v4118
        %v4233 = vadd.f32 %v3157, %v4121
        %v4234 = vadd.f32 %v3158, %v4126
        %v4235 = vadd.f32 %v3159, %v4129
        %v4236 = vadd.f32 %v3160, %v4134
        %v4237 = vadd.f32 %v3161, %v4137
        %v4238 = vadd.f32 %v3162, %v4142
        %v4239 = vadd.f32 %v3163, %v4145
        %v4240 = vadd.f32 %v3164, %v4150
        %v4241 = vadd.f32 %v3165, %v4153
        %v4242 = vadd.f32 %v3166, %v4158
        %v4243 = vadd.f32 %v3167, %v4161
        %v4244 = vadd.f32 %v3168, %v4166
        %v4245 = vadd.f32 %v3169, %v4169
        %v4246 = vadd.f32 %v3170, %v4174
        %v4247 = vadd.f32 %v3171, %v4177
        %v4248 = vadd.f32 %v3172, %v4182
        %v4249 = vadd.f32 %v3173, %v4185
        %v4250 = vadd.f32 %v3174, %v4190
        %v4251 = vadd.f32 %v3175, %v4193
        %v4252 = vadd.f32 %v3176, %v4198
        %v4253 = vadd.f32 %v3177, %v4201
        %v4254 = vadd.f32 %v3178, %v4206
        %v4255 = vadd.f32 %v3179, %v4209
        %v4256 = vadd.f32 %v3180, %v4214
        %v4257 = vadd.f32 %v3181, %v4217
        %v4258 = vadd.f32 %v3182, %v4222
        %v4259 = vadd.f32 %v3183, %v4225
        %v4260 = vld [vmem:[%s5] sm:$0x1]
        %v4261 = vlaneseq
        %v4262 = vshrl.u32 %v4261, 7
        %v4263 = vsub.s32 0, %v4262
        %v4264 = vrot.slane %v4260, %v4263
        %v4265 = vmul.f32 %v4228, %v4264
        %v4266 = vmul.f32 %v4229, %v4264
        %v4267 = vmul.f32 %v4230, %v4264
        %v4268 = vmul.f32 %v4231, %v4264
        %v4269 = vmul.f32 %v4232, %v4264
        %v4270 = vmul.f32 %v4233, %v4264
        %v4271 = vmul.f32 %v4234, %v4264
        %v4272 = vmul.f32 %v4235, %v4264
        %v4273 = vmul.f32 %v4236, %v4264
        %v4274 = vmul.f32 %v4237, %v4264
        %v4275 = vmul.f32 %v4238, %v4264
        %v4276 = vmul.f32 %v4239, %v4264
        %v4277 = vmul.f32 %v4240, %v4264
        %v4278 = vmul.f32 %v4241, %v4264
        %v4279 = vmul.f32 %v4242, %v4264
        %v4280 = vmul.f32 %v4243, %v4264
        %v4281 = vmul.f32 %v4244, %v4264
        %v4282 = vmul.f32 %v4245, %v4264
        %v4283 = vmul.f32 %v4246, %v4264
        %v4284 = vmul.f32 %v4247, %v4264
        %v4285 = vmul.f32 %v4248, %v4264
        %v4286 = vmul.f32 %v4249, %v4264
        %v4287 = vmul.f32 %v4250, %v4264
        %v4288 = vmul.f32 %v4251, %v4264
        %v4289 = vmul.f32 %v4252, %v4264
        %v4290 = vmul.f32 %v4253, %v4264
        %v4291 = vmul.f32 %v4254, %v4264
        %v4292 = vmul.f32 %v4255, %v4264
        %v4293 = vmul.f32 %v4256, %v4264
        %v4294 = vmul.f32 %v4257, %v4264
        %v4295 = vmul.f32 %v4258, %v4264
        %v4296 = vmul.f32 %v4259, %v4264
        %v4297 = vld [vmem:[%s5 + $0x1] sm:$0x1]
        %v4298 = vlaneseq
        %v4299 = vshrl.u32 %v4298, 7
        %v4300 = vsub.s32 0, %v4299
        %v4301 = vrot.slane %v4297, %v4300
        %v4302 = vadd.f32 %v4265, %v4301
        %v4303 = vadd.f32 %v4266, %v4301
        %v4304 = vadd.f32 %v4267, %v4301
        %v4305 = vadd.f32 %v4268, %v4301
        %v4306 = vadd.f32 %v4269, %v4301
        %v4307 = vadd.f32 %v4270, %v4301
        %v4308 = vadd.f32 %v4271, %v4301
        %v4309 = vadd.f32 %v4272, %v4301
        %v4310 = vadd.f32 %v4273, %v4301
        %v4311 = vadd.f32 %v4274, %v4301
        %v4312 = vadd.f32 %v4275, %v4301
        %v4313 = vadd.f32 %v4276, %v4301
        %v4314 = vadd.f32 %v4277, %v4301
        %v4315 = vadd.f32 %v4278, %v4301
        %v4316 = vadd.f32 %v4279, %v4301
        %v4317 = vadd.f32 %v4280, %v4301
        %v4318 = vadd.f32 %v4281, %v4301
        %v4319 = vadd.f32 %v4282, %v4301
        %v4320 = vadd.f32 %v4283, %v4301
        %v4321 = vadd.f32 %v4284, %v4301
        %v4322 = vadd.f32 %v4285, %v4301
        %v4323 = vadd.f32 %v4286, %v4301
        %v4324 = vadd.f32 %v4287, %v4301
        %v4325 = vadd.f32 %v4288, %v4301
        %v4326 = vadd.f32 %v4289, %v4301
        %v4327 = vadd.f32 %v4290, %v4301
        %v4328 = vadd.f32 %v4291, %v4301
        %v4329 = vadd.f32 %v4292, %v4301
        %v4330 = vadd.f32 %v4293, %v4301
        %v4331 = vadd.f32 %v4294, %v4301
        %v4332 = vadd.f32 %v4295, %v4301
        %v4333 = vadd.f32 %v4296, %v4301
        %v4334 = vmax.f32 %v4302, 0.0
        %v4335 = vmax.f32 %v4303, 0.0
        %v4336 = vmax.f32 %v4304, 0.0
        %v4337 = vmax.f32 %v4305, 0.0
        %v4338 = vmax.f32 %v4306, 0.0
        %v4339 = vmax.f32 %v4307, 0.0
        %v4340 = vmax.f32 %v4308, 0.0
        %v4341 = vmax.f32 %v4309, 0.0
        %v4342 = vmax.f32 %v4310, 0.0
        %v4343 = vmax.f32 %v4311, 0.0
        %v4344 = vmax.f32 %v4312, 0.0
        %v4345 = vmax.f32 %v4313, 0.0
        %v4346 = vmax.f32 %v4314, 0.0
        %v4347 = vmax.f32 %v4315, 0.0
        %v4348 = vmax.f32 %v4316, 0.0
        %v4349 = vmax.f32 %v4317, 0.0
        %v4350 = vmax.f32 %v4318, 0.0
        %v4351 = vmax.f32 %v4319, 0.0
        %v4352 = vmax.f32 %v4320, 0.0
        %v4353 = vmax.f32 %v4321, 0.0
        %v4354 = vmax.f32 %v4322, 0.0
        %v4355 = vmax.f32 %v4323, 0.0
        %v4356 = vmax.f32 %v4324, 0.0
        %v4357 = vmax.f32 %v4325, 0.0
        %v4358 = vmax.f32 %v4326, 0.0
        %v4359 = vmax.f32 %v4327, 0.0
        %v4360 = vmax.f32 %v4328, 0.0
        %v4361 = vmax.f32 %v4329, 0.0
        %v4362 = vmax.f32 %v4330, 0.0
        %v4363 = vmax.f32 %v4331, 0.0
        %v4364 = vmax.f32 %v4332, 0.0
        %v4365 = vmax.f32 %v4333, 0.0
        %v4366 = vpack.c.bf16 %v4335, %v4334
        %v4367 = vpack.c.bf16 %v4337, %v4336
        %v4368 = vpack.c.bf16 %v4339, %v4338
        %v4369 = vpack.c.bf16 %v4341, %v4340
        %v4370 = vpack.c.bf16 %v4343, %v4342
        %v4371 = vpack.c.bf16 %v4345, %v4344
        %v4372 = vpack.c.bf16 %v4347, %v4346
        %v4373 = vpack.c.bf16 %v4349, %v4348
        %v4374 = vpack.c.bf16 %v4351, %v4350
        %v4375 = vpack.c.bf16 %v4353, %v4352
        %v4376 = vpack.c.bf16 %v4355, %v4354
        %v4377 = vpack.c.bf16 %v4357, %v4356
        %v4378 = vpack.c.bf16 %v4359, %v4358
        %v4379 = vpack.c.bf16 %v4361, %v4360
        %v4380 = vpack.c.bf16 %v4363, %v4362
        %v4381 = vpack.c.bf16 %v4365, %v4364
        %4382 = vst [vmem:[#allocation3] sm:$0xf] 0
        %4383 = vst [vmem:[#allocation3 + $0x4] sm:$0xf] 0
        %4384 = vst [vmem:[#allocation3 + $0x8] sm:$0xf] 0
        %s4385 = scalar_lea.vmem [#allocation3], 204
        %4386 = vst [vmem:[%s4385] sm:$0xf] 0
        %4387 = vst [vmem:[%s4385 + $0x4] sm:$0xf] 0
        %4388 = vst [vmem:[%s4385 + $0x8] sm:$0xf] 0
        %s4389 = scalar_lea.vmem [#allocation3], 12
        %v4390 = vld [vmem:[%s4389] sm:$0x1]
        %v4391 = vsel %vm371, 0, %v4390
        %4392 = vst [vmem:[%s4389] sm:$0x1] %v4391
        %v4393 = vld [vmem:[%s4389 + $0xc] sm:$0x1]
        %v4394 = vsel %vm371, 0, %v4393
        %4395 = vst [vmem:[%s4389 + $0xc] sm:$0x1] %v4394
        %v4396 = vld [vmem:[%s4389 + $0x18] sm:$0x1]
        %v4397 = vsel %vm371, 0, %v4396
        %4398 = vst [vmem:[%s4389 + $0x18] sm:$0x1] %v4397
        %v4399 = vld [vmem:[%s4389 + $0x24] sm:$0x1]
        %v4400 = vsel %vm371, 0, %v4399
        %4401 = vst [vmem:[%s4389 + $0x24] sm:$0x1] %v4400
        %v4402 = vld [vmem:[%s4389 + $0x30] sm:$0x1]
        %v4403 = vsel %vm371, 0, %v4402
        %4404 = vst [vmem:[%s4389 + $0x30] sm:$0x1] %v4403
        %v4405 = vld [vmem:[%s4389 + $0x3c] sm:$0x1]
        %v4406 = vsel %vm371, 0, %v4405
        %4407 = vst [vmem:[%s4389 + $0x3c] sm:$0x1] %v4406
        %v4408 = vld [vmem:[%s4389 + $0x48] sm:$0x1]
        %v4409 = vsel %vm371, 0, %v4408
        %4410 = vst [vmem:[%s4389 + $0x48] sm:$0x1] %v4409
        %v4411 = vld [vmem:[%s4389 + $0x54] sm:$0x1]
        %v4412 = vsel %vm371, 0, %v4411
        %4413 = vst [vmem:[%s4389 + $0x54] sm:$0x1] %v4412
        %v4414 = vld [vmem:[%s4389 + $0x60] sm:$0x1]
        %v4415 = vsel %vm371, 0, %v4414
        %4416 = vst [vmem:[%s4389 + $0x60] sm:$0x1] %v4415
        %v4417 = vld [vmem:[%s4389 + $0x6c] sm:$0x1]
        %v4418 = vsel %vm371, 0, %v4417
        %4419 = vst [vmem:[%s4389 + $0x6c] sm:$0x1] %v4418
        %v4420 = vld [vmem:[%s4389 + $0x78] sm:$0x1]
        %v4421 = vsel %vm371, 0, %v4420
        %4422 = vst [vmem:[%s4389 + $0x78] sm:$0x1] %v4421
        %v4423 = vld [vmem:[%s4389 + $0x84] sm:$0x1]
        %v4424 = vsel %vm371, 0, %v4423
        %4425 = vst [vmem:[%s4389 + $0x84] sm:$0x1] %v4424
        %v4426 = vld [vmem:[%s4389 + $0x90] sm:$0x1]
        %v4427 = vsel %vm371, 0, %v4426
        %4428 = vst [vmem:[%s4389 + $0x90] sm:$0x1] %v4427
        %v4429 = vld [vmem:[%s4389 + $0x9c] sm:$0x1]
        %v4430 = vsel %vm371, 0, %v4429
        %4431 = vst [vmem:[%s4389 + $0x9c] sm:$0x1] %v4430
        %v4432 = vld [vmem:[%s4389 + $0xa8] sm:$0x1]
        %v4433 = vsel %vm371, 0, %v4432
        %4434 = vst [vmem:[%s4389 + $0xa8] sm:$0x1] %v4433
        %v4435 = vld [vmem:[%s4389 + $0xb4] sm:$0x1]
        %v4436 = vsel %vm371, 0, %v4435
        %4437 = vst [vmem:[%s4389 + $0xb4] sm:$0x1] %v4436
        %v4438 = vld [vmem:[%s4389 + $0x8] sm:$0x1]
        %v4439 = vsel %vm421, 0, %v4438
        %4440 = vst [vmem:[%s4389 + $0x8] sm:$0x1] %v4439
        %v4441 = vld [vmem:[%s4389 + $0x14] sm:$0x1]
        %v4442 = vsel %vm421, 0, %v4441
        %4443 = vst [vmem:[%s4389 + $0x14] sm:$0x1] %v4442
        %v4444 = vld [vmem:[%s4389 + $0x20] sm:$0x1]
        %v4445 = vsel %vm421, 0, %v4444
        %4446 = vst [vmem:[%s4389 + $0x20] sm:$0x1] %v4445
        %v4447 = vld [vmem:[%s4389 + $0x2c] sm:$0x1]
        %v4448 = vsel %vm421, 0, %v4447
        %4449 = vst [vmem:[%s4389 + $0x2c] sm:$0x1] %v4448
        %v4450 = vld [vmem:[%s4389 + $0x38] sm:$0x1]
        %v4451 = vsel %vm421, 0, %v4450
        %4452 = vst [vmem:[%s4389 + $0x38] sm:$0x1] %v4451
        %v4453 = vld [vmem:[%s4389 + $0x44] sm:$0x1]
        %v4454 = vsel %vm421, 0, %v4453
        %4455 = vst [vmem:[%s4389 + $0x44] sm:$0x1] %v4454
        %v4456 = vld [vmem:[%s4389 + $0x50] sm:$0x1]
        %v4457 = vsel %vm421, 0, %v4456
        %4458 = vst [vmem:[%s4389 + $0x50] sm:$0x1] %v4457
        %v4459 = vld [vmem:[%s4389 + $0x5c] sm:$0x1]
        %v4460 = vsel %vm421, 0, %v4459
        %4461 = vst [vmem:[%s4389 + $0x5c] sm:$0x1] %v4460
        %v4462 = vld [vmem:[%s4389 + $0x68] sm:$0x1]
        %v4463 = vsel %vm421, 0, %v4462
        %4464 = vst [vmem:[%s4389 + $0x68] sm:$0x1] %v4463
        %v4465 = vld [vmem:[%s4389 + $0x74] sm:$0x1]
        %v4466 = vsel %vm421, 0, %v4465
        %4467 = vst [vmem:[%s4389 + $0x74] sm:$0x1] %v4466
        %v4468 = vld [vmem:[%s4389 + $0x80] sm:$0x1]
        %v4469 = vsel %vm421, 0, %v4468
        %4470 = vst [vmem:[%s4389 + $0x80] sm:$0x1] %v4469
        %v4471 = vld [vmem:[%s4389 + $0x8c] sm:$0x1]
        %v4472 = vsel %vm421, 0, %v4471
        %4473 = vst [vmem:[%s4389 + $0x8c] sm:$0x1] %v4472
        %v4474 = vld [vmem:[%s4389 + $0x98] sm:$0x1]
        %v4475 = vsel %vm421, 0, %v4474
        %4476 = vst [vmem:[%s4389 + $0x98] sm:$0x1] %v4475
        %v4477 = vld [vmem:[%s4389 + $0xa4] sm:$0x1]
        %v4478 = vsel %vm421, 0, %v4477
        %4479 = vst [vmem:[%s4389 + $0xa4] sm:$0x1] %v4478
        %v4480 = vld [vmem:[%s4389 + $0xb0] sm:$0x1]
        %v4481 = vsel %vm421, 0, %v4480
        %4482 = vst [vmem:[%s4389 + $0xb0] sm:$0x1] %v4481
        %v4483 = vld [vmem:[%s4389 + $0xbc] sm:$0x1]
        %v4484 = vsel %vm421, 0, %v4483
        %4485 = vst [vmem:[%s4389 + $0xbc] sm:$0x1] %v4484
        %v4502 = vunpack.c.l.b16 %v4366
        %v4503 = vunpack.c.h.b16 %v4366
        %v4504 = vunpack.c.l.b16 %v4367
        %v4505 = vunpack.c.h.b16 %v4367
        %v4506 = vunpack.c.l.b16 %v4368
        %v4507 = vunpack.c.h.b16 %v4368
        %v4508 = vunpack.c.l.b16 %v4369
        %v4509 = vunpack.c.h.b16 %v4369
        %v4510 = vunpack.c.l.b16 %v4370
        %v4511 = vunpack.c.h.b16 %v4370
        %v4512 = vunpack.c.l.b16 %v4371
        %v4513 = vunpack.c.h.b16 %v4371
        %v4514 = vunpack.c.l.b16 %v4372
        %v4515 = vunpack.c.h.b16 %v4372
        %v4516 = vunpack.c.l.b16 %v4373
        %v4517 = vunpack.c.h.b16 %v4373
        %v4518 = vunpack.c.l.b16 %v4374
        %v4519 = vunpack.c.h.b16 %v4374
        %v4520 = vunpack.c.l.b16 %v4375
        %v4521 = vunpack.c.h.b16 %v4375
        %v4522 = vunpack.c.l.b16 %v4376
        %v4523 = vunpack.c.h.b16 %v4376
        %v4524 = vunpack.c.l.b16 %v4377
        %v4525 = vunpack.c.h.b16 %v4377
        %v4526 = vunpack.c.l.b16 %v4378
        %v4527 = vunpack.c.h.b16 %v4378
        %v4528 = vunpack.c.l.b16 %v4379
        %v4529 = vunpack.c.h.b16 %v4379
        %v4530 = vunpack.c.l.b16 %v4380
        %v4531 = vunpack.c.h.b16 %v4380
        %v4532 = vunpack.c.l.b16 %v4381
        %v4533 = vunpack.c.h.b16 %v4381
        %v4534 = vpack.c.b16 %v4502, %v4502
        %v4535 = vpack.c.b16 %v4503, %v4503
        %v4536 = vpack.c.b16 %v4504, %v4504
        %v4537 = vpack.c.b16 %v4505, %v4505
        %v4538 = vpack.c.b16 %v4506, %v4506
        %v4539 = vpack.c.b16 %v4507, %v4507
        %v4540 = vpack.c.b16 %v4508, %v4508
        %v4541 = vpack.c.b16 %v4509, %v4509
        %v4542 = vpack.c.b16 %v4510, %v4510
        %v4543 = vpack.c.b16 %v4511, %v4511
        %v4544 = vpack.c.b16 %v4512, %v4512
        %v4545 = vpack.c.b16 %v4513, %v4513
        %v4546 = vpack.c.b16 %v4514, %v4514
        %v4547 = vpack.c.b16 %v4515, %v4515
        %v4548 = vpack.c.b16 %v4516, %v4516
        %v4549 = vpack.c.b16 %v4517, %v4517
        %v4550 = vpack.c.b16 %v4518, %v4518
        %v4551 = vpack.c.b16 %v4519, %v4519
        %v4552 = vpack.c.b16 %v4520, %v4520
        %v4553 = vpack.c.b16 %v4521, %v4521
        %v4554 = vpack.c.b16 %v4522, %v4522
        %v4555 = vpack.c.b16 %v4523, %v4523
        %v4556 = vpack.c.b16 %v4524, %v4524
        %v4557 = vpack.c.b16 %v4525, %v4525
        %v4558 = vpack.c.b16 %v4526, %v4526
        %v4559 = vpack.c.b16 %v4527, %v4527
        %v4560 = vpack.c.b16 %v4528, %v4528
        %v4561 = vpack.c.b16 %v4529, %v4529
        %v4562 = vpack.c.b16 %v4530, %v4530
        %v4563 = vpack.c.b16 %v4531, %v4531
        %v4564 = vpack.c.b16 %v4532, %v4532
        %v4565 = vpack.c.b16 %v4533, %v4533
        %v4567 = vshrl.u32 %v4534, 16
        %v4569 = vrot.slane %v4567, 7
        %v4570 = vshll.u32 %v4534, 16
        %v4572 = vor.u32 %v4569, %v4570
        %v4573 = vrot.slane %v4569, 4
        %v4575 = vshrl.u32 %v4535, 16
        %v4577 = vrot.slane %v4575, 7
        %v4578 = vshll.u32 %v4535, 16
        %v4580 = vor.u32 %v4577, %v4578
        %v4581 = vsel %vm471, %v4573, %v4580
        %v4582 = vrot.slane %v4577, 4
        %v4584 = vshrl.u32 %v4536, 16
        %v4586 = vrot.slane %v4584, 7
        %v4587 = vshll.u32 %v4536, 16
        %v4589 = vor.u32 %v4586, %v4587
        %v4590 = vrot.slane %v4586, 4
        %v4592 = vshrl.u32 %v4537, 16
        %v4594 = vrot.slane %v4592, 7
        %v4595 = vshll.u32 %v4537, 16
        %v4597 = vor.u32 %v4594, %v4595
        %v4598 = vsel %vm471, %v4590, %v4597
        %v4599 = vrot.slane %v4594, 4
        %v4601 = vshrl.u32 %v4538, 16
        %v4603 = vrot.slane %v4601, 7
        %v4604 = vshll.u32 %v4538, 16
        %v4606 = vor.u32 %v4603, %v4604
        %v4607 = vrot.slane %v4603, 4
        %v4609 = vshrl.u32 %v4539, 16
        %v4611 = vrot.slane %v4609, 7
        %v4612 = vshll.u32 %v4539, 16
        %v4614 = vor.u32 %v4611, %v4612
        %v4615 = vsel %vm471, %v4607, %v4614
        %v4616 = vrot.slane %v4611, 4
        %v4618 = vshrl.u32 %v4540, 16
        %v4620 = vrot.slane %v4618, 7
        %v4621 = vshll.u32 %v4540, 16
        %v4623 = vor.u32 %v4620, %v4621
        %v4624 = vrot.slane %v4620, 4
        %v4626 = vshrl.u32 %v4541, 16
        %v4628 = vrot.slane %v4626, 7
        %v4629 = vshll.u32 %v4541, 16
        %v4631 = vor.u32 %v4628, %v4629
        %v4632 = vsel %vm471, %v4624, %v4631
        %v4633 = vrot.slane %v4628, 4
        %v4635 = vshrl.u32 %v4542, 16
        %v4637 = vrot.slane %v4635, 7
        %v4638 = vshll.u32 %v4542, 16
        %v4640 = vor.u32 %v4637, %v4638
        %v4641 = vrot.slane %v4637, 4
        %v4643 = vshrl.u32 %v4543, 16
        %v4645 = vrot.slane %v4643, 7
        %v4646 = vshll.u32 %v4543, 16
        %v4648 = vor.u32 %v4645, %v4646
        %v4649 = vsel %vm471, %v4641, %v4648
        %v4650 = vrot.slane %v4645, 4
        %v4652 = vshrl.u32 %v4544, 16
        %v4654 = vrot.slane %v4652, 7
        %v4655 = vshll.u32 %v4544, 16
        %v4657 = vor.u32 %v4654, %v4655
        %v4658 = vrot.slane %v4654, 4
        %v4660 = vshrl.u32 %v4545, 16
        %v4662 = vrot.slane %v4660, 7
        %v4663 = vshll.u32 %v4545, 16
        %v4665 = vor.u32 %v4662, %v4663
        %v4666 = vsel %vm471, %v4658, %v4665
        %v4667 = vrot.slane %v4662, 4
        %v4669 = vshrl.u32 %v4546, 16
        %v4671 = vrot.slane %v4669, 7
        %v4672 = vshll.u32 %v4546, 16
        %v4674 = vor.u32 %v4671, %v4672
        %v4675 = vrot.slane %v4671, 4
        %v4677 = vshrl.u32 %v4547, 16
        %v4679 = vrot.slane %v4677, 7
        %v4680 = vshll.u32 %v4547, 16
        %v4682 = vor.u32 %v4679, %v4680
        %v4683 = vsel %vm471, %v4675, %v4682
        %v4684 = vrot.slane %v4679, 4
        %v4686 = vshrl.u32 %v4548, 16
        %v4688 = vrot.slane %v4686, 7
        %v4689 = vshll.u32 %v4548, 16
        %v4691 = vor.u32 %v4688, %v4689
        %v4692 = vrot.slane %v4688, 4
        %v4694 = vshrl.u32 %v4549, 16
        %v4696 = vrot.slane %v4694, 7
        %v4697 = vshll.u32 %v4549, 16
        %v4699 = vor.u32 %v4696, %v4697
        %v4700 = vsel %vm471, %v4692, %v4699
        %v4701 = vrot.slane %v4696, 4
        %v4703 = vshrl.u32 %v4550, 16
        %v4705 = vrot.slane %v4703, 7
        %v4706 = vshll.u32 %v4550, 16
        %v4708 = vor.u32 %v4705, %v4706
        %v4709 = vrot.slane %v4705, 4
        %v4711 = vshrl.u32 %v4551, 16
        %v4713 = vrot.slane %v4711, 7
        %v4714 = vshll.u32 %v4551, 16
        %v4716 = vor.u32 %v4713, %v4714
        %v4717 = vsel %vm471, %v4709, %v4716
        %v4718 = vrot.slane %v4713, 4
        %v4720 = vshrl.u32 %v4552, 16
        %v4722 = vrot.slane %v4720, 7
        %v4723 = vshll.u32 %v4552, 16
        %v4725 = vor.u32 %v4722, %v4723
        %v4726 = vrot.slane %v4722, 4
        %v4728 = vshrl.u32 %v4553, 16
        %v4730 = vrot.slane %v4728, 7
        %v4731 = vshll.u32 %v4553, 16
        %v4733 = vor.u32 %v4730, %v4731
        %v4734 = vsel %vm471, %v4726, %v4733
        %v4735 = vrot.slane %v4730, 4
        %v4737 = vshrl.u32 %v4554, 16
        %v4739 = vrot.slane %v4737, 7
        %v4740 = vshll.u32 %v4554, 16
        %v4742 = vor.u32 %v4739, %v4740
        %v4743 = vrot.slane %v4739, 4
        %v4745 = vshrl.u32 %v4555, 16
        %v4747 = vrot.slane %v4745, 7
        %v4748 = vshll.u32 %v4555, 16
        %v4750 = vor.u32 %v4747, %v4748
        %v4751 = vsel %vm471, %v4743, %v4750
        %v4752 = vrot.slane %v4747, 4
        %v4754 = vshrl.u32 %v4556, 16
        %v4756 = vrot.slane %v4754, 7
        %v4757 = vshll.u32 %v4556, 16
        %v4759 = vor.u32 %v4756, %v4757
        %v4760 = vrot.slane %v4756, 4
        %v4762 = vshrl.u32 %v4557, 16
        %v4764 = vrot.slane %v4762, 7
        %v4765 = vshll.u32 %v4557, 16
        %v4767 = vor.u32 %v4764, %v4765
        %v4768 = vsel %vm471, %v4760, %v4767
        %v4769 = vrot.slane %v4764, 4
        %v4771 = vshrl.u32 %v4558, 16
        %v4773 = vrot.slane %v4771, 7
        %v4774 = vshll.u32 %v4558, 16
        %v4776 = vor.u32 %v4773, %v4774
        %v4777 = vrot.slane %v4773, 4
        %v4779 = vshrl.u32 %v4559, 16
        %v4781 = vrot.slane %v4779, 7
        %v4782 = vshll.u32 %v4559, 16
        %v4784 = vor.u32 %v4781, %v4782
        %v4785 = vsel %vm471, %v4777, %v4784
        %v4786 = vrot.slane %v4781, 4
        %v4788 = vshrl.u32 %v4560, 16
        %v4790 = vrot.slane %v4788, 7
        %v4791 = vshll.u32 %v4560, 16
        %v4793 = vor.u32 %v4790, %v4791
        %v4794 = vrot.slane %v4790, 4
        %v4796 = vshrl.u32 %v4561, 16
        %v4798 = vrot.slane %v4796, 7
        %v4799 = vshll.u32 %v4561, 16
        %v4801 = vor.u32 %v4798, %v4799
        %v4802 = vsel %vm471, %v4794, %v4801
        %v4803 = vrot.slane %v4798, 4
        %v4805 = vshrl.u32 %v4562, 16
        %v4807 = vrot.slane %v4805, 7
        %v4808 = vshll.u32 %v4562, 16
        %v4810 = vor.u32 %v4807, %v4808
        %v4811 = vrot.slane %v4807, 4
        %v4813 = vshrl.u32 %v4563, 16
        %v4815 = vrot.slane %v4813, 7
        %v4816 = vshll.u32 %v4563, 16
        %v4818 = vor.u32 %v4815, %v4816
        %v4819 = vsel %vm471, %v4811, %v4818
        %v4820 = vrot.slane %v4815, 4
        %v4822 = vshrl.u32 %v4564, 16
        %v4824 = vrot.slane %v4822, 7
        %v4825 = vshll.u32 %v4564, 16
        %v4827 = vor.u32 %v4824, %v4825
        %v4828 = vrot.slane %v4824, 4
        %v4830 = vshrl.u32 %v4565, 16
        %v4832 = vrot.slane %v4830, 7
        %v4833 = vshll.u32 %v4565, 16
        %v4835 = vor.u32 %v4832, %v4833
        %v4836 = vsel %vm471, %v4828, %v4835
        %v4837 = vrot.slane %v4832, 4
        %v4886 = vld [vmem:[%s4389] sm:$0xf]
        %v4887 = vsel %vm793, %v4572, %v4886
        %4888 = vst [vmem:[%s4389] sm:$0xf] %v4887
        %4889 = vst [vmem:[%s4389 + $0x4] sm:$0xf] %v4581
        %v4890 = vld [vmem:[%s4389 + $0x8] sm:$0x1]
        %v4891 = vsel %vm371, %v4582, %v4890
        %4892 = vst [vmem:[%s4389 + $0x8] sm:$0x1] %v4891
        %v4893 = vld [vmem:[%s4389 + $0xc] sm:$0xf]
        %v4894 = vsel %vm793, %v4589, %v4893
        %4895 = vst [vmem:[%s4389 + $0xc] sm:$0xf] %v4894
        %4896 = vst [vmem:[%s4389 + $0x10] sm:$0xf] %v4598
        %v4897 = vld [vmem:[%s4389 + $0x14] sm:$0x1]
        %v4898 = vsel %vm371, %v4599, %v4897
        %4899 = vst [vmem:[%s4389 + $0x14] sm:$0x1] %v4898
        %v4900 = vld [vmem:[%s4389 + $0x18] sm:$0xf]
        %v4901 = vsel %vm793, %v4606, %v4900
        %4902 = vst [vmem:[%s4389 + $0x18] sm:$0xf] %v4901
        %4903 = vst [vmem:[%s4389 + $0x1c] sm:$0xf] %v4615
        %v4904 = vld [vmem:[%s4389 + $0x20] sm:$0x1]
        %v4905 = vsel %vm371, %v4616, %v4904
        %4906 = vst [vmem:[%s4389 + $0x20] sm:$0x1] %v4905
        %v4907 = vld [vmem:[%s4389 + $0x24] sm:$0xf]
        %v4908 = vsel %vm793, %v4623, %v4907
        %4909 = vst [vmem:[%s4389 + $0x24] sm:$0xf] %v4908
        %4910 = vst [vmem:[%s4389 + $0x28] sm:$0xf] %v4632
        %v4911 = vld [vmem:[%s4389 + $0x2c] sm:$0x1]
        %v4912 = vsel %vm371, %v4633, %v4911
        %4913 = vst [vmem:[%s4389 + $0x2c] sm:$0x1] %v4912
        %v4914 = vld [vmem:[%s4389 + $0x30] sm:$0xf]
        %v4915 = vsel %vm793, %v4640, %v4914
        %4916 = vst [vmem:[%s4389 + $0x30] sm:$0xf] %v4915
        %4917 = vst [vmem:[%s4389 + $0x34] sm:$0xf] %v4649
        %v4918 = vld [vmem:[%s4389 + $0x38] sm:$0x1]
        %v4919 = vsel %vm371, %v4650, %v4918
        %4920 = vst [vmem:[%s4389 + $0x38] sm:$0x1] %v4919
        %v4921 = vld [vmem:[%s4389 + $0x3c] sm:$0xf]
        %v4922 = vsel %vm793, %v4657, %v4921
        %4923 = vst [vmem:[%s4389 + $0x3c] sm:$0xf] %v4922
        %4924 = vst [vmem:[%s4389 + $0x40] sm:$0xf] %v4666
        %v4925 = vld [vmem:[%s4389 + $0x44] sm:$0x1]
        %v4926 = vsel %vm371, %v4667, %v4925
        %4927 = vst [vmem:[%s4389 + $0x44] sm:$0x1] %v4926
        %v4928 = vld [vmem:[%s4389 + $0x48] sm:$0xf]
        %v4929 = vsel %vm793, %v4674, %v4928
        %4930 = vst [vmem:[%s4389 + $0x48] sm:$0xf] %v4929
        %4931 = vst [vmem:[%s4389 + $0x4c] sm:$0xf] %v4683
        %v4932 = vld [vmem:[%s4389 + $0x50] sm:$0x1]
        %v4933 = vsel %vm371, %v4684, %v4932
        %4934 = vst [vmem:[%s4389 + $0x50] sm:$0x1] %v4933
        %v4935 = vld [vmem:[%s4389 + $0x54] sm:$0xf]
        %v4936 = vsel %vm793, %v4691, %v4935
        %4937 = vst [vmem:[%s4389 + $0x54] sm:$0xf] %v4936
        %4938 = vst [vmem:[%s4389 + $0x58] sm:$0xf] %v4700
        %v4939 = vld [vmem:[%s4389 + $0x5c] sm:$0x1]
        %v4940 = vsel %vm371, %v4701, %v4939
        %4941 = vst [vmem:[%s4389 + $0x5c] sm:$0x1] %v4940
        %v4942 = vld [vmem:[%s4389 + $0x60] sm:$0xf]
        %v4943 = vsel %vm793, %v4708, %v4942
        %4944 = vst [vmem:[%s4389 + $0x60] sm:$0xf] %v4943
        %4945 = vst [vmem:[%s4389 + $0x64] sm:$0xf] %v4717
        %v4946 = vld [vmem:[%s4389 + $0x68] sm:$0x1]
        %v4947 = vsel %vm371, %v4718, %v4946
        %4948 = vst [vmem:[%s4389 + $0x68] sm:$0x1] %v4947
        %v4949 = vld [vmem:[%s4389 + $0x6c] sm:$0xf]
        %v4950 = vsel %vm793, %v4725, %v4949
        %4951 = vst [vmem:[%s4389 + $0x6c] sm:$0xf] %v4950
        %4952 = vst [vmem:[%s4389 + $0x70] sm:$0xf] %v4734
        %v4953 = vld [vmem:[%s4389 + $0x74] sm:$0x1]
        %v4954 = vsel %vm371, %v4735, %v4953
        %4955 = vst [vmem:[%s4389 + $0x74] sm:$0x1] %v4954
        %v4956 = vld [vmem:[%s4389 + $0x78] sm:$0xf]
        %v4957 = vsel %vm793, %v4742, %v4956
        %4958 = vst [vmem:[%s4389 + $0x78] sm:$0xf] %v4957
        %4959 = vst [vmem:[%s4389 + $0x7c] sm:$0xf] %v4751
        %v4960 = vld [vmem:[%s4389 + $0x80] sm:$0x1]
        %v4961 = vsel %vm371, %v4752, %v4960
        %4962 = vst [vmem:[%s4389 + $0x80] sm:$0x1] %v4961
        %v4963 = vld [vmem:[%s4389 + $0x84] sm:$0xf]
        %v4964 = vsel %vm793, %v4759, %v4963
        %4965 = vst [vmem:[%s4389 + $0x84] sm:$0xf] %v4964
        %4966 = vst [vmem:[%s4389 + $0x88] sm:$0xf] %v4768
        %v4967 = vld [vmem:[%s4389 + $0x8c] sm:$0x1]
        %v4968 = vsel %vm371, %v4769, %v4967
        %4969 = vst [vmem:[%s4389 + $0x8c] sm:$0x1] %v4968
        %v4970 = vld [vmem:[%s4389 + $0x90] sm:$0xf]
        %v4971 = vsel %vm793, %v4776, %v4970
        %4972 = vst [vmem:[%s4389 + $0x90] sm:$0xf] %v4971
        %4973 = vst [vmem:[%s4389 + $0x94] sm:$0xf] %v4785
        %v4974 = vld [vmem:[%s4389 + $0x98] sm:$0x1]
        %v4975 = vsel %vm371, %v4786, %v4974
        %4976 = vst [vmem:[%s4389 + $0x98] sm:$0x1] %v4975
        %v4977 = vld [vmem:[%s4389 + $0x9c] sm:$0xf]
        %v4978 = vsel %vm793, %v4793, %v4977
        %4979 = vst [vmem:[%s4389 + $0x9c] sm:$0xf] %v4978
        %4980 = vst [vmem:[%s4389 + $0xa0] sm:$0xf] %v4802
        %v4981 = vld [vmem:[%s4389 + $0xa4] sm:$0x1]
        %v4982 = vsel %vm371, %v4803, %v4981
        %4983 = vst [vmem:[%s4389 + $0xa4] sm:$0x1] %v4982
        %v4984 = vld [vmem:[%s4389 + $0xa8] sm:$0xf]
        %v4985 = vsel %vm793, %v4810, %v4984
        %4986 = vst [vmem:[%s4389 + $0xa8] sm:$0xf] %v4985
        %4987 = vst [vmem:[%s4389 + $0xac] sm:$0xf] %v4819
        %v4988 = vld [vmem:[%s4389 + $0xb0] sm:$0x1]
        %v4989 = vsel %vm371, %v4820, %v4988
        %4990 = vst [vmem:[%s4389 + $0xb0] sm:$0x1] %v4989
        %v4991 = vld [vmem:[%s4389 + $0xb4] sm:$0xf]
        %v4992 = vsel %vm793, %v4827, %v4991
        %4993 = vst [vmem:[%s4389 + $0xb4] sm:$0xf] %v4992
        %4994 = vst [vmem:[%s4389 + $0xb8] sm:$0xf] %v4836
        %v4995 = vld [vmem:[%s4389 + $0xbc] sm:$0x1]
        %v4996 = vsel %vm371, %v4837, %v4995
        %4997 = vst [vmem:[%s4389 + $0xbc] sm:$0x1] %v4996
        %v4998 = vld [vmem:[#allocation3] sm:$0xf]
        %v4999 = vld [vmem:[#allocation3 + $0x4] sm:$0xf]
        %v5000 = vld [vmem:[#allocation3 + $0xc] sm:$0xf]
        %v5001 = vld [vmem:[#allocation3 + $0x10] sm:$0xf]
        %v5002 = vld [vmem:[#allocation3 + $0x18] sm:$0xf]
        %v5003 = vld [vmem:[#allocation3 + $0x1c] sm:$0xf]
        %v5004 = vld [vmem:[#allocation3 + $0x24] sm:$0xf]
        %v5005 = vld [vmem:[#allocation3 + $0x28] sm:$0xf]
        %v5006 = vld [vmem:[#allocation3 + $0x30] sm:$0xf]
        %v5007 = vld [vmem:[#allocation3 + $0x34] sm:$0xf]
        %v5008 = vld [vmem:[#allocation3 + $0x3c] sm:$0xf]
        %v5009 = vld [vmem:[#allocation3 + $0x40] sm:$0xf]
        %v5010 = vld [vmem:[#allocation3 + $0x48] sm:$0xf]
        %v5011 = vld [vmem:[#allocation3 + $0x4c] sm:$0xf]
        %v5012 = vld [vmem:[#allocation3 + $0x54] sm:$0xf]
        %v5013 = vld [vmem:[#allocation3 + $0x58] sm:$0xf]
        %v5014 = vld [vmem:[#allocation3 + $0x60] sm:$0xf]
        %v5015 = vld [vmem:[#allocation3 + $0x64] sm:$0xf]
        %v5016 = vld [vmem:[#allocation3 + $0x6c] sm:$0xf]
        %v5017 = vld [vmem:[#allocation3 + $0x70] sm:$0xf]
        %v5018 = vld [vmem:[#allocation3 + $0x78] sm:$0xf]
        %v5019 = vld [vmem:[#allocation3 + $0x7c] sm:$0xf]
        %v5020 = vld [vmem:[#allocation3 + $0x84] sm:$0xf]
        %v5021 = vld [vmem:[#allocation3 + $0x88] sm:$0xf]
        %v5022 = vld [vmem:[#allocation3 + $0x90] sm:$0xf]
        %v5023 = vld [vmem:[#allocation3 + $0x94] sm:$0xf]
        %v5024 = vld [vmem:[#allocation3 + $0x9c] sm:$0xf]
        %v5025 = vld [vmem:[#allocation3 + $0xa0] sm:$0xf]
        %v5026 = vld [vmem:[#allocation3 + $0xa8] sm:$0xf]
        %v5027 = vld [vmem:[#allocation3 + $0xac] sm:$0xf]
        %v5028 = vld [vmem:[#allocation3 + $0xb4] sm:$0xf]
        %v5029 = vld [vmem:[#allocation3 + $0xb8] sm:$0xf]
        %v5030 = vld [vmem:[#allocation3 + $0x8] sm:$0x1]
        %v5031 = vld [vmem:[#allocation3 + $0x14] sm:$0x1]
        %v5032 = vld [vmem:[#allocation3 + $0x20] sm:$0x1]
        %v5033 = vld [vmem:[#allocation3 + $0x2c] sm:$0x1]
        %v5034 = vld [vmem:[#allocation3 + $0x38] sm:$0x1]
        %v5035 = vld [vmem:[#allocation3 + $0x44] sm:$0x1]
        %v5036 = vld [vmem:[#allocation3 + $0x50] sm:$0x1]
        %v5037 = vld [vmem:[#allocation3 + $0x5c] sm:$0x1]
        %v5038 = vld [vmem:[#allocation3 + $0x68] sm:$0x1]
        %v5039 = vld [vmem:[#allocation3 + $0x74] sm:$0x1]
        %v5040 = vld [vmem:[#allocation3 + $0x80] sm:$0x1]
        %v5041 = vld [vmem:[#allocation3 + $0x8c] sm:$0x1]
        %v5042 = vld [vmem:[#allocation3 + $0x98] sm:$0x1]
        %v5043 = vld [vmem:[#allocation3 + $0xa4] sm:$0x1]
        %v5044 = vld [vmem:[#allocation3 + $0xb0] sm:$0x1]
        %v5045 = vld [vmem:[#allocation3 + $0xbc] sm:$0x1]
        %v5046 = vld [vmem:[#allocation3] sm:$0xe]
        %v5047 = vld [vmem:[#allocation3 + $0xc] sm:$0xe]
        %v5048 = vld [vmem:[#allocation3 + $0x18] sm:$0xe]
        %v5049 = vld [vmem:[#allocation3 + $0x24] sm:$0xe]
        %v5050 = vld [vmem:[#allocation3 + $0x30] sm:$0xe]
        %v5051 = vld [vmem:[#allocation3 + $0x3c] sm:$0xe]
        %v5052 = vld [vmem:[#allocation3 + $0x48] sm:$0xe]
        %v5053 = vld [vmem:[#allocation3 + $0x54] sm:$0xe]
        %v5054 = vld [vmem:[#allocation3 + $0x60] sm:$0xe]
        %v5055 = vld [vmem:[#allocation3 + $0x6c] sm:$0xe]
        %v5056 = vld [vmem:[#allocation3 + $0x78] sm:$0xe]
        %v5057 = vld [vmem:[#allocation3 + $0x84] sm:$0xe]
        %v5058 = vld [vmem:[#allocation3 + $0x90] sm:$0xe]
        %v5059 = vld [vmem:[#allocation3 + $0x9c] sm:$0xe]
        %v5060 = vld [vmem:[#allocation3 + $0xa8] sm:$0xe]
        %v5061 = vld [vmem:[#allocation3 + $0xb4] sm:$0xe]
        %v5094 = vunpack.c.l.b16 %v4998
        %v5095 = vunpack.c.l.b16 %v4999
        %v5096 = vunpack.c.l.b16 %v5000
        %v5097 = vunpack.c.l.b16 %v5001
        %v5098 = vunpack.c.l.b16 %v5002
        %v5099 = vunpack.c.l.b16 %v5003
        %v5100 = vunpack.c.l.b16 %v5004
        %v5101 = vunpack.c.l.b16 %v5005
        %v5102 = vunpack.c.l.b16 %v5006
        %v5103 = vunpack.c.l.b16 %v5007
        %v5104 = vunpack.c.l.b16 %v5008
        %v5105 = vunpack.c.l.b16 %v5009
        %v5106 = vunpack.c.l.b16 %v5010
        %v5107 = vunpack.c.l.b16 %v5011
        %v5108 = vunpack.c.l.b16 %v5012
        %v5109 = vunpack.c.l.b16 %v5013
        %v5110 = vunpack.c.l.b16 %v5014
        %v5111 = vunpack.c.l.b16 %v5015
        %v5112 = vunpack.c.l.b16 %v5016
        %v5113 = vunpack.c.l.b16 %v5017
        %v5114 = vunpack.c.l.b16 %v5018
        %v5115 = vunpack.c.l.b16 %v5019
        %v5116 = vunpack.c.l.b16 %v5020
        %v5117 = vunpack.c.l.b16 %v5021
        %v5118 = vunpack.c.l.b16 %v5022
        %v5119 = vunpack.c.l.b16 %v5023
        %v5120 = vunpack.c.l.b16 %v5024
        %v5121 = vunpack.c.l.b16 %v5025
        %v5122 = vunpack.c.l.b16 %v5026
        %v5123 = vunpack.c.l.b16 %v5027
        %v5124 = vunpack.c.l.b16 %v5028
        %v5125 = vunpack.c.l.b16 %v5029
        %v5126 = vpack.c.b16 %v5095, %v5094
        %v5127 = vpack.c.b16 %v5097, %v5096
        %v5128 = vpack.c.b16 %v5099, %v5098
        %v5129 = vpack.c.b16 %v5101, %v5100
        %v5130 = vpack.c.b16 %v5103, %v5102
        %v5131 = vpack.c.b16 %v5105, %v5104
        %v5132 = vpack.c.b16 %v5107, %v5106
        %v5133 = vpack.c.b16 %v5109, %v5108
        %v5134 = vpack.c.b16 %v5111, %v5110
        %v5135 = vpack.c.b16 %v5113, %v5112
        %v5136 = vpack.c.b16 %v5115, %v5114
        %v5137 = vpack.c.b16 %v5117, %v5116
        %v5138 = vpack.c.b16 %v5119, %v5118
        %v5139 = vpack.c.b16 %v5121, %v5120
        %v5140 = vpack.c.b16 %v5123, %v5122
        %v5141 = vpack.c.b16 %v5125, %v5124
        %v5174 = vunpack.c.l.b16 %v5030
        %v5175 = vunpack.c.l.b16 %v5031
        %v5176 = vunpack.c.l.b16 %v5032
        %v5177 = vunpack.c.l.b16 %v5033
        %v5178 = vunpack.c.l.b16 %v5034
        %v5179 = vunpack.c.l.b16 %v5035
        %v5180 = vunpack.c.l.b16 %v5036
        %v5181 = vunpack.c.l.b16 %v5037
        %v5182 = vunpack.c.l.b16 %v5038
        %v5183 = vunpack.c.l.b16 %v5039
        %v5184 = vunpack.c.l.b16 %v5040
        %v5185 = vunpack.c.l.b16 %v5041
        %v5186 = vunpack.c.l.b16 %v5042
        %v5187 = vunpack.c.l.b16 %v5043
        %v5188 = vunpack.c.l.b16 %v5044
        %v5189 = vunpack.c.l.b16 %v5045
        %v5190 = vpack.c.b16 %v5174, %v5174
        %v5191 = vpack.c.b16 %v5175, %v5175
        %v5192 = vpack.c.b16 %v5176, %v5176
        %v5193 = vpack.c.b16 %v5177, %v5177
        %v5194 = vpack.c.b16 %v5178, %v5178
        %v5195 = vpack.c.b16 %v5179, %v5179
        %v5196 = vpack.c.b16 %v5180, %v5180
        %v5197 = vpack.c.b16 %v5181, %v5181
        %v5198 = vpack.c.b16 %v5182, %v5182
        %v5199 = vpack.c.b16 %v5183, %v5183
        %v5200 = vpack.c.b16 %v5184, %v5184
        %v5201 = vpack.c.b16 %v5185, %v5185
        %v5202 = vpack.c.b16 %v5186, %v5186
        %v5203 = vpack.c.b16 %v5187, %v5187
        %v5204 = vpack.c.b16 %v5188, %v5188
        %v5205 = vpack.c.b16 %v5189, %v5189
        %v5207 = vshrl.u32 %v5126, 16
        %v5209 = vshll.u32 %v5126, 16
        %v5211 = vrot.slane %v5209, 1
        %v5212 = vor.u32 %v5207, %v5211
        %v5214 = vshll.u32 %v5190, 16
        %v5216 = vrot.slane %v5214, 1
        %v5217 = vsel %vm1114, %v5212, %v5216
        %v5219 = vshrl.u32 %v5127, 16
        %v5221 = vshll.u32 %v5127, 16
        %v5223 = vrot.slane %v5221, 1
        %v5224 = vor.u32 %v5219, %v5223
        %v5226 = vshll.u32 %v5191, 16
        %v5228 = vrot.slane %v5226, 1
        %v5229 = vsel %vm1114, %v5224, %v5228
        %v5231 = vshrl.u32 %v5128, 16
        %v5233 = vshll.u32 %v5128, 16
        %v5235 = vrot.slane %v5233, 1
        %v5236 = vor.u32 %v5231, %v5235
        %v5238 = vshll.u32 %v5192, 16
        %v5240 = vrot.slane %v5238, 1
        %v5241 = vsel %vm1114, %v5236, %v5240
        %v5243 = vshrl.u32 %v5129, 16
        %v5245 = vshll.u32 %v5129, 16
        %v5247 = vrot.slane %v5245, 1
        %v5248 = vor.u32 %v5243, %v5247
        %v5250 = vshll.u32 %v5193, 16
        %v5252 = vrot.slane %v5250, 1
        %v5253 = vsel %vm1114, %v5248, %v5252
        %v5255 = vshrl.u32 %v5130, 16
        %v5257 = vshll.u32 %v5130, 16
        %v5259 = vrot.slane %v5257, 1
        %v5260 = vor.u32 %v5255, %v5259
        %v5262 = vshll.u32 %v5194, 16
        %v5264 = vrot.slane %v5262, 1
        %v5265 = vsel %vm1114, %v5260, %v5264
        %v5267 = vshrl.u32 %v5131, 16
        %v5269 = vshll.u32 %v5131, 16
        %v5271 = vrot.slane %v5269, 1
        %v5272 = vor.u32 %v5267, %v5271
        %v5274 = vshll.u32 %v5195, 16
        %v5276 = vrot.slane %v5274, 1
        %v5277 = vsel %vm1114, %v5272, %v5276
        %v5279 = vshrl.u32 %v5132, 16
        %v5281 = vshll.u32 %v5132, 16
        %v5283 = vrot.slane %v5281, 1
        %v5284 = vor.u32 %v5279, %v5283
        %v5286 = vshll.u32 %v5196, 16
        %v5288 = vrot.slane %v5286, 1
        %v5289 = vsel %vm1114, %v5284, %v5288
        %v5291 = vshrl.u32 %v5133, 16
        %v5293 = vshll.u32 %v5133, 16
        %v5295 = vrot.slane %v5293, 1
        %v5296 = vor.u32 %v5291, %v5295
        %v5298 = vshll.u32 %v5197, 16
        %v5300 = vrot.slane %v5298, 1
        %v5301 = vsel %vm1114, %v5296, %v5300
        %v5303 = vshrl.u32 %v5134, 16
        %v5305 = vshll.u32 %v5134, 16
        %v5307 = vrot.slane %v5305, 1
        %v5308 = vor.u32 %v5303, %v5307
        %v5310 = vshll.u32 %v5198, 16
        %v5312 = vrot.slane %v5310, 1
        %v5313 = vsel %vm1114, %v5308, %v5312
        %v5315 = vshrl.u32 %v5135, 16
        %v5317 = vshll.u32 %v5135, 16
        %v5319 = vrot.slane %v5317, 1
        %v5320 = vor.u32 %v5315, %v5319
        %v5322 = vshll.u32 %v5199, 16
        %v5324 = vrot.slane %v5322, 1
        %v5325 = vsel %vm1114, %v5320, %v5324
        %v5327 = vshrl.u32 %v5136, 16
        %v5329 = vshll.u32 %v5136, 16
        %v5331 = vrot.slane %v5329, 1
        %v5332 = vor.u32 %v5327, %v5331
        %v5334 = vshll.u32 %v5200, 16
        %v5336 = vrot.slane %v5334, 1
        %v5337 = vsel %vm1114, %v5332, %v5336
        %v5339 = vshrl.u32 %v5137, 16
        %v5341 = vshll.u32 %v5137, 16
        %v5343 = vrot.slane %v5341, 1
        %v5344 = vor.u32 %v5339, %v5343
        %v5346 = vshll.u32 %v5201, 16
        %v5348 = vrot.slane %v5346, 1
        %v5349 = vsel %vm1114, %v5344, %v5348
        %v5351 = vshrl.u32 %v5138, 16
        %v5353 = vshll.u32 %v5138, 16
        %v5355 = vrot.slane %v5353, 1
        %v5356 = vor.u32 %v5351, %v5355
        %v5358 = vshll.u32 %v5202, 16
        %v5360 = vrot.slane %v5358, 1
        %v5361 = vsel %vm1114, %v5356, %v5360
        %v5363 = vshrl.u32 %v5139, 16
        %v5365 = vshll.u32 %v5139, 16
        %v5367 = vrot.slane %v5365, 1
        %v5368 = vor.u32 %v5363, %v5367
        %v5370 = vshll.u32 %v5203, 16
        %v5372 = vrot.slane %v5370, 1
        %v5373 = vsel %vm1114, %v5368, %v5372
        %v5375 = vshrl.u32 %v5140, 16
        %v5377 = vshll.u32 %v5140, 16
        %v5379 = vrot.slane %v5377, 1
        %v5380 = vor.u32 %v5375, %v5379
        %v5382 = vshll.u32 %v5204, 16
        %v5384 = vrot.slane %v5382, 1
        %v5385 = vsel %vm1114, %v5380, %v5384
        %v5387 = vshrl.u32 %v5141, 16
        %v5389 = vshll.u32 %v5141, 16
        %v5391 = vrot.slane %v5389, 1
        %v5392 = vor.u32 %v5387, %v5391
        %v5394 = vshll.u32 %v5205, 16
        %v5396 = vrot.slane %v5394, 1
        %v5397 = vsel %vm1114, %v5392, %v5396
        %v5430 = vunpack.c.l.b16 %v5046
        %v5431 = vunpack.c.l.b16 %v5047
        %v5432 = vunpack.c.l.b16 %v5048
        %v5433 = vunpack.c.l.b16 %v5049
        %v5434 = vunpack.c.l.b16 %v5050
        %v5435 = vunpack.c.l.b16 %v5051
        %v5436 = vunpack.c.l.b16 %v5052
        %v5437 = vunpack.c.l.b16 %v5053
        %v5438 = vunpack.c.l.b16 %v5054
        %v5439 = vunpack.c.l.b16 %v5055
        %v5440 = vunpack.c.l.b16 %v5056
        %v5441 = vunpack.c.l.b16 %v5057
        %v5442 = vunpack.c.l.b16 %v5058
        %v5443 = vunpack.c.l.b16 %v5059
        %v5444 = vunpack.c.l.b16 %v5060
        %v5445 = vunpack.c.l.b16 %v5061
        %v5446 = vpack.c.b16 %v5095, %v5430
        %v5447 = vpack.c.b16 %v5097, %v5431
        %v5448 = vpack.c.b16 %v5099, %v5432
        %v5449 = vpack.c.b16 %v5101, %v5433
        %v5450 = vpack.c.b16 %v5103, %v5434
        %v5451 = vpack.c.b16 %v5105, %v5435
        %v5452 = vpack.c.b16 %v5107, %v5436
        %v5453 = vpack.c.b16 %v5109, %v5437
        %v5454 = vpack.c.b16 %v5111, %v5438
        %v5455 = vpack.c.b16 %v5113, %v5439
        %v5456 = vpack.c.b16 %v5115, %v5440
        %v5457 = vpack.c.b16 %v5117, %v5441
        %v5458 = vpack.c.b16 %v5119, %v5442
        %v5459 = vpack.c.b16 %v5121, %v5443
        %v5460 = vpack.c.b16 %v5123, %v5444
        %v5461 = vpack.c.b16 %v5125, %v5445
        %v5462 = vrot.slane %v5446, 1
        %v5463 = vrot.slane %v5190, 1
        %v5464 = vsel %vm1371, %v5462, %v5463
        %v5465 = vrot.slane %v5447, 1
        %v5466 = vrot.slane %v5191, 1
        %v5467 = vsel %vm1371, %v5465, %v5466
        %v5468 = vrot.slane %v5448, 1
        %v5469 = vrot.slane %v5192, 1
        %v5470 = vsel %vm1371, %v5468, %v5469
        %v5471 = vrot.slane %v5449, 1
        %v5472 = vrot.slane %v5193, 1
        %v5473 = vsel %vm1371, %v5471, %v5472
        %v5474 = vrot.slane %v5450, 1
        %v5475 = vrot.slane %v5194, 1
        %v5476 = vsel %vm1371, %v5474, %v5475
        %v5477 = vrot.slane %v5451, 1
        %v5478 = vrot.slane %v5195, 1
        %v5479 = vsel %vm1371, %v5477, %v5478
        %v5480 = vrot.slane %v5452, 1
        %v5481 = vrot.slane %v5196, 1
        %v5482 = vsel %vm1371, %v5480, %v5481
        %v5483 = vrot.slane %v5453, 1
        %v5484 = vrot.slane %v5197, 1
        %v5485 = vsel %vm1371, %v5483, %v5484
        %v5486 = vrot.slane %v5454, 1
        %v5487 = vrot.slane %v5198, 1
        %v5488 = vsel %vm1371, %v5486, %v5487
        %v5489 = vrot.slane %v5455, 1
        %v5490 = vrot.slane %v5199, 1
        %v5491 = vsel %vm1371, %v5489, %v5490
        %v5492 = vrot.slane %v5456, 1
        %v5493 = vrot.slane %v5200, 1
        %v5494 = vsel %vm1371, %v5492, %v5493
        %v5495 = vrot.slane %v5457, 1
        %v5496 = vrot.slane %v5201, 1
        %v5497 = vsel %vm1371, %v5495, %v5496
        %v5498 = vrot.slane %v5458, 1
        %v5499 = vrot.slane %v5202, 1
        %v5500 = vsel %vm1371, %v5498, %v5499
        %v5501 = vrot.slane %v5459, 1
        %v5502 = vrot.slane %v5203, 1
        %v5503 = vsel %vm1371, %v5501, %v5502
        %v5504 = vrot.slane %v5460, 1
        %v5505 = vrot.slane %v5204, 1
        %v5506 = vsel %vm1371, %v5504, %v5505
        %v5507 = vrot.slane %v5461, 1
        %v5508 = vrot.slane %v5205, 1
        %v5509 = vsel %vm1371, %v5507, %v5508
        %v5526 = vld [vmem:[#allocation10] sm:$0xf]
        %v5527 = vld [vmem:[#allocation10 + $0x4] sm:$0xf]
        %v5528 = vld [vmem:[#allocation10 + $0x8] sm:$0xf]
        %v5529 = vld [vmem:[#allocation10 + $0xc] sm:$0xf]
        %v5530 = vld [vmem:[#allocation10 + $0x10] sm:$0xf]
        %v5531 = vld [vmem:[#allocation10 + $0x14] sm:$0xf]
        %v5532 = vld [vmem:[#allocation10 + $0x18] sm:$0xf]
        %v5533 = vld [vmem:[#allocation10 + $0x1c] sm:$0xf]
        %v5534 = vld [vmem:[#allocation10 + $0x20] sm:$0xf]
        %v5535 = vld [vmem:[#allocation10 + $0x24] sm:$0xf]
        %v5536 = vld [vmem:[#allocation10 + $0x28] sm:$0xf]
        %v5537 = vld [vmem:[#allocation10 + $0x2c] sm:$0xf]
        %v5538 = vld [vmem:[#allocation10 + $0x30] sm:$0xf]
        %v5539 = vld [vmem:[#allocation10 + $0x34] sm:$0xf]
        %v5540 = vld [vmem:[#allocation10 + $0x38] sm:$0xf]
        %v5541 = vld [vmem:[#allocation10 + $0x3c] sm:$0xf]
        %v5542 = vld [vmem:[#allocation10 + $0x40] sm:$0xf]
        %v5543 = vld [vmem:[#allocation10 + $0x44] sm:$0xf]
        %v5544 = vld [vmem:[#allocation10 + $0x48] sm:$0xf]
        %v5545 = vld [vmem:[#allocation10 + $0x4c] sm:$0xf]
        %v5546 = vld [vmem:[#allocation10 + $0x50] sm:$0xf]
        %v5547 = vld [vmem:[#allocation10 + $0x54] sm:$0xf]
        %v5548 = vld [vmem:[#allocation10 + $0x58] sm:$0xf]
        %v5549 = vld [vmem:[#allocation10 + $0x5c] sm:$0xf]
        %v5550 = vld [vmem:[#allocation10 + $0x60] sm:$0xf]
        %v5551 = vld [vmem:[#allocation10 + $0x64] sm:$0xf]
        %v5552 = vld [vmem:[#allocation10 + $0x68] sm:$0xf]
        %v5553 = vld [vmem:[#allocation10 + $0x6c] sm:$0xf]
        %v5554 = vld [vmem:[#allocation10 + $0x70] sm:$0xf]
        %v5555 = vld [vmem:[#allocation10 + $0x74] sm:$0xf]
        %v5556 = vld [vmem:[#allocation10 + $0x78] sm:$0xf]
        %v5557 = vld [vmem:[#allocation10 + $0x7c] sm:$0xf]
        %v5558 = vld [vmem:[#allocation10 + $0x80] sm:$0xf]
        %v5559 = vld [vmem:[#allocation10 + $0x84] sm:$0xf]
        %v5560 = vld [vmem:[#allocation10 + $0x88] sm:$0xf]
        %v5561 = vld [vmem:[#allocation10 + $0x8c] sm:$0xf]
        %v5562 = vld [vmem:[#allocation10 + $0x90] sm:$0xf]
        %v5563 = vld [vmem:[#allocation10 + $0x94] sm:$0xf]
        %v5564 = vld [vmem:[#allocation10 + $0x98] sm:$0xf]
        %v5565 = vld [vmem:[#allocation10 + $0x9c] sm:$0xf]
        %v5566 = vld [vmem:[#allocation10 + $0xa0] sm:$0xf]
        %v5567 = vld [vmem:[#allocation10 + $0xa4] sm:$0xf]
        %v5568 = vld [vmem:[#allocation10 + $0xa8] sm:$0xf]
        %v5569 = vld [vmem:[#allocation10 + $0xac] sm:$0xf]
        %v5570 = vld [vmem:[#allocation10 + $0xb0] sm:$0xf]
        %v5571 = vld [vmem:[#allocation10 + $0xb4] sm:$0xf]
        %v5572 = vld [vmem:[#allocation10 + $0xb8] sm:$0xf]
        %v5573 = vld [vmem:[#allocation10 + $0xbc] sm:$0xf]
        %v5574 = vld [vmem:[%s4389] sm:$0xf]
        %v5575 = vld [vmem:[%s4389 + $0x4] sm:$0xf]
        %v5576 = vld [vmem:[%s4389 + $0xc] sm:$0xf]
        %v5577 = vld [vmem:[%s4389 + $0x10] sm:$0xf]
        %v5578 = vld [vmem:[%s4389 + $0x18] sm:$0xf]
        %v5579 = vld [vmem:[%s4389 + $0x1c] sm:$0xf]
        %v5580 = vld [vmem:[%s4389 + $0x24] sm:$0xf]
        %v5581 = vld [vmem:[%s4389 + $0x28] sm:$0xf]
        %v5582 = vld [vmem:[%s4389 + $0x30] sm:$0xf]
        %v5583 = vld [vmem:[%s4389 + $0x34] sm:$0xf]
        %v5584 = vld [vmem:[%s4389 + $0x3c] sm:$0xf]
        %v5585 = vld [vmem:[%s4389 + $0x40] sm:$0xf]
        %v5586 = vld [vmem:[%s4389 + $0x48] sm:$0xf]
        %v5587 = vld [vmem:[%s4389 + $0x4c] sm:$0xf]
        %v5588 = vld [vmem:[%s4389 + $0x54] sm:$0xf]
        %v5589 = vld [vmem:[%s4389 + $0x58] sm:$0xf]
        %v5590 = vld [vmem:[%s4389 + $0x60] sm:$0xf]
        %v5591 = vld [vmem:[%s4389 + $0x64] sm:$0xf]
        %v5592 = vld [vmem:[%s4389 + $0x6c] sm:$0xf]
        %v5593 = vld [vmem:[%s4389 + $0x70] sm:$0xf]
        %v5594 = vld [vmem:[%s4389 + $0x78] sm:$0xf]
        %v5595 = vld [vmem:[%s4389 + $0x7c] sm:$0xf]
        %v5596 = vld [vmem:[%s4389 + $0x84] sm:$0xf]
        %v5597 = vld [vmem:[%s4389 + $0x88] sm:$0xf]
        %v5598 = vld [vmem:[%s4389 + $0x90] sm:$0xf]
        %v5599 = vld [vmem:[%s4389 + $0x94] sm:$0xf]
        %v5600 = vld [vmem:[%s4389 + $0x9c] sm:$0xf]
        %v5601 = vld [vmem:[%s4389 + $0xa0] sm:$0xf]
        %v5602 = vld [vmem:[%s4389 + $0xa8] sm:$0xf]
        %v5603 = vld [vmem:[%s4389 + $0xac] sm:$0xf]
        %v5604 = vld [vmem:[%s4389 + $0xb4] sm:$0xf]
        %v5605 = vld [vmem:[%s4389 + $0xb8] sm:$0xf]
        %v5606 = vld [vmem:[%s4389 + $0x8] sm:$0x1]
        %v5607 = vld [vmem:[%s4389 + $0x14] sm:$0x1]
        %v5608 = vld [vmem:[%s4389 + $0x20] sm:$0x1]
        %v5609 = vld [vmem:[%s4389 + $0x2c] sm:$0x1]
        %v5610 = vld [vmem:[%s4389 + $0x38] sm:$0x1]
        %v5611 = vld [vmem:[%s4389 + $0x44] sm:$0x1]
        %v5612 = vld [vmem:[%s4389 + $0x50] sm:$0x1]
        %v5613 = vld [vmem:[%s4389 + $0x5c] sm:$0x1]
        %v5614 = vld [vmem:[%s4389 + $0x68] sm:$0x1]
        %v5615 = vld [vmem:[%s4389 + $0x74] sm:$0x1]
        %v5616 = vld [vmem:[%s4389 + $0x80] sm:$0x1]
        %v5617 = vld [vmem:[%s4389 + $0x8c] sm:$0x1]
        %v5618 = vld [vmem:[%s4389 + $0x98] sm:$0x1]
        %v5619 = vld [vmem:[%s4389 + $0xa4] sm:$0x1]
        %v5620 = vld [vmem:[%s4389 + $0xb0] sm:$0x1]
        %v5621 = vld [vmem:[%s4389 + $0xbc] sm:$0x1]
        %v5622 = vld [vmem:[%s4389] sm:$0xe]
        %v5623 = vld [vmem:[%s4389 + $0xc] sm:$0xe]
        %v5624 = vld [vmem:[%s4389 + $0x18] sm:$0xe]
        %v5625 = vld [vmem:[%s4389 + $0x24] sm:$0xe]
        %v5626 = vld [vmem:[%s4389 + $0x30] sm:$0xe]
        %v5627 = vld [vmem:[%s4389 + $0x3c] sm:$0xe]
        %v5628 = vld [vmem:[%s4389 + $0x48] sm:$0xe]
        %v5629 = vld [vmem:[%s4389 + $0x54] sm:$0xe]
        %v5630 = vld [vmem:[%s4389 + $0x60] sm:$0xe]
        %v5631 = vld [vmem:[%s4389 + $0x6c] sm:$0xe]
        %v5632 = vld [vmem:[%s4389 + $0x78] sm:$0xe]
        %v5633 = vld [vmem:[%s4389 + $0x84] sm:$0xe]
        %v5634 = vld [vmem:[%s4389 + $0x90] sm:$0xe]
        %v5635 = vld [vmem:[%s4389 + $0x9c] sm:$0xe]
        %v5636 = vld [vmem:[%s4389 + $0xa8] sm:$0xe]
        %v5637 = vld [vmem:[%s4389 + $0xb4] sm:$0xe]
        %v5670 = vunpack.c.l.b16 %v5574
        %v5671 = vunpack.c.l.b16 %v5575
        %v5672 = vunpack.c.l.b16 %v5576
        %v5673 = vunpack.c.l.b16 %v5577
        %v5674 = vunpack.c.l.b16 %v5578
        %v5675 = vunpack.c.l.b16 %v5579
        %v5676 = vunpack.c.l.b16 %v5580
        %v5677 = vunpack.c.l.b16 %v5581
        %v5678 = vunpack.c.l.b16 %v5582
        %v5679 = vunpack.c.l.b16 %v5583
        %v5680 = vunpack.c.l.b16 %v5584
        %v5681 = vunpack.c.l.b16 %v5585
        %v5682 = vunpack.c.l.b16 %v5586
        %v5683 = vunpack.c.l.b16 %v5587
        %v5684 = vunpack.c.l.b16 %v5588
        %v5685 = vunpack.c.l.b16 %v5589
        %v5686 = vunpack.c.l.b16 %v5590
        %v5687 = vunpack.c.l.b16 %v5591
        %v5688 = vunpack.c.l.b16 %v5592
        %v5689 = vunpack.c.l.b16 %v5593
        %v5690 = vunpack.c.l.b16 %v5594
        %v5691 = vunpack.c.l.b16 %v5595
        %v5692 = vunpack.c.l.b16 %v5596
        %v5693 = vunpack.c.l.b16 %v5597
        %v5694 = vunpack.c.l.b16 %v5598
        %v5695 = vunpack.c.l.b16 %v5599
        %v5696 = vunpack.c.l.b16 %v5600
        %v5697 = vunpack.c.l.b16 %v5601
        %v5698 = vunpack.c.l.b16 %v5602
        %v5699 = vunpack.c.l.b16 %v5603
        %v5700 = vunpack.c.l.b16 %v5604
        %v5701 = vunpack.c.l.b16 %v5605
        %v5702 = vpack.c.b16 %v5671, %v5670
        %v5703 = vpack.c.b16 %v5673, %v5672
        %v5704 = vpack.c.b16 %v5675, %v5674
        %v5705 = vpack.c.b16 %v5677, %v5676
        %v5706 = vpack.c.b16 %v5679, %v5678
        %v5707 = vpack.c.b16 %v5681, %v5680
        %v5708 = vpack.c.b16 %v5683, %v5682
        %v5709 = vpack.c.b16 %v5685, %v5684
        %v5710 = vpack.c.b16 %v5687, %v5686
        %v5711 = vpack.c.b16 %v5689, %v5688
        %v5712 = vpack.c.b16 %v5691, %v5690
        %v5713 = vpack.c.b16 %v5693, %v5692
        %v5714 = vpack.c.b16 %v5695, %v5694
        %v5715 = vpack.c.b16 %v5697, %v5696
        %v5716 = vpack.c.b16 %v5699, %v5698
        %v5717 = vpack.c.b16 %v5701, %v5700
        %v5750 = vunpack.c.l.b16 %v5606
        %v5751 = vunpack.c.l.b16 %v5607
        %v5752 = vunpack.c.l.b16 %v5608
        %v5753 = vunpack.c.l.b16 %v5609
        %v5754 = vunpack.c.l.b16 %v5610
        %v5755 = vunpack.c.l.b16 %v5611
        %v5756 = vunpack.c.l.b16 %v5612
        %v5757 = vunpack.c.l.b16 %v5613
        %v5758 = vunpack.c.l.b16 %v5614
        %v5759 = vunpack.c.l.b16 %v5615
        %v5760 = vunpack.c.l.b16 %v5616
        %v5761 = vunpack.c.l.b16 %v5617
        %v5762 = vunpack.c.l.b16 %v5618
        %v5763 = vunpack.c.l.b16 %v5619
        %v5764 = vunpack.c.l.b16 %v5620
        %v5765 = vunpack.c.l.b16 %v5621
        %v5766 = vpack.c.b16 %v5750, %v5750
        %v5767 = vpack.c.b16 %v5751, %v5751
        %v5768 = vpack.c.b16 %v5752, %v5752
        %v5769 = vpack.c.b16 %v5753, %v5753
        %v5770 = vpack.c.b16 %v5754, %v5754
        %v5771 = vpack.c.b16 %v5755, %v5755
        %v5772 = vpack.c.b16 %v5756, %v5756
        %v5773 = vpack.c.b16 %v5757, %v5757
        %v5774 = vpack.c.b16 %v5758, %v5758
        %v5775 = vpack.c.b16 %v5759, %v5759
        %v5776 = vpack.c.b16 %v5760, %v5760
        %v5777 = vpack.c.b16 %v5761, %v5761
        %v5778 = vpack.c.b16 %v5762, %v5762
        %v5779 = vpack.c.b16 %v5763, %v5763
        %v5780 = vpack.c.b16 %v5764, %v5764
        %v5781 = vpack.c.b16 %v5765, %v5765
        %v5783 = vshrl.u32 %v5702, 16
        %v5785 = vshll.u32 %v5702, 16
        %v5787 = vrot.slane %v5785, 1
        %v5788 = vor.u32 %v5783, %v5787
        %v5790 = vshll.u32 %v5766, 16
        %v5792 = vrot.slane %v5790, 1
        %v5793 = vsel %vm1114, %v5788, %v5792
        %v5795 = vshrl.u32 %v5703, 16
        %v5797 = vshll.u32 %v5703, 16
        %v5799 = vrot.slane %v5797, 1
        %v5800 = vor.u32 %v5795, %v5799
        %v5802 = vshll.u32 %v5767, 16
        %v5804 = vrot.slane %v5802, 1
        %v5805 = vsel %vm1114, %v5800, %v5804
        %v5807 = vshrl.u32 %v5704, 16
        %v5809 = vshll.u32 %v5704, 16
        %v5811 = vrot.slane %v5809, 1
        %v5812 = vor.u32 %v5807, %v5811
        %v5814 = vshll.u32 %v5768, 16
        %v5816 = vrot.slane %v5814, 1
        %v5817 = vsel %vm1114, %v5812, %v5816
        %v5819 = vshrl.u32 %v5705, 16
        %v5821 = vshll.u32 %v5705, 16
        %v5823 = vrot.slane %v5821, 1
        %v5824 = vor.u32 %v5819, %v5823
        %v5826 = vshll.u32 %v5769, 16
        %v5828 = vrot.slane %v5826, 1
        %v5829 = vsel %vm1114, %v5824, %v5828
        %v5831 = vshrl.u32 %v5706, 16
        %v5833 = vshll.u32 %v5706, 16
        %v5835 = vrot.slane %v5833, 1
        %v5836 = vor.u32 %v5831, %v5835
        %v5838 = vshll.u32 %v5770, 16
        %v5840 = vrot.slane %v5838, 1
        %v5841 = vsel %vm1114, %v5836, %v5840
        %v5843 = vshrl.u32 %v5707, 16
        %v5845 = vshll.u32 %v5707, 16
        %v5847 = vrot.slane %v5845, 1
        %v5848 = vor.u32 %v5843, %v5847
        %v5850 = vshll.u32 %v5771, 16
        %v5852 = vrot.slane %v5850, 1
        %v5853 = vsel %vm1114, %v5848, %v5852
        %v5855 = vshrl.u32 %v5708, 16
        %v5857 = vshll.u32 %v5708, 16
        %v5859 = vrot.slane %v5857, 1
        %v5860 = vor.u32 %v5855, %v5859
        %v5862 = vshll.u32 %v5772, 16
        %v5864 = vrot.slane %v5862, 1
        %v5865 = vsel %vm1114, %v5860, %v5864
        %v5867 = vshrl.u32 %v5709, 16
        %v5869 = vshll.u32 %v5709, 16
        %v5871 = vrot.slane %v5869, 1
        %v5872 = vor.u32 %v5867, %v5871
        %v5874 = vshll.u32 %v5773, 16
        %v5876 = vrot.slane %v5874, 1
        %v5877 = vsel %vm1114, %v5872, %v5876
        %v5879 = vshrl.u32 %v5710, 16
        %v5881 = vshll.u32 %v5710, 16
        %v5883 = vrot.slane %v5881, 1
        %v5884 = vor.u32 %v5879, %v5883
        %v5886 = vshll.u32 %v5774, 16
        %v5888 = vrot.slane %v5886, 1
        %v5889 = vsel %vm1114, %v5884, %v5888
        %v5891 = vshrl.u32 %v5711, 16
        %v5893 = vshll.u32 %v5711, 16
        %v5895 = vrot.slane %v5893, 1
        %v5896 = vor.u32 %v5891, %v5895
        %v5898 = vshll.u32 %v5775, 16
        %v5900 = vrot.slane %v5898, 1
        %v5901 = vsel %vm1114, %v5896, %v5900
        %v5903 = vshrl.u32 %v5712, 16
        %v5905 = vshll.u32 %v5712, 16
        %v5907 = vrot.slane %v5905, 1
        %v5908 = vor.u32 %v5903, %v5907
        %v5910 = vshll.u32 %v5776, 16
        %v5912 = vrot.slane %v5910, 1
        %v5913 = vsel %vm1114, %v5908, %v5912
        %v5915 = vshrl.u32 %v5713, 16
        %v5917 = vshll.u32 %v5713, 16
        %v5919 = vrot.slane %v5917, 1
        %v5920 = vor.u32 %v5915, %v5919
        %v5922 = vshll.u32 %v5777, 16
        %v5924 = vrot.slane %v5922, 1
        %v5925 = vsel %vm1114, %v5920, %v5924
        %v5927 = vshrl.u32 %v5714, 16
        %v5929 = vshll.u32 %v5714, 16
        %v5931 = vrot.slane %v5929, 1
        %v5932 = vor.u32 %v5927, %v5931
        %v5934 = vshll.u32 %v5778, 16
        %v5936 = vrot.slane %v5934, 1
        %v5937 = vsel %vm1114, %v5932, %v5936
        %v5939 = vshrl.u32 %v5715, 16
        %v5941 = vshll.u32 %v5715, 16
        %v5943 = vrot.slane %v5941, 1
        %v5944 = vor.u32 %v5939, %v5943
        %v5946 = vshll.u32 %v5779, 16
        %v5948 = vrot.slane %v5946, 1
        %v5949 = vsel %vm1114, %v5944, %v5948
        %v5951 = vshrl.u32 %v5716, 16
        %v5953 = vshll.u32 %v5716, 16
        %v5955 = vrot.slane %v5953, 1
        %v5956 = vor.u32 %v5951, %v5955
        %v5958 = vshll.u32 %v5780, 16
        %v5960 = vrot.slane %v5958, 1
        %v5961 = vsel %vm1114, %v5956, %v5960
        %v5963 = vshrl.u32 %v5717, 16
        %v5965 = vshll.u32 %v5717, 16
        %v5967 = vrot.slane %v5965, 1
        %v5968 = vor.u32 %v5963, %v5967
        %v5970 = vshll.u32 %v5781, 16
        %v5972 = vrot.slane %v5970, 1
        %v5973 = vsel %vm1114, %v5968, %v5972
        %v6006 = vunpack.c.l.b16 %v5622
        %v6007 = vunpack.c.l.b16 %v5623
        %v6008 = vunpack.c.l.b16 %v5624
        %v6009 = vunpack.c.l.b16 %v5625
        %v6010 = vunpack.c.l.b16 %v5626
        %v6011 = vunpack.c.l.b16 %v5627
        %v6012 = vunpack.c.l.b16 %v5628
        %v6013 = vunpack.c.l.b16 %v5629
        %v6014 = vunpack.c.l.b16 %v5630
        %v6015 = vunpack.c.l.b16 %v5631
        %v6016 = vunpack.c.l.b16 %v5632
        %v6017 = vunpack.c.l.b16 %v5633
        %v6018 = vunpack.c.l.b16 %v5634
        %v6019 = vunpack.c.l.b16 %v5635
        %v6020 = vunpack.c.l.b16 %v5636
        %v6021 = vunpack.c.l.b16 %v5637
        %v6022 = vpack.c.b16 %v5671, %v6006
        %v6023 = vpack.c.b16 %v5673, %v6007
        %v6024 = vpack.c.b16 %v5675, %v6008
        %v6025 = vpack.c.b16 %v5677, %v6009
        %v6026 = vpack.c.b16 %v5679, %v6010
        %v6027 = vpack.c.b16 %v5681, %v6011
        %v6028 = vpack.c.b16 %v5683, %v6012
        %v6029 = vpack.c.b16 %v5685, %v6013
        %v6030 = vpack.c.b16 %v5687, %v6014
        %v6031 = vpack.c.b16 %v5689, %v6015
        %v6032 = vpack.c.b16 %v5691, %v6016
        %v6033 = vpack.c.b16 %v5693, %v6017
        %v6034 = vpack.c.b16 %v5695, %v6018
        %v6035 = vpack.c.b16 %v5697, %v6019
        %v6036 = vpack.c.b16 %v5699, %v6020
        %v6037 = vpack.c.b16 %v5701, %v6021
        %v6038 = vrot.slane %v6022, 1
        %v6039 = vrot.slane %v5766, 1
        %v6040 = vsel %vm1371, %v6038, %v6039
        %v6041 = vrot.slane %v6023, 1
        %v6042 = vrot.slane %v5767, 1
        %v6043 = vsel %vm1371, %v6041, %v6042
        %v6044 = vrot.slane %v6024, 1
        %v6045 = vrot.slane %v5768, 1
        %v6046 = vsel %vm1371, %v6044, %v6045
        %v6047 = vrot.slane %v6025, 1
        %v6048 = vrot.slane %v5769, 1
        %v6049 = vsel %vm1371, %v6047, %v6048
        %v6050 = vrot.slane %v6026, 1
        %v6051 = vrot.slane %v5770, 1
        %v6052 = vsel %vm1371, %v6050, %v6051
        %v6053 = vrot.slane %v6027, 1
        %v6054 = vrot.slane %v5771, 1
        %v6055 = vsel %vm1371, %v6053, %v6054
        %v6056 = vrot.slane %v6028, 1
        %v6057 = vrot.slane %v5772, 1
        %v6058 = vsel %vm1371, %v6056, %v6057
        %v6059 = vrot.slane %v6029, 1
        %v6060 = vrot.slane %v5773, 1
        %v6061 = vsel %vm1371, %v6059, %v6060
        %v6062 = vrot.slane %v6030, 1
        %v6063 = vrot.slane %v5774, 1
        %v6064 = vsel %vm1371, %v6062, %v6063
        %v6065 = vrot.slane %v6031, 1
        %v6066 = vrot.slane %v5775, 1
        %v6067 = vsel %vm1371, %v6065, %v6066
        %v6068 = vrot.slane %v6032, 1
        %v6069 = vrot.slane %v5776, 1
        %v6070 = vsel %vm1371, %v6068, %v6069
        %v6071 = vrot.slane %v6033, 1
        %v6072 = vrot.slane %v5777, 1
        %v6073 = vsel %vm1371, %v6071, %v6072
        %v6074 = vrot.slane %v6034, 1
        %v6075 = vrot.slane %v5778, 1
        %v6076 = vsel %vm1371, %v6074, %v6075
        %v6077 = vrot.slane %v6035, 1
        %v6078 = vrot.slane %v5779, 1
        %v6079 = vsel %vm1371, %v6077, %v6078
        %v6080 = vrot.slane %v6036, 1
        %v6081 = vrot.slane %v5780, 1
        %v6082 = vsel %vm1371, %v6080, %v6081
        %v6083 = vrot.slane %v6037, 1
        %v6084 = vrot.slane %v5781, 1
        %v6085 = vsel %vm1371, %v6083, %v6084
        %s6102 = scalar_lea.vmem [#allocation10], 192
        %v6103 = vld [vmem:[%s6102] sm:$0xf]
        %v6104 = vld [vmem:[%s6102 + $0x4] sm:$0xf]
        %v6105 = vld [vmem:[%s6102 + $0x8] sm:$0xf]
        %v6106 = vld [vmem:[%s6102 + $0xc] sm:$0xf]
        %v6107 = vld [vmem:[%s6102 + $0x10] sm:$0xf]
        %v6108 = vld [vmem:[%s6102 + $0x14] sm:$0xf]
        %v6109 = vld [vmem:[%s6102 + $0x18] sm:$0xf]
        %v6110 = vld [vmem:[%s6102 + $0x1c] sm:$0xf]
        %v6111 = vld [vmem:[%s6102 + $0x20] sm:$0xf]
        %v6112 = vld [vmem:[%s6102 + $0x24] sm:$0xf]
        %v6113 = vld [vmem:[%s6102 + $0x28] sm:$0xf]
        %v6114 = vld [vmem:[%s6102 + $0x2c] sm:$0xf]
        %v6115 = vld [vmem:[%s6102 + $0x30] sm:$0xf]
        %v6116 = vld [vmem:[%s6102 + $0x34] sm:$0xf]
        %v6117 = vld [vmem:[%s6102 + $0x38] sm:$0xf]
        %v6118 = vld [vmem:[%s6102 + $0x3c] sm:$0xf]
        %v6119 = vld [vmem:[%s6102 + $0x40] sm:$0xf]
        %v6120 = vld [vmem:[%s6102 + $0x44] sm:$0xf]
        %v6121 = vld [vmem:[%s6102 + $0x48] sm:$0xf]
        %v6122 = vld [vmem:[%s6102 + $0x4c] sm:$0xf]
        %v6123 = vld [vmem:[%s6102 + $0x50] sm:$0xf]
        %v6124 = vld [vmem:[%s6102 + $0x54] sm:$0xf]
        %v6125 = vld [vmem:[%s6102 + $0x58] sm:$0xf]
        %v6126 = vld [vmem:[%s6102 + $0x5c] sm:$0xf]
        %v6127 = vld [vmem:[%s6102 + $0x60] sm:$0xf]
        %v6128 = vld [vmem:[%s6102 + $0x64] sm:$0xf]
        %v6129 = vld [vmem:[%s6102 + $0x68] sm:$0xf]
        %v6130 = vld [vmem:[%s6102 + $0x6c] sm:$0xf]
        %v6131 = vld [vmem:[%s6102 + $0x70] sm:$0xf]
        %v6132 = vld [vmem:[%s6102 + $0x74] sm:$0xf]
        %v6133 = vld [vmem:[%s6102 + $0x78] sm:$0xf]
        %v6134 = vld [vmem:[%s6102 + $0x7c] sm:$0xf]
        %v6135 = vld [vmem:[%s6102 + $0x80] sm:$0xf]
        %v6136 = vld [vmem:[%s6102 + $0x84] sm:$0xf]
        %v6137 = vld [vmem:[%s6102 + $0x88] sm:$0xf]
        %v6138 = vld [vmem:[%s6102 + $0x8c] sm:$0xf]
        %v6139 = vld [vmem:[%s6102 + $0x90] sm:$0xf]
        %v6140 = vld [vmem:[%s6102 + $0x94] sm:$0xf]
        %v6141 = vld [vmem:[%s6102 + $0x98] sm:$0xf]
        %v6142 = vld [vmem:[%s6102 + $0x9c] sm:$0xf]
        %v6143 = vld [vmem:[%s6102 + $0xa0] sm:$0xf]
        %v6144 = vld [vmem:[%s6102 + $0xa4] sm:$0xf]
        %v6145 = vld [vmem:[%s6102 + $0xa8] sm:$0xf]
        %v6146 = vld [vmem:[%s6102 + $0xac] sm:$0xf]
        %v6147 = vld [vmem:[%s6102 + $0xb0] sm:$0xf]
        %v6148 = vld [vmem:[%s6102 + $0xb4] sm:$0xf]
        %v6149 = vld [vmem:[%s6102 + $0xb8] sm:$0xf]
        %v6150 = vld [vmem:[%s6102 + $0xbc] sm:$0xf]
        %v6199 = vunpack.c.l.b16 %v6103
        %v6200 = vunpack.c.l.b16 %v6104
        %v6201 = vunpack.c.l.b16 %v6105
        %v6202 = vunpack.c.l.b16 %v6106
        %v6203 = vunpack.c.l.b16 %v6107
        %v6204 = vunpack.c.l.b16 %v6108
        %v6205 = vunpack.c.l.b16 %v6109
        %v6206 = vunpack.c.l.b16 %v6110
        %v6207 = vunpack.c.l.b16 %v6111
        %v6208 = vunpack.c.l.b16 %v6112
        %v6209 = vunpack.c.l.b16 %v6113
        %v6210 = vunpack.c.l.b16 %v6114
        %v6211 = vunpack.c.l.b16 %v6115
        %v6212 = vunpack.c.l.b16 %v6116
        %v6213 = vunpack.c.l.b16 %v6117
        %v6214 = vunpack.c.l.b16 %v6118
        %v6215 = vunpack.c.l.b16 %v6119
        %v6216 = vunpack.c.l.b16 %v6120
        %v6217 = vunpack.c.l.b16 %v6121
        %v6218 = vunpack.c.l.b16 %v6122
        %v6219 = vunpack.c.l.b16 %v6123
        %v6220 = vunpack.c.l.b16 %v6124
        %v6221 = vunpack.c.l.b16 %v6125
        %v6222 = vunpack.c.l.b16 %v6126
        %v6223 = vunpack.c.l.b16 %v6127
        %v6224 = vunpack.c.l.b16 %v6128
        %v6225 = vunpack.c.l.b16 %v6129
        %v6226 = vunpack.c.l.b16 %v6130
        %v6227 = vunpack.c.l.b16 %v6131
        %v6228 = vunpack.c.l.b16 %v6132
        %v6229 = vunpack.c.l.b16 %v6133
        %v6230 = vunpack.c.l.b16 %v6134
        %v6231 = vunpack.c.l.b16 %v6135
        %v6232 = vunpack.c.l.b16 %v6136
        %v6233 = vunpack.c.l.b16 %v6137
        %v6234 = vunpack.c.l.b16 %v6138
        %v6235 = vunpack.c.l.b16 %v6139
        %v6236 = vunpack.c.l.b16 %v6140
        %v6237 = vunpack.c.l.b16 %v6141
        %v6238 = vunpack.c.l.b16 %v6142
        %v6239 = vunpack.c.l.b16 %v6143
        %v6240 = vunpack.c.l.b16 %v6144
        %v6241 = vunpack.c.l.b16 %v6145
        %v6242 = vunpack.c.l.b16 %v6146
        %v6243 = vunpack.c.l.b16 %v6147
        %v6244 = vunpack.c.l.b16 %v6148
        %v6245 = vunpack.c.l.b16 %v6149
        %v6246 = vunpack.c.l.b16 %v6150
        %v6247 = vpack.c.b16 %v6200, %v6199
        %v6248 = vpack.c.b16 %v6202, %v6201
        %v6249 = vpack.c.b16 %v6204, %v6203
        %v6250 = vpack.c.b16 %v6206, %v6205
        %v6251 = vpack.c.b16 %v6208, %v6207
        %v6252 = vpack.c.b16 %v6210, %v6209
        %v6253 = vpack.c.b16 %v6212, %v6211
        %v6254 = vpack.c.b16 %v6214, %v6213
        %v6255 = vpack.c.b16 %v6216, %v6215
        %v6256 = vpack.c.b16 %v6218, %v6217
        %v6257 = vpack.c.b16 %v6220, %v6219
        %v6258 = vpack.c.b16 %v6222, %v6221
        %v6259 = vpack.c.b16 %v6224, %v6223
        %v6260 = vpack.c.b16 %v6226, %v6225
        %v6261 = vpack.c.b16 %v6228, %v6227
        %v6262 = vpack.c.b16 %v6230, %v6229
        %v6263 = vpack.c.b16 %v6232, %v6231
        %v6264 = vpack.c.b16 %v6234, %v6233
        %v6265 = vpack.c.b16 %v6236, %v6235
        %v6266 = vpack.c.b16 %v6238, %v6237
        %v6267 = vpack.c.b16 %v6240, %v6239
        %v6268 = vpack.c.b16 %v6242, %v6241
        %v6269 = vpack.c.b16 %v6244, %v6243
        %v6270 = vpack.c.b16 %v6246, %v6245
        %6295 = vmatprep.subr.bf16.mxu0 0
        %6296 = vmatpush1.bf16.msra.mxu0 %v6247
        %6297 = vmatprep.subr.bf16.mxu0 0
        %6298 = vmatpush1.bf16.msra.mxu0 %v6248
        %6299 = vmatprep.subr.bf16.mxu0 0
        %6300 = vmatpush1.bf16.msra.mxu0 %v6249
        %6301 = vmatprep.subr.bf16.mxu0 0
        %6302 = vmatpush1.bf16.msra.mxu0 %v6250
        %6303 = vmatprep.subr.bf16.mxu0 0
        %6304 = vmatpush1.bf16.msra.mxu0 %v6251
        %6305 = vmatprep.subr.bf16.mxu0 0
        %6306 = vmatpush1.bf16.msra.mxu0 %v6252
        %6307 = vmatprep.subr.bf16.mxu0 0
        %6308 = vmatpush1.bf16.msra.mxu0 %v6253
        %6309 = vmatprep.subr.bf16.mxu0 0
        %6310 = vmatpush1.bf16.msra.mxu0 %v6254
        %6311 = vmatprep.subr.bf16.mxu0 0
        %6312 = vmatpush1.bf16.msra.mxu0 %v6255
        %6313 = vmatprep.subr.bf16.mxu0 0
        %6314 = vmatpush1.bf16.msra.mxu0 %v6256
        %6315 = vmatprep.subr.bf16.mxu0 0
        %6316 = vmatpush1.bf16.msra.mxu0 %v6257
        %6317 = vmatprep.subr.bf16.mxu0 0
        %6318 = vmatpush1.bf16.msra.mxu0 %v6258
        %6319 = vmatprep.subr.bf16.mxu0 0
        %6320 = vmatpush1.bf16.msra.mxu0 %v6259
        %6321 = vmatprep.subr.bf16.mxu0 0
        %6322 = vmatpush1.bf16.msra.mxu0 %v6260
        %6323 = vmatprep.subr.bf16.mxu0 0
        %6324 = vmatpush1.bf16.msra.mxu0 %v6261
        %6325 = vmatprep.subr.bf16.mxu0 0
        %6326 = vmatpush1.bf16.msra.mxu0 %v6262
        %6327 = vmatprep.mubr.bf16.mxu0 %v5793
        %6328 = vmatmul.mubr.bf16.gmra.mrb[0].mxu0 %v5702
        %v6329 = vpop.f32.mrb[0].mxu0
        %v6330 = vadd.f32 0.0, %v6329
        %v6331 = vpop.f32.mrb[0].mxu0
        %v6332 = vpop.f32.mrb[0].mxu0
        %v6333 = vadd.f32 0.0, %v6332
        %v6334 = vpop.f32.mrb[0].mxu0
        %6335 = vmatprep.mubr.bf16.mxu0 %v5805
        %6336 = vmatmul.mubr.bf16.gmra.mrb[0].mxu0 %v5703
        %v6337 = vpop.f32.mrb[0].mxu0
        %v6338 = vadd.f32 0.0, %v6337
        %v6339 = vpop.f32.mrb[0].mxu0
        %v6340 = vpop.f32.mrb[0].mxu0
        %v6341 = vadd.f32 0.0, %v6340
        %v6342 = vpop.f32.mrb[0].mxu0
        %6343 = vmatprep.mubr.bf16.mxu0 %v5817
        %6344 = vmatmul.mubr.bf16.gmra.mrb[0].mxu0 %v5704
        %v6345 = vpop.f32.mrb[0].mxu0
        %v6346 = vadd.f32 0.0, %v6345
        %v6347 = vpop.f32.mrb[0].mxu0
        %v6348 = vpop.f32.mrb[0].mxu0
        %v6349 = vadd.f32 0.0, %v6348
        %v6350 = vpop.f32.mrb[0].mxu0
        %6351 = vmatprep.mubr.bf16.mxu0 %v5829
        %6352 = vmatmul.mubr.bf16.gmra.mrb[0].mxu0 %v5705
        %v6353 = vpop.f32.mrb[0].mxu0
        %v6354 = vadd.f32 0.0, %v6353
        %v6355 = vpop.f32.mrb[0].mxu0
        %v6356 = vpop.f32.mrb[0].mxu0
        %v6357 = vadd.f32 0.0, %v6356
        %v6358 = vpop.f32.mrb[0].mxu0
        %6359 = vmatprep.mubr.bf16.mxu0 %v5841
        %6360 = vmatmul.mubr.bf16.gmra.mrb[0].mxu0 %v5706
        %v6361 = vpop.f32.mrb[0].mxu0
        %v6362 = vadd.f32 0.0, %v6361
        %v6363 = vpop.f32.mrb[0].mxu0
        %v6364 = vpop.f32.mrb[0].mxu0
        %v6365 = vadd.f32 0.0, %v6364
        %v6366 = vpop.f32.mrb[0].mxu0
        %6367 = vmatprep.mubr.bf16.mxu0 %v5853
        %6368 = vmatmul.mubr.bf16.gmra.mrb[0].mxu0 %v5707
        %v6369 = vpop.f32.mrb[0].mxu0
        %v6370 = vadd.f32 0.0, %v6369
        %v6371 = vpop.f32.mrb[0].mxu0
        %v6372 = vpop.f32.mrb[0].mxu0
        %v6373 = vadd.f32 0.0, %v6372
        %v6374 = vpop.f32.mrb[0].mxu0
        %6375 = vmatprep.mubr.bf16.mxu0 %v5865
        %6376 = vmatmul.mubr.bf16.gmra.mrb[0].mxu0 %v5708
        %v6377 = vpop.f32.mrb[0].mxu0
        %v6378 = vadd.f32 0.0, %v6377
        %v6379 = vpop.f32.mrb[0].mxu0
        %v6380 = vpop.f32.mrb[0].mxu0
        %v6381 = vadd.f32 0.0, %v6380
        %v6382 = vpop.f32.mrb[0].mxu0
        %6383 = vmatprep.mubr.bf16.mxu0 %v5877
        %6384 = vmatmul.mubr.bf16.gmra.mrb[0].mxu0 %v5709
        %v6385 = vpop.f32.mrb[0].mxu0
        %v6386 = vadd.f32 0.0, %v6385
        %v6387 = vpop.f32.mrb[0].mxu0
        %v6388 = vpop.f32.mrb[0].mxu0
        %v6389 = vadd.f32 0.0, %v6388
        %v6390 = vpop.f32.mrb[0].mxu0
        %6391 = vmatprep.mubr.bf16.mxu0 %v5889
        %6392 = vmatmul.mubr.bf16.gmra.mrb[0].mxu0 %v5710
        %v6393 = vpop.f32.mrb[0].mxu0
        %v6394 = vadd.f32 0.0, %v6393
        %v6395 = vpop.f32.mrb[0].mxu0
        %v6396 = vpop.f32.mrb[0].mxu0
        %v6397 = vadd.f32 0.0, %v6396
        %v6398 = vpop.f32.mrb[0].mxu0
        %6399 = vmatprep.mubr.bf16.mxu0 %v5901
        %6400 = vmatmul.mubr.bf16.gmra.mrb[0].mxu0 %v5711
        %v6401 = vpop.f32.mrb[0].mxu0
        %v6402 = vadd.f32 0.0, %v6401
        %v6403 = vpop.f32.mrb[0].mxu0
        %v6404 = vpop.f32.mrb[0].mxu0
        %v6405 = vadd.f32 0.0, %v6404
        %v6406 = vpop.f32.mrb[0].mxu0
        %6407 = vmatprep.mubr.bf16.mxu0 %v5913
        %6408 = vmatmul.mubr.bf16.gmra.mrb[0].mxu0 %v5712
        %v6409 = vpop.f32.mrb[0].mxu0
        %v6410 = vadd.f32 0.0, %v6409
        %v6411 = vpop.f32.mrb[0].mxu0
        %v6412 = vpop.f32.mrb[0].mxu0
        %v6413 = vadd.f32 0.0, %v6412
        %v6414 = vpop.f32.mrb[0].mxu0
        %6415 = vmatprep.mubr.bf16.mxu0 %v5925
        %6416 = vmatmul.mubr.bf16.gmra.mrb[0].mxu0 %v5713
        %v6417 = vpop.f32.mrb[0].mxu0
        %v6418 = vadd.f32 0.0, %v6417
        %v6419 = vpop.f32.mrb[0].mxu0
        %v6420 = vpop.f32.mrb[0].mxu0
        %v6421 = vadd.f32 0.0, %v6420
        %v6422 = vpop.f32.mrb[0].mxu0
        %6423 = vmatprep.mubr.bf16.mxu0 %v5937
        %6424 = vmatmul.mubr.bf16.gmra.mrb[0].mxu0 %v5714
        %v6425 = vpop.f32.mrb[0].mxu0
        %v6426 = vadd.f32 0.0, %v6425
        %v6427 = vpop.f32.mrb[0].mxu0
        %v6428 = vpop.f32.mrb[0].mxu0
        %v6429 = vadd.f32 0.0, %v6428
        %v6430 = vpop.f32.mrb[0].mxu0
        %6431 = vmatprep.mubr.bf16.mxu0 %v5949
        %6432 = vmatmul.mubr.bf16.gmra.mrb[0].mxu0 %v5715
        %v6433 = vpop.f32.mrb[0].mxu0
        %v6434 = vadd.f32 0.0, %v6433
        %v6435 = vpop.f32.mrb[0].mxu0
        %v6436 = vpop.f32.mrb[0].mxu0
        %v6437 = vadd.f32 0.0, %v6436
        %v6438 = vpop.f32.mrb[0].mxu0
        %6439 = vmatprep.mubr.bf16.mxu0 %v5961
        %6440 = vmatmul.mubr.bf16.gmra.mrb[0].mxu0 %v5716
        %v6441 = vpop.f32.mrb[0].mxu0
        %v6442 = vadd.f32 0.0, %v6441
        %v6443 = vpop.f32.mrb[0].mxu0
        %v6444 = vpop.f32.mrb[0].mxu0
        %v6445 = vadd.f32 0.0, %v6444
        %v6446 = vpop.f32.mrb[0].mxu0
        %6447 = vmatprep.mubr.bf16.mxu0 %v5973
        %6448 = vmatmul.mubr.bf16.gmra.mrb[0].mxu0 %v5717
        %v6449 = vpop.f32.mrb[0].mxu0
        %v6450 = vadd.f32 0.0, %v6449
        %v6451 = vpop.f32.mrb[0].mxu0
        %v6452 = vpop.f32.mrb[0].mxu0
        %v6453 = vadd.f32 0.0, %v6452
        %v6454 = vpop.f32.mrb[0].mxu0
        %6455 = vdwg.mxu0
        %6456 = vmatprep.subr.bf16.mxu0 0
        %6457 = vmatpush1.bf16.msra.mxu0 %v6263
        %6458 = vmatprep.subr.bf16.mxu0 0
        %6459 = vmatpush1.bf16.msra.mxu0 %v6264
        %6460 = vmatprep.subr.bf16.mxu0 0
        %6461 = vmatpush1.bf16.msra.mxu0 %v6265
        %6462 = vmatprep.subr.bf16.mxu0 0
        %6463 = vmatpush1.bf16.msra.mxu0 %v6266
        %6464 = vmatprep.subr.bf16.mxu0 0
        %6465 = vmatpush1.bf16.msra.mxu0 %v6267
        %6466 = vmatprep.subr.bf16.mxu0 0
        %6467 = vmatpush1.bf16.msra.mxu0 %v6268
        %6468 = vmatprep.subr.bf16.mxu0 0
        %6469 = vmatpush1.bf16.msra.mxu0 %v6269
        %6470 = vmatprep.subr.bf16.mxu0 0
        %6471 = vmatpush1.bf16.msra.mxu0 %v6270
        %6472 = vmatprep.subr.bf16.mxu0 0
        %6473 = vmatpush1.bf16.msra.mxu0 0
        %6474 = vmatprep.subr.bf16.mxu0 0
        %6475 = vmatpush1.bf16.msra.mxu0 0
        %6476 = vmatprep.subr.bf16.mxu0 0
        %6477 = vmatpush1.bf16.msra.mxu0 0
        %6478 = vmatprep.subr.bf16.mxu0 0
        %6479 = vmatpush1.bf16.msra.mxu0 0
        %6480 = vmatprep.subr.bf16.mxu0 0
        %6481 = vmatpush1.bf16.msra.mxu0 0
        %6482 = vmatprep.subr.bf16.mxu0 0
        %6483 = vmatpush1.bf16.msra.mxu0 0
        %6484 = vmatprep.subr.bf16.mxu0 0
        %6485 = vmatpush1.bf16.msra.mxu0 0
        %6486 = vmatprep.subr.bf16.mxu0 0
        %6487 = vmatpush1.bf16.msra.mxu0 0
        %6488 = vmatprep.mubr.bf16.mxu0 0
        %6489 = vmatmul.mubr.bf16.gmra.mrb[0].mxu0 %v6040
        %v6490 = vpop.f32.mrb[0].mxu0
        %v6491 = vadd.f32 %v6330, %v6490
        %v6492 = vpop.f32.mrb[0].mxu0
        %v6493 = vpop.f32.mrb[0].mxu0
        %v6494 = vadd.f32 %v6333, %v6493
        %v6495 = vpop.f32.mrb[0].mxu0
        %6496 = vmatprep.mubr.bf16.mxu0 0
        %6497 = vmatmul.mubr.bf16.gmra.mrb[0].mxu0 %v6043
        %v6498 = vpop.f32.mrb[0].mxu0
        %v6499 = vadd.f32 %v6338, %v6498
        %v6500 = vpop.f32.mrb[0].mxu0
        %v6501 = vpop.f32.mrb[0].mxu0
        %v6502 = vadd.f32 %v6341, %v6501
        %v6503 = vpop.f32.mrb[0].mxu0
        %6504 = vmatprep.mubr.bf16.mxu0 0
        %6505 = vmatmul.mubr.bf16.gmra.mrb[0].mxu0 %v6046
        %v6506 = vpop.f32.mrb[0].mxu0
        %v6507 = vadd.f32 %v6346, %v6506
        %v6508 = vpop.f32.mrb[0].mxu0
        %v6509 = vpop.f32.mrb[0].mxu0
        %v6510 = vadd.f32 %v6349, %v6509
        %v6511 = vpop.f32.mrb[0].mxu0
        %6512 = vmatprep.mubr.bf16.mxu0 0
        %6513 = vmatmul.mubr.bf16.gmra.mrb[0].mxu0 %v6049
        %v6514 = vpop.f32.mrb[0].mxu0
        %v6515 = vadd.f32 %v6354, %v6514
        %v6516 = vpop.f32.mrb[0].mxu0
        %v6517 = vpop.f32.mrb[0].mxu0
        %v6518 = vadd.f32 %v6357, %v6517
        %v6519 = vpop.f32.mrb[0].mxu0
        %6520 = vmatprep.mubr.bf16.mxu0 0
        %6521 = vmatmul.mubr.bf16.gmra.mrb[0].mxu0 %v6052
        %v6522 = vpop.f32.mrb[0].mxu0
        %v6523 = vadd.f32 %v6362, %v6522
        %v6524 = vpop.f32.mrb[0].mxu0
        %v6525 = vpop.f32.mrb[0].mxu0
        %v6526 = vadd.f32 %v6365, %v6525
        %v6527 = vpop.f32.mrb[0].mxu0
        %6528 = vmatprep.mubr.bf16.mxu0 0
        %6529 = vmatmul.mubr.bf16.gmra.mrb[0].mxu0 %v6055
        %v6530 = vpop.f32.mrb[0].mxu0
        %v6531 = vadd.f32 %v6370, %v6530
        %v6532 = vpop.f32.mrb[0].mxu0
        %v6533 = vpop.f32.mrb[0].mxu0
        %v6534 = vadd.f32 %v6373, %v6533
        %v6535 = vpop.f32.mrb[0].mxu0
        %6536 = vmatprep.mubr.bf16.mxu0 0
        %6537 = vmatmul.mubr.bf16.gmra.mrb[0].mxu0 %v6058
        %v6538 = vpop.f32.mrb[0].mxu0
        %v6539 = vadd.f32 %v6378, %v6538
        %v6540 = vpop.f32.mrb[0].mxu0
        %v6541 = vpop.f32.mrb[0].mxu0
        %v6542 = vadd.f32 %v6381, %v6541
        %v6543 = vpop.f32.mrb[0].mxu0
        %6544 = vmatprep.mubr.bf16.mxu0 0
        %6545 = vmatmul.mubr.bf16.gmra.mrb[0].mxu0 %v6061
        %v6546 = vpop.f32.mrb[0].mxu0
        %v6547 = vadd.f32 %v6386, %v6546
        %v6548 = vpop.f32.mrb[0].mxu0
        %v6549 = vpop.f32.mrb[0].mxu0
        %v6550 = vadd.f32 %v6389, %v6549
        %v6551 = vpop.f32.mrb[0].mxu0
        %6552 = vmatprep.mubr.bf16.mxu0 0
        %6553 = vmatmul.mubr.bf16.gmra.mrb[0].mxu0 %v6064
        %v6554 = vpop.f32.mrb[0].mxu0
        %v6555 = vadd.f32 %v6394, %v6554
        %v6556 = vpop.f32.mrb[0].mxu0
        %v6557 = vpop.f32.mrb[0].mxu0
        %v6558 = vadd.f32 %v6397, %v6557
        %v6559 = vpop.f32.mrb[0].mxu0
        %6560 = vmatprep.mubr.bf16.mxu0 0
        %6561 = vmatmul.mubr.bf16.gmra.mrb[0].mxu0 %v6067
        %v6562 = vpop.f32.mrb[0].mxu0
        %v6563 = vadd.f32 %v6402, %v6562
        %v6564 = vpop.f32.mrb[0].mxu0
        %v6565 = vpop.f32.mrb[0].mxu0
        %v6566 = vadd.f32 %v6405, %v6565
        %v6567 = vpop.f32.mrb[0].mxu0
        %6568 = vmatprep.mubr.bf16.mxu0 0
        %6569 = vmatmul.mubr.bf16.gmra.mrb[0].mxu0 %v6070
        %v6570 = vpop.f32.mrb[0].mxu0
        %v6571 = vadd.f32 %v6410, %v6570
        %v6572 = vpop.f32.mrb[0].mxu0
        %v6573 = vpop.f32.mrb[0].mxu0
        %v6574 = vadd.f32 %v6413, %v6573
        %v6575 = vpop.f32.mrb[0].mxu0
        %6576 = vmatprep.mubr.bf16.mxu0 0
        %6577 = vmatmul.mubr.bf16.gmra.mrb[0].mxu0 %v6073
        %v6578 = vpop.f32.mrb[0].mxu0
        %v6579 = vadd.f32 %v6418, %v6578
        %v6580 = vpop.f32.mrb[0].mxu0
        %v6581 = vpop.f32.mrb[0].mxu0
        %v6582 = vadd.f32 %v6421, %v6581
        %v6583 = vpop.f32.mrb[0].mxu0
        %6584 = vmatprep.mubr.bf16.mxu0 0
        %6585 = vmatmul.mubr.bf16.gmra.mrb[0].mxu0 %v6076
        %v6586 = vpop.f32.mrb[0].mxu0
        %v6587 = vadd.f32 %v6426, %v6586
        %v6588 = vpop.f32.mrb[0].mxu0
        %v6589 = vpop.f32.mrb[0].mxu0
        %v6590 = vadd.f32 %v6429, %v6589
        %v6591 = vpop.f32.mrb[0].mxu0
        %6592 = vmatprep.mubr.bf16.mxu0 0
        %6593 = vmatmul.mubr.bf16.gmra.mrb[0].mxu0 %v6079
        %v6594 = vpop.f32.mrb[0].mxu0
        %v6595 = vadd.f32 %v6434, %v6594
        %v6596 = vpop.f32.mrb[0].mxu0
        %v6597 = vpop.f32.mrb[0].mxu0
        %v6598 = vadd.f32 %v6437, %v6597
        %v6599 = vpop.f32.mrb[0].mxu0
        %6600 = vmatprep.mubr.bf16.mxu0 0
        %6601 = vmatmul.mubr.bf16.gmra.mrb[0].mxu0 %v6082
        %v6602 = vpop.f32.mrb[0].mxu0
        %v6603 = vadd.f32 %v6442, %v6602
        %v6604 = vpop.f32.mrb[0].mxu0
        %v6605 = vpop.f32.mrb[0].mxu0
        %v6606 = vadd.f32 %v6445, %v6605
        %v6607 = vpop.f32.mrb[0].mxu0
        %6608 = vmatprep.mubr.bf16.mxu0 0
        %6609 = vmatmul.mubr.bf16.gmra.mrb[0].mxu0 %v6085
        %v6610 = vpop.f32.mrb[0].mxu0
        %v6611 = vadd.f32 %v6450, %v6610
        %v6612 = vpop.f32.mrb[0].mxu0
        %v6613 = vpop.f32.mrb[0].mxu0
        %v6614 = vadd.f32 %v6453, %v6613
        %v6615 = vpop.f32.mrb[0].mxu0
        %6616 = vdwg.mxu0
        %v6665 = vunpack.c.l.b16 %v5526
        %v6666 = vunpack.c.l.b16 %v5527
        %v6667 = vunpack.c.l.b16 %v5528
        %v6668 = vunpack.c.l.b16 %v5529
        %v6669 = vunpack.c.l.b16 %v5530
        %v6670 = vunpack.c.l.b16 %v5531
        %v6671 = vunpack.c.l.b16 %v5532
        %v6672 = vunpack.c.l.b16 %v5533
        %v6673 = vunpack.c.l.b16 %v5534
        %v6674 = vunpack.c.l.b16 %v5535
        %v6675 = vunpack.c.l.b16 %v5536
        %v6676 = vunpack.c.l.b16 %v5537
        %v6677 = vunpack.c.l.b16 %v5538
        %v6678 = vunpack.c.l.b16 %v5539
        %v6679 = vunpack.c.l.b16 %v5540
        %v6680 = vunpack.c.l.b16 %v5541
        %v6681 = vunpack.c.l.b16 %v5542
        %v6682 = vunpack.c.l.b16 %v5543
        %v6683 = vunpack.c.l.b16 %v5544
        %v6684 = vunpack.c.l.b16 %v5545
        %v6685 = vunpack.c.l.b16 %v5546
        %v6686 = vunpack.c.l.b16 %v5547
        %v6687 = vunpack.c.l.b16 %v5548
        %v6688 = vunpack.c.l.b16 %v5549
        %v6689 = vunpack.c.l.b16 %v5550
        %v6690 = vunpack.c.l.b16 %v5551
        %v6691 = vunpack.c.l.b16 %v5552
        %v6692 = vunpack.c.l.b16 %v5553
        %v6693 = vunpack.c.l.b16 %v5554
        %v6694 = vunpack.c.l.b16 %v5555
        %v6695 = vunpack.c.l.b16 %v5556
        %v6696 = vunpack.c.l.b16 %v5557
        %v6697 = vunpack.c.l.b16 %v5558
        %v6698 = vunpack.c.l.b16 %v5559
        %v6699 = vunpack.c.l.b16 %v5560
        %v6700 = vunpack.c.l.b16 %v5561
        %v6701 = vunpack.c.l.b16 %v5562
        %v6702 = vunpack.c.l.b16 %v5563
        %v6703 = vunpack.c.l.b16 %v5564
        %v6704 = vunpack.c.l.b16 %v5565
        %v6705 = vunpack.c.l.b16 %v5566
        %v6706 = vunpack.c.l.b16 %v5567
        %v6707 = vunpack.c.l.b16 %v5568
        %v6708 = vunpack.c.l.b16 %v5569
        %v6709 = vunpack.c.l.b16 %v5570
        %v6710 = vunpack.c.l.b16 %v5571
        %v6711 = vunpack.c.l.b16 %v5572
        %v6712 = vunpack.c.l.b16 %v5573
        %v6713 = vpack.c.b16 %v6666, %v6665
        %v6714 = vpack.c.b16 %v6668, %v6667
        %v6715 = vpack.c.b16 %v6670, %v6669
        %v6716 = vpack.c.b16 %v6672, %v6671
        %v6717 = vpack.c.b16 %v6674, %v6673
        %v6718 = vpack.c.b16 %v6676, %v6675
        %v6719 = vpack.c.b16 %v6678, %v6677
        %v6720 = vpack.c.b16 %v6680, %v6679
        %v6721 = vpack.c.b16 %v6682, %v6681
        %v6722 = vpack.c.b16 %v6684, %v6683
        %v6723 = vpack.c.b16 %v6686, %v6685
        %v6724 = vpack.c.b16 %v6688, %v6687
        %v6725 = vpack.c.b16 %v6690, %v6689
        %v6726 = vpack.c.b16 %v6692, %v6691
        %v6727 = vpack.c.b16 %v6694, %v6693
        %v6728 = vpack.c.b16 %v6696, %v6695
        %v6729 = vpack.c.b16 %v6698, %v6697
        %v6730 = vpack.c.b16 %v6700, %v6699
        %v6731 = vpack.c.b16 %v6702, %v6701
        %v6732 = vpack.c.b16 %v6704, %v6703
        %v6733 = vpack.c.b16 %v6706, %v6705
        %v6734 = vpack.c.b16 %v6708, %v6707
        %v6735 = vpack.c.b16 %v6710, %v6709
        %v6736 = vpack.c.b16 %v6712, %v6711
        %6761 = vmatprep.subr.bf16.mxu0 0
        %6762 = vmatpush1.bf16.msra.mxu0 %v6713
        %6763 = vmatprep.subr.bf16.mxu0 0
        %6764 = vmatpush1.bf16.msra.mxu0 %v6714
        %6765 = vmatprep.subr.bf16.mxu0 0
        %6766 = vmatpush1.bf16.msra.mxu0 %v6715
        %6767 = vmatprep.subr.bf16.mxu0 0
        %6768 = vmatpush1.bf16.msra.mxu0 %v6716
        %6769 = vmatprep.subr.bf16.mxu0 0
        %6770 = vmatpush1.bf16.msra.mxu0 %v6717
        %6771 = vmatprep.subr.bf16.mxu0 0
        %6772 = vmatpush1.bf16.msra.mxu0 %v6718
        %6773 = vmatprep.subr.bf16.mxu0 0
        %6774 = vmatpush1.bf16.msra.mxu0 %v6719
        %6775 = vmatprep.subr.bf16.mxu0 0
        %6776 = vmatpush1.bf16.msra.mxu0 %v6720
        %6777 = vmatprep.subr.bf16.mxu0 0
        %6778 = vmatpush1.bf16.msra.mxu0 %v6721
        %6779 = vmatprep.subr.bf16.mxu0 0
        %6780 = vmatpush1.bf16.msra.mxu0 %v6722
        %6781 = vmatprep.subr.bf16.mxu0 0
        %6782 = vmatpush1.bf16.msra.mxu0 %v6723
        %6783 = vmatprep.subr.bf16.mxu0 0
        %6784 = vmatpush1.bf16.msra.mxu0 %v6724
        %6785 = vmatprep.subr.bf16.mxu0 0
        %6786 = vmatpush1.bf16.msra.mxu0 %v6725
        %6787 = vmatprep.subr.bf16.mxu0 0
        %6788 = vmatpush1.bf16.msra.mxu0 %v6726
        %6789 = vmatprep.subr.bf16.mxu0 0
        %6790 = vmatpush1.bf16.msra.mxu0 %v6727
        %6791 = vmatprep.subr.bf16.mxu0 0
        %6792 = vmatpush1.bf16.msra.mxu0 %v6728
        %6793 = vmatprep.mubr.bf16.mxu0 %v5217
        %6794 = vmatmul.mubr.bf16.gmra.mrb[0].mxu0 %v5126
        %v6795 = vpop.f32.mrb[0].mxu0
        %v6796 = vadd.f32 %v6491, %v6795
        %v6797 = vpop.f32.mrb[0].mxu0
        %v6798 = vpop.f32.mrb[0].mxu0
        %v6799 = vadd.f32 %v6494, %v6798
        %v6800 = vpop.f32.mrb[0].mxu0
        %6801 = vmatprep.mubr.bf16.mxu0 %v5229
        %6802 = vmatmul.mubr.bf16.gmra.mrb[0].mxu0 %v5127
        %v6803 = vpop.f32.mrb[0].mxu0
        %v6804 = vadd.f32 %v6499, %v6803
        %v6805 = vpop.f32.mrb[0].mxu0
        %v6806 = vpop.f32.mrb[0].mxu0
        %v6807 = vadd.f32 %v6502, %v6806
        %v6808 = vpop.f32.mrb[0].mxu0
        %6809 = vmatprep.mubr.bf16.mxu0 %v5241
        %6810 = vmatmul.mubr.bf16.gmra.mrb[0].mxu0 %v5128
        %v6811 = vpop.f32.mrb[0].mxu0
        %v6812 = vadd.f32 %v6507, %v6811
        %v6813 = vpop.f32.mrb[0].mxu0
        %v6814 = vpop.f32.mrb[0].mxu0
        %v6815 = vadd.f32 %v6510, %v6814
        %v6816 = vpop.f32.mrb[0].mxu0
        %6817 = vmatprep.mubr.bf16.mxu0 %v5253
        %6818 = vmatmul.mubr.bf16.gmra.mrb[0].mxu0 %v5129
        %v6819 = vpop.f32.mrb[0].mxu0
        %v6820 = vadd.f32 %v6515, %v6819
        %v6821 = vpop.f32.mrb[0].mxu0
        %v6822 = vpop.f32.mrb[0].mxu0
        %v6823 = vadd.f32 %v6518, %v6822
        %v6824 = vpop.f32.mrb[0].mxu0
        %6825 = vmatprep.mubr.bf16.mxu0 %v5265
        %6826 = vmatmul.mubr.bf16.gmra.mrb[0].mxu0 %v5130
        %v6827 = vpop.f32.mrb[0].mxu0
        %v6828 = vadd.f32 %v6523, %v6827
        %v6829 = vpop.f32.mrb[0].mxu0
        %v6830 = vpop.f32.mrb[0].mxu0
        %v6831 = vadd.f32 %v6526, %v6830
        %v6832 = vpop.f32.mrb[0].mxu0
        %6833 = vmatprep.mubr.bf16.mxu0 %v5277
        %6834 = vmatmul.mubr.bf16.gmra.mrb[0].mxu0 %v5131
        %v6835 = vpop.f32.mrb[0].mxu0
        %v6836 = vadd.f32 %v6531, %v6835
        %v6837 = vpop.f32.mrb[0].mxu0
        %v6838 = vpop.f32.mrb[0].mxu0
        %v6839 = vadd.f32 %v6534, %v6838
        %v6840 = vpop.f32.mrb[0].mxu0
        %6841 = vmatprep.mubr.bf16.mxu0 %v5289
        %6842 = vmatmul.mubr.bf16.gmra.mrb[0].mxu0 %v5132
        %v6843 = vpop.f32.mrb[0].mxu0
        %v6844 = vadd.f32 %v6539, %v6843
        %v6845 = vpop.f32.mrb[0].mxu0
        %v6846 = vpop.f32.mrb[0].mxu0
        %v6847 = vadd.f32 %v6542, %v6846
        %v6848 = vpop.f32.mrb[0].mxu0
        %6849 = vmatprep.mubr.bf16.mxu0 %v5301
        %6850 = vmatmul.mubr.bf16.gmra.mrb[0].mxu0 %v5133
        %v6851 = vpop.f32.mrb[0].mxu0
        %v6852 = vadd.f32 %v6547, %v6851
        %v6853 = vpop.f32.mrb[0].mxu0
        %v6854 = vpop.f32.mrb[0].mxu0
        %v6855 = vadd.f32 %v6550, %v6854
        %v6856 = vpop.f32.mrb[0].mxu0
        %6857 = vmatprep.mubr.bf16.mxu0 %v5313
        %6858 = vmatmul.mubr.bf16.gmra.mrb[0].mxu0 %v5134
        %v6859 = vpop.f32.mrb[0].mxu0
        %v6860 = vadd.f32 %v6555, %v6859
        %v6861 = vpop.f32.mrb[0].mxu0
        %v6862 = vpop.f32.mrb[0].mxu0
        %v6863 = vadd.f32 %v6558, %v6862
        %v6864 = vpop.f32.mrb[0].mxu0
        %6865 = vmatprep.mubr.bf16.mxu0 %v5325
        %6866 = vmatmul.mubr.bf16.gmra.mrb[0].mxu0 %v5135
        %v6867 = vpop.f32.mrb[0].mxu0
        %v6868 = vadd.f32 %v6563, %v6867
        %v6869 = vpop.f32.mrb[0].mxu0
        %v6870 = vpop.f32.mrb[0].mxu0
        %v6871 = vadd.f32 %v6566, %v6870
        %v6872 = vpop.f32.mrb[0].mxu0
        %6873 = vmatprep.mubr.bf16.mxu0 %v5337
        %6874 = vmatmul.mubr.bf16.gmra.mrb[0].mxu0 %v5136
        %v6875 = vpop.f32.mrb[0].mxu0
        %v6876 = vadd.f32 %v6571, %v6875
        %v6877 = vpop.f32.mrb[0].mxu0
        %v6878 = vpop.f32.mrb[0].mxu0
        %v6879 = vadd.f32 %v6574, %v6878
        %v6880 = vpop.f32.mrb[0].mxu0
        %6881 = vmatprep.mubr.bf16.mxu0 %v5349
        %6882 = vmatmul.mubr.bf16.gmra.mrb[0].mxu0 %v5137
        %v6883 = vpop.f32.mrb[0].mxu0
        %v6884 = vadd.f32 %v6579, %v6883
        %v6885 = vpop.f32.mrb[0].mxu0
        %v6886 = vpop.f32.mrb[0].mxu0
        %v6887 = vadd.f32 %v6582, %v6886
        %v6888 = vpop.f32.mrb[0].mxu0
        %6889 = vmatprep.mubr.bf16.mxu0 %v5361
        %6890 = vmatmul.mubr.bf16.gmra.mrb[0].mxu0 %v5138
        %v6891 = vpop.f32.mrb[0].mxu0
        %v6892 = vadd.f32 %v6587, %v6891
        %v6893 = vpop.f32.mrb[0].mxu0
        %v6894 = vpop.f32.mrb[0].mxu0
        %v6895 = vadd.f32 %v6590, %v6894
        %v6896 = vpop.f32.mrb[0].mxu0
        %6897 = vmatprep.mubr.bf16.mxu0 %v5373
        %6898 = vmatmul.mubr.bf16.gmra.mrb[0].mxu0 %v5139
        %v6899 = vpop.f32.mrb[0].mxu0
        %v6900 = vadd.f32 %v6595, %v6899
        %v6901 = vpop.f32.mrb[0].mxu0
        %v6902 = vpop.f32.mrb[0].mxu0
        %v6903 = vadd.f32 %v6598, %v6902
        %v6904 = vpop.f32.mrb[0].mxu0
        %6905 = vmatprep.mubr.bf16.mxu0 %v5385
        %6906 = vmatmul.mubr.bf16.gmra.mrb[0].mxu0 %v5140
        %v6907 = vpop.f32.mrb[0].mxu0
        %v6908 = vadd.f32 %v6603, %v6907
        %v6909 = vpop.f32.mrb[0].mxu0
        %v6910 = vpop.f32.mrb[0].mxu0
        %v6911 = vadd.f32 %v6606, %v6910
        %v6912 = vpop.f32.mrb[0].mxu0
        %6913 = vmatprep.mubr.bf16.mxu0 %v5397
        %6914 = vmatmul.mubr.bf16.gmra.mrb[0].mxu0 %v5141
        %v6915 = vpop.f32.mrb[0].mxu0
        %v6916 = vadd.f32 %v6611, %v6915
        %v6917 = vpop.f32.mrb[0].mxu0
        %v6918 = vpop.f32.mrb[0].mxu0
        %v6919 = vadd.f32 %v6614, %v6918
        %v6920 = vpop.f32.mrb[0].mxu0
        %6921 = vdwg.mxu0
        %6922 = vmatprep.subr.bf16.mxu0 0
        %6923 = vmatpush1.bf16.msra.mxu0 %v6729
        %6924 = vmatprep.subr.bf16.mxu0 0
        %6925 = vmatpush1.bf16.msra.mxu0 %v6730
        %6926 = vmatprep.subr.bf16.mxu0 0
        %6927 = vmatpush1.bf16.msra.mxu0 %v6731
        %6928 = vmatprep.subr.bf16.mxu0 0
        %6929 = vmatpush1.bf16.msra.mxu0 %v6732
        %6930 = vmatprep.subr.bf16.mxu0 0
        %6931 = vmatpush1.bf16.msra.mxu0 %v6733
        %6932 = vmatprep.subr.bf16.mxu0 0
        %6933 = vmatpush1.bf16.msra.mxu0 %v6734
        %6934 = vmatprep.subr.bf16.mxu0 0
        %6935 = vmatpush1.bf16.msra.mxu0 %v6735
        %6936 = vmatprep.subr.bf16.mxu0 0
        %6937 = vmatpush1.bf16.msra.mxu0 %v6736
        %6938 = vmatprep.subr.bf16.mxu0 0
        %6939 = vmatpush1.bf16.msra.mxu0 0
        %6940 = vmatprep.subr.bf16.mxu0 0
        %6941 = vmatpush1.bf16.msra.mxu0 0
        %6942 = vmatprep.subr.bf16.mxu0 0
        %6943 = vmatpush1.bf16.msra.mxu0 0
        %6944 = vmatprep.subr.bf16.mxu0 0
        %6945 = vmatpush1.bf16.msra.mxu0 0
        %6946 = vmatprep.subr.bf16.mxu0 0
        %6947 = vmatpush1.bf16.msra.mxu0 0
        %6948 = vmatprep.subr.bf16.mxu0 0
        %6949 = vmatpush1.bf16.msra.mxu0 0
        %6950 = vmatprep.subr.bf16.mxu0 0
        %6951 = vmatpush1.bf16.msra.mxu0 0
        %6952 = vmatprep.subr.bf16.mxu0 0
        %6953 = vmatpush1.bf16.msra.mxu0 0
        %6954 = vmatprep.mubr.bf16.mxu0 0
        %6955 = vmatmul.mubr.bf16.gmra.mrb[0].mxu0 %v5464
        %v6956 = vpop.f32.mrb[0].mxu0
        %v6957 = vadd.f32 %v6796, %v6956
        %v6958 = vpop.f32.mrb[0].mxu0
        %v6959 = vpop.f32.mrb[0].mxu0
        %v6960 = vadd.f32 %v6799, %v6959
        %v6961 = vpop.f32.mrb[0].mxu0
        %6962 = vmatprep.mubr.bf16.mxu0 0
        %6963 = vmatmul.mubr.bf16.gmra.mrb[0].mxu0 %v5467
        %v6964 = vpop.f32.mrb[0].mxu0
        %v6965 = vadd.f32 %v6804, %v6964
        %v6966 = vpop.f32.mrb[0].mxu0
        %v6967 = vpop.f32.mrb[0].mxu0
        %v6968 = vadd.f32 %v6807, %v6967
        %v6969 = vpop.f32.mrb[0].mxu0
        %6970 = vmatprep.mubr.bf16.mxu0 0
        %6971 = vmatmul.mubr.bf16.gmra.mrb[0].mxu0 %v5470
        %v6972 = vpop.f32.mrb[0].mxu0
        %v6973 = vadd.f32 %v6812, %v6972
        %v6974 = vpop.f32.mrb[0].mxu0
        %v6975 = vpop.f32.mrb[0].mxu0
        %v6976 = vadd.f32 %v6815, %v6975
        %v6977 = vpop.f32.mrb[0].mxu0
        %6978 = vmatprep.mubr.bf16.mxu0 0
        %6979 = vmatmul.mubr.bf16.gmra.mrb[0].mxu0 %v5473
        %v6980 = vpop.f32.mrb[0].mxu0
        %v6981 = vadd.f32 %v6820, %v6980
        %v6982 = vpop.f32.mrb[0].mxu0
        %v6983 = vpop.f32.mrb[0].mxu0
        %v6984 = vadd.f32 %v6823, %v6983
        %v6985 = vpop.f32.mrb[0].mxu0
        %6986 = vmatprep.mubr.bf16.mxu0 0
        %6987 = vmatmul.mubr.bf16.gmra.mrb[0].mxu0 %v5476
        %v6988 = vpop.f32.mrb[0].mxu0
        %v6989 = vadd.f32 %v6828, %v6988
        %v6990 = vpop.f32.mrb[0].mxu0
        %v6991 = vpop.f32.mrb[0].mxu0
        %v6992 = vadd.f32 %v6831, %v6991
        %v6993 = vpop.f32.mrb[0].mxu0
        %6994 = vmatprep.mubr.bf16.mxu0 0
        %6995 = vmatmul.mubr.bf16.gmra.mrb[0].mxu0 %v5479
        %v6996 = vpop.f32.mrb[0].mxu0
        %v6997 = vadd.f32 %v6836, %v6996
        %v6998 = vpop.f32.mrb[0].mxu0
        %v6999 = vpop.f32.mrb[0].mxu0
        %v7000 = vadd.f32 %v6839, %v6999
        %v7001 = vpop.f32.mrb[0].mxu0
        %7002 = vmatprep.mubr.bf16.mxu0 0
        %7003 = vmatmul.mubr.bf16.gmra.mrb[0].mxu0 %v5482
        %v7004 = vpop.f32.mrb[0].mxu0
        %v7005 = vadd.f32 %v6844, %v7004
        %v7006 = vpop.f32.mrb[0].mxu0
        %v7007 = vpop.f32.mrb[0].mxu0
        %v7008 = vadd.f32 %v6847, %v7007
        %v7009 = vpop.f32.mrb[0].mxu0
        %7010 = vmatprep.mubr.bf16.mxu0 0
        %7011 = vmatmul.mubr.bf16.gmra.mrb[0].mxu0 %v5485
        %v7012 = vpop.f32.mrb[0].mxu0
        %v7013 = vadd.f32 %v6852, %v7012
        %v7014 = vpop.f32.mrb[0].mxu0
        %v7015 = vpop.f32.mrb[0].mxu0
        %v7016 = vadd.f32 %v6855, %v7015
        %v7017 = vpop.f32.mrb[0].mxu0
        %7018 = vmatprep.mubr.bf16.mxu0 0
        %7019 = vmatmul.mubr.bf16.gmra.mrb[0].mxu0 %v5488
        %v7020 = vpop.f32.mrb[0].mxu0
        %v7021 = vadd.f32 %v6860, %v7020
        %v7022 = vpop.f32.mrb[0].mxu0
        %v7023 = vpop.f32.mrb[0].mxu0
        %v7024 = vadd.f32 %v6863, %v7023
        %v7025 = vpop.f32.mrb[0].mxu0
        %7026 = vmatprep.mubr.bf16.mxu0 0
        %7027 = vmatmul.mubr.bf16.gmra.mrb[0].mxu0 %v5491
        %v7028 = vpop.f32.mrb[0].mxu0
        %v7029 = vadd.f32 %v6868, %v7028
        %v7030 = vpop.f32.mrb[0].mxu0
        %v7031 = vpop.f32.mrb[0].mxu0
        %v7032 = vadd.f32 %v6871, %v7031
        %v7033 = vpop.f32.mrb[0].mxu0
        %7034 = vmatprep.mubr.bf16.mxu0 0
        %7035 = vmatmul.mubr.bf16.gmra.mrb[0].mxu0 %v5494
        %v7036 = vpop.f32.mrb[0].mxu0
        %v7037 = vadd.f32 %v6876, %v7036
        %v7038 = vpop.f32.mrb[0].mxu0
        %v7039 = vpop.f32.mrb[0].mxu0
        %v7040 = vadd.f32 %v6879, %v7039
        %v7041 = vpop.f32.mrb[0].mxu0
        %7042 = vmatprep.mubr.bf16.mxu0 0
        %7043 = vmatmul.mubr.bf16.gmra.mrb[0].mxu0 %v5497
        %v7044 = vpop.f32.mrb[0].mxu0
        %v7045 = vadd.f32 %v6884, %v7044
        %v7046 = vpop.f32.mrb[0].mxu0
        %v7047 = vpop.f32.mrb[0].mxu0
        %v7048 = vadd.f32 %v6887, %v7047
        %v7049 = vpop.f32.mrb[0].mxu0
        %7050 = vmatprep.mubr.bf16.mxu0 0
        %7051 = vmatmul.mubr.bf16.gmra.mrb[0].mxu0 %v5500
        %v7052 = vpop.f32.mrb[0].mxu0
        %v7053 = vadd.f32 %v6892, %v7052
        %v7054 = vpop.f32.mrb[0].mxu0
        %v7055 = vpop.f32.mrb[0].mxu0
        %v7056 = vadd.f32 %v6895, %v7055
        %v7057 = vpop.f32.mrb[0].mxu0
        %7058 = vmatprep.mubr.bf16.mxu0 0
        %7059 = vmatmul.mubr.bf16.gmra.mrb[0].mxu0 %v5503
        %v7060 = vpop.f32.mrb[0].mxu0
        %v7061 = vadd.f32 %v6900, %v7060
        %v7062 = vpop.f32.mrb[0].mxu0
        %v7063 = vpop.f32.mrb[0].mxu0
        %v7064 = vadd.f32 %v6903, %v7063
        %v7065 = vpop.f32.mrb[0].mxu0
        %7066 = vmatprep.mubr.bf16.mxu0 0
        %7067 = vmatmul.mubr.bf16.gmra.mrb[0].mxu0 %v5506
        %v7068 = vpop.f32.mrb[0].mxu0
        %v7069 = vadd.f32 %v6908, %v7068
        %v7070 = vpop.f32.mrb[0].mxu0
        %v7071 = vpop.f32.mrb[0].mxu0
        %v7072 = vadd.f32 %v6911, %v7071
        %v7073 = vpop.f32.mrb[0].mxu0
        %7074 = vmatprep.mubr.bf16.mxu0 0
        %7075 = vmatmul.mubr.bf16.gmra.mrb[0].mxu0 %v5509
        %v7076 = vpop.f32.mrb[0].mxu0
        %v7077 = vadd.f32 %v6916, %v7076
        %v7078 = vpop.f32.mrb[0].mxu0
        %v7079 = vpop.f32.mrb[0].mxu0
        %v7080 = vadd.f32 %v6919, %v7079
        %v7081 = vpop.f32.mrb[0].mxu0
        %7082 = vdwg.mxu0
        %s7083 = scalar_lea.vmem [#allocation3], 24
        %v7084 = vld [vmem:[%s7083] sm:$0xf]
        %v7085 = vld [vmem:[%s7083 + $0x4] sm:$0xf]
        %v7086 = vld [vmem:[%s7083 + $0xc] sm:$0xf]
        %v7087 = vld [vmem:[%s7083 + $0x10] sm:$0xf]
        %v7088 = vld [vmem:[%s7083 + $0x18] sm:$0xf]
        %v7089 = vld [vmem:[%s7083 + $0x1c] sm:$0xf]
        %v7090 = vld [vmem:[%s7083 + $0x24] sm:$0xf]
        %v7091 = vld [vmem:[%s7083 + $0x28] sm:$0xf]
        %v7092 = vld [vmem:[%s7083 + $0x30] sm:$0xf]
        %v7093 = vld [vmem:[%s7083 + $0x34] sm:$0xf]
        %v7094 = vld [vmem:[%s7083 + $0x3c] sm:$0xf]
        %v7095 = vld [vmem:[%s7083 + $0x40] sm:$0xf]
        %v7096 = vld [vmem:[%s7083 + $0x48] sm:$0xf]
        %v7097 = vld [vmem:[%s7083 + $0x4c] sm:$0xf]
        %v7098 = vld [vmem:[%s7083 + $0x54] sm:$0xf]
        %v7099 = vld [vmem:[%s7083 + $0x58] sm:$0xf]
        %v7100 = vld [vmem:[%s7083 + $0x60] sm:$0xf]
        %v7101 = vld [vmem:[%s7083 + $0x64] sm:$0xf]
        %v7102 = vld [vmem:[%s7083 + $0x6c] sm:$0xf]
        %v7103 = vld [vmem:[%s7083 + $0x70] sm:$0xf]
        %v7104 = vld [vmem:[%s7083 + $0x78] sm:$0xf]
        %v7105 = vld [vmem:[%s7083 + $0x7c] sm:$0xf]
        %v7106 = vld [vmem:[%s7083 + $0x84] sm:$0xf]
        %v7107 = vld [vmem:[%s7083 + $0x88] sm:$0xf]
        %v7108 = vld [vmem:[%s7083 + $0x90] sm:$0xf]
        %v7109 = vld [vmem:[%s7083 + $0x94] sm:$0xf]
        %v7110 = vld [vmem:[%s7083 + $0x9c] sm:$0xf]
        %v7111 = vld [vmem:[%s7083 + $0xa0] sm:$0xf]
        %v7112 = vld [vmem:[%s7083 + $0xa8] sm:$0xf]
        %v7113 = vld [vmem:[%s7083 + $0xac] sm:$0xf]
        %v7114 = vld [vmem:[%s7083 + $0xb4] sm:$0xf]
        %v7115 = vld [vmem:[%s7083 + $0xb8] sm:$0xf]
        %v7116 = vld [vmem:[%s7083 + $0x8] sm:$0x1]
        %v7117 = vld [vmem:[%s7083 + $0x14] sm:$0x1]
        %v7118 = vld [vmem:[%s7083 + $0x20] sm:$0x1]
        %v7119 = vld [vmem:[%s7083 + $0x2c] sm:$0x1]
        %v7120 = vld [vmem:[%s7083 + $0x38] sm:$0x1]
        %v7121 = vld [vmem:[%s7083 + $0x44] sm:$0x1]
        %v7122 = vld [vmem:[%s7083 + $0x50] sm:$0x1]
        %v7123 = vld [vmem:[%s7083 + $0x5c] sm:$0x1]
        %v7124 = vld [vmem:[%s7083 + $0x68] sm:$0x1]
        %v7125 = vld [vmem:[%s7083 + $0x74] sm:$0x1]
        %v7126 = vld [vmem:[%s7083 + $0x80] sm:$0x1]
        %v7127 = vld [vmem:[%s7083 + $0x8c] sm:$0x1]
        %v7128 = vld [vmem:[%s7083 + $0x98] sm:$0x1]
        %v7129 = vld [vmem:[%s7083 + $0xa4] sm:$0x1]
        %v7130 = vld [vmem:[%s7083 + $0xb0] sm:$0x1]
        %v7131 = vld [vmem:[%s7083 + $0xbc] sm:$0x1]
        %v7132 = vld [vmem:[%s7083] sm:$0xe]
        %v7133 = vld [vmem:[%s7083 + $0xc] sm:$0xe]
        %v7134 = vld [vmem:[%s7083 + $0x18] sm:$0xe]
        %v7135 = vld [vmem:[%s7083 + $0x24] sm:$0xe]
        %v7136 = vld [vmem:[%s7083 + $0x30] sm:$0xe]
        %v7137 = vld [vmem:[%s7083 + $0x3c] sm:$0xe]
        %v7138 = vld [vmem:[%s7083 + $0x48] sm:$0xe]
        %v7139 = vld [vmem:[%s7083 + $0x54] sm:$0xe]
        %v7140 = vld [vmem:[%s7083 + $0x60] sm:$0xe]
        %v7141 = vld [vmem:[%s7083 + $0x6c] sm:$0xe]
        %v7142 = vld [vmem:[%s7083 + $0x78] sm:$0xe]
        %v7143 = vld [vmem:[%s7083 + $0x84] sm:$0xe]
        %v7144 = vld [vmem:[%s7083 + $0x90] sm:$0xe]
        %v7145 = vld [vmem:[%s7083 + $0x9c] sm:$0xe]
        %v7146 = vld [vmem:[%s7083 + $0xa8] sm:$0xe]
        %v7147 = vld [vmem:[%s7083 + $0xb4] sm:$0xe]
        %v7180 = vunpack.c.l.b16 %v7084
        %v7181 = vunpack.c.l.b16 %v7085
        %v7182 = vunpack.c.l.b16 %v7086
        %v7183 = vunpack.c.l.b16 %v7087
        %v7184 = vunpack.c.l.b16 %v7088
        %v7185 = vunpack.c.l.b16 %v7089
        %v7186 = vunpack.c.l.b16 %v7090
        %v7187 = vunpack.c.l.b16 %v7091
        %v7188 = vunpack.c.l.b16 %v7092
        %v7189 = vunpack.c.l.b16 %v7093
        %v7190 = vunpack.c.l.b16 %v7094
        %v7191 = vunpack.c.l.b16 %v7095
        %v7192 = vunpack.c.l.b16 %v7096
        %v7193 = vunpack.c.l.b16 %v7097
        %v7194 = vunpack.c.l.b16 %v7098
        %v7195 = vunpack.c.l.b16 %v7099
        %v7196 = vunpack.c.l.b16 %v7100
        %v7197 = vunpack.c.l.b16 %v7101
        %v7198 = vunpack.c.l.b16 %v7102
        %v7199 = vunpack.c.l.b16 %v7103
        %v7200 = vunpack.c.l.b16 %v7104
        %v7201 = vunpack.c.l.b16 %v7105
        %v7202 = vunpack.c.l.b16 %v7106
        %v7203 = vunpack.c.l.b16 %v7107
        %v7204 = vunpack.c.l.b16 %v7108
        %v7205 = vunpack.c.l.b16 %v7109
        %v7206 = vunpack.c.l.b16 %v7110
        %v7207 = vunpack.c.l.b16 %v7111
        %v7208 = vunpack.c.l.b16 %v7112
        %v7209 = vunpack.c.l.b16 %v7113
        %v7210 = vunpack.c.l.b16 %v7114
        %v7211 = vunpack.c.l.b16 %v7115
        %v7212 = vpack.c.b16 %v7181, %v7180
        %v7213 = vpack.c.b16 %v7183, %v7182
        %v7214 = vpack.c.b16 %v7185, %v7184
        %v7215 = vpack.c.b16 %v7187, %v7186
        %v7216 = vpack.c.b16 %v7189, %v7188
        %v7217 = vpack.c.b16 %v7191, %v7190
        %v7218 = vpack.c.b16 %v7193, %v7192
        %v7219 = vpack.c.b16 %v7195, %v7194
        %v7220 = vpack.c.b16 %v7197, %v7196
        %v7221 = vpack.c.b16 %v7199, %v7198
        %v7222 = vpack.c.b16 %v7201, %v7200
        %v7223 = vpack.c.b16 %v7203, %v7202
        %v7224 = vpack.c.b16 %v7205, %v7204
        %v7225 = vpack.c.b16 %v7207, %v7206
        %v7226 = vpack.c.b16 %v7209, %v7208
        %v7227 = vpack.c.b16 %v7211, %v7210
        %v7260 = vunpack.c.l.b16 %v7116
        %v7261 = vunpack.c.l.b16 %v7117
        %v7262 = vunpack.c.l.b16 %v7118
        %v7263 = vunpack.c.l.b16 %v7119
        %v7264 = vunpack.c.l.b16 %v7120
        %v7265 = vunpack.c.l.b16 %v7121
        %v7266 = vunpack.c.l.b16 %v7122
        %v7267 = vunpack.c.l.b16 %v7123
        %v7268 = vunpack.c.l.b16 %v7124
        %v7269 = vunpack.c.l.b16 %v7125
        %v7270 = vunpack.c.l.b16 %v7126
        %v7271 = vunpack.c.l.b16 %v7127
        %v7272 = vunpack.c.l.b16 %v7128
        %v7273 = vunpack.c.l.b16 %v7129
        %v7274 = vunpack.c.l.b16 %v7130
        %v7275 = vunpack.c.l.b16 %v7131
        %v7276 = vpack.c.b16 %v7260, %v7260
        %v7277 = vpack.c.b16 %v7261, %v7261
        %v7278 = vpack.c.b16 %v7262, %v7262
        %v7279 = vpack.c.b16 %v7263, %v7263
        %v7280 = vpack.c.b16 %v7264, %v7264
        %v7281 = vpack.c.b16 %v7265, %v7265
        %v7282 = vpack.c.b16 %v7266, %v7266
        %v7283 = vpack.c.b16 %v7267, %v7267
        %v7284 = vpack.c.b16 %v7268, %v7268
        %v7285 = vpack.c.b16 %v7269, %v7269
        %v7286 = vpack.c.b16 %v7270, %v7270
        %v7287 = vpack.c.b16 %v7271, %v7271
        %v7288 = vpack.c.b16 %v7272, %v7272
        %v7289 = vpack.c.b16 %v7273, %v7273
        %v7290 = vpack.c.b16 %v7274, %v7274
        %v7291 = vpack.c.b16 %v7275, %v7275
        %v7293 = vshrl.u32 %v7212, 16
        %v7295 = vshll.u32 %v7212, 16
        %v7297 = vrot.slane %v7295, 1
        %v7298 = vor.u32 %v7293, %v7297
        %v7300 = vshll.u32 %v7276, 16
        %v7302 = vrot.slane %v7300, 1
        %v7303 = vsel %vm1114, %v7298, %v7302
        %v7305 = vshrl.u32 %v7213, 16
        %v7307 = vshll.u32 %v7213, 16
        %v7309 = vrot.slane %v7307, 1
        %v7310 = vor.u32 %v7305, %v7309
        %v7312 = vshll.u32 %v7277, 16
        %v7314 = vrot.slane %v7312, 1
        %v7315 = vsel %vm1114, %v7310, %v7314
        %v7317 = vshrl.u32 %v7214, 16
        %v7319 = vshll.u32 %v7214, 16
        %v7321 = vrot.slane %v7319, 1
        %v7322 = vor.u32 %v7317, %v7321
        %v7324 = vshll.u32 %v7278, 16
        %v7326 = vrot.slane %v7324, 1
        %v7327 = vsel %vm1114, %v7322, %v7326
        %v7329 = vshrl.u32 %v7215, 16
        %v7331 = vshll.u32 %v7215, 16
        %v7333 = vrot.slane %v7331, 1
        %v7334 = vor.u32 %v7329, %v7333
        %v7336 = vshll.u32 %v7279, 16
        %v7338 = vrot.slane %v7336, 1
        %v7339 = vsel %vm1114, %v7334, %v7338
        %v7341 = vshrl.u32 %v7216, 16
        %v7343 = vshll.u32 %v7216, 16
        %v7345 = vrot.slane %v7343, 1
        %v7346 = vor.u32 %v7341, %v7345
        %v7348 = vshll.u32 %v7280, 16
        %v7350 = vrot.slane %v7348, 1
        %v7351 = vsel %vm1114, %v7346, %v7350
        %v7353 = vshrl.u32 %v7217, 16
        %v7355 = vshll.u32 %v7217, 16
        %v7357 = vrot.slane %v7355, 1
        %v7358 = vor.u32 %v7353, %v7357
        %v7360 = vshll.u32 %v7281, 16
        %v7362 = vrot.slane %v7360, 1
        %v7363 = vsel %vm1114, %v7358, %v7362
        %v7365 = vshrl.u32 %v7218, 16
        %v7367 = vshll.u32 %v7218, 16
        %v7369 = vrot.slane %v7367, 1
        %v7370 = vor.u32 %v7365, %v7369
        %v7372 = vshll.u32 %v7282, 16
        %v7374 = vrot.slane %v7372, 1
        %v7375 = vsel %vm1114, %v7370, %v7374
        %v7377 = vshrl.u32 %v7219, 16
        %v7379 = vshll.u32 %v7219, 16
        %v7381 = vrot.slane %v7379, 1
        %v7382 = vor.u32 %v7377, %v7381
        %v7384 = vshll.u32 %v7283, 16
        %v7386 = vrot.slane %v7384, 1
        %v7387 = vsel %vm1114, %v7382, %v7386
        %v7389 = vshrl.u32 %v7220, 16
        %v7391 = vshll.u32 %v7220, 16
        %v7393 = vrot.slane %v7391, 1
        %v7394 = vor.u32 %v7389, %v7393
        %v7396 = vshll.u32 %v7284, 16
        %v7398 = vrot.slane %v7396, 1
        %v7399 = vsel %vm1114, %v7394, %v7398
        %v7401 = vshrl.u32 %v7221, 16
        %v7403 = vshll.u32 %v7221, 16
        %v7405 = vrot.slane %v7403, 1
        %v7406 = vor.u32 %v7401, %v7405
        %v7408 = vshll.u32 %v7285, 16
        %v7410 = vrot.slane %v7408, 1
        %v7411 = vsel %vm1114, %v7406, %v7410
        %v7413 = vshrl.u32 %v7222, 16
        %v7415 = vshll.u32 %v7222, 16
        %v7417 = vrot.slane %v7415, 1
        %v7418 = vor.u32 %v7413, %v7417
        %v7420 = vshll.u32 %v7286, 16
        %v7422 = vrot.slane %v7420, 1
        %v7423 = vsel %vm1114, %v7418, %v7422
        %v7425 = vshrl.u32 %v7223, 16
        %v7427 = vshll.u32 %v7223, 16
        %v7429 = vrot.slane %v7427, 1
        %v7430 = vor.u32 %v7425, %v7429
        %v7432 = vshll.u32 %v7287, 16
        %v7434 = vrot.slane %v7432, 1
        %v7435 = vsel %vm1114, %v7430, %v7434
        %v7437 = vshrl.u32 %v7224, 16
        %v7439 = vshll.u32 %v7224, 16
        %v7441 = vrot.slane %v7439, 1
        %v7442 = vor.u32 %v7437, %v7441
        %v7444 = vshll.u32 %v7288, 16
        %v7446 = vrot.slane %v7444, 1
        %v7447 = vsel %vm1114, %v7442, %v7446
        %v7449 = vshrl.u32 %v7225, 16
        %v7451 = vshll.u32 %v7225, 16
        %v7453 = vrot.slane %v7451, 1
        %v7454 = vor.u32 %v7449, %v7453
        %v7456 = vshll.u32 %v7289, 16
        %v7458 = vrot.slane %v7456, 1
        %v7459 = vsel %vm1114, %v7454, %v7458
        %v7461 = vshrl.u32 %v7226, 16
        %v7463 = vshll.u32 %v7226, 16
        %v7465 = vrot.slane %v7463, 1
        %v7466 = vor.u32 %v7461, %v7465
        %v7468 = vshll.u32 %v7290, 16
        %v7470 = vrot.slane %v7468, 1
        %v7471 = vsel %vm1114, %v7466, %v7470
        %v7473 = vshrl.u32 %v7227, 16
        %v7475 = vshll.u32 %v7227, 16
        %v7477 = vrot.slane %v7475, 1
        %v7478 = vor.u32 %v7473, %v7477
        %v7480 = vshll.u32 %v7291, 16
        %v7482 = vrot.slane %v7480, 1
        %v7483 = vsel %vm1114, %v7478, %v7482
        %v7516 = vunpack.c.l.b16 %v7132
        %v7517 = vunpack.c.l.b16 %v7133
        %v7518 = vunpack.c.l.b16 %v7134
        %v7519 = vunpack.c.l.b16 %v7135
        %v7520 = vunpack.c.l.b16 %v7136
        %v7521 = vunpack.c.l.b16 %v7137
        %v7522 = vunpack.c.l.b16 %v7138
        %v7523 = vunpack.c.l.b16 %v7139
        %v7524 = vunpack.c.l.b16 %v7140
        %v7525 = vunpack.c.l.b16 %v7141
        %v7526 = vunpack.c.l.b16 %v7142
        %v7527 = vunpack.c.l.b16 %v7143
        %v7528 = vunpack.c.l.b16 %v7144
        %v7529 = vunpack.c.l.b16 %v7145
        %v7530 = vunpack.c.l.b16 %v7146
        %v7531 = vunpack.c.l.b16 %v7147
        %v7532 = vpack.c.b16 %v7181, %v7516
        %v7533 = vpack.c.b16 %v7183, %v7517
        %v7534 = vpack.c.b16 %v7185, %v7518
        %v7535 = vpack.c.b16 %v7187, %v7519
        %v7536 = vpack.c.b16 %v7189, %v7520
        %v7537 = vpack.c.b16 %v7191, %v7521
        %v7538 = vpack.c.b16 %v7193, %v7522
        %v7539 = vpack.c.b16 %v7195, %v7523
        %v7540 = vpack.c.b16 %v7197, %v7524
        %v7541 = vpack.c.b16 %v7199, %v7525
        %v7542 = vpack.c.b16 %v7201, %v7526
        %v7543 = vpack.c.b16 %v7203, %v7527
        %v7544 = vpack.c.b16 %v7205, %v7528
        %v7545 = vpack.c.b16 %v7207, %v7529
        %v7546 = vpack.c.b16 %v7209, %v7530
        %v7547 = vpack.c.b16 %v7211, %v7531
        %v7548 = vrot.slane %v7532, 1
        %v7549 = vrot.slane %v7276, 1
        %v7550 = vsel %vm1371, %v7548, %v7549
        %v7551 = vrot.slane %v7533, 1
        %v7552 = vrot.slane %v7277, 1
        %v7553 = vsel %vm1371, %v7551, %v7552
        %v7554 = vrot.slane %v7534, 1
        %v7555 = vrot.slane %v7278, 1
        %v7556 = vsel %vm1371, %v7554, %v7555
        %v7557 = vrot.slane %v7535, 1
        %v7558 = vrot.slane %v7279, 1
        %v7559 = vsel %vm1371, %v7557, %v7558
        %v7560 = vrot.slane %v7536, 1
        %v7561 = vrot.slane %v7280, 1
        %v7562 = vsel %vm1371, %v7560, %v7561
        %v7563 = vrot.slane %v7537, 1
        %v7564 = vrot.slane %v7281, 1
        %v7565 = vsel %vm1371, %v7563, %v7564
        %v7566 = vrot.slane %v7538, 1
        %v7567 = vrot.slane %v7282, 1
        %v7568 = vsel %vm1371, %v7566, %v7567
        %v7569 = vrot.slane %v7539, 1
        %v7570 = vrot.slane %v7283, 1
        %v7571 = vsel %vm1371, %v7569, %v7570
        %v7572 = vrot.slane %v7540, 1
        %v7573 = vrot.slane %v7284, 1
        %v7574 = vsel %vm1371, %v7572, %v7573
        %v7575 = vrot.slane %v7541, 1
        %v7576 = vrot.slane %v7285, 1
        %v7577 = vsel %vm1371, %v7575, %v7576
        %v7578 = vrot.slane %v7542, 1
        %v7579 = vrot.slane %v7286, 1
        %v7580 = vsel %vm1371, %v7578, %v7579
        %v7581 = vrot.slane %v7543, 1
        %v7582 = vrot.slane %v7287, 1
        %v7583 = vsel %vm1371, %v7581, %v7582
        %v7584 = vrot.slane %v7544, 1
        %v7585 = vrot.slane %v7288, 1
        %v7586 = vsel %vm1371, %v7584, %v7585
        %v7587 = vrot.slane %v7545, 1
        %v7588 = vrot.slane %v7289, 1
        %v7589 = vsel %vm1371, %v7587, %v7588
        %v7590 = vrot.slane %v7546, 1
        %v7591 = vrot.slane %v7290, 1
        %v7592 = vsel %vm1371, %v7590, %v7591
        %v7593 = vrot.slane %v7547, 1
        %v7594 = vrot.slane %v7291, 1
        %v7595 = vsel %vm1371, %v7593, %v7594
        %s7612 = scalar_lea.vmem [#allocation10], 384
        %v7613 = vld [vmem:[%s7612] sm:$0xf]
        %v7614 = vld [vmem:[%s7612 + $0x4] sm:$0xf]
        %v7615 = vld [vmem:[%s7612 + $0x8] sm:$0xf]
        %v7616 = vld [vmem:[%s7612 + $0xc] sm:$0xf]
        %v7617 = vld [vmem:[%s7612 + $0x10] sm:$0xf]
        %v7618 = vld [vmem:[%s7612 + $0x14] sm:$0xf]
        %v7619 = vld [vmem:[%s7612 + $0x18] sm:$0xf]
        %v7620 = vld [vmem:[%s7612 + $0x1c] sm:$0xf]
        %v7621 = vld [vmem:[%s7612 + $0x20] sm:$0xf]
        %v7622 = vld [vmem:[%s7612 + $0x24] sm:$0xf]
        %v7623 = vld [vmem:[%s7612 + $0x28] sm:$0xf]
        %v7624 = vld [vmem:[%s7612 + $0x2c] sm:$0xf]
        %v7625 = vld [vmem:[%s7612 + $0x30] sm:$0xf]
        %v7626 = vld [vmem:[%s7612 + $0x34] sm:$0xf]
        %v7627 = vld [vmem:[%s7612 + $0x38] sm:$0xf]
        %v7628 = vld [vmem:[%s7612 + $0x3c] sm:$0xf]
        %v7629 = vld [vmem:[%s7612 + $0x40] sm:$0xf]
        %v7630 = vld [vmem:[%s7612 + $0x44] sm:$0xf]
        %v7631 = vld [vmem:[%s7612 + $0x48] sm:$0xf]
        %v7632 = vld [vmem:[%s7612 + $0x4c] sm:$0xf]
        %v7633 = vld [vmem:[%s7612 + $0x50] sm:$0xf]
        %v7634 = vld [vmem:[%s7612 + $0x54] sm:$0xf]
        %v7635 = vld [vmem:[%s7612 + $0x58] sm:$0xf]
        %v7636 = vld [vmem:[%s7612 + $0x5c] sm:$0xf]
        %v7637 = vld [vmem:[%s7612 + $0x60] sm:$0xf]
        %v7638 = vld [vmem:[%s7612 + $0x64] sm:$0xf]
        %v7639 = vld [vmem:[%s7612 + $0x68] sm:$0xf]
        %v7640 = vld [vmem:[%s7612 + $0x6c] sm:$0xf]
        %v7641 = vld [vmem:[%s7612 + $0x70] sm:$0xf]
        %v7642 = vld [vmem:[%s7612 + $0x74] sm:$0xf]
        %v7643 = vld [vmem:[%s7612 + $0x78] sm:$0xf]
        %v7644 = vld [vmem:[%s7612 + $0x7c] sm:$0xf]
        %v7645 = vld [vmem:[%s7612 + $0x80] sm:$0xf]
        %v7646 = vld [vmem:[%s7612 + $0x84] sm:$0xf]
        %v7647 = vld [vmem:[%s7612 + $0x88] sm:$0xf]
        %v7648 = vld [vmem:[%s7612 + $0x8c] sm:$0xf]
        %v7649 = vld [vmem:[%s7612 + $0x90] sm:$0xf]
        %v7650 = vld [vmem:[%s7612 + $0x94] sm:$0xf]
        %v7651 = vld [vmem:[%s7612 + $0x98] sm:$0xf]
        %v7652 = vld [vmem:[%s7612 + $0x9c] sm:$0xf]
        %v7653 = vld [vmem:[%s7612 + $0xa0] sm:$0xf]
        %v7654 = vld [vmem:[%s7612 + $0xa4] sm:$0xf]
        %v7655 = vld [vmem:[%s7612 + $0xa8] sm:$0xf]
        %v7656 = vld [vmem:[%s7612 + $0xac] sm:$0xf]
        %v7657 = vld [vmem:[%s7612 + $0xb0] sm:$0xf]
        %v7658 = vld [vmem:[%s7612 + $0xb4] sm:$0xf]
        %v7659 = vld [vmem:[%s7612 + $0xb8] sm:$0xf]
        %v7660 = vld [vmem:[%s7612 + $0xbc] sm:$0xf]
        %v7709 = vunpack.c.l.b16 %v7613
        %v7710 = vunpack.c.l.b16 %v7614
        %v7711 = vunpack.c.l.b16 %v7615
        %v7712 = vunpack.c.l.b16 %v7616
        %v7713 = vunpack.c.l.b16 %v7617
        %v7714 = vunpack.c.l.b16 %v7618
        %v7715 = vunpack.c.l.b16 %v7619
        %v7716 = vunpack.c.l.b16 %v7620
        %v7717 = vunpack.c.l.b16 %v7621
        %v7718 = vunpack.c.l.b16 %v7622
        %v7719 = vunpack.c.l.b16 %v7623
        %v7720 = vunpack.c.l.b16 %v7624
        %v7721 = vunpack.c.l.b16 %v7625
        %v7722 = vunpack.c.l.b16 %v7626
        %v7723 = vunpack.c.l.b16 %v7627
        %v7724 = vunpack.c.l.b16 %v7628
        %v7725 = vunpack.c.l.b16 %v7629
        %v7726 = vunpack.c.l.b16 %v7630
        %v7727 = vunpack.c.l.b16 %v7631
        %v7728 = vunpack.c.l.b16 %v7632
        %v7729 = vunpack.c.l.b16 %v7633
        %v7730 = vunpack.c.l.b16 %v7634
        %v7731 = vunpack.c.l.b16 %v7635
        %v7732 = vunpack.c.l.b16 %v7636
        %v7733 = vunpack.c.l.b16 %v7637
        %v7734 = vunpack.c.l.b16 %v7638
        %v7735 = vunpack.c.l.b16 %v7639
        %v7736 = vunpack.c.l.b16 %v7640
        %v7737 = vunpack.c.l.b16 %v7641
        %v7738 = vunpack.c.l.b16 %v7642
        %v7739 = vunpack.c.l.b16 %v7643
        %v7740 = vunpack.c.l.b16 %v7644
        %v7741 = vunpack.c.l.b16 %v7645
        %v7742 = vunpack.c.l.b16 %v7646
        %v7743 = vunpack.c.l.b16 %v7647
        %v7744 = vunpack.c.l.b16 %v7648
        %v7745 = vunpack.c.l.b16 %v7649
        %v7746 = vunpack.c.l.b16 %v7650
        %v7747 = vunpack.c.l.b16 %v7651
        %v7748 = vunpack.c.l.b16 %v7652
        %v7749 = vunpack.c.l.b16 %v7653
        %v7750 = vunpack.c.l.b16 %v7654
        %v7751 = vunpack.c.l.b16 %v7655
        %v7752 = vunpack.c.l.b16 %v7656
        %v7753 = vunpack.c.l.b16 %v7657
        %v7754 = vunpack.c.l.b16 %v7658
        %v7755 = vunpack.c.l.b16 %v7659
        %v7756 = vunpack.c.l.b16 %v7660
        %v7757 = vpack.c.b16 %v7710, %v7709
        %v7758 = vpack.c.b16 %v7712, %v7711
        %v7759 = vpack.c.b16 %v7714, %v7713
        %v7760 = vpack.c.b16 %v7716, %v7715
        %v7761 = vpack.c.b16 %v7718, %v7717
        %v7762 = vpack.c.b16 %v7720, %v7719
        %v7763 = vpack.c.b16 %v7722, %v7721
        %v7764 = vpack.c.b16 %v7724, %v7723
        %v7765 = vpack.c.b16 %v7726, %v7725
        %v7766 = vpack.c.b16 %v7728, %v7727
        %v7767 = vpack.c.b16 %v7730, %v7729
        %v7768 = vpack.c.b16 %v7732, %v7731
        %v7769 = vpack.c.b16 %v7734, %v7733
        %v7770 = vpack.c.b16 %v7736, %v7735
        %v7771 = vpack.c.b16 %v7738, %v7737
        %v7772 = vpack.c.b16 %v7740, %v7739
        %v7773 = vpack.c.b16 %v7742, %v7741
        %v7774 = vpack.c.b16 %v7744, %v7743
        %v7775 = vpack.c.b16 %v7746, %v7745
        %v7776 = vpack.c.b16 %v7748, %v7747
        %v7777 = vpack.c.b16 %v7750, %v7749
        %v7778 = vpack.c.b16 %v7752, %v7751
        %v7779 = vpack.c.b16 %v7754, %v7753
        %v7780 = vpack.c.b16 %v7756, %v7755
        %7805 = vmatprep.subr.bf16.mxu0 0
        %7806 = vmatpush1.bf16.msra.mxu0 %v7757
        %7807 = vmatprep.subr.bf16.mxu0 0
        %7808 = vmatpush1.bf16.msra.mxu0 %v7758
        %7809 = vmatprep.subr.bf16.mxu0 0
        %7810 = vmatpush1.bf16.msra.mxu0 %v7759
        %7811 = vmatprep.subr.bf16.mxu0 0
        %7812 = vmatpush1.bf16.msra.mxu0 %v7760
        %7813 = vmatprep.subr.bf16.mxu0 0
        %7814 = vmatpush1.bf16.msra.mxu0 %v7761
        %7815 = vmatprep.subr.bf16.mxu0 0
        %7816 = vmatpush1.bf16.msra.mxu0 %v7762
        %7817 = vmatprep.subr.bf16.mxu0 0
        %7818 = vmatpush1.bf16.msra.mxu0 %v7763
        %7819 = vmatprep.subr.bf16.mxu0 0
        %7820 = vmatpush1.bf16.msra.mxu0 %v7764
        %7821 = vmatprep.subr.bf16.mxu0 0
        %7822 = vmatpush1.bf16.msra.mxu0 %v7765
        %7823 = vmatprep.subr.bf16.mxu0 0
        %7824 = vmatpush1.bf16.msra.mxu0 %v7766
        %7825 = vmatprep.subr.bf16.mxu0 0
        %7826 = vmatpush1.bf16.msra.mxu0 %v7767
        %7827 = vmatprep.subr.bf16.mxu0 0
        %7828 = vmatpush1.bf16.msra.mxu0 %v7768
        %7829 = vmatprep.subr.bf16.mxu0 0
        %7830 = vmatpush1.bf16.msra.mxu0 %v7769
        %7831 = vmatprep.subr.bf16.mxu0 0
        %7832 = vmatpush1.bf16.msra.mxu0 %v7770
        %7833 = vmatprep.subr.bf16.mxu0 0
        %7834 = vmatpush1.bf16.msra.mxu0 %v7771
        %7835 = vmatprep.subr.bf16.mxu0 0
        %7836 = vmatpush1.bf16.msra.mxu0 %v7772
        %7837 = vmatprep.mubr.bf16.mxu0 %v7303
        %7838 = vmatmul.mubr.bf16.gmra.mrb[0].mxu0 %v7212
        %v7839 = vpop.f32.mrb[0].mxu0
        %v7840 = vadd.f32 0.0, %v7839
        %v7841 = vpop.f32.mrb[0].mxu0
        %v7842 = vpop.f32.mrb[0].mxu0
        %v7843 = vadd.f32 0.0, %v7842
        %v7844 = vpop.f32.mrb[0].mxu0
        %7845 = vmatprep.mubr.bf16.mxu0 %v7315
        %7846 = vmatmul.mubr.bf16.gmra.mrb[0].mxu0 %v7213
        %v7847 = vpop.f32.mrb[0].mxu0
        %v7848 = vadd.f32 0.0, %v7847
        %v7849 = vpop.f32.mrb[0].mxu0
        %v7850 = vpop.f32.mrb[0].mxu0
        %v7851 = vadd.f32 0.0, %v7850
        %v7852 = vpop.f32.mrb[0].mxu0
        %7853 = vmatprep.mubr.bf16.mxu0 %v7327
        %7854 = vmatmul.mubr.bf16.gmra.mrb[0].mxu0 %v7214
        %v7855 = vpop.f32.mrb[0].mxu0
        %v7856 = vadd.f32 0.0, %v7855
        %v7857 = vpop.f32.mrb[0].mxu0
        %v7858 = vpop.f32.mrb[0].mxu0
        %v7859 = vadd.f32 0.0, %v7858
        %v7860 = vpop.f32.mrb[0].mxu0
        %7861 = vmatprep.mubr.bf16.mxu0 %v7339
        %7862 = vmatmul.mubr.bf16.gmra.mrb[0].mxu0 %v7215
        %v7863 = vpop.f32.mrb[0].mxu0
        %v7864 = vadd.f32 0.0, %v7863
        %v7865 = vpop.f32.mrb[0].mxu0
        %v7866 = vpop.f32.mrb[0].mxu0
        %v7867 = vadd.f32 0.0, %v7866
        %v7868 = vpop.f32.mrb[0].mxu0
        %7869 = vmatprep.mubr.bf16.mxu0 %v7351
        %7870 = vmatmul.mubr.bf16.gmra.mrb[0].mxu0 %v7216
        %v7871 = vpop.f32.mrb[0].mxu0
        %v7872 = vadd.f32 0.0, %v7871
        %v7873 = vpop.f32.mrb[0].mxu0
        %v7874 = vpop.f32.mrb[0].mxu0
        %v7875 = vadd.f32 0.0, %v7874
        %v7876 = vpop.f32.mrb[0].mxu0
        %7877 = vmatprep.mubr.bf16.mxu0 %v7363
        %7878 = vmatmul.mubr.bf16.gmra.mrb[0].mxu0 %v7217
        %v7879 = vpop.f32.mrb[0].mxu0
        %v7880 = vadd.f32 0.0, %v7879
        %v7881 = vpop.f32.mrb[0].mxu0
        %v7882 = vpop.f32.mrb[0].mxu0
        %v7883 = vadd.f32 0.0, %v7882
        %v7884 = vpop.f32.mrb[0].mxu0
        %7885 = vmatprep.mubr.bf16.mxu0 %v7375
        %7886 = vmatmul.mubr.bf16.gmra.mrb[0].mxu0 %v7218
        %v7887 = vpop.f32.mrb[0].mxu0
        %v7888 = vadd.f32 0.0, %v7887
        %v7889 = vpop.f32.mrb[0].mxu0
        %v7890 = vpop.f32.mrb[0].mxu0
        %v7891 = vadd.f32 0.0, %v7890
        %v7892 = vpop.f32.mrb[0].mxu0
        %7893 = vmatprep.mubr.bf16.mxu0 %v7387
        %7894 = vmatmul.mubr.bf16.gmra.mrb[0].mxu0 %v7219
        %v7895 = vpop.f32.mrb[0].mxu0
        %v7896 = vadd.f32 0.0, %v7895
        %v7897 = vpop.f32.mrb[0].mxu0
        %v7898 = vpop.f32.mrb[0].mxu0
        %v7899 = vadd.f32 0.0, %v7898
        %v7900 = vpop.f32.mrb[0].mxu0
        %7901 = vmatprep.mubr.bf16.mxu0 %v7399
        %7902 = vmatmul.mubr.bf16.gmra.mrb[0].mxu0 %v7220
        %v7903 = vpop.f32.mrb[0].mxu0
        %v7904 = vadd.f32 0.0, %v7903
        %v7905 = vpop.f32.mrb[0].mxu0
        %v7906 = vpop.f32.mrb[0].mxu0
        %v7907 = vadd.f32 0.0, %v7906
        %v7908 = vpop.f32.mrb[0].mxu0
        %7909 = vmatprep.mubr.bf16.mxu0 %v7411
        %7910 = vmatmul.mubr.bf16.gmra.mrb[0].mxu0 %v7221
        %v7911 = vpop.f32.mrb[0].mxu0
        %v7912 = vadd.f32 0.0, %v7911
        %v7913 = vpop.f32.mrb[0].mxu0
        %v7914 = vpop.f32.mrb[0].mxu0
        %v7915 = vadd.f32 0.0, %v7914
        %v7916 = vpop.f32.mrb[0].mxu0
        %7917 = vmatprep.mubr.bf16.mxu0 %v7423
        %7918 = vmatmul.mubr.bf16.gmra.mrb[0].mxu0 %v7222
        %v7919 = vpop.f32.mrb[0].mxu0
        %v7920 = vadd.f32 0.0, %v7919
        %v7921 = vpop.f32.mrb[0].mxu0
        %v7922 = vpop.f32.mrb[0].mxu0
        %v7923 = vadd.f32 0.0, %v7922
        %v7924 = vpop.f32.mrb[0].mxu0
        %7925 = vmatprep.mubr.bf16.mxu0 %v7435
        %7926 = vmatmul.mubr.bf16.gmra.mrb[0].mxu0 %v7223
        %v7927 = vpop.f32.mrb[0].mxu0
        %v7928 = vadd.f32 0.0, %v7927
        %v7929 = vpop.f32.mrb[0].mxu0
        %v7930 = vpop.f32.mrb[0].mxu0
        %v7931 = vadd.f32 0.0, %v7930
        %v7932 = vpop.f32.mrb[0].mxu0
        %7933 = vmatprep.mubr.bf16.mxu0 %v7447
        %7934 = vmatmul.mubr.bf16.gmra.mrb[0].mxu0 %v7224
        %v7935 = vpop.f32.mrb[0].mxu0
        %v7936 = vadd.f32 0.0, %v7935
        %v7937 = vpop.f32.mrb[0].mxu0
        %v7938 = vpop.f32.mrb[0].mxu0
        %v7939 = vadd.f32 0.0, %v7938
        %v7940 = vpop.f32.mrb[0].mxu0
        %7941 = vmatprep.mubr.bf16.mxu0 %v7459
        %7942 = vmatmul.mubr.bf16.gmra.mrb[0].mxu0 %v7225
        %v7943 = vpop.f32.mrb[0].mxu0
        %v7944 = vadd.f32 0.0, %v7943
        %v7945 = vpop.f32.mrb[0].mxu0
        %v7946 = vpop.f32.mrb[0].mxu0
        %v7947 = vadd.f32 0.0, %v7946
        %v7948 = vpop.f32.mrb[0].mxu0
        %7949 = vmatprep.mubr.bf16.mxu0 %v7471
        %7950 = vmatmul.mubr.bf16.gmra.mrb[0].mxu0 %v7226
        %v7951 = vpop.f32.mrb[0].mxu0
        %v7952 = vadd.f32 0.0, %v7951
        %v7953 = vpop.f32.mrb[0].mxu0
        %v7954 = vpop.f32.mrb[0].mxu0
        %v7955 = vadd.f32 0.0, %v7954
        %v7956 = vpop.f32.mrb[0].mxu0
        %7957 = vmatprep.mubr.bf16.mxu0 %v7483
        %7958 = vmatmul.mubr.bf16.gmra.mrb[0].mxu0 %v7227
        %v7959 = vpop.f32.mrb[0].mxu0
        %v7960 = vadd.f32 0.0, %v7959
        %v7961 = vpop.f32.mrb[0].mxu0
        %v7962 = vpop.f32.mrb[0].mxu0
        %v7963 = vadd.f32 0.0, %v7962
        %v7964 = vpop.f32.mrb[0].mxu0
        %7965 = vdwg.mxu0
        %7966 = vmatprep.subr.bf16.mxu0 0
        %7967 = vmatpush1.bf16.msra.mxu0 %v7773
        %7968 = vmatprep.subr.bf16.mxu0 0
        %7969 = vmatpush1.bf16.msra.mxu0 %v7774
        %7970 = vmatprep.subr.bf16.mxu0 0
        %7971 = vmatpush1.bf16.msra.mxu0 %v7775
        %7972 = vmatprep.subr.bf16.mxu0 0
        %7973 = vmatpush1.bf16.msra.mxu0 %v7776
        %7974 = vmatprep.subr.bf16.mxu0 0
        %7975 = vmatpush1.bf16.msra.mxu0 %v7777
        %7976 = vmatprep.subr.bf16.mxu0 0
        %7977 = vmatpush1.bf16.msra.mxu0 %v7778
        %7978 = vmatprep.subr.bf16.mxu0 0
        %7979 = vmatpush1.bf16.msra.mxu0 %v7779
        %7980 = vmatprep.subr.bf16.mxu0 0
        %7981 = vmatpush1.bf16.msra.mxu0 %v7780
        %7982 = vmatprep.subr.bf16.mxu0 0
        %7983 = vmatpush1.bf16.msra.mxu0 0
        %7984 = vmatprep.subr.bf16.mxu0 0
        %7985 = vmatpush1.bf16.msra.mxu0 0
        %7986 = vmatprep.subr.bf16.mxu0 0
        %7987 = vmatpush1.bf16.msra.mxu0 0
        %7988 = vmatprep.subr.bf16.mxu0 0
        %7989 = vmatpush1.bf16.msra.mxu0 0
        %7990 = vmatprep.subr.bf16.mxu0 0
        %7991 = vmatpush1.bf16.msra.mxu0 0
        %7992 = vmatprep.subr.bf16.mxu0 0
        %7993 = vmatpush1.bf16.msra.mxu0 0
        %7994 = vmatprep.subr.bf16.mxu0 0
        %7995 = vmatpush1.bf16.msra.mxu0 0
        %7996 = vmatprep.subr.bf16.mxu0 0
        %7997 = vmatpush1.bf16.msra.mxu0 0
        %7998 = vmatprep.mubr.bf16.mxu0 0
        %7999 = vmatmul.mubr.bf16.gmra.mrb[0].mxu0 %v7550
        %v8000 = vpop.f32.mrb[0].mxu0
        %v8001 = vadd.f32 %v7840, %v8000
        %v8002 = vpop.f32.mrb[0].mxu0
        %v8003 = vpop.f32.mrb[0].mxu0
        %v8004 = vadd.f32 %v7843, %v8003
        %v8005 = vpop.f32.mrb[0].mxu0
        %8006 = vmatprep.mubr.bf16.mxu0 0
        %8007 = vmatmul.mubr.bf16.gmra.mrb[0].mxu0 %v7553
        %v8008 = vpop.f32.mrb[0].mxu0
        %v8009 = vadd.f32 %v7848, %v8008
        %v8010 = vpop.f32.mrb[0].mxu0
        %v8011 = vpop.f32.mrb[0].mxu0
        %v8012 = vadd.f32 %v7851, %v8011
        %v8013 = vpop.f32.mrb[0].mxu0
        %8014 = vmatprep.mubr.bf16.mxu0 0
        %8015 = vmatmul.mubr.bf16.gmra.mrb[0].mxu0 %v7556
        %v8016 = vpop.f32.mrb[0].mxu0
        %v8017 = vadd.f32 %v7856, %v8016
        %v8018 = vpop.f32.mrb[0].mxu0
        %v8019 = vpop.f32.mrb[0].mxu0
        %v8020 = vadd.f32 %v7859, %v8019
        %v8021 = vpop.f32.mrb[0].mxu0
        %8022 = vmatprep.mubr.bf16.mxu0 0
        %8023 = vmatmul.mubr.bf16.gmra.mrb[0].mxu0 %v7559
        %v8024 = vpop.f32.mrb[0].mxu0
        %v8025 = vadd.f32 %v7864, %v8024
        %v8026 = vpop.f32.mrb[0].mxu0
        %v8027 = vpop.f32.mrb[0].mxu0
        %v8028 = vadd.f32 %v7867, %v8027
        %v8029 = vpop.f32.mrb[0].mxu0
        %8030 = vmatprep.mubr.bf16.mxu0 0
        %8031 = vmatmul.mubr.bf16.gmra.mrb[0].mxu0 %v7562
        %v8032 = vpop.f32.mrb[0].mxu0
        %v8033 = vadd.f32 %v7872, %v8032
        %v8034 = vpop.f32.mrb[0].mxu0
        %v8035 = vpop.f32.mrb[0].mxu0
        %v8036 = vadd.f32 %v7875, %v8035
        %v8037 = vpop.f32.mrb[0].mxu0
        %8038 = vmatprep.mubr.bf16.mxu0 0
        %8039 = vmatmul.mubr.bf16.gmra.mrb[0].mxu0 %v7565
        %v8040 = vpop.f32.mrb[0].mxu0
        %v8041 = vadd.f32 %v7880, %v8040
        %v8042 = vpop.f32.mrb[0].mxu0
        %v8043 = vpop.f32.mrb[0].mxu0
        %v8044 = vadd.f32 %v7883, %v8043
        %v8045 = vpop.f32.mrb[0].mxu0
        %8046 = vmatprep.mubr.bf16.mxu0 0
        %8047 = vmatmul.mubr.bf16.gmra.mrb[0].mxu0 %v7568
        %v8048 = vpop.f32.mrb[0].mxu0
        %v8049 = vadd.f32 %v7888, %v8048
        %v8050 = vpop.f32.mrb[0].mxu0
        %v8051 = vpop.f32.mrb[0].mxu0
        %v8052 = vadd.f32 %v7891, %v8051
        %v8053 = vpop.f32.mrb[0].mxu0
        %8054 = vmatprep.mubr.bf16.mxu0 0
        %8055 = vmatmul.mubr.bf16.gmra.mrb[0].mxu0 %v7571
        %v8056 = vpop.f32.mrb[0].mxu0
        %v8057 = vadd.f32 %v7896, %v8056
        %v8058 = vpop.f32.mrb[0].mxu0
        %v8059 = vpop.f32.mrb[0].mxu0
        %v8060 = vadd.f32 %v7899, %v8059
        %v8061 = vpop.f32.mrb[0].mxu0
        %8062 = vmatprep.mubr.bf16.mxu0 0
        %8063 = vmatmul.mubr.bf16.gmra.mrb[0].mxu0 %v7574
        %v8064 = vpop.f32.mrb[0].mxu0
        %v8065 = vadd.f32 %v7904, %v8064
        %v8066 = vpop.f32.mrb[0].mxu0
        %v8067 = vpop.f32.mrb[0].mxu0
        %v8068 = vadd.f32 %v7907, %v8067
        %v8069 = vpop.f32.mrb[0].mxu0
        %8070 = vmatprep.mubr.bf16.mxu0 0
        %8071 = vmatmul.mubr.bf16.gmra.mrb[0].mxu0 %v7577
        %v8072 = vpop.f32.mrb[0].mxu0
        %v8073 = vadd.f32 %v7912, %v8072
        %v8074 = vpop.f32.mrb[0].mxu0
        %v8075 = vpop.f32.mrb[0].mxu0
        %v8076 = vadd.f32 %v7915, %v8075
        %v8077 = vpop.f32.mrb[0].mxu0
        %8078 = vmatprep.mubr.bf16.mxu0 0
        %8079 = vmatmul.mubr.bf16.gmra.mrb[0].mxu0 %v7580
        %v8080 = vpop.f32.mrb[0].mxu0
        %v8081 = vadd.f32 %v7920, %v8080
        %v8082 = vpop.f32.mrb[0].mxu0
        %v8083 = vpop.f32.mrb[0].mxu0
        %v8084 = vadd.f32 %v7923, %v8083
        %v8085 = vpop.f32.mrb[0].mxu0
        %8086 = vmatprep.mubr.bf16.mxu0 0
        %8087 = vmatmul.mubr.bf16.gmra.mrb[0].mxu0 %v7583
        %v8088 = vpop.f32.mrb[0].mxu0
        %v8089 = vadd.f32 %v7928, %v8088
        %v8090 = vpop.f32.mrb[0].mxu0
        %v8091 = vpop.f32.mrb[0].mxu0
        %v8092 = vadd.f32 %v7931, %v8091
        %v8093 = vpop.f32.mrb[0].mxu0
        %8094 = vmatprep.mubr.bf16.mxu0 0
        %8095 = vmatmul.mubr.bf16.gmra.mrb[0].mxu0 %v7586
        %v8096 = vpop.f32.mrb[0].mxu0
        %v8097 = vadd.f32 %v7936, %v8096
        %v8098 = vpop.f32.mrb[0].mxu0
        %v8099 = vpop.f32.mrb[0].mxu0
        %v8100 = vadd.f32 %v7939, %v8099
        %v8101 = vpop.f32.mrb[0].mxu0
        %8102 = vmatprep.mubr.bf16.mxu0 0
        %8103 = vmatmul.mubr.bf16.gmra.mrb[0].mxu0 %v7589
        %v8104 = vpop.f32.mrb[0].mxu0
        %v8105 = vadd.f32 %v7944, %v8104
        %v8106 = vpop.f32.mrb[0].mxu0
        %v8107 = vpop.f32.mrb[0].mxu0
        %v8108 = vadd.f32 %v7947, %v8107
        %v8109 = vpop.f32.mrb[0].mxu0
        %8110 = vmatprep.mubr.bf16.mxu0 0
        %8111 = vmatmul.mubr.bf16.gmra.mrb[0].mxu0 %v7592
        %v8112 = vpop.f32.mrb[0].mxu0
        %v8113 = vadd.f32 %v7952, %v8112
        %v8114 = vpop.f32.mrb[0].mxu0
        %v8115 = vpop.f32.mrb[0].mxu0
        %v8116 = vadd.f32 %v7955, %v8115
        %v8117 = vpop.f32.mrb[0].mxu0
        %8118 = vmatprep.mubr.bf16.mxu0 0
        %8119 = vmatmul.mubr.bf16.gmra.mrb[0].mxu0 %v7595
        %v8120 = vpop.f32.mrb[0].mxu0
        %v8121 = vadd.f32 %v7960, %v8120
        %v8122 = vpop.f32.mrb[0].mxu0
        %v8123 = vpop.f32.mrb[0].mxu0
        %v8124 = vadd.f32 %v7963, %v8123
        %v8125 = vpop.f32.mrb[0].mxu0
        %8126 = vdwg.mxu0
        %v8127 = vadd.f32 %v6957, %v8001
        %v8128 = vadd.f32 %v6960, %v8004
        %v8129 = vadd.f32 %v6965, %v8009
        %v8130 = vadd.f32 %v6968, %v8012
        %v8131 = vadd.f32 %v6973, %v8017
        %v8132 = vadd.f32 %v6976, %v8020
        %v8133 = vadd.f32 %v6981, %v8025
        %v8134 = vadd.f32 %v6984, %v8028
        %v8135 = vadd.f32 %v6989, %v8033
        %v8136 = vadd.f32 %v6992, %v8036
        %v8137 = vadd.f32 %v6997, %v8041
        %v8138 = vadd.f32 %v7000, %v8044
        %v8139 = vadd.f32 %v7005, %v8049
        %v8140 = vadd.f32 %v7008, %v8052
        %v8141 = vadd.f32 %v7013, %v8057
        %v8142 = vadd.f32 %v7016, %v8060
        %v8143 = vadd.f32 %v7021, %v8065
        %v8144 = vadd.f32 %v7024, %v8068
        %v8145 = vadd.f32 %v7029, %v8073
        %v8146 = vadd.f32 %v7032, %v8076
        %v8147 = vadd.f32 %v7037, %v8081
        %v8148 = vadd.f32 %v7040, %v8084
        %v8149 = vadd.f32 %v7045, %v8089
        %v8150 = vadd.f32 %v7048, %v8092
        %v8151 = vadd.f32 %v7053, %v8097
        %v8152 = vadd.f32 %v7056, %v8100
        %v8153 = vadd.f32 %v7061, %v8105
        %v8154 = vadd.f32 %v7064, %v8108
        %v8155 = vadd.f32 %v7069, %v8113
        %v8156 = vadd.f32 %v7072, %v8116
        %v8157 = vadd.f32 %v7077, %v8121
        %v8158 = vadd.f32 %v7080, %v8124
        %v8159 = vld [vmem:[%s5 + $0x2] sm:$0x1]
        %v8160 = vlaneseq
        %v8161 = vshrl.u32 %v8160, 7
        %v8162 = vsub.s32 0, %v8161
        %v8163 = vrot.slane %v8159, %v8162
        %v8164 = vmul.f32 %v8127, %v8163
        %v8165 = vmul.f32 %v8128, %v8163
        %v8166 = vmul.f32 %v8129, %v8163
        %v8167 = vmul.f32 %v8130, %v8163
        %v8168 = vmul.f32 %v8131, %v8163
        %v8169 = vmul.f32 %v8132, %v8163
        %v8170 = vmul.f32 %v8133, %v8163
        %v8171 = vmul.f32 %v8134, %v8163
        %v8172 = vmul.f32 %v8135, %v8163
        %v8173 = vmul.f32 %v8136, %v8163
        %v8174 = vmul.f32 %v8137, %v8163
        %v8175 = vmul.f32 %v8138, %v8163
        %v8176 = vmul.f32 %v8139, %v8163
        %v8177 = vmul.f32 %v8140, %v8163
        %v8178 = vmul.f32 %v8141, %v8163
        %v8179 = vmul.f32 %v8142, %v8163
        %v8180 = vmul.f32 %v8143, %v8163
        %v8181 = vmul.f32 %v8144, %v8163
        %v8182 = vmul.f32 %v8145, %v8163
        %v8183 = vmul.f32 %v8146, %v8163
        %v8184 = vmul.f32 %v8147, %v8163
        %v8185 = vmul.f32 %v8148, %v8163
        %v8186 = vmul.f32 %v8149, %v8163
        %v8187 = vmul.f32 %v8150, %v8163
        %v8188 = vmul.f32 %v8151, %v8163
        %v8189 = vmul.f32 %v8152, %v8163
        %v8190 = vmul.f32 %v8153, %v8163
        %v8191 = vmul.f32 %v8154, %v8163
        %v8192 = vmul.f32 %v8155, %v8163
        %v8193 = vmul.f32 %v8156, %v8163
        %v8194 = vmul.f32 %v8157, %v8163
        %v8195 = vmul.f32 %v8158, %v8163
        %v8196 = vld [vmem:[%s5 + $0x3] sm:$0x1]
        %v8197 = vlaneseq
        %v8198 = vshrl.u32 %v8197, 7
        %v8199 = vsub.s32 0, %v8198
        %v8200 = vrot.slane %v8196, %v8199
        %v8201 = vadd.f32 %v8164, %v8200
        %v8202 = vadd.f32 %v8165, %v8200
        %v8203 = vadd.f32 %v8166, %v8200
        %v8204 = vadd.f32 %v8167, %v8200
        %v8205 = vadd.f32 %v8168, %v8200
        %v8206 = vadd.f32 %v8169, %v8200
        %v8207 = vadd.f32 %v8170, %v8200
        %v8208 = vadd.f32 %v8171, %v8200
        %v8209 = vadd.f32 %v8172, %v8200
        %v8210 = vadd.f32 %v8173, %v8200
        %v8211 = vadd.f32 %v8174, %v8200
        %v8212 = vadd.f32 %v8175, %v8200
        %v8213 = vadd.f32 %v8176, %v8200
        %v8214 = vadd.f32 %v8177, %v8200
        %v8215 = vadd.f32 %v8178, %v8200
        %v8216 = vadd.f32 %v8179, %v8200
        %v8217 = vadd.f32 %v8180, %v8200
        %v8218 = vadd.f32 %v8181, %v8200
        %v8219 = vadd.f32 %v8182, %v8200
        %v8220 = vadd.f32 %v8183, %v8200
        %v8221 = vadd.f32 %v8184, %v8200
        %v8222 = vadd.f32 %v8185, %v8200
        %v8223 = vadd.f32 %v8186, %v8200
        %v8224 = vadd.f32 %v8187, %v8200
        %v8225 = vadd.f32 %v8188, %v8200
        %v8226 = vadd.f32 %v8189, %v8200
        %v8227 = vadd.f32 %v8190, %v8200
        %v8228 = vadd.f32 %v8191, %v8200
        %v8229 = vadd.f32 %v8192, %v8200
        %v8230 = vadd.f32 %v8193, %v8200
        %v8231 = vadd.f32 %v8194, %v8200
        %v8232 = vadd.f32 %v8195, %v8200
        %v8233 = vadd.f32 %v8201, %v8202
        %v8234 = vadd.f32 %v8233, %v8203
        %v8235 = vadd.f32 %v8234, %v8204
        %v8236 = vadd.f32 %v8235, %v8205
        %v8237 = vadd.f32 %v8236, %v8206
        %v8238 = vadd.f32 %v8237, %v8207
        %v8239 = vadd.f32 %v8238, %v8208
        %v8240 = vadd.f32 %v8239, %v8209
        %v8241 = vadd.f32 %v8240, %v8210
        %v8242 = vadd.f32 %v8241, %v8211
        %v8243 = vadd.f32 %v8242, %v8212
        %v8244 = vadd.f32 %v8243, %v8213
        %v8245 = vadd.f32 %v8244, %v8214
        %v8246 = vadd.f32 %v8245, %v8215
        %v8247 = vadd.f32 %v8246, %v8216
        %v8248 = vadd.f32 %v8247, %v8217
        %v8249 = vadd.f32 %v8248, %v8218
        %v8250 = vadd.f32 %v8249, %v8219
        %v8251 = vadd.f32 %v8250, %v8220
        %v8252 = vadd.f32 %v8251, %v8221
        %v8253 = vadd.f32 %v8252, %v8222
        %v8254 = vadd.f32 %v8253, %v8223
        %v8255 = vadd.f32 %v8254, %v8224
        %v8256 = vadd.f32 %v8255, %v8225
        %v8257 = vadd.f32 %v8256, %v8226
        %v8258 = vadd.f32 %v8257, %v8227
        %v8259 = vadd.f32 %v8258, %v8228
        %v8260 = vadd.f32 %v8259, %v8229
        %v8261 = vadd.f32 %v8260, %v8230
        %v8262 = vadd.f32 %v8261, %v8231
        %v8263 = vadd.f32 %v8262, %v8232
        %v8264 = vrot.slane %v8263, 4
        %v8265 = vadd.f32 %v8263, %v8264
        %v8266 = vrot.slane %v8265, 2
        %v8267 = vadd.f32 %v8265, %v8266
        %v8268 = vrot.slane %v8267, 1
        %v8269 = vadd.f32 %v8267, %v8268
        %v8270 = vrcp.pop 256.0
        %v8271 = vmul.f32 %v8269, %v8270
        %v8272 = vld [vmem:[#allocation12] sm:$0xff]
        %v8273 = vld [vmem:[#allocation12 + $0x8] sm:$0xff]
        %v8274 = vld [vmem:[#allocation12 + $0x10] sm:$0xff]
        %v8275 = vld [vmem:[#allocation12 + $0x18] sm:$0xff]
        %v8276 = vld [vmem:[#allocation12 + $0x20] sm:$0xff]
        %v8277 = vld [vmem:[#allocation12 + $0x28] sm:$0xff]
        %v8278 = vld [vmem:[#allocation12 + $0x30] sm:$0xff]
        %v8279 = vld [vmem:[#allocation12 + $0x38] sm:$0xff]
        %v8280 = vld [vmem:[#allocation12 + $0x40] sm:$0xff]
        %v8281 = vld [vmem:[#allocation12 + $0x48] sm:$0xff]
        %v8282 = vld [vmem:[#allocation12 + $0x50] sm:$0xff]
        %v8283 = vld [vmem:[#allocation12 + $0x58] sm:$0xff]
        %v8284 = vld [vmem:[#allocation12 + $0x60] sm:$0xff]
        %v8285 = vld [vmem:[#allocation12 + $0x68] sm:$0xff]
        %v8286 = vld [vmem:[#allocation12 + $0x70] sm:$0xff]
        %v8287 = vld [vmem:[#allocation12 + $0x78] sm:$0xff]
        %8288 = vmatprep.subr.mxu0 0.0
        %8289 = vmatpush1.msra.mxu0 %v8272
        %8290 = vmatprep.subr.mxu0 0.0
        %8291 = vmatpush1.msra.mxu0 %v8273
        %8292 = vmatprep.subr.mxu0 0.0
        %8293 = vmatpush1.msra.mxu0 %v8274
        %8294 = vmatprep.subr.mxu0 0.0
        %8295 = vmatpush1.msra.mxu0 %v8275
        %8296 = vmatprep.subr.mxu0 0.0
        %8297 = vmatpush1.msra.mxu0 %v8276
        %8298 = vmatprep.subr.mxu0 0.0
        %8299 = vmatpush1.msra.mxu0 %v8277
        %8300 = vmatprep.subr.mxu0 0.0
        %8301 = vmatpush1.msra.mxu0 %v8278
        %8302 = vmatprep.subr.mxu0 0.0
        %8303 = vmatpush1.msra.mxu0 %v8279
        %8304 = vmatprep.subr.mxu0 0.0
        %8305 = vmatpush1.msra.mxu0 %v8280
        %8306 = vmatprep.subr.mxu0 0.0
        %8307 = vmatpush1.msra.mxu0 %v8281
        %8308 = vmatprep.subr.mxu0 0.0
        %8309 = vmatpush1.msra.mxu0 %v8282
        %8310 = vmatprep.subr.mxu0 0.0
        %8311 = vmatpush1.msra.mxu0 %v8283
        %8312 = vmatprep.subr.mxu0 0.0
        %8313 = vmatpush1.msra.mxu0 %v8284
        %8314 = vmatprep.subr.mxu0 0.0
        %8315 = vmatpush1.msra.mxu0 %v8285
        %8316 = vmatprep.subr.mxu0 0.0
        %8317 = vmatpush1.msra.mxu0 %v8286
        %8318 = vmatprep.subr.mxu0 0.0
        %8319 = vmatpush1.msra.mxu0 %v8287
        %8320 = vmatprep.subr.mxu0 0.0
        %8321 = vmatpush1.msra.mxu0 0.0
        %8322 = vmatprep.subr.mxu0 0.0
        %8323 = vmatpush1.msra.mxu0 0.0
        %8324 = vmatprep.subr.mxu0 0.0
        %8325 = vmatpush1.msra.mxu0 0.0
        %8326 = vmatprep.subr.mxu0 0.0
        %8327 = vmatpush1.msra.mxu0 0.0
        %8328 = vmatprep.subr.mxu0 0.0
        %8329 = vmatpush1.msra.mxu0 0.0
        %8330 = vmatprep.subr.mxu0 0.0
        %8331 = vmatpush1.msra.mxu0 0.0
        %8332 = vmatprep.subr.mxu0 0.0
        %8333 = vmatpush1.msra.mxu0 0.0
        %8334 = vmatprep.subr.mxu0 0.0
        %8335 = vmatpush1.msra.mxu0 0.0
        %8336 = vmatprep.subr.mxu0 0.0
        %8337 = vmatpush1.msra.mxu0 0.0
        %8338 = vmatprep.subr.mxu0 0.0
        %8339 = vmatpush1.msra.mxu0 0.0
        %8340 = vmatprep.subr.mxu0 0.0
        %8341 = vmatpush1.msra.mxu0 0.0
        %8342 = vmatprep.subr.mxu0 0.0
        %8343 = vmatpush1.msra.mxu0 0.0
        %8344 = vmatprep.subr.mxu0 0.0
        %8345 = vmatpush1.msra.mxu0 0.0
        %8346 = vmatprep.subr.mxu0 0.0
        %8347 = vmatpush1.msra.mxu0 0.0
        %8348 = vmatprep.subr.mxu0 0.0
        %8349 = vmatpush1.msra.mxu0 0.0
        %8350 = vmatprep.subr.mxu0 0.0
        %8351 = vmatpush1.msra.mxu0 0.0
        %8352 = vmatprep.mubr.f32.mxu0 0.0
        %8353 = vmatmul.mubr.f32.gmra.mrb[0].mxu0 %v8271
        %v8354 = vpop.f32.mrb[0].mxu0
        %v8355 = vadd.f32 0.0, %v8354
        %v8356 = vpop.f32.mrb[0].mxu0
        %8357 = vdwg.mxu0
        %v8358 = vxor.u32 %v8355, 2147483648
        %v8359 = vmul.f32 %v8358, 1.442695
        %v8360 = vpow.pop %v8359
        %v8361 = vadd.f32 %v8360, 1.0
        %v8362 = vrcp.pop %v8361
        %v8363 = vmul.f32 1.0, %v8362
        %v8364 = vlaneseq
        %v8365 = vshrl.u32 %v8364, 7
        %v8366 = vsub.s32 0, %v8365
        %v8367 = vrot.slane %v8363, %v8366
        %v8368 = vmul.f32 %v8201, %v8367
        %v8369 = vmul.f32 %v8202, %v8367
        %v8370 = vmul.f32 %v8203, %v8367
        %v8371 = vmul.f32 %v8204, %v8367
        %v8372 = vmul.f32 %v8205, %v8367
        %v8373 = vmul.f32 %v8206, %v8367
        %v8374 = vmul.f32 %v8207, %v8367
        %v8375 = vmul.f32 %v8208, %v8367
        %v8376 = vmul.f32 %v8209, %v8367
        %v8377 = vmul.f32 %v8210, %v8367
        %v8378 = vmul.f32 %v8211, %v8367
        %v8379 = vmul.f32 %v8212, %v8367
        %v8380 = vmul.f32 %v8213, %v8367
        %v8381 = vmul.f32 %v8214, %v8367
        %v8382 = vmul.f32 %v8215, %v8367
        %v8383 = vmul.f32 %v8216, %v8367
        %v8384 = vmul.f32 %v8217, %v8367
        %v8385 = vmul.f32 %v8218, %v8367
        %v8386 = vmul.f32 %v8219, %v8367
        %v8387 = vmul.f32 %v8220, %v8367
        %v8388 = vmul.f32 %v8221, %v8367
        %v8389 = vmul.f32 %v8222, %v8367
        %v8390 = vmul.f32 %v8223, %v8367
        %v8391 = vmul.f32 %v8224, %v8367
        %v8392 = vmul.f32 %v8225, %v8367
        %v8393 = vmul.f32 %v8226, %v8367
        %v8394 = vmul.f32 %v8227, %v8367
        %v8395 = vmul.f32 %v8228, %v8367
        %v8396 = vmul.f32 %v8229, %v8367
        %v8397 = vmul.f32 %v8230, %v8367
        %v8398 = vmul.f32 %v8231, %v8367
        %v8399 = vmul.f32 %v8232, %v8367
        %v8400 = vld [vmem:[%s5 + $0x4] sm:$0x1]
        %v8401 = vlaneseq
        %v8402 = vshrl.u32 %v8401, 7
        %v8403 = vsub.s32 0, %v8402
        %v8404 = vrot.slane %v8400, %v8403
        %v8405 = vmul.f32 %v1954, %v8404
        %v8406 = vmul.f32 %v1958, %v8404
        %v8407 = vmul.f32 %v1964, %v8404
        %v8408 = vmul.f32 %v1968, %v8404
        %v8409 = vmul.f32 %v1974, %v8404
        %v8410 = vmul.f32 %v1978, %v8404
        %v8411 = vmul.f32 %v1984, %v8404
        %v8412 = vmul.f32 %v1988, %v8404
        %v8413 = vmul.f32 %v1994, %v8404
        %v8414 = vmul.f32 %v1998, %v8404
        %v8415 = vmul.f32 %v2004, %v8404
        %v8416 = vmul.f32 %v2008, %v8404
        %v8417 = vmul.f32 %v2014, %v8404
        %v8418 = vmul.f32 %v2018, %v8404
        %v8419 = vmul.f32 %v2024, %v8404
        %v8420 = vmul.f32 %v2028, %v8404
        %v8421 = vmul.f32 %v2034, %v8404
        %v8422 = vmul.f32 %v2038, %v8404
        %v8423 = vmul.f32 %v2044, %v8404
        %v8424 = vmul.f32 %v2048, %v8404
        %v8425 = vmul.f32 %v2054, %v8404
        %v8426 = vmul.f32 %v2058, %v8404
        %v8427 = vmul.f32 %v2064, %v8404
        %v8428 = vmul.f32 %v2068, %v8404
        %v8429 = vmul.f32 %v2074, %v8404
        %v8430 = vmul.f32 %v2078, %v8404
        %v8431 = vmul.f32 %v2084, %v8404
        %v8432 = vmul.f32 %v2088, %v8404
        %v8433 = vmul.f32 %v2094, %v8404
        %v8434 = vmul.f32 %v2098, %v8404
        %v8435 = vmul.f32 %v2104, %v8404
        %v8436 = vmul.f32 %v2108, %v8404
        %v8437 = vld [vmem:[%s5 + $0x5] sm:$0x1]
        %v8438 = vlaneseq
        %v8439 = vshrl.u32 %v8438, 7
        %v8440 = vsub.s32 0, %v8439
        %v8441 = vrot.slane %v8437, %v8440
        %v8442 = vadd.f32 %v8405, %v8441
        %v8443 = vadd.f32 %v8406, %v8441
        %v8444 = vadd.f32 %v8407, %v8441
        %v8445 = vadd.f32 %v8408, %v8441
        %v8446 = vadd.f32 %v8409, %v8441
        %v8447 = vadd.f32 %v8410, %v8441
        %v8448 = vadd.f32 %v8411, %v8441
        %v8449 = vadd.f32 %v8412, %v8441
        %v8450 = vadd.f32 %v8413, %v8441
        %v8451 = vadd.f32 %v8414, %v8441
        %v8452 = vadd.f32 %v8415, %v8441
        %v8453 = vadd.f32 %v8416, %v8441
        %v8454 = vadd.f32 %v8417, %v8441
        %v8455 = vadd.f32 %v8418, %v8441
        %v8456 = vadd.f32 %v8419, %v8441
        %v8457 = vadd.f32 %v8420, %v8441
        %v8458 = vadd.f32 %v8421, %v8441
        %v8459 = vadd.f32 %v8422, %v8441
        %v8460 = vadd.f32 %v8423, %v8441
        %v8461 = vadd.f32 %v8424, %v8441
        %v8462 = vadd.f32 %v8425, %v8441
        %v8463 = vadd.f32 %v8426, %v8441
        %v8464 = vadd.f32 %v8427, %v8441
        %v8465 = vadd.f32 %v8428, %v8441
        %v8466 = vadd.f32 %v8429, %v8441
        %v8467 = vadd.f32 %v8430, %v8441
        %v8468 = vadd.f32 %v8431, %v8441
        %v8469 = vadd.f32 %v8432, %v8441
        %v8470 = vadd.f32 %v8433, %v8441
        %v8471 = vadd.f32 %v8434, %v8441
        %v8472 = vadd.f32 %v8435, %v8441
        %v8473 = vadd.f32 %v8436, %v8441
        %v8474 = vadd.f32 %v8368, %v8442
        %v8475 = vadd.f32 %v8369, %v8443
        %v8476 = vadd.f32 %v8370, %v8444
        %v8477 = vadd.f32 %v8371, %v8445
        %v8478 = vadd.f32 %v8372, %v8446
        %v8479 = vadd.f32 %v8373, %v8447
        %v8480 = vadd.f32 %v8374, %v8448
        %v8481 = vadd.f32 %v8375, %v8449
        %v8482 = vadd.f32 %v8376, %v8450
        %v8483 = vadd.f32 %v8377, %v8451
        %v8484 = vadd.f32 %v8378, %v8452
        %v8485 = vadd.f32 %v8379, %v8453
        %v8486 = vadd.f32 %v8380, %v8454
        %v8487 = vadd.f32 %v8381, %v8455
        %v8488 = vadd.f32 %v8382, %v8456
        %v8489 = vadd.f32 %v8383, %v8457
        %v8490 = vadd.f32 %v8384, %v8458
        %v8491 = vadd.f32 %v8385, %v8459
        %v8492 = vadd.f32 %v8386, %v8460
        %v8493 = vadd.f32 %v8387, %v8461
        %v8494 = vadd.f32 %v8388, %v8462
        %v8495 = vadd.f32 %v8389, %v8463
        %v8496 = vadd.f32 %v8390, %v8464
        %v8497 = vadd.f32 %v8391, %v8465
        %v8498 = vadd.f32 %v8392, %v8466
        %v8499 = vadd.f32 %v8393, %v8467
        %v8500 = vadd.f32 %v8394, %v8468
        %v8501 = vadd.f32 %v8395, %v8469
        %v8502 = vadd.f32 %v8396, %v8470
        %v8503 = vadd.f32 %v8397, %v8471
        %v8504 = vadd.f32 %v8398, %v8472
        %v8505 = vadd.f32 %v8399, %v8473
        %v8506 = vmax.f32 %v8474, 0.0
        %v8507 = vmax.f32 %v8475, 0.0
        %v8508 = vmax.f32 %v8476, 0.0
        %v8509 = vmax.f32 %v8477, 0.0
        %v8510 = vmax.f32 %v8478, 0.0
        %v8511 = vmax.f32 %v8479, 0.0
        %v8512 = vmax.f32 %v8480, 0.0
        %v8513 = vmax.f32 %v8481, 0.0
        %v8514 = vmax.f32 %v8482, 0.0
        %v8515 = vmax.f32 %v8483, 0.0
        %v8516 = vmax.f32 %v8484, 0.0
        %v8517 = vmax.f32 %v8485, 0.0
        %v8518 = vmax.f32 %v8486, 0.0
        %v8519 = vmax.f32 %v8487, 0.0
        %v8520 = vmax.f32 %v8488, 0.0
        %v8521 = vmax.f32 %v8489, 0.0
        %v8522 = vmax.f32 %v8490, 0.0
        %v8523 = vmax.f32 %v8491, 0.0
        %v8524 = vmax.f32 %v8492, 0.0
        %v8525 = vmax.f32 %v8493, 0.0
        %v8526 = vmax.f32 %v8494, 0.0
        %v8527 = vmax.f32 %v8495, 0.0
        %v8528 = vmax.f32 %v8496, 0.0
        %v8529 = vmax.f32 %v8497, 0.0
        %v8530 = vmax.f32 %v8498, 0.0
        %v8531 = vmax.f32 %v8499, 0.0
        %v8532 = vmax.f32 %v8500, 0.0
        %v8533 = vmax.f32 %v8501, 0.0
        %v8534 = vmax.f32 %v8502, 0.0
        %v8535 = vmax.f32 %v8503, 0.0
        %v8536 = vmax.f32 %v8504, 0.0
        %v8537 = vmax.f32 %v8505, 0.0
        %v8538 = vpack.c.bf16 %v8507, %v8506
        %v8539 = vpack.c.bf16 %v8509, %v8508
        %v8540 = vpack.c.bf16 %v8511, %v8510
        %v8541 = vpack.c.bf16 %v8513, %v8512
        %v8542 = vpack.c.bf16 %v8515, %v8514
        %v8543 = vpack.c.bf16 %v8517, %v8516
        %v8544 = vpack.c.bf16 %v8519, %v8518
        %v8545 = vpack.c.bf16 %v8521, %v8520
        %v8546 = vpack.c.bf16 %v8523, %v8522
        %v8547 = vpack.c.bf16 %v8525, %v8524
        %v8548 = vpack.c.bf16 %v8527, %v8526
        %v8549 = vpack.c.bf16 %v8529, %v8528
        %v8550 = vpack.c.bf16 %v8531, %v8530
        %v8551 = vpack.c.bf16 %v8533, %v8532
        %v8552 = vpack.c.bf16 %v8535, %v8534
        %v8553 = vpack.c.bf16 %v8537, %v8536
        %v8570 = vunpack.c.l.b16 %v8538
        %v8571 = vunpack.c.h.b16 %v8538
        %v8572 = vunpack.c.l.b16 %v8539
        %v8573 = vunpack.c.h.b16 %v8539
        %v8574 = vunpack.c.l.b16 %v8540
        %v8575 = vunpack.c.h.b16 %v8540
        %v8576 = vunpack.c.l.b16 %v8541
        %v8577 = vunpack.c.h.b16 %v8541
        %v8578 = vunpack.c.l.b16 %v8542
        %v8579 = vunpack.c.h.b16 %v8542
        %v8580 = vunpack.c.l.b16 %v8543
        %v8581 = vunpack.c.h.b16 %v8543
        %v8582 = vunpack.c.l.b16 %v8544
        %v8583 = vunpack.c.h.b16 %v8544
        %v8584 = vunpack.c.l.b16 %v8545
        %v8585 = vunpack.c.h.b16 %v8545
        %v8586 = vunpack.c.l.b16 %v8546
        %v8587 = vunpack.c.h.b16 %v8546
        %v8588 = vunpack.c.l.b16 %v8547
        %v8589 = vunpack.c.h.b16 %v8547
        %v8590 = vunpack.c.l.b16 %v8548
        %v8591 = vunpack.c.h.b16 %v8548
        %v8592 = vunpack.c.l.b16 %v8549
        %v8593 = vunpack.c.h.b16 %v8549
        %v8594 = vunpack.c.l.b16 %v8550
        %v8595 = vunpack.c.h.b16 %v8550
        %v8596 = vunpack.c.l.b16 %v8551
        %v8597 = vunpack.c.h.b16 %v8551
        %v8598 = vunpack.c.l.b16 %v8552
        %v8599 = vunpack.c.h.b16 %v8552
        %v8600 = vunpack.c.l.b16 %v8553
        %v8601 = vunpack.c.h.b16 %v8553
        %v8602 = vpack.c.b16 %v8570, %v8570
        %v8603 = vpack.c.b16 %v8571, %v8571
        %v8604 = vpack.c.b16 %v8572, %v8572
        %v8605 = vpack.c.b16 %v8573, %v8573
        %v8606 = vpack.c.b16 %v8574, %v8574
        %v8607 = vpack.c.b16 %v8575, %v8575
        %v8608 = vpack.c.b16 %v8576, %v8576
        %v8609 = vpack.c.b16 %v8577, %v8577
        %v8610 = vpack.c.b16 %v8578, %v8578
        %v8611 = vpack.c.b16 %v8579, %v8579
        %v8612 = vpack.c.b16 %v8580, %v8580
        %v8613 = vpack.c.b16 %v8581, %v8581
        %v8614 = vpack.c.b16 %v8582, %v8582
        %v8615 = vpack.c.b16 %v8583, %v8583
        %v8616 = vpack.c.b16 %v8584, %v8584
        %v8617 = vpack.c.b16 %v8585, %v8585
        %v8618 = vpack.c.b16 %v8586, %v8586
        %v8619 = vpack.c.b16 %v8587, %v8587
        %v8620 = vpack.c.b16 %v8588, %v8588
        %v8621 = vpack.c.b16 %v8589, %v8589
        %v8622 = vpack.c.b16 %v8590, %v8590
        %v8623 = vpack.c.b16 %v8591, %v8591
        %v8624 = vpack.c.b16 %v8592, %v8592
        %v8625 = vpack.c.b16 %v8593, %v8593
        %v8626 = vpack.c.b16 %v8594, %v8594
        %v8627 = vpack.c.b16 %v8595, %v8595
        %v8628 = vpack.c.b16 %v8596, %v8596
        %v8629 = vpack.c.b16 %v8597, %v8597
        %v8630 = vpack.c.b16 %v8598, %v8598
        %v8631 = vpack.c.b16 %v8599, %v8599
        %v8632 = vpack.c.b16 %v8600, %v8600
        %v8633 = vpack.c.b16 %v8601, %v8601
        %8666 = vst [vmem:[%s327] sm:$0xf] %v8602
        %8667 = vst [vmem:[%s327 + $0x4] sm:$0xf] %v8603
        %8668 = vst [vmem:[%s327 + $0x8] sm:$0xf] %v8604
        %8669 = vst [vmem:[%s327 + $0xc] sm:$0xf] %v8605
        %8670 = vst [vmem:[%s327 + $0x10] sm:$0xf] %v8606
        %8671 = vst [vmem:[%s327 + $0x14] sm:$0xf] %v8607
        %8672 = vst [vmem:[%s327 + $0x18] sm:$0xf] %v8608
        %8673 = vst [vmem:[%s327 + $0x1c] sm:$0xf] %v8609
        %8674 = vst [vmem:[%s327 + $0x20] sm:$0xf] %v8610
        %8675 = vst [vmem:[%s327 + $0x24] sm:$0xf] %v8611
        %8676 = vst [vmem:[%s327 + $0x28] sm:$0xf] %v8612
        %8677 = vst [vmem:[%s327 + $0x2c] sm:$0xf] %v8613
        %8678 = vst [vmem:[%s327 + $0x30] sm:$0xf] %v8614
        %8679 = vst [vmem:[%s327 + $0x34] sm:$0xf] %v8615
        %8680 = vst [vmem:[%s327 + $0x38] sm:$0xf] %v8616
        %8681 = vst [vmem:[%s327 + $0x3c] sm:$0xf] %v8617
        %8682 = vst [vmem:[%s327 + $0x40] sm:$0xf] %v8618
        %8683 = vst [vmem:[%s327 + $0x44] sm:$0xf] %v8619
        %8684 = vst [vmem:[%s327 + $0x48] sm:$0xf] %v8620
        %8685 = vst [vmem:[%s327 + $0x4c] sm:$0xf] %v8621
        %8686 = vst [vmem:[%s327 + $0x50] sm:$0xf] %v8622
        %8687 = vst [vmem:[%s327 + $0x54] sm:$0xf] %v8623
        %8688 = vst [vmem:[%s327 + $0x58] sm:$0xf] %v8624
        %8689 = vst [vmem:[%s327 + $0x5c] sm:$0xf] %v8625
        %8690 = vst [vmem:[%s327 + $0x60] sm:$0xf] %v8626
        %8691 = vst [vmem:[%s327 + $0x64] sm:$0xf] %v8627
        %8692 = vst [vmem:[%s327 + $0x68] sm:$0xf] %v8628
        %8693 = vst [vmem:[%s327 + $0x6c] sm:$0xf] %v8629
        %8694 = vst [vmem:[%s327 + $0x70] sm:$0xf] %v8630
        %8695 = vst [vmem:[%s327 + $0x74] sm:$0xf] %v8631
        %8696 = vst [vmem:[%s327 + $0x78] sm:$0xf] %v8632
        %8697 = vst [vmem:[%s327 + $0x7c] sm:$0xf] %v8633
        %s8698 = sand.u32 %s164, 1
        %s8699 = scalar_lea.sflag [#allocation6], %s8698
        %s8700 = sand.u32 %s164, 1
        %s8701 = smul.addr %s8700, 128
        %s8702 = scalar_lea.vmem [#allocation13], %s8701
        // Predicated region
        $region65: #{tpu_custom_call.1} parent=43 // pred_check
          %p8703 = pneg %p174
        $region66: #{tpu_custom_call.1} parent=43 // pred_check_branch
          %8705 = sbr.rel (%p8703) target = $region68
        $region67: #{tpu_custom_call.1} parent=43 // pred_region
          %s8707 = ssub.s32 2048, 2048
          %8708 = vsyncadd %s8699, %s8707
          %s8709 = smul.addr %s25, 32
          %s8710 = smul.addr %s8709, 64
          %s8711 = scalar_lea.hbm %s6, %s8710
          %s8712 = sshll.u32 %s8702, 4
          %s8713 = int_to_ptr.vmem [resolvable:$true] %s8712
          %8718 = dma.vmem_to_hbm [thread:$0]  %s8713, 2048, %s8711, %s8699, 64, 64, 4
        $region68: #{tpu_custom_call.1} parent=43 // pred_fallthru
          _
      $region44: #{tpu_custom_call.1} parent=5 // pred_fallthru
        _
      %p8719 = scmp.le.s32.totalorder 2, %s20
      // Predicated region
      $region69: #{tpu_custom_call.1} parent=5 // pred_check
        %p8720 = pneg %p8719
      $region70: #{tpu_custom_call.1} parent=5 // pred_check_branch
        %8722 = sbr.rel (%p8720) target = $region72
      $region71: #{tpu_custom_call.1} parent=5 // pred_region
        %s8723 = ssub.s32 %s20, 2
        // Predicated region
        $region73: #{tpu_custom_call.1} parent=71 // pred_check
          %p8724 = pneg %p180
        $region74: #{tpu_custom_call.1} parent=71 // pred_check_branch
          %8726 = sbr.rel (%p8724) target = $region76
        $region75: #{tpu_custom_call.1} parent=71 // pred_region
          %s8727 = sand.u32 %s165, 1
          %s8728 = scalar_lea.sflag [#allocation6], %s8727
          %s8729 = sand.u32 %s165, 1
          %s8730 = smul.addr %s8729, 128
          %s8731 = scalar_lea.vmem [#allocation13], %s8730
          %8732 = dma.done %s8728, 2048
        $region76: #{tpu_custom_call.1} parent=71 // pred_fallthru
          _
      $region72: #{tpu_custom_call.1} parent=5 // pred_fallthru
        _
    $region6: #{tpu_custom_call.1} parent=1 // loop_footer
      %s24 = sadd.s32 1, %s20
    $region7: #{tpu_custom_call.1} parent=1 // loop_footer_branch
      %19 = sbr.rel target = $region3
    $region8: #{tpu_custom_call.1} parent=1 // loop_exit
      _
    %8733 = vsyncpa [#allocation5], 1
    %s8734 = scalar_lea.sflag [#allocation5], 1
    %8735 = vsyncpa %s8734, 1
    %8736 = vsyncpa [#allocation8], 1
    %8737 = vsyncpa [#allocation11], 1
    %8738 = vsyncpa [#allocation6], 1
    %s8739 = scalar_lea.sflag [#allocation6], 1
    %8740 = vsyncpa %s8739, 1

</llo_original>
